<compile_context>
chip_gen: v5e
topology: v5e:2x2
jax: 0.10.0
libtpu: 0.0.40
codegen_flags: <defaults>
</compile_context>

<pallas_src>
import numpy as np
import jax
import jax.numpy as jnp
from jax.experimental import pallas as pl
from jax.experimental.pallas import tpu as pltpu

H = W = 28
HW = H * W            # 784 valid pixels per image
SEG = 896             # per-image lane segment (7 * 128, lane aligned)
EPS = 1e-5
KSTACK_MAX = 9 * 12   # largest stacked contraction axis (conv2: 9 taps x 12 in-ch)


def _build_tap_masks():
    """(9, 1, SEG) f32 per-image validity masks, one per 3x3 tap (k = dy*3 + dx).

    mask[k, 0, j] == 1 iff lane j is a real pixel (j < 784) AND the tap source
    pixel (row+dy-1, col+dx-1) lies inside the 28x28 image (conv zero padding).
    Compile-time numpy constant; batch-independent (tiled in-kernel).
    """
    jl = np.arange(SEG)
    row, col = jl // W, jl % W
    in_img = jl < HW
    ms = []
    for dy in range(3):
        for dx in range(3):
            ri, cc = row + dy - 1, col + dx - 1
            ms.append(in_img & (ri >= 0) & (ri < H) & (cc >= 0) & (cc < W))
    return np.stack(ms).astype(np.float32).reshape(9, 1, SEG)


def _make_generator_kernel(batch):
    lanes = batch * SEG
    inv_n = 1.0 / float(batch * HW)      # BN: biased variance over (N, H, W)

    def tile_mask(m):
        # (1, SEG) per-image mask -> (1, lanes); SEG is lane-aligned so this is
        # a cheap lane-dim concat of identical slabs.
        return jnp.concatenate([m] * batch, axis=1) if batch > 1 else m

    def bn_relu(x, g_ref, b_ref):
        # Training-mode BatchNorm2d + ReLU, vectorized over channels (sublanes).
        # One-pass stats: padding lanes of x are already zero, so plain sums
        # over the lane axis are sums over valid pixels only.
        s1 = jnp.sum(x, axis=1, keepdims=True)            # (C, 1)
        s2 = jnp.sum(x * x, axis=1, keepdims=True)        # (C, 1)
        m = s1 * inv_n
        v = s2 * inv_n - m * m
        scale = g_ref[...] * jax.lax.rsqrt(v + EPS)       # (C, 1)
        shift = b_ref[...] - m * scale                    # (C, 1)
        return jnp.maximum(x * scale + shift, 0.0)

    def conv3x3(x, w_ref, b_ref, masks_ref, xs_ref):
        # x: (Ci, lanes); w_ref: (Co, 9*Ci) with column index k*Ci + c;
        # taps are stacked on the contraction axis in VMEM scratch, then ONE
        # MXU dot produces all output channels.
        co = w_ref.shape[0]
        ci = w_ref.shape[1] // 9
        for dy in range(3):
            for dx in range(3):
                k = dy * 3 + dx
                off = (dy - 1) * W + (dx - 1)              # flattened source offset
                if off == 0:
                    tap = x                                # centre tap, unmasked
                else:
                    tap = pltpu.roll(x, shift=(-off) % lanes, axis=1)
                    tap = tap * tile_mask(masks_ref[k])    # conv zero-padding at edges
                xs_ref[pl.ds(k * ci, ci), :] = tap
        out = jnp.dot(w_ref[...], xs_ref[0:9 * ci, :],
                      preferred_element_type=jnp.float32)  # (Co, lanes)
        return out + b_ref[...]

    def kernel(x_ref, wfc_ref, bfc_ref, masks_ref,
               g0_ref, b0_ref,
               w1_ref, c1b_ref, g1_ref, b1_ref,
               w2_ref, c2b_ref, g2_ref, b2_ref,
               w3_ref, c3b_ref,
               out_ref,
               xs_ref, h0_ref):
        valid = tile_mask(masks_ref[4])    # centre-tap mask == in-image mask (1, lanes)

        # ---- fc: one (B,100)@(100,896) MXU dot, then B lane-segment retiles ----
        h = jnp.dot(x_ref[...], wfc_ref[...],
                    preferred_element_type=jnp.float32) + bfc_ref[...]     # (B, SEG)
        for b in range(batch):
            h0_ref[:, pl.ds(b * SEG, SEG)] = h[b:b + 1, :]
        # Padding lanes of h0 are exactly zero (fc weight/bias are zero-padded).

        # ---- br: BatchNorm2d(1) + ReLU ----
        x0 = bn_relu(h0_ref[...], g0_ref, b0_ref)                          # (1, lanes)

        # ---- downsample1: conv(1->12) + BN + ReLU ----
        y1 = conv3x3(x0, w1_ref, c1b_ref, masks_ref, xs_ref) * valid
        x1 = bn_relu(y1, g1_ref, b1_ref)                                   # (12, lanes)

        # ---- downsample2: conv(12->6) + BN + ReLU ----
        y2 = conv3x3(x1, w2_ref, c2b_ref, masks_ref, xs_ref) * valid
        x2 = bn_relu(y2, g2_ref, b2_ref)                                   # (6, lanes)

        # ---- downsample3: conv(6->1) + tanh (padding lanes sliced off in wrapper) ----
        out_ref[...] = jnp.tanh(conv3x3(x2, w3_ref, c3b_ref, masks_ref, xs_ref))

    return kernel


def prepare_params(p):
    """Layout-only parameter prep. Run ONCE when params are created/updated
    (hoisted out of the per-step jitted forward)."""
    fcw = jnp.pad(p["fc_w"].astype(jnp.float32), ((0, 0), (0, SEG - HW)))      # (100, 896)
    fcb = jnp.pad(p["fc_b"].astype(jnp.float32).reshape(1, -1),
                  ((0, 0), (0, SEG - HW)))                                      # (1, 896)

    def prep_w(w):   # (Co, Ci, 3, 3) -> (Co, 9*Ci), column index k*Ci + c, k = dy*3+dx
        co, ci = w.shape[0], w.shape[1]
        return jnp.transpose(w.astype(jnp.float32), (0, 2, 3, 1)).reshape(co, 9 * ci)

    def col(v):      # per-channel params -> (C, 1) lane-broadcastable columns
        return v.astype(jnp.float32).reshape(-1, 1)

    return {
        "fcw": fcw, "fcb": fcb, "masks": jnp.asarray(_build_tap_masks()),
        "g0": col(p["g0"]), "b0": col(p["b0"]),
        "w1": prep_w(p["w1"]), "c1b": col(p["c1b"]), "g1": col(p["g1"]), "b1": col(p["b1"]),
        "w2": prep_w(p["w2"]), "c2b": col(p["c2b"]), "g2": col(p["g2"]), "b2": col(p["b2"]),
        "w3": prep_w(p["w3"]), "c3b": col(p["c3b"]),
    }


@jax.jit
def generator_forward(x, pp):
    batch = x.shape[0]
    lanes = batch * SEG
    vmem = pl.BlockSpec(memory_space=pltpu.MemorySpace.VMEM)
    out = pl.pallas_call(
        _make_generator_kernel(batch),
        out_shape=jax.ShapeDtypeStruct((1, lanes), jnp.float32),
        in_specs=[vmem] * 16,
        out_specs=vmem,
        scratch_shapes=[
            pltpu.VMEM((KSTACK_MAX, lanes), jnp.float32),   # stacked conv taps
            pltpu.VMEM((1, lanes), jnp.float32),            # lane-dense fc output
        ],
    )(x.astype(jnp.float32), pp["fcw"], pp["fcb"], pp["masks"],
      pp["g0"], pp["b0"],
      pp["w1"], pp["c1b"], pp["g1"], pp["b1"],
      pp["w2"], pp["c2b"], pp["g2"], pp["b2"],
      pp["w3"], pp["c3b"])

    # Lane-dense kernel output -> NCHW (wrapper-side reshape/slice only).
    return out.reshape(batch, SEG)[:, :HW].reshape(batch, 1, H, W)


# ----------------------------- pure-JAX reference ----------------------------
# Default (TPU bf16-class) matmul/conv precision, matching the in-kernel dots,
# so the comparison only measures accumulation-order / BN-formula differences.

def reference_forward(x, p):
    h = jnp.dot(x, p["fc_w"]) + p["fc_b"]
    z = h.reshape(-1, 1, H, W)

    def bn_relu(t, g, b):
        m = t.mean(axis=(0, 2, 3), keepdims=True)
        v = ((t - m) ** 2).mean(axis=(0, 2, 3), keepdims=True)
        y = (t - m) / jnp.sqrt(v + EPS) * g.reshape(1, -1, 1, 1) + b.reshape(1, -1, 1, 1)
        return jnp.maximum(y, 0.0)

    def conv(t, w, b):
        o = jax.lax.conv_general_dilated(
            t, w, window_strides=(1, 1), padding=((1, 1), (1, 1)),
            dimension_numbers=("NCHW", "OIHW", "NCHW"))
        return o + b.reshape(1, -1, 1, 1)

    z = bn_relu(z, p["g0"], p["b0"])
    z = bn_relu(conv(z, p["w1"], p["c1b"]), p["g1"], p["b1"])
    z = bn_relu(conv(z, p["w2"], p["c2b"]), p["g2"], p["b2"])
    return jnp.tanh(conv(z, p["w3"], p["c3b"]))


# ----------------------------- main -------------------------------------------

if __name__ == "__main__":
    key = jax.random.PRNGKey(0)
    keys = jax.random.split(key, 10)
    B = 2

    params = {
        "fc_w": jax.random.normal(keys[0], (100, 784), jnp.float32) * 0.05,
        "fc_b": jax.random.normal(keys[1], (1, 784), jnp.float32) * 0.05,
        "w1":  jax.random.normal(keys[2], (12, 1, 3, 3), jnp.float32) * 0.2,
        "c1b": jax.random.normal(keys[3], (12,), jnp.float32) * 0.1,
        "w2":  jax.random.normal(keys[4], (6, 12, 3, 3), jnp.float32) * 0.2,
        "c2b": jax.random.normal(keys[5], (6,), jnp.float32) * 0.1,
        "w3":  jax.random.normal(keys[6], (1, 6, 3, 3), jnp.float32) * 0.2,
        "c3b": jax.random.normal(keys[7], (1,), jnp.float32) * 0.1,
        # BatchNorm affine params (PyTorch default init: weight=1, bias=0)
        "g0": jnp.ones((1,), jnp.float32),  "b0": jnp.zeros((1,), jnp.float32),
        "g1": jnp.ones((12,), jnp.float32), "b1": jnp.zeros((12,), jnp.float32),
        "g2": jnp.ones((6,), jnp.float32),  "b2": jnp.zeros((6,), jnp.float32),
    }
    x = jax.random.normal(keys[8], (B, 100), jnp.float32)

    prepped = prepare_params(params)          # one-time layout prep (outside the step)
    out = generator_forward(x, prepped)
    out = jax.block_until_ready(out)
    assert out.shape == (B, 1, H, W) and out.dtype == jnp.float32

    ref = reference_forward(x, params)
    err = float(jnp.max(jnp.abs(out - ref)))
    # Both paths use the TPU's default matmul/conv precision; tolerance covers
    # accumulation-order and one-pass-vs-two-pass BN differences (tanh-bounded
    # outputs in [-1, 1]).
    assert err < 3e-2, f"max abs error vs reference: {err}"

    print("KERNEL_OK")
</pallas_src>

<mosaic_0001>
module attributes {stable_mosaic.version = 11 : i64} {
  func.func @kernel(%arg0: memref<2x100xf32, #tpu.memory_space<vmem>>, %arg1: memref<100x896xf32, #tpu.memory_space<vmem>>, %arg2: memref<1x896xf32, #tpu.memory_space<vmem>>, %arg3: memref<9x1x896xf32, #tpu.memory_space<vmem>>, %arg4: memref<1x1xf32, #tpu.memory_space<vmem>>, %arg5: memref<1x1xf32, #tpu.memory_space<vmem>>, %arg6: memref<12x9xf32, #tpu.memory_space<vmem>>, %arg7: memref<12x1xf32, #tpu.memory_space<vmem>>, %arg8: memref<12x1xf32, #tpu.memory_space<vmem>>, %arg9: memref<12x1xf32, #tpu.memory_space<vmem>>, %arg10: memref<6x108xf32, #tpu.memory_space<vmem>>, %arg11: memref<6x1xf32, #tpu.memory_space<vmem>>, %arg12: memref<6x1xf32, #tpu.memory_space<vmem>>, %arg13: memref<6x1xf32, #tpu.memory_space<vmem>>, %arg14: memref<1x54xf32, #tpu.memory_space<vmem>>, %arg15: memref<1x1xf32, #tpu.memory_space<vmem>>, %arg16: memref<1x1792xf32, #tpu.memory_space<vmem>>, %arg17: memref<108x1792xf32, #tpu.memory_space<vmem>>, %arg18: memref<1x1792xf32, #tpu.memory_space<vmem>>) attributes {dimension_semantics = [], scalar_prefetch = 0 : i64, scratch_operands = 2 : i64, tpu.core_type = #tpu.core_type<tc>} {
    %c4 = arith.constant 4 : index
    %c0 = arith.constant 0 : index
    %c0_0 = arith.constant 0 : index
    %0 = vector.load %arg3[%c4, %c0, %c0_0] : memref<9x1x896xf32, #tpu.memory_space<vmem>>, vector<1x1x896xf32>
    %1 = vector.shape_cast %0 : vector<1x1x896xf32> to vector<1x896xf32>
    %2 = tpu.concatenate %1, %1 in 1 : vector<1x896xf32>, vector<1x896xf32> -> vector<1x1792xf32>
    %c0_1 = arith.constant 0 : index
    %c0_2 = arith.constant 0 : index
    %3 = vector.load %arg0[%c0_1, %c0_2] : memref<2x100xf32, #tpu.memory_space<vmem>>, vector<2x100xf32>
    %c0_3 = arith.constant 0 : index
    %c0_4 = arith.constant 0 : index
    %4 = vector.load %arg1[%c0_3, %c0_4] : memref<100x896xf32, #tpu.memory_space<vmem>>, vector<100x896xf32>
    %cst = arith.constant dense<0.000000e+00> : vector<2x896xf32>
    %5 = tpu.matmul %3, %4, %cst {dimension_numbers = #tpu.dot_dimension_numbers<[1], [0], [0], [1], [0, 0, 1, 1], [], []>} : vector<2x100xf32>, vector<100x896xf32>, vector<2x896xf32> -> vector<2x896xf32>
    %c0_5 = arith.constant 0 : index
    %c0_6 = arith.constant 0 : index
    %6 = vector.load %arg2[%c0_5, %c0_6] : memref<1x896xf32, #tpu.memory_space<vmem>>, vector<1x896xf32>
    %7 = vector.broadcast %6 : vector<1x896xf32> to vector<2x896xf32>
    %8 = arith.addf %5, %7 : vector<2x896xf32>
    %9 = vector.extract_strided_slice %8 {offsets = [0, 0], sizes = [1, 896], strides = [1, 1]} : vector<2x896xf32> to vector<1x896xf32>
    %c0_7 = arith.constant 0 : index
    %c0_8 = arith.constant 0 : index
    %10 = vector.load %arg18[%c0_7, %c0_8] : memref<1x1792xf32, #tpu.memory_space<vmem>>, vector<1x896xf32>
    tpu.vector_store %arg18[%c0_7, %c0_8], %9 {strides = array<i32>} : memref<1x1792xf32, #tpu.memory_space<vmem>>, vector<1x896xf32>,
    %11 = vector.extract_strided_slice %8 {offsets = [1, 0], sizes = [1, 896], strides = [1, 1]} : vector<2x896xf32> to vector<1x896xf32>
    %c0_9 = arith.constant 0 : index
    %c896 = arith.constant 896 : index
    %12 = vector.load %arg18[%c0_9, %c896] : memref<1x1792xf32, #tpu.memory_space<vmem>>, vector<1x896xf32>
    tpu.vector_store %arg18[%c0_9, %c896], %11 {strides = array<i32>} : memref<1x1792xf32, #tpu.memory_space<vmem>>, vector<1x896xf32>,
    %c0_10 = arith.constant 0 : index
    %c0_11 = arith.constant 0 : index
    %13 = vector.load %arg18[%c0_10, %c0_11] : memref<1x1792xf32, #tpu.memory_space<vmem>>, vector<1x1792xf32>
    %cst_12 = arith.constant dense<0.000000e+00> : vector<1xf32>
    %14 = vector.multi_reduction <add>, %13, %cst_12 [1] : vector<1x1792xf32> to vector<1xf32>
    %15 = vector.shape_cast %14 : vector<1xf32> to vector<1x1xf32>
    %16 = arith.mulf %13, %13 : vector<1x1792xf32>
    %cst_13 = arith.constant dense<0.000000e+00> : vector<1xf32>
    %17 = vector.multi_reduction <add>, %16, %cst_13 [1] : vector<1x1792xf32> to vector<1xf32>
    %18 = vector.shape_cast %17 : vector<1xf32> to vector<1x1xf32>
    %cst_14 = arith.constant 6.37755089E-4 : f32
    %19 = vector.broadcast %cst_14 : f32 to vector<1x1xf32>
    %20 = arith.mulf %15, %19 : vector<1x1xf32>
    %cst_15 = arith.constant 6.37755089E-4 : f32
    %21 = vector.broadcast %cst_15 : f32 to vector<1x1xf32>
    %22 = arith.mulf %18, %21 : vector<1x1xf32>
    %23 = arith.mulf %20, %20 : vector<1x1xf32>
    %24 = arith.subf %22, %23 : vector<1x1xf32>
    %c0_16 = arith.constant 0 : index
    %c0_17 = arith.constant 0 : index
    %25 = vector.load %arg4[%c0_16, %c0_17] : memref<1x1xf32, #tpu.memory_space<vmem>>, vector<1x1xf32>
    %cst_18 = arith.constant 9.99999974E-6 : f32
    %26 = vector.broadcast %cst_18 : f32 to vector<1x1xf32>
    %27 = arith.addf %24, %26 : vector<1x1xf32>
    %28 = math.rsqrt %27 : vector<1x1xf32>
    %29 = arith.mulf %25, %28 : vector<1x1xf32>
    %c0_19 = arith.constant 0 : index
    %c0_20 = arith.constant 0 : index
    %30 = vector.load %arg5[%c0_19, %c0_20] : memref<1x1xf32, #tpu.memory_space<vmem>>, vector<1x1xf32>
    %31 = arith.mulf %20, %29 : vector<1x1xf32>
    %32 = arith.subf %30, %31 : vector<1x1xf32>
    %33 = vector.broadcast %29 : vector<1x1xf32> to vector<1x1792xf32>
    %34 = arith.mulf %13, %33 : vector<1x1792xf32>
    %35 = vector.broadcast %32 : vector<1x1xf32> to vector<1x1792xf32>
    %36 = arith.addf %34, %35 : vector<1x1792xf32>
    %cst_21 = arith.constant 0.000000e+00 : f32
    %37 = vector.broadcast %cst_21 : f32 to vector<1x1792xf32>
    %38 = arith.maximumf %36, %37 : vector<1x1792xf32>
    %c29_i32 = arith.constant 29 : i32
    %39 = tpu.dynamic_rotate %38 by %c29_i32 dim 1 : vector<1x1792xf32>, i32 -> vector<1x1792xf32>
    %c0_22 = arith.constant 0 : index
    %c0_23 = arith.constant 0 : index
    %c0_24 = arith.constant 0 : index
    %40 = vector.load %arg3[%c0_22, %c0_23, %c0_24] : memref<9x1x896xf32, #tpu.memory_space<vmem>>, vector<1x1x896xf32>
    %41 = vector.shape_cast %40 : vector<1x1x896xf32> to vector<1x896xf32>
    %42 = tpu.concatenate %41, %41 in 1 : vector<1x896xf32>, vector<1x896xf32> -> vector<1x1792xf32>
    %43 = arith.mulf %39, %42 : vector<1x1792xf32>
    %c0_25 = arith.constant 0 : index
    %c0_26 = arith.constant 0 : index
    %44 = vector.load %arg17[%c0_25, %c0_26] : memref<108x1792xf32, #tpu.memory_space<vmem>>, vector<1x1792xf32>
    tpu.vector_store %arg17[%c0_25, %c0_26], %43 {strides = array<i32>} : memref<108x1792xf32, #tpu.memory_space<vmem>>, vector<1x1792xf32>,
    %c28_i32 = arith.constant 28 : i32
    %45 = tpu.dynamic_rotate %38 by %c28_i32 dim 1 : vector<1x1792xf32>, i32 -> vector<1x1792xf32>
    %c1 = arith.constant 1 : index
    %c0_27 = arith.constant 0 : index
    %c0_28 = arith.constant 0 : index
    %46 = vector.load %arg3[%c1, %c0_27, %c0_28] : memref<9x1x896xf32, #tpu.memory_space<vmem>>, vector<1x1x896xf32>
    %47 = vector.shape_cast %46 : vector<1x1x896xf32> to vector<1x896xf32>
    %48 = tpu.concatenate %47, %47 in 1 : vector<1x896xf32>, vector<1x896xf32> -> vector<1x1792xf32>
    %49 = arith.mulf %45, %48 : vector<1x1792xf32>
    %c1_29 = arith.constant 1 : index
    %c0_30 = arith.constant 0 : index
    %50 = vector.load %arg17[%c1_29, %c0_30] : memref<108x1792xf32, #tpu.memory_space<vmem>>, vector<1x1792xf32>
    tpu.vector_store %arg17[%c1_29, %c0_30], %49 {strides = array<i32>} : memref<108x1792xf32, #tpu.memory_space<vmem>>, vector<1x1792xf32>,
    %c27_i32 = arith.constant 27 : i32
    %51 = tpu.dynamic_rotate %38 by %c27_i32 dim 1 : vector<1x1792xf32>, i32 -> vector<1x1792xf32>
    %c2 = arith.constant 2 : index
    %c0_31 = arith.constant 0 : index
    %c0_32 = arith.constant 0 : index
    %52 = vector.load %arg3[%c2, %c0_31, %c0_32] : memref<9x1x896xf32, #tpu.memory_space<vmem>>, vector<1x1x896xf32>
    %53 = vector.shape_cast %52 : vector<1x1x896xf32> to vector<1x896xf32>
    %54 = tpu.concatenate %53, %53 in 1 : vector<1x896xf32>, vector<1x896xf32> -> vector<1x1792xf32>
    %55 = arith.mulf %51, %54 : vector<1x1792xf32>
    %c2_33 = arith.constant 2 : index
    %c0_34 = arith.constant 0 : index
    %56 = vector.load %arg17[%c2_33, %c0_34] : memref<108x1792xf32, #tpu.memory_space<vmem>>, vector<1x1792xf32>
    tpu.vector_store %arg17[%c2_33, %c0_34], %55 {strides = array<i32>} : memref<108x1792xf32, #tpu.memory_space<vmem>>, vector<1x1792xf32>,
    %c1_i32 = arith.constant 1 : i32
    %57 = tpu.dynamic_rotate %38 by %c1_i32 dim 1 : vector<1x1792xf32>, i32 -> vector<1x1792xf32>
    %c3 = arith.constant 3 : index
    %c0_35 = arith.constant 0 : index
    %c0_36 = arith.constant 0 : index
    %58 = vector.load %arg3[%c3, %c0_35, %c0_36] : memref<9x1x896xf32, #tpu.memory_space<vmem>>, vector<1x1x896xf32>
    %59 = vector.shape_cast %58 : vector<1x1x896xf32> to vector<1x896xf32>
    %60 = tpu.concatenate %59, %59 in 1 : vector<1x896xf32>, vector<1x896xf32> -> vector<1x1792xf32>
    %61 = arith.mulf %57, %60 : vector<1x1792xf32>
    %c3_37 = arith.constant 3 : index
    %c0_38 = arith.constant 0 : index
    %62 = vector.load %arg17[%c3_37, %c0_38] : memref<108x1792xf32, #tpu.memory_space<vmem>>, vector<1x1792xf32>
    tpu.vector_store %arg17[%c3_37, %c0_38], %61 {strides = array<i32>} : memref<108x1792xf32, #tpu.memory_space<vmem>>, vector<1x1792xf32>,
    %c4_39 = arith.constant 4 : index
    %c0_40 = arith.constant 0 : index
    %63 = vector.load %arg17[%c4_39, %c0_40] : memref<108x1792xf32, #tpu.memory_space<vmem>>, vector<1x1792xf32>
    tpu.vector_store %arg17[%c4_39, %c0_40], %38 {strides = array<i32>} : memref<108x1792xf32, #tpu.memory_space<vmem>>, vector<1x1792xf32>,
    %c1791_i32 = arith.constant 1791 : i32
    %64 = tpu.dynamic_rotate %38 by %c1791_i32 dim 1 : vector<1x1792xf32>, i32 -> vector<1x1792xf32>
    %c5 = arith.constant 5 : index
    %c0_41 = arith.constant 0 : index
    %c0_42 = arith.constant 0 : index
    %65 = vector.load %arg3[%c5, %c0_41, %c0_42] : memref<9x1x896xf32, #tpu.memory_space<vmem>>, vector<1x1x896xf32>
    %66 = vector.shape_cast %65 : vector<1x1x896xf32> to vector<1x896xf32>
    %67 = tpu.concatenate %66, %66 in 1 : vector<1x896xf32>, vector<1x896xf32> -> vector<1x1792xf32>
    %68 = arith.mulf %64, %67 : vector<1x1792xf32>
    %c5_43 = arith.constant 5 : index
    %c0_44 = arith.constant 0 : index
    %69 = vector.load %arg17[%c5_43, %c0_44] : memref<108x1792xf32, #tpu.memory_space<vmem>>, vector<1x1792xf32>
    tpu.vector_store %arg17[%c5_43, %c0_44], %68 {strides = array<i32>} : memref<108x1792xf32, #tpu.memory_space<vmem>>, vector<1x1792xf32>,
    %c1765_i32 = arith.constant 1765 : i32
    %70 = tpu.dynamic_rotate %38 by %c1765_i32 dim 1 : vector<1x1792xf32>, i32 -> vector<1x1792xf32>
    %c6 = arith.constant 6 : index
    %c0_45 = arith.constant 0 : index
    %c0_46 = arith.constant 0 : index
    %71 = vector.load %arg3[%c6, %c0_45, %c0_46] : memref<9x1x896xf32, #tpu.memory_space<vmem>>, vector<1x1x896xf32>
    %72 = vector.shape_cast %71 : vector<1x1x896xf32> to vector<1x896xf32>
    %73 = tpu.concatenate %72, %72 in 1 : vector<1x896xf32>, vector<1x896xf32> -> vector<1x1792xf32>
    %74 = arith.mulf %70, %73 : vector<1x1792xf32>
    %c6_47 = arith.constant 6 : index
    %c0_48 = arith.constant 0 : index
    %75 = vector.load %arg17[%c6_47, %c0_48] : memref<108x1792xf32, #tpu.memory_space<vmem>>, vector<1x1792xf32>
    tpu.vector_store %arg17[%c6_47, %c0_48], %74 {strides = array<i32>} : memref<108x1792xf32, #tpu.memory_space<vmem>>, vector<1x1792xf32>,
    %c1764_i32 = arith.constant 1764 : i32
    %76 = tpu.dynamic_rotate %38 by %c1764_i32 dim 1 : vector<1x1792xf32>, i32 -> vector<1x1792xf32>
    %c7 = arith.constant 7 : index
    %c0_49 = arith.constant 0 : index
    %c0_50 = arith.constant 0 : index
    %77 = vector.load %arg3[%c7, %c0_49, %c0_50] : memref<9x1x896xf32, #tpu.memory_space<vmem>>, vector<1x1x896xf32>
    %78 = vector.shape_cast %77 : vector<1x1x896xf32> to vector<1x896xf32>
    %79 = tpu.concatenate %78, %78 in 1 : vector<1x896xf32>, vector<1x896xf32> -> vector<1x1792xf32>
    %80 = arith.mulf %76, %79 : vector<1x1792xf32>
    %c7_51 = arith.constant 7 : index
    %c0_52 = arith.constant 0 : index
    %81 = vector.load %arg17[%c7_51, %c0_52] : memref<108x1792xf32, #tpu.memory_space<vmem>>, vector<1x1792xf32>
    tpu.vector_store %arg17[%c7_51, %c0_52], %80 {strides = array<i32>} : memref<108x1792xf32, #tpu.memory_space<vmem>>, vector<1x1792xf32>,
    %c1763_i32 = arith.constant 1763 : i32
    %82 = tpu.dynamic_rotate %38 by %c1763_i32 dim 1 : vector<1x1792xf32>, i32 -> vector<1x1792xf32>
    %c8 = arith.constant 8 : index
    %c0_53 = arith.constant 0 : index
    %c0_54 = arith.constant 0 : index
    %83 = vector.load %arg3[%c8, %c0_53, %c0_54] : memref<9x1x896xf32, #tpu.memory_space<vmem>>, vector<1x1x896xf32>
    %84 = vector.shape_cast %83 : vector<1x1x896xf32> to vector<1x896xf32>
    %85 = tpu.concatenate %84, %84 in 1 : vector<1x896xf32>, vector<1x896xf32> -> vector<1x1792xf32>
    %86 = arith.mulf %82, %85 : vector<1x1792xf32>
    %c8_55 = arith.constant 8 : index
    %c0_56 = arith.constant 0 : index
    %87 = vector.load %arg17[%c8_55, %c0_56] : memref<108x1792xf32, #tpu.memory_space<vmem>>, vector<1x1792xf32>
    tpu.vector_store %arg17[%c8_55, %c0_56], %86 {strides = array<i32>} : memref<108x1792xf32, #tpu.memory_space<vmem>>, vector<1x1792xf32>,
    %c0_57 = arith.constant 0 : index
    %c0_58 = arith.constant 0 : index
    %88 = vector.load %arg6[%c0_57, %c0_58] : memref<12x9xf32, #tpu.memory_space<vmem>>, vector<12x9xf32>
    %c0_59 = arith.constant 0 : index
    %c0_60 = arith.constant 0 : index
    %89 = vector.load %arg17[%c0_59, %c0_60] : memref<108x1792xf32, #tpu.memory_space<vmem>>, vector<9x1792xf32>
    %cst_61 = arith.constant dense<0.000000e+00> : vector<12x1792xf32>
    %90 = tpu.matmul %88, %89, %cst_61 {dimension_numbers = #tpu.dot_dimension_numbers<[1], [0], [0], [1], [0, 0, 1, 1], [], []>} : vector<12x9xf32>, vector<9x1792xf32>, vector<12x1792xf32> -> vector<12x1792xf32>
    %c0_62 = arith.constant 0 : index
    %c0_63 = arith.constant 0 : index
    %91 = vector.load %arg7[%c0_62, %c0_63] : memref<12x1xf32, #tpu.memory_space<vmem>>, vector<12x1xf32>
    %92 = vector.broadcast %91 : vector<12x1xf32> to vector<12x1792xf32>
    %93 = arith.addf %90, %92 : vector<12x1792xf32>
    %94 = vector.broadcast %2 : vector<1x1792xf32> to vector<12x1792xf32>
    %95 = arith.mulf %93, %94 : vector<12x1792xf32>
    %cst_64 = arith.constant dense<0.000000e+00> : vector<12xf32>
    %96 = vector.multi_reduction <add>, %95, %cst_64 [1] : vector<12x1792xf32> to vector<12xf32>
    %97 = vector.shape_cast %96 : vector<12xf32> to vector<12x1xf32>
    %98 = arith.mulf %95, %95 : vector<12x1792xf32>
    %cst_65 = arith.constant dense<0.000000e+00> : vector<12xf32>
    %99 = vector.multi_reduction <add>, %98, %cst_65 [1] : vector<12x1792xf32> to vector<12xf32>
    %100 = vector.shape_cast %99 : vector<12xf32> to vector<12x1xf32>
    %cst_66 = arith.constant 6.37755089E-4 : f32
    %101 = vector.broadcast %cst_66 : f32 to vector<12x1xf32>
    %102 = arith.mulf %97, %101 : vector<12x1xf32>
    %cst_67 = arith.constant 6.37755089E-4 : f32
    %103 = vector.broadcast %cst_67 : f32 to vector<12x1xf32>
    %104 = arith.mulf %100, %103 : vector<12x1xf32>
    %105 = arith.mulf %102, %102 : vector<12x1xf32>
    %106 = arith.subf %104, %105 : vector<12x1xf32>
    %c0_68 = arith.constant 0 : index
    %c0_69 = arith.constant 0 : index
    %107 = vector.load %arg8[%c0_68, %c0_69] : memref<12x1xf32, #tpu.memory_space<vmem>>, vector<12x1xf32>
    %cst_70 = arith.constant 9.99999974E-6 : f32
    %108 = vector.broadcast %cst_70 : f32 to vector<12x1xf32>
    %109 = arith.addf %106, %108 : vector<12x1xf32>
    %110 = math.rsqrt %109 : vector<12x1xf32>
    %111 = arith.mulf %107, %110 : vector<12x1xf32>
    %c0_71 = arith.constant 0 : index
    %c0_72 = arith.constant 0 : index
    %112 = vector.load %arg9[%c0_71, %c0_72] : memref<12x1xf32, #tpu.memory_space<vmem>>, vector<12x1xf32>
    %113 = arith.mulf %102, %111 : vector<12x1xf32>
    %114 = arith.subf %112, %113 : vector<12x1xf32>
    %115 = vector.broadcast %111 : vector<12x1xf32> to vector<12x1792xf32>
    %116 = arith.mulf %95, %115 : vector<12x1792xf32>
    %117 = vector.broadcast %114 : vector<12x1xf32> to vector<12x1792xf32>
    %118 = arith.addf %116, %117 : vector<12x1792xf32>
    %cst_73 = arith.constant 0.000000e+00 : f32
    %119 = vector.broadcast %cst_73 : f32 to vector<12x1792xf32>
    %120 = arith.maximumf %118, %119 : vector<12x1792xf32>
    %c29_i32_74 = arith.constant 29 : i32
    %121 = tpu.dynamic_rotate %120 by %c29_i32_74 dim 1 : vector<12x1792xf32>, i32 -> vector<12x1792xf32>
    %c0_75 = arith.constant 0 : index
    %c0_76 = arith.constant 0 : index
    %c0_77 = arith.constant 0 : index
    %122 = vector.load %arg3[%c0_75, %c0_76, %c0_77] : memref<9x1x896xf32, #tpu.memory_space<vmem>>, vector<1x1x896xf32>
    %123 = vector.shape_cast %122 : vector<1x1x896xf32> to vector<1x896xf32>
    %124 = tpu.concatenate %123, %123 in 1 : vector<1x896xf32>, vector<1x896xf32> -> vector<1x1792xf32>
    %125 = vector.broadcast %124 : vector<1x1792xf32> to vector<12x1792xf32>
    %126 = arith.mulf %121, %125 : vector<12x1792xf32>
    %c0_78 = arith.constant 0 : index
    %c0_79 = arith.constant 0 : index
    %127 = vector.load %arg17[%c0_78, %c0_79] : memref<108x1792xf32, #tpu.memory_space<vmem>>, vector<12x1792xf32>
    tpu.vector_store %arg17[%c0_78, %c0_79], %126 {strides = array<i32>} : memref<108x1792xf32, #tpu.memory_space<vmem>>, vector<12x1792xf32>,
    %c28_i32_80 = arith.constant 28 : i32
    %128 = tpu.dynamic_rotate %120 by %c28_i32_80 dim 1 : vector<12x1792xf32>, i32 -> vector<12x1792xf32>
    %c1_81 = arith.constant 1 : index
    %c0_82 = arith.constant 0 : index
    %c0_83 = arith.constant 0 : index
    %129 = vector.load %arg3[%c1_81, %c0_82, %c0_83] : memref<9x1x896xf32, #tpu.memory_space<vmem>>, vector<1x1x896xf32>
    %130 = vector.shape_cast %129 : vector<1x1x896xf32> to vector<1x896xf32>
    %131 = tpu.concatenate %130, %130 in 1 : vector<1x896xf32>, vector<1x896xf32> -> vector<1x1792xf32>
    %132 = vector.broadcast %131 : vector<1x1792xf32> to vector<12x1792xf32>
    %133 = arith.mulf %128, %132 : vector<12x1792xf32>
    %c12 = arith.constant 12 : index
    %c0_84 = arith.constant 0 : index
    %134 = vector.load %arg17[%c12, %c0_84] : memref<108x1792xf32, #tpu.memory_space<vmem>>, vector<12x1792xf32>
    tpu.vector_store %arg17[%c12, %c0_84], %133 {strides = array<i32>} : memref<108x1792xf32, #tpu.memory_space<vmem>>, vector<12x1792xf32>,
    %c27_i32_85 = arith.constant 27 : i32
    %135 = tpu.dynamic_rotate %120 by %c27_i32_85 dim 1 : vector<12x1792xf32>, i32 -> vector<12x1792xf32>
    %c2_86 = arith.constant 2 : index
    %c0_87 = arith.constant 0 : index
    %c0_88 = arith.constant 0 : index
    %136 = vector.load %arg3[%c2_86, %c0_87, %c0_88] : memref<9x1x896xf32, #tpu.memory_space<vmem>>, vector<1x1x896xf32>
    %137 = vector.shape_cast %136 : vector<1x1x896xf32> to vector<1x896xf32>
    %138 = tpu.concatenate %137, %137 in 1 : vector<1x896xf32>, vector<1x896xf32> -> vector<1x1792xf32>
    %139 = vector.broadcast %138 : vector<1x1792xf32> to vector<12x1792xf32>
    %140 = arith.mulf %135, %139 : vector<12x1792xf32>
    %c24 = arith.constant 24 : index
    %c0_89 = arith.constant 0 : index
    %141 = vector.load %arg17[%c24, %c0_89] : memref<108x1792xf32, #tpu.memory_space<vmem>>, vector<12x1792xf32>
    tpu.vector_store %arg17[%c24, %c0_89], %140 {strides = array<i32>} : memref<108x1792xf32, #tpu.memory_space<vmem>>, vector<12x1792xf32>,
    %c1_i32_90 = arith.constant 1 : i32
    %142 = tpu.dynamic_rotate %120 by %c1_i32_90 dim 1 : vector<12x1792xf32>, i32 -> vector<12x1792xf32>
    %c3_91 = arith.constant 3 : index
    %c0_92 = arith.constant 0 : index
    %c0_93 = arith.constant 0 : index
    %143 = vector.load %arg3[%c3_91, %c0_92, %c0_93] : memref<9x1x896xf32, #tpu.memory_space<vmem>>, vector<1x1x896xf32>
    %144 = vector.shape_cast %143 : vector<1x1x896xf32> to vector<1x896xf32>
    %145 = tpu.concatenate %144, %144 in 1 : vector<1x896xf32>, vector<1x896xf32> -> vector<1x1792xf32>
    %146 = vector.broadcast %145 : vector<1x1792xf32> to vector<12x1792xf32>
    %147 = arith.mulf %142, %146 : vector<12x1792xf32>
    %c36 = arith.constant 36 : index
    %c0_94 = arith.constant 0 : index
    %148 = vector.load %arg17[%c36, %c0_94] : memref<108x1792xf32, #tpu.memory_space<vmem>>, vector<12x1792xf32>
    tpu.vector_store %arg17[%c36, %c0_94], %147 {strides = array<i32>} : memref<108x1792xf32, #tpu.memory_space<vmem>>, vector<12x1792xf32>,
    %c48 = arith.constant 48 : index
    %c0_95 = arith.constant 0 : index
    %149 = vector.load %arg17[%c48, %c0_95] : memref<108x1792xf32, #tpu.memory_space<vmem>>, vector<12x1792xf32>
    tpu.vector_store %arg17[%c48, %c0_95], %120 {strides = array<i32>} : memref<108x1792xf32, #tpu.memory_space<vmem>>, vector<12x1792xf32>,
    %c1791_i32_96 = arith.constant 1791 : i32
    %150 = tpu.dynamic_rotate %120 by %c1791_i32_96 dim 1 : vector<12x1792xf32>, i32 -> vector<12x1792xf32>
    %c5_97 = arith.constant 5 : index
    %c0_98 = arith.constant 0 : index
    %c0_99 = arith.constant 0 : index
    %151 = vector.load %arg3[%c5_97, %c0_98, %c0_99] : memref<9x1x896xf32, #tpu.memory_space<vmem>>, vector<1x1x896xf32>
    %152 = vector.shape_cast %151 : vector<1x1x896xf32> to vector<1x896xf32>
    %153 = tpu.concatenate %152, %152 in 1 : vector<1x896xf32>, vector<1x896xf32> -> vector<1x1792xf32>
    %154 = vector.broadcast %153 : vector<1x1792xf32> to vector<12x1792xf32>
    %155 = arith.mulf %150, %154 : vector<12x1792xf32>
    %c60 = arith.constant 60 : index
    %c0_100 = arith.constant 0 : index
    %156 = vector.load %arg17[%c60, %c0_100] : memref<108x1792xf32, #tpu.memory_space<vmem>>, vector<12x1792xf32>
    tpu.vector_store %arg17[%c60, %c0_100], %155 {strides = array<i32>} : memref<108x1792xf32, #tpu.memory_space<vmem>>, vector<12x1792xf32>,
    %c1765_i32_101 = arith.constant 1765 : i32
    %157 = tpu.dynamic_rotate %120 by %c1765_i32_101 dim 1 : vector<12x1792xf32>, i32 -> vector<12x1792xf32>
    %c6_102 = arith.constant 6 : index
    %c0_103 = arith.constant 0 : index
    %c0_104 = arith.constant 0 : index
    %158 = vector.load %arg3[%c6_102, %c0_103, %c0_104] : memref<9x1x896xf32, #tpu.memory_space<vmem>>, vector<1x1x896xf32>
    %159 = vector.shape_cast %158 : vector<1x1x896xf32> to vector<1x896xf32>
    %160 = tpu.concatenate %159, %159 in 1 : vector<1x896xf32>, vector<1x896xf32> -> vector<1x1792xf32>
    %161 = vector.broadcast %160 : vector<1x1792xf32> to vector<12x1792xf32>
    %162 = arith.mulf %157, %161 : vector<12x1792xf32>
    %c72 = arith.constant 72 : index
    %c0_105 = arith.constant 0 : index
    %163 = vector.load %arg17[%c72, %c0_105] : memref<108x1792xf32, #tpu.memory_space<vmem>>, vector<12x1792xf32>
    tpu.vector_store %arg17[%c72, %c0_105], %162 {strides = array<i32>} : memref<108x1792xf32, #tpu.memory_space<vmem>>, vector<12x1792xf32>,
    %c1764_i32_106 = arith.constant 1764 : i32
    %164 = tpu.dynamic_rotate %120 by %c1764_i32_106 dim 1 : vector<12x1792xf32>, i32 -> vector<12x1792xf32>
    %c7_107 = arith.constant 7 : index
    %c0_108 = arith.constant 0 : index
    %c0_109 = arith.constant 0 : index
    %165 = vector.load %arg3[%c7_107, %c0_108, %c0_109] : memref<9x1x896xf32, #tpu.memory_space<vmem>>, vector<1x1x896xf32>
    %166 = vector.shape_cast %165 : vector<1x1x896xf32> to vector<1x896xf32>
    %167 = tpu.concatenate %166, %166 in 1 : vector<1x896xf32>, vector<1x896xf32> -> vector<1x1792xf32>
    %168 = vector.broadcast %167 : vector<1x1792xf32> to vector<12x1792xf32>
    %169 = arith.mulf %164, %168 : vector<12x1792xf32>
    %c84 = arith.constant 84 : index
    %c0_110 = arith.constant 0 : index
    %170 = vector.load %arg17[%c84, %c0_110] : memref<108x1792xf32, #tpu.memory_space<vmem>>, vector<12x1792xf32>
    tpu.vector_store %arg17[%c84, %c0_110], %169 {strides = array<i32>} : memref<108x1792xf32, #tpu.memory_space<vmem>>, vector<12x1792xf32>,
    %c1763_i32_111 = arith.constant 1763 : i32
    %171 = tpu.dynamic_rotate %120 by %c1763_i32_111 dim 1 : vector<12x1792xf32>, i32 -> vector<12x1792xf32>
    %c8_112 = arith.constant 8 : index
    %c0_113 = arith.constant 0 : index
    %c0_114 = arith.constant 0 : index
    %172 = vector.load %arg3[%c8_112, %c0_113, %c0_114] : memref<9x1x896xf32, #tpu.memory_space<vmem>>, vector<1x1x896xf32>
    %173 = vector.shape_cast %172 : vector<1x1x896xf32> to vector<1x896xf32>
    %174 = tpu.concatenate %173, %173 in 1 : vector<1x896xf32>, vector<1x896xf32> -> vector<1x1792xf32>
    %175 = vector.broadcast %174 : vector<1x1792xf32> to vector<12x1792xf32>
    %176 = arith.mulf %171, %175 : vector<12x1792xf32>
    %c96 = arith.constant 96 : index
    %c0_115 = arith.constant 0 : index
    %177 = vector.load %arg17[%c96, %c0_115] : memref<108x1792xf32, #tpu.memory_space<vmem>>, vector<12x1792xf32>
    tpu.vector_store %arg17[%c96, %c0_115], %176 {strides = array<i32>} : memref<108x1792xf32, #tpu.memory_space<vmem>>, vector<12x1792xf32>,
    %c0_116 = arith.constant 0 : index
    %c0_117 = arith.constant 0 : index
    %178 = vector.load %arg10[%c0_116, %c0_117] : memref<6x108xf32, #tpu.memory_space<vmem>>, vector<6x108xf32>
    %c0_118 = arith.constant 0 : index
    %c0_119 = arith.constant 0 : index
    %179 = vector.load %arg17[%c0_118, %c0_119] : memref<108x1792xf32, #tpu.memory_space<vmem>>, vector<108x1792xf32>
    %cst_120 = arith.constant dense<0.000000e+00> : vector<6x1792xf32>
    %180 = tpu.matmul %178, %179, %cst_120 {dimension_numbers = #tpu.dot_dimension_numbers<[1], [0], [0], [1], [0, 0, 1, 1], [], []>} : vector<6x108xf32>, vector<108x1792xf32>, vector<6x1792xf32> -> vector<6x1792xf32>
    %c0_121 = arith.constant 0 : index
    %c0_122 = arith.constant 0 : index
    %181 = vector.load %arg11[%c0_121, %c0_122] : memref<6x1xf32, #tpu.memory_space<vmem>>, vector<6x1xf32>
    %182 = vector.broadcast %181 : vector<6x1xf32> to vector<6x1792xf32>
    %183 = arith.addf %180, %182 : vector<6x1792xf32>
    %184 = vector.broadcast %2 : vector<1x1792xf32> to vector<6x1792xf32>
    %185 = arith.mulf %183, %184 : vector<6x1792xf32>
    %cst_123 = arith.constant dense<0.000000e+00> : vector<6xf32>
    %186 = vector.multi_reduction <add>, %185, %cst_123 [1] : vector<6x1792xf32> to vector<6xf32>
    %187 = vector.shape_cast %186 : vector<6xf32> to vector<6x1xf32>
    %188 = arith.mulf %185, %185 : vector<6x1792xf32>
    %cst_124 = arith.constant dense<0.000000e+00> : vector<6xf32>
    %189 = vector.multi_reduction <add>, %188, %cst_124 [1] : vector<6x1792xf32> to vector<6xf32>
    %190 = vector.shape_cast %189 : vector<6xf32> to vector<6x1xf32>
    %cst_125 = arith.constant 6.37755089E-4 : f32
    %191 = vector.broadcast %cst_125 : f32 to vector<6x1xf32>
    %192 = arith.mulf %187, %191 : vector<6x1xf32>
    %cst_126 = arith.constant 6.37755089E-4 : f32
    %193 = vector.broadcast %cst_126 : f32 to vector<6x1xf32>
    %194 = arith.mulf %190, %193 : vector<6x1xf32>
    %195 = arith.mulf %192, %192 : vector<6x1xf32>
    %196 = arith.subf %194, %195 : vector<6x1xf32>
    %c0_127 = arith.constant 0 : index
    %c0_128 = arith.constant 0 : index
    %197 = vector.load %arg12[%c0_127, %c0_128] : memref<6x1xf32, #tpu.memory_space<vmem>>, vector<6x1xf32>
    %cst_129 = arith.constant 9.99999974E-6 : f32
    %198 = vector.broadcast %cst_129 : f32 to vector<6x1xf32>
    %199 = arith.addf %196, %198 : vector<6x1xf32>
    %200 = math.rsqrt %199 : vector<6x1xf32>
    %201 = arith.mulf %197, %200 : vector<6x1xf32>
    %c0_130 = arith.constant 0 : index
    %c0_131 = arith.constant 0 : index
    %202 = vector.load %arg13[%c0_130, %c0_131] : memref<6x1xf32, #tpu.memory_space<vmem>>, vector<6x1xf32>
    %203 = arith.mulf %192, %201 : vector<6x1xf32>
    %204 = arith.subf %202, %203 : vector<6x1xf32>
    %205 = vector.broadcast %201 : vector<6x1xf32> to vector<6x1792xf32>
    %206 = arith.mulf %185, %205 : vector<6x1792xf32>
    %207 = vector.broadcast %204 : vector<6x1xf32> to vector<6x1792xf32>
    %208 = arith.addf %206, %207 : vector<6x1792xf32>
    %cst_132 = arith.constant 0.000000e+00 : f32
    %209 = vector.broadcast %cst_132 : f32 to vector<6x1792xf32>
    %210 = arith.maximumf %208, %209 : vector<6x1792xf32>
    %c29_i32_133 = arith.constant 29 : i32
    %211 = tpu.dynamic_rotate %210 by %c29_i32_133 dim 1 : vector<6x1792xf32>, i32 -> vector<6x1792xf32>
    %c0_134 = arith.constant 0 : index
    %c0_135 = arith.constant 0 : index
    %c0_136 = arith.constant 0 : index
    %212 = vector.load %arg3[%c0_134, %c0_135, %c0_136] : memref<9x1x896xf32, #tpu.memory_space<vmem>>, vector<1x1x896xf32>
    %213 = vector.shape_cast %212 : vector<1x1x896xf32> to vector<1x896xf32>
    %214 = tpu.concatenate %213, %213 in 1 : vector<1x896xf32>, vector<1x896xf32> -> vector<1x1792xf32>
    %215 = vector.broadcast %214 : vector<1x1792xf32> to vector<6x1792xf32>
    %216 = arith.mulf %211, %215 : vector<6x1792xf32>
    %c0_137 = arith.constant 0 : index
    %c0_138 = arith.constant 0 : index
    %217 = vector.load %arg17[%c0_137, %c0_138] : memref<108x1792xf32, #tpu.memory_space<vmem>>, vector<6x1792xf32>
    tpu.vector_store %arg17[%c0_137, %c0_138], %216 {strides = array<i32>} : memref<108x1792xf32, #tpu.memory_space<vmem>>, vector<6x1792xf32>,
    %c28_i32_139 = arith.constant 28 : i32
    %218 = tpu.dynamic_rotate %210 by %c28_i32_139 dim 1 : vector<6x1792xf32>, i32 -> vector<6x1792xf32>
    %c1_140 = arith.constant 1 : index
    %c0_141 = arith.constant 0 : index
    %c0_142 = arith.constant 0 : index
    %219 = vector.load %arg3[%c1_140, %c0_141, %c0_142] : memref<9x1x896xf32, #tpu.memory_space<vmem>>, vector<1x1x896xf32>
    %220 = vector.shape_cast %219 : vector<1x1x896xf32> to vector<1x896xf32>
    %221 = tpu.concatenate %220, %220 in 1 : vector<1x896xf32>, vector<1x896xf32> -> vector<1x1792xf32>
    %222 = vector.broadcast %221 : vector<1x1792xf32> to vector<6x1792xf32>
    %223 = arith.mulf %218, %222 : vector<6x1792xf32>
    %c6_143 = arith.constant 6 : index
    %c0_144 = arith.constant 0 : index
    %224 = vector.load %arg17[%c6_143, %c0_144] : memref<108x1792xf32, #tpu.memory_space<vmem>>, vector<6x1792xf32>
    tpu.vector_store %arg17[%c6_143, %c0_144], %223 {strides = array<i32>} : memref<108x1792xf32, #tpu.memory_space<vmem>>, vector<6x1792xf32>,
    %c27_i32_145 = arith.constant 27 : i32
    %225 = tpu.dynamic_rotate %210 by %c27_i32_145 dim 1 : vector<6x1792xf32>, i32 -> vector<6x1792xf32>
    %c2_146 = arith.constant 2 : index
    %c0_147 = arith.constant 0 : index
    %c0_148 = arith.constant 0 : index
    %226 = vector.load %arg3[%c2_146, %c0_147, %c0_148] : memref<9x1x896xf32, #tpu.memory_space<vmem>>, vector<1x1x896xf32>
    %227 = vector.shape_cast %226 : vector<1x1x896xf32> to vector<1x896xf32>
    %228 = tpu.concatenate %227, %227 in 1 : vector<1x896xf32>, vector<1x896xf32> -> vector<1x1792xf32>
    %229 = vector.broadcast %228 : vector<1x1792xf32> to vector<6x1792xf32>
    %230 = arith.mulf %225, %229 : vector<6x1792xf32>
    %c12_149 = arith.constant 12 : index
    %c0_150 = arith.constant 0 : index
    %231 = vector.load %arg17[%c12_149, %c0_150] : memref<108x1792xf32, #tpu.memory_space<vmem>>, vector<6x1792xf32>
    tpu.vector_store %arg17[%c12_149, %c0_150], %230 {strides = array<i32>} : memref<108x1792xf32, #tpu.memory_space<vmem>>, vector<6x1792xf32>,
    %c1_i32_151 = arith.constant 1 : i32
    %232 = tpu.dynamic_rotate %210 by %c1_i32_151 dim 1 : vector<6x1792xf32>, i32 -> vector<6x1792xf32>
    %c3_152 = arith.constant 3 : index
    %c0_153 = arith.constant 0 : index
    %c0_154 = arith.constant 0 : index
    %233 = vector.load %arg3[%c3_152, %c0_153, %c0_154] : memref<9x1x896xf32, #tpu.memory_space<vmem>>, vector<1x1x896xf32>
    %234 = vector.shape_cast %233 : vector<1x1x896xf32> to vector<1x896xf32>
    %235 = tpu.concatenate %234, %234 in 1 : vector<1x896xf32>, vector<1x896xf32> -> vector<1x1792xf32>
    %236 = vector.broadcast %235 : vector<1x1792xf32> to vector<6x1792xf32>
    %237 = arith.mulf %232, %236 : vector<6x1792xf32>
    %c18 = arith.constant 18 : index
    %c0_155 = arith.constant 0 : index
    %238 = vector.load %arg17[%c18, %c0_155] : memref<108x1792xf32, #tpu.memory_space<vmem>>, vector<6x1792xf32>
    tpu.vector_store %arg17[%c18, %c0_155], %237 {strides = array<i32>} : memref<108x1792xf32, #tpu.memory_space<vmem>>, vector<6x1792xf32>,
    %c24_156 = arith.constant 24 : index
    %c0_157 = arith.constant 0 : index
    %239 = vector.load %arg17[%c24_156, %c0_157] : memref<108x1792xf32, #tpu.memory_space<vmem>>, vector<6x1792xf32>
    tpu.vector_store %arg17[%c24_156, %c0_157], %210 {strides = array<i32>} : memref<108x1792xf32, #tpu.memory_space<vmem>>, vector<6x1792xf32>,
    %c1791_i32_158 = arith.constant 1791 : i32
    %240 = tpu.dynamic_rotate %210 by %c1791_i32_158 dim 1 : vector<6x1792xf32>, i32 -> vector<6x1792xf32>
    %c5_159 = arith.constant 5 : index
    %c0_160 = arith.constant 0 : index
    %c0_161 = arith.constant 0 : index
    %241 = vector.load %arg3[%c5_159, %c0_160, %c0_161] : memref<9x1x896xf32, #tpu.memory_space<vmem>>, vector<1x1x896xf32>
    %242 = vector.shape_cast %241 : vector<1x1x896xf32> to vector<1x896xf32>
    %243 = tpu.concatenate %242, %242 in 1 : vector<1x896xf32>, vector<1x896xf32> -> vector<1x1792xf32>
    %244 = vector.broadcast %243 : vector<1x1792xf32> to vector<6x1792xf32>
    %245 = arith.mulf %240, %244 : vector<6x1792xf32>
    %c30 = arith.constant 30 : index
    %c0_162 = arith.constant 0 : index
    %246 = vector.load %arg17[%c30, %c0_162] : memref<108x1792xf32, #tpu.memory_space<vmem>>, vector<6x1792xf32>
    tpu.vector_store %arg17[%c30, %c0_162], %245 {strides = array<i32>} : memref<108x1792xf32, #tpu.memory_space<vmem>>, vector<6x1792xf32>,
    %c1765_i32_163 = arith.constant 1765 : i32
    %247 = tpu.dynamic_rotate %210 by %c1765_i32_163 dim 1 : vector<6x1792xf32>, i32 -> vector<6x1792xf32>
    %c6_164 = arith.constant 6 : index
    %c0_165 = arith.constant 0 : index
    %c0_166 = arith.constant 0 : index
    %248 = vector.load %arg3[%c6_164, %c0_165, %c0_166] : memref<9x1x896xf32, #tpu.memory_space<vmem>>, vector<1x1x896xf32>
    %249 = vector.shape_cast %248 : vector<1x1x896xf32> to vector<1x896xf32>
    %250 = tpu.concatenate %249, %249 in 1 : vector<1x896xf32>, vector<1x896xf32> -> vector<1x1792xf32>
    %251 = vector.broadcast %250 : vector<1x1792xf32> to vector<6x1792xf32>
    %252 = arith.mulf %247, %251 : vector<6x1792xf32>
    %c36_167 = arith.constant 36 : index
    %c0_168 = arith.constant 0 : index
    %253 = vector.load %arg17[%c36_167, %c0_168] : memref<108x1792xf32, #tpu.memory_space<vmem>>, vector<6x1792xf32>
    tpu.vector_store %arg17[%c36_167, %c0_168], %252 {strides = array<i32>} : memref<108x1792xf32, #tpu.memory_space<vmem>>, vector<6x1792xf32>,
    %c1764_i32_169 = arith.constant 1764 : i32
    %254 = tpu.dynamic_rotate %210 by %c1764_i32_169 dim 1 : vector<6x1792xf32>, i32 -> vector<6x1792xf32>
    %c7_170 = arith.constant 7 : index
    %c0_171 = arith.constant 0 : index
    %c0_172 = arith.constant 0 : index
    %255 = vector.load %arg3[%c7_170, %c0_171, %c0_172] : memref<9x1x896xf32, #tpu.memory_space<vmem>>, vector<1x1x896xf32>
    %256 = vector.shape_cast %255 : vector<1x1x896xf32> to vector<1x896xf32>
    %257 = tpu.concatenate %256, %256 in 1 : vector<1x896xf32>, vector<1x896xf32> -> vector<1x1792xf32>
    %258 = vector.broadcast %257 : vector<1x1792xf32> to vector<6x1792xf32>
    %259 = arith.mulf %254, %258 : vector<6x1792xf32>
    %c42 = arith.constant 42 : index
    %c0_173 = arith.constant 0 : index
    %260 = vector.load %arg17[%c42, %c0_173] : memref<108x1792xf32, #tpu.memory_space<vmem>>, vector<6x1792xf32>
    tpu.vector_store %arg17[%c42, %c0_173], %259 {strides = array<i32>} : memref<108x1792xf32, #tpu.memory_space<vmem>>, vector<6x1792xf32>,
    %c1763_i32_174 = arith.constant 1763 : i32
    %261 = tpu.dynamic_rotate %210 by %c1763_i32_174 dim 1 : vector<6x1792xf32>, i32 -> vector<6x1792xf32>
    %c8_175 = arith.constant 8 : index
    %c0_176 = arith.constant 0 : index
    %c0_177 = arith.constant 0 : index
    %262 = vector.load %arg3[%c8_175, %c0_176, %c0_177] : memref<9x1x896xf32, #tpu.memory_space<vmem>>, vector<1x1x896xf32>
    %263 = vector.shape_cast %262 : vector<1x1x896xf32> to vector<1x896xf32>
    %264 = tpu.concatenate %263, %263 in 1 : vector<1x896xf32>, vector<1x896xf32> -> vector<1x1792xf32>
    %265 = vector.broadcast %264 : vector<1x1792xf32> to vector<6x1792xf32>
    %266 = arith.mulf %261, %265 : vector<6x1792xf32>
    %c48_178 = arith.constant 48 : index
    %c0_179 = arith.constant 0 : index
    %267 = vector.load %arg17[%c48_178, %c0_179] : memref<108x1792xf32, #tpu.memory_space<vmem>>, vector<6x1792xf32>
    tpu.vector_store %arg17[%c48_178, %c0_179], %266 {strides = array<i32>} : memref<108x1792xf32, #tpu.memory_space<vmem>>, vector<6x1792xf32>,
    %c0_180 = arith.constant 0 : index
    %c0_181 = arith.constant 0 : index
    %268 = vector.load %arg14[%c0_180, %c0_181] : memref<1x54xf32, #tpu.memory_space<vmem>>, vector<1x54xf32>
    %c0_182 = arith.constant 0 : index
    %c0_183 = arith.constant 0 : index
    %269 = vector.load %arg17[%c0_182, %c0_183] : memref<108x1792xf32, #tpu.memory_space<vmem>>, vector<54x1792xf32>
    %cst_184 = arith.constant dense<0.000000e+00> : vector<1x1792xf32>
    %270 = tpu.matmul %268, %269, %cst_184 {dimension_numbers = #tpu.dot_dimension_numbers<[1], [0], [0], [1], [0, 0, 1, 1], [], []>} : vector<1x54xf32>, vector<54x1792xf32>, vector<1x1792xf32> -> vector<1x1792xf32>
    %c0_185 = arith.constant 0 : index
    %c0_186 = arith.constant 0 : index
    %271 = vector.load %arg15[%c0_185, %c0_186] : memref<1x1xf32, #tpu.memory_space<vmem>>, vector<1x1xf32>
    %272 = vector.broadcast %271 : vector<1x1xf32> to vector<1x1792xf32>
    %273 = arith.addf %270, %272 : vector<1x1792xf32>
    %274 = math.tanh %273 : vector<1x1792xf32>
    %c0_187 = arith.constant 0 : index
    %c0_188 = arith.constant 0 : index
    %275 = vector.load %arg16[%c0_187, %c0_188] : memref<1x1792xf32, #tpu.memory_space<vmem>>, vector<1x1792xf32>
    tpu.vector_store %arg16[%c0_187, %c0_188], %274 {strides = array<i32>} : memref<1x1792xf32, #tpu.memory_space<vmem>>, vector<1x1792xf32>,
    return
  }
}

</mosaic_0001>

<llo_original>
// kernel: generator_forward.1
$region0: #{generator_forward.1}
  #allocation0 [shape = 'u32[]', space=smem, size = 0x4, offset = 0x4, fixed_abs, tag = 'smem constant byte address 0x4 - core index']
  #allocation1 [shape = 'u32[72,128]{1,0:T(1,128)}', space=vmem, size = 0x9000, scoped, tag = 'internal scratch']
  #allocation2 [shape = 'f32[108,1792]{1,0:T(8,128)}', space=vmem, size = 0xc4000, scoped, tag = 'scratch operand']
  #allocation3 [shape = 'f32[1,1792]{1,0:T(1,128)}', space=vmem, size = 0x1c00, scoped, tag = 'scratch operand']
  #allocation4 [shape = 'f32[1,1]{1,0:T(1,128)S(1)}', space=vmem, size = 0x200, scoped, tag = 'scoped memory for generator_forward.1']
  #allocation5 [shape = 'f32[1,1]{1,0:T(1,128)S(1)}', space=vmem, size = 0x200, scoped, tag = 'scoped memory for generator_forward.1']
  #allocation6 [shape = 'f32[1,1]{1,0:T(1,128)S(1)}', space=vmem, size = 0x200, scoped, tag = 'scoped memory for generator_forward.1']
  %s0 = inlined_call_operand.vmem [shape: f32[2,100], index: 0, kind: input, shape index: {}]
  %s1 = inlined_call_operand.hbm [shape: f32[100,896], index: 1, kind: input, shape index: {}]
  %s2 = inlined_call_operand.vmem [shape: f32[1,896], index: 2, kind: input, shape index: {}]
  %s3 = inlined_call_operand.hbm [shape: f32[9,1,896], index: 3, kind: input, shape index: {}]
  %s4 = inlined_call_operand.<no memory space> [shape: f32[1,1], index: 4, kind: input, shape index: {}]
  %s5 = inlined_call_operand.<no memory space> [shape: f32[1,1], index: 5, kind: input, shape index: {}]
  %s6 = inlined_call_operand.vmem [shape: f32[12,9], index: 6, kind: input, shape index: {}]
  %s7 = inlined_call_operand.vmem [shape: f32[12,1], index: 7, kind: input, shape index: {}]
  %s8 = inlined_call_operand.vmem [shape: f32[12,1], index: 8, kind: input, shape index: {}]
  %s9 = inlined_call_operand.vmem [shape: f32[12,1], index: 9, kind: input, shape index: {}]
  %s10 = inlined_call_operand.vmem [shape: f32[6,108], index: 10, kind: input, shape index: {}]
  %s11 = inlined_call_operand.vmem [shape: f32[6,1], index: 11, kind: input, shape index: {}]
  %s12 = inlined_call_operand.vmem [shape: f32[6,1], index: 12, kind: input, shape index: {}]
  %s13 = inlined_call_operand.vmem [shape: f32[6,1], index: 13, kind: input, shape index: {}]
  %s14 = inlined_call_operand.vmem [shape: f32[1,54], index: 14, kind: input, shape index: {}]
  %s15 = inlined_call_operand.<no memory space> [shape: f32[1,1], index: 15, kind: input, shape index: {}]
  %s16 = inlined_call_operand.vmem [shape: f32[1,1792], index: 16, kind: output, shape index: {}]
  %s17 = sld [smem:[#allocation0]]
  $region82: #{generator_forward.1} parent=0
    _
  %s19 = ssub.s32 1, %s17
  %s20 = scalar_select 0, %s19, %s17
  %v21 = vstv %s4
  %22 = vst [vmem:[#allocation4] sm:$0x1] %v21
  %v23 = vstv %s5
  %24 = vst [vmem:[#allocation5] sm:$0x1] %v23
  %v25 = vstv %s15
  %26 = vst [vmem:[#allocation6] sm:$0x1] %v25
  $region1: #{generator_forward.1} parent=0
    #allocation7 [shape = 'u8[372736]{0}', space=vmem, size = 0x5b000, scoped, tag = 'input window, operand 1, single buffered']
    #allocation8 [shape = 's32[1]{0}', space=sflag, size = 0x4, scoped, tag = 'scoped memory for generator_forward.1']
    #allocation9 [shape = 'u8[32256]{0}', space=vmem, size = 0x8000, scoped, tag = 'input window, operand 3, single buffered']
    #allocation10 [shape = 's32[1]{0}', space=sflag, size = 0x4, scoped, tag = 'scoped memory for generator_forward.1']
    %27 = vsyncpa [#allocation8], 0
    %28 = vsyncpa [#allocation10], 0
    // Predicated region
    $region2: #{generator_forward.1} parent=1 // pred_check
      _
    $region3: #{generator_forward.1} parent=1 // pred_check_branch
      %30 = sbr.rel (0) target = $region5
    $region4: #{generator_forward.1} parent=1 // pred_region
      _
    $region5: #{generator_forward.1} parent=1 // pred_fallthru
      _
    // Predicated region
    $region6: #{generator_forward.1} parent=1 // pred_check
      _
    $region7: #{generator_forward.1} parent=1 // pred_check_branch
      %32 = sbr.rel (0) target = $region9
    $region8: #{generator_forward.1} parent=1 // pred_region
      %34 = vsyncadd [#allocation8], 0
      %s35 = sshll.u32 %s1, 4
      %s36 = int_to_ptr.hbm [resolvable:$true] %s35
      %s37 = sshll.u32 [#allocation7], 4
      %s38 = int_to_ptr.vmem [resolvable:$true] %s37
      %43 = dma.hbm_to_vmem [thread:$0]  %s36, 11648, %s38, [#allocation8], 896, 896, 56
    $region9: #{generator_forward.1} parent=1 // pred_fallthru
      _
    // Predicated region
    $region10: #{generator_forward.1} parent=1 // pred_check
      _
    $region11: #{generator_forward.1} parent=1 // pred_check_branch
      %45 = sbr.rel (0) target = $region13
    $region12: #{generator_forward.1} parent=1 // pred_region
      _
    $region13: #{generator_forward.1} parent=1 // pred_fallthru
      _
    // Predicated region
    $region14: #{generator_forward.1} parent=1 // pred_check
      _
    $region15: #{generator_forward.1} parent=1 // pred_check_branch
      %47 = sbr.rel (0) target = $region17
    $region16: #{generator_forward.1} parent=1 // pred_region
      %49 = vsyncadd [#allocation10], 0
      %s50 = sshll.u32 %s3, 4
      %s51 = int_to_ptr.hbm [resolvable:$true] %s50
      %s52 = sshll.u32 [#allocation9], 4
      %s53 = int_to_ptr.vmem [resolvable:$true] %s52
      %58 = dma.hbm_to_vmem [thread:$0]  %s51, 1008, %s53, [#allocation10], 112, 112, 7
    $region17: #{generator_forward.1} parent=1 // pred_fallthru
      _
    // Predicated region
    $region18: #{generator_forward.1} parent=1 // pred_check
      _
    $region19: #{generator_forward.1} parent=1 // pred_check_branch
      %60 = sbr.rel (0) target = $region21
    $region20: #{generator_forward.1} parent=1 // pred_region
      _
    $region21: #{generator_forward.1} parent=1 // pred_fallthru
      _
    // Predicated region
    $region22: #{generator_forward.1} parent=1 // pred_check
      _
    $region23: #{generator_forward.1} parent=1 // pred_check_branch
      %62 = sbr.rel (0) target = $region25
    $region24: #{generator_forward.1} parent=1 // pred_region
      _
    $region25: #{generator_forward.1} parent=1 // pred_fallthru
      _
    // Predicated region
    $region26: #{generator_forward.1} parent=1 // pred_check
      _
    $region27: #{generator_forward.1} parent=1 // pred_check_branch
      %64 = sbr.rel (0) target = $region29
    $region28: #{generator_forward.1} parent=1 // pred_region
      _
    $region29: #{generator_forward.1} parent=1 // pred_fallthru
      _
    // Predicated region
    $region30: #{generator_forward.1} parent=1 // pred_check
      _
    $region31: #{generator_forward.1} parent=1 // pred_check_branch
      %66 = sbr.rel (0) target = $region33
    $region32: #{generator_forward.1} parent=1 // pred_region
      _
    $region33: #{generator_forward.1} parent=1 // pred_fallthru
      _
    // Predicated region
    $region34: #{generator_forward.1} parent=1 // pred_check
      _
    $region35: #{generator_forward.1} parent=1 // pred_check_branch
      %68 = sbr.rel (0) target = $region37
    $region36: #{generator_forward.1} parent=1 // pred_region
      _
    $region37: #{generator_forward.1} parent=1 // pred_fallthru
      _
    // Predicated region
    $region38: #{generator_forward.1} parent=1 // pred_check
      _
    $region39: #{generator_forward.1} parent=1 // pred_check_branch
      %70 = sbr.rel (0) target = $region41
    $region40: #{generator_forward.1} parent=1 // pred_region
      _
    $region41: #{generator_forward.1} parent=1 // pred_fallthru
      _
    // Predicated region
    $region42: #{generator_forward.1} parent=1 // pred_check
      _
    $region43: #{generator_forward.1} parent=1 // pred_check_branch
      %72 = sbr.rel (0) target = $region45
    $region44: #{generator_forward.1} parent=1 // pred_region
      _
    $region45: #{generator_forward.1} parent=1 // pred_fallthru
      _
    // Predicated region
    $region46: #{generator_forward.1} parent=1 // pred_check
      _
    $region47: #{generator_forward.1} parent=1 // pred_check_branch
      %74 = sbr.rel (0) target = $region49
    $region48: #{generator_forward.1} parent=1 // pred_region
      _
    $region49: #{generator_forward.1} parent=1 // pred_fallthru
      _
    // Predicated region
    $region50: #{generator_forward.1} parent=1 // pred_check
      _
    $region51: #{generator_forward.1} parent=1 // pred_check_branch
      %76 = sbr.rel (0) target = $region53
    $region52: #{generator_forward.1} parent=1 // pred_region
      _
    $region53: #{generator_forward.1} parent=1 // pred_fallthru
      _
    // Predicated region
    $region54: #{generator_forward.1} parent=1 // pred_check
      _
    $region55: #{generator_forward.1} parent=1 // pred_check_branch
      %78 = sbr.rel (0) target = $region57
    $region56: #{generator_forward.1} parent=1 // pred_region
      _
    $region57: #{generator_forward.1} parent=1 // pred_fallthru
      _
    // Predicated region
    $region58: #{generator_forward.1} parent=1 // pred_check
      _
    $region59: #{generator_forward.1} parent=1 // pred_check_branch
      %80 = sbr.rel (0) target = $region61
    $region60: #{generator_forward.1} parent=1 // pred_region
      _
    $region61: #{generator_forward.1} parent=1 // pred_fallthru
      _
    // Predicated region
    $region62: #{generator_forward.1} parent=1 // pred_check
      _
    $region63: #{generator_forward.1} parent=1 // pred_check_branch
      %82 = sbr.rel (0) target = $region65
    $region64: #{generator_forward.1} parent=1 // pred_region
      _
    $region65: #{generator_forward.1} parent=1 // pred_fallthru
      _
    // Predicated region
    $region66: #{generator_forward.1} parent=1 // pred_check
      _
    $region67: #{generator_forward.1} parent=1 // pred_check_branch
      %84 = sbr.rel (0) target = $region69
    $region68: #{generator_forward.1} parent=1 // pred_region
      %86 = dma.done [#allocation8], 11648
    $region69: #{generator_forward.1} parent=1 // pred_fallthru
      _
    // Predicated region
    $region70: #{generator_forward.1} parent=1 // pred_check
      _
    $region71: #{generator_forward.1} parent=1 // pred_check_branch
      %88 = sbr.rel (0) target = $region73
    $region72: #{generator_forward.1} parent=1 // pred_region
      %90 = dma.done [#allocation10], 1008
    $region73: #{generator_forward.1} parent=1 // pred_fallthru
      _
    %s91 = scalar_lea.vmem [#allocation9], 28
    %v92 = vld [vmem:[%s91] sm:$0xff]
    %v94 = vperm.slane %v92, 0
    %v95 = vperm.slane %v92, 1
    %v96 = vperm.slane %v92, 2
    %v97 = vperm.slane %v92, 3
    %v98 = vperm.slane %v92, 4
    %v99 = vperm.slane %v92, 5
    %v100 = vperm.slane %v92, 6
    %v108 = vld [vmem:[%s0] sm:$0x3]
    %v109 = vld [vmem:[#allocation7] sm:$0xff]
    %v110 = vld [vmem:[#allocation7 + $0x8] sm:$0xff]
    %v111 = vld [vmem:[#allocation7 + $0x10] sm:$0xff]
    %v112 = vld [vmem:[#allocation7 + $0x18] sm:$0xff]
    %v113 = vld [vmem:[#allocation7 + $0x20] sm:$0xff]
    %v114 = vld [vmem:[#allocation7 + $0x28] sm:$0xff]
    %v115 = vld [vmem:[#allocation7 + $0x30] sm:$0xff]
    %v116 = vld [vmem:[#allocation7 + $0x38] sm:$0xff]
    %v117 = vld [vmem:[#allocation7 + $0x40] sm:$0xff]
    %v118 = vld [vmem:[#allocation7 + $0x48] sm:$0xff]
    %v119 = vld [vmem:[#allocation7 + $0x50] sm:$0xff]
    %v120 = vld [vmem:[#allocation7 + $0x58] sm:$0xff]
    %v121 = vld [vmem:[#allocation7 + $0x60] sm:$0xff]
    %v122 = vld [vmem:[#allocation7 + $0x68] sm:$0xff]
    %v123 = vld [vmem:[#allocation7 + $0x70] sm:$0xff]
    %v124 = vld [vmem:[#allocation7 + $0x78] sm:$0xff]
    %v125 = vld [vmem:[#allocation7 + $0x80] sm:$0xff]
    %v126 = vld [vmem:[#allocation7 + $0x88] sm:$0xff]
    %v127 = vld [vmem:[#allocation7 + $0x90] sm:$0xff]
    %v128 = vld [vmem:[#allocation7 + $0x98] sm:$0xff]
    %v129 = vld [vmem:[#allocation7 + $0xa0] sm:$0xff]
    %v130 = vld [vmem:[#allocation7 + $0xa8] sm:$0xff]
    %v131 = vld [vmem:[#allocation7 + $0xb0] sm:$0xff]
    %v132 = vld [vmem:[#allocation7 + $0xb8] sm:$0xff]
    %v133 = vld [vmem:[#allocation7 + $0xc0] sm:$0xff]
    %v134 = vld [vmem:[#allocation7 + $0xc8] sm:$0xff]
    %v135 = vld [vmem:[#allocation7 + $0xd0] sm:$0xff]
    %v136 = vld [vmem:[#allocation7 + $0xd8] sm:$0xff]
    %v137 = vld [vmem:[#allocation7 + $0xe0] sm:$0xff]
    %v138 = vld [vmem:[#allocation7 + $0xe8] sm:$0xff]
    %v139 = vld [vmem:[#allocation7 + $0xf0] sm:$0xff]
    %v140 = vld [vmem:[#allocation7 + $0xf8] sm:$0xff]
    %v141 = vld [vmem:[#allocation7 + $0x100] sm:$0xff]
    %v142 = vld [vmem:[#allocation7 + $0x108] sm:$0xff]
    %v143 = vld [vmem:[#allocation7 + $0x110] sm:$0xff]
    %v144 = vld [vmem:[#allocation7 + $0x118] sm:$0xff]
    %v145 = vld [vmem:[#allocation7 + $0x120] sm:$0xff]
    %v146 = vld [vmem:[#allocation7 + $0x128] sm:$0xff]
    %v147 = vld [vmem:[#allocation7 + $0x130] sm:$0xff]
    %v148 = vld [vmem:[#allocation7 + $0x138] sm:$0xff]
    %v149 = vld [vmem:[#allocation7 + $0x140] sm:$0xff]
    %v150 = vld [vmem:[#allocation7 + $0x148] sm:$0xff]
    %v151 = vld [vmem:[#allocation7 + $0x150] sm:$0xff]
    %v152 = vld [vmem:[#allocation7 + $0x158] sm:$0xff]
    %v153 = vld [vmem:[#allocation7 + $0x160] sm:$0xff]
    %v154 = vld [vmem:[#allocation7 + $0x168] sm:$0xff]
    %v155 = vld [vmem:[#allocation7 + $0x170] sm:$0xff]
    %v156 = vld [vmem:[#allocation7 + $0x178] sm:$0xff]
    %v157 = vld [vmem:[#allocation7 + $0x180] sm:$0xff]
    %v158 = vld [vmem:[#allocation7 + $0x188] sm:$0xff]
    %v159 = vld [vmem:[#allocation7 + $0x190] sm:$0xff]
    %v160 = vld [vmem:[#allocation7 + $0x198] sm:$0xff]
    %v161 = vld [vmem:[#allocation7 + $0x1a0] sm:$0xff]
    %v162 = vld [vmem:[#allocation7 + $0x1a8] sm:$0xff]
    %v163 = vld [vmem:[#allocation7 + $0x1b0] sm:$0xff]
    %v164 = vld [vmem:[#allocation7 + $0x1b8] sm:$0xff]
    %v165 = vld [vmem:[#allocation7 + $0x1c0] sm:$0xff]
    %v166 = vld [vmem:[#allocation7 + $0x1c8] sm:$0xff]
    %v167 = vld [vmem:[#allocation7 + $0x1d0] sm:$0xff]
    %v168 = vld [vmem:[#allocation7 + $0x1d8] sm:$0xff]
    %v169 = vld [vmem:[#allocation7 + $0x1e0] sm:$0xff]
    %v170 = vld [vmem:[#allocation7 + $0x1e8] sm:$0xff]
    %v171 = vld [vmem:[#allocation7 + $0x1f0] sm:$0xff]
    %v172 = vld [vmem:[#allocation7 + $0x1f8] sm:$0xff]
    %v173 = vld [vmem:[#allocation7 + $0x200] sm:$0xff]
    %v174 = vld [vmem:[#allocation7 + $0x208] sm:$0xff]
    %v175 = vld [vmem:[#allocation7 + $0x210] sm:$0xff]
    %v176 = vld [vmem:[#allocation7 + $0x218] sm:$0xff]
    %v177 = vld [vmem:[#allocation7 + $0x220] sm:$0xff]
    %v178 = vld [vmem:[#allocation7 + $0x228] sm:$0xff]
    %v179 = vld [vmem:[#allocation7 + $0x230] sm:$0xff]
    %v180 = vld [vmem:[#allocation7 + $0x238] sm:$0xff]
    %v181 = vld [vmem:[#allocation7 + $0x240] sm:$0xff]
    %v182 = vld [vmem:[#allocation7 + $0x248] sm:$0xff]
    %v183 = vld [vmem:[#allocation7 + $0x250] sm:$0xff]
    %v184 = vld [vmem:[#allocation7 + $0x258] sm:$0xff]
    %v185 = vld [vmem:[#allocation7 + $0x260] sm:$0xff]
    %v186 = vld [vmem:[#allocation7 + $0x268] sm:$0xff]
    %v187 = vld [vmem:[#allocation7 + $0x270] sm:$0xff]
    %v188 = vld [vmem:[#allocation7 + $0x278] sm:$0xff]
    %v189 = vld [vmem:[#allocation7 + $0x280] sm:$0xff]
    %v190 = vld [vmem:[#allocation7 + $0x288] sm:$0xff]
    %v191 = vld [vmem:[#allocation7 + $0x290] sm:$0xff]
    %v192 = vld [vmem:[#allocation7 + $0x298] sm:$0xff]
    %v193 = vld [vmem:[#allocation7 + $0x2a0] sm:$0xf]
    %v194 = vld [vmem:[#allocation7 + $0x2a8] sm:$0xf]
    %v195 = vld [vmem:[#allocation7 + $0x2b0] sm:$0xf]
    %v196 = vld [vmem:[#allocation7 + $0x2b8] sm:$0xf]
    %v197 = vld [vmem:[#allocation7 + $0x2c0] sm:$0xf]
    %v198 = vld [vmem:[#allocation7 + $0x2c8] sm:$0xf]
    %v199 = vld [vmem:[#allocation7 + $0x2d0] sm:$0xf]
    %v200 = vld [vmem:[%s2] sm:$0xff]
    %v202 = vperm.slane %v200, 0
    %v203 = vperm.slane %v200, 1
    %v204 = vperm.slane %v200, 2
    %v205 = vperm.slane %v200, 3
    %v206 = vperm.slane %v200, 4
    %v207 = vperm.slane %v200, 5
    %v208 = vperm.slane %v200, 6
    %vm216 = vcmask 818176
    %v218 = vsel %vm216, %v108, 0
    %vm220 = vcmask 1043456
    %v222 = vsel %vm220, %v193, 0
    %v225 = vsel %vm220, %v194, 0
    %v228 = vsel %vm220, %v195, 0
    %v231 = vsel %vm220, %v196, 0
    %v234 = vsel %vm220, %v197, 0
    %v237 = vsel %vm220, %v198, 0
    %v240 = vsel %vm220, %v199, 0
    %242 = vmatpush.msra.mxu0 0.0
    %243 = vmatpush.msra.mxu0 0.0
    %244 = vmatpush.msra.mxu0 0.0
    %245 = vmatpush.msra.mxu0 %v222
    %246 = vmatpush.msra.mxu0 %v186
    %247 = vmatpush.msra.mxu0 %v179
    %248 = vmatpush.msra.mxu0 %v172
    %249 = vmatpush.msra.mxu0 %v165
    %250 = vmatpush.msra.mxu0 %v158
    %251 = vmatpush.msra.mxu0 %v151
    %252 = vmatpush.msra.mxu0 %v144
    %253 = vmatpush.msra.mxu0 %v137
    %254 = vmatpush.msra.mxu0 %v130
    %255 = vmatpush.msra.mxu0 %v123
    %256 = vmatpush.msra.mxu0 %v116
    %257 = vmatpush.msra.mxu0 %v109
    %258 = vmatmul.f32.gmra.mxu0 %v218
    %v259 = vpop.f32.mrf.mxu0
    %v260 = vadd.f32 %v202, %v259
    %261 = vdwg.mxu0
    %262 = vmatpush.msra.mxu0 0.0
    %263 = vmatpush.msra.mxu0 0.0
    %264 = vmatpush.msra.mxu0 0.0
    %265 = vmatpush.msra.mxu0 %v225
    %266 = vmatpush.msra.mxu0 %v187
    %267 = vmatpush.msra.mxu0 %v180
    %268 = vmatpush.msra.mxu0 %v173
    %269 = vmatpush.msra.mxu0 %v166
    %270 = vmatpush.msra.mxu0 %v159
    %271 = vmatpush.msra.mxu0 %v152
    %272 = vmatpush.msra.mxu0 %v145
    %273 = vmatpush.msra.mxu0 %v138
    %274 = vmatpush.msra.mxu0 %v131
    %275 = vmatpush.msra.mxu0 %v124
    %276 = vmatpush.msra.mxu0 %v117
    %277 = vmatpush.msra.mxu0 %v110
    %278 = vmatmul.f32.gmra.mxu0 %v218
    %v279 = vpop.f32.mrf.mxu0
    %v280 = vadd.f32 %v203, %v279
    %281 = vdwg.mxu0
    %282 = vmatpush.msra.mxu0 0.0
    %283 = vmatpush.msra.mxu0 0.0
    %284 = vmatpush.msra.mxu0 0.0
    %285 = vmatpush.msra.mxu0 %v228
    %286 = vmatpush.msra.mxu0 %v188
    %287 = vmatpush.msra.mxu0 %v181
    %288 = vmatpush.msra.mxu0 %v174
    %289 = vmatpush.msra.mxu0 %v167
    %290 = vmatpush.msra.mxu0 %v160
    %291 = vmatpush.msra.mxu0 %v153
    %292 = vmatpush.msra.mxu0 %v146
    %293 = vmatpush.msra.mxu0 %v139
    %294 = vmatpush.msra.mxu0 %v132
    %295 = vmatpush.msra.mxu0 %v125
    %296 = vmatpush.msra.mxu0 %v118
    %297 = vmatpush.msra.mxu0 %v111
    %298 = vmatmul.f32.gmra.mxu0 %v218
    %v299 = vpop.f32.mrf.mxu0
    %v300 = vadd.f32 %v204, %v299
    %301 = vdwg.mxu0
    %302 = vmatpush.msra.mxu0 0.0
    %303 = vmatpush.msra.mxu0 0.0
    %304 = vmatpush.msra.mxu0 0.0
    %305 = vmatpush.msra.mxu0 %v231
    %306 = vmatpush.msra.mxu0 %v189
    %307 = vmatpush.msra.mxu0 %v182
    %308 = vmatpush.msra.mxu0 %v175
    %309 = vmatpush.msra.mxu0 %v168
    %310 = vmatpush.msra.mxu0 %v161
    %311 = vmatpush.msra.mxu0 %v154
    %312 = vmatpush.msra.mxu0 %v147
    %313 = vmatpush.msra.mxu0 %v140
    %314 = vmatpush.msra.mxu0 %v133
    %315 = vmatpush.msra.mxu0 %v126
    %316 = vmatpush.msra.mxu0 %v119
    %317 = vmatpush.msra.mxu0 %v112
    %318 = vmatmul.f32.gmra.mxu0 %v218
    %v319 = vpop.f32.mrf.mxu0
    %v320 = vadd.f32 %v205, %v319
    %321 = vdwg.mxu0
    %322 = vmatpush.msra.mxu0 0.0
    %323 = vmatpush.msra.mxu0 0.0
    %324 = vmatpush.msra.mxu0 0.0
    %325 = vmatpush.msra.mxu0 %v234
    %326 = vmatpush.msra.mxu0 %v190
    %327 = vmatpush.msra.mxu0 %v183
    %328 = vmatpush.msra.mxu0 %v176
    %329 = vmatpush.msra.mxu0 %v169
    %330 = vmatpush.msra.mxu0 %v162
    %331 = vmatpush.msra.mxu0 %v155
    %332 = vmatpush.msra.mxu0 %v148
    %333 = vmatpush.msra.mxu0 %v141
    %334 = vmatpush.msra.mxu0 %v134
    %335 = vmatpush.msra.mxu0 %v127
    %336 = vmatpush.msra.mxu0 %v120
    %337 = vmatpush.msra.mxu0 %v113
    %338 = vmatmul.f32.gmra.mxu0 %v218
    %v339 = vpop.f32.mrf.mxu0
    %v340 = vadd.f32 %v206, %v339
    %341 = vdwg.mxu0
    %342 = vmatpush.msra.mxu0 0.0
    %343 = vmatpush.msra.mxu0 0.0
    %344 = vmatpush.msra.mxu0 0.0
    %345 = vmatpush.msra.mxu0 %v237
    %346 = vmatpush.msra.mxu0 %v191
    %347 = vmatpush.msra.mxu0 %v184
    %348 = vmatpush.msra.mxu0 %v177
    %349 = vmatpush.msra.mxu0 %v170
    %350 = vmatpush.msra.mxu0 %v163
    %351 = vmatpush.msra.mxu0 %v156
    %352 = vmatpush.msra.mxu0 %v149
    %353 = vmatpush.msra.mxu0 %v142
    %354 = vmatpush.msra.mxu0 %v135
    %355 = vmatpush.msra.mxu0 %v128
    %356 = vmatpush.msra.mxu0 %v121
    %357 = vmatpush.msra.mxu0 %v114
    %358 = vmatmul.f32.gmra.mxu0 %v218
    %v359 = vpop.f32.mrf.mxu0
    %v360 = vadd.f32 %v207, %v359
    %361 = vdwg.mxu0
    %362 = vmatpush.msra.mxu0 0.0
    %363 = vmatpush.msra.mxu0 0.0
    %364 = vmatpush.msra.mxu0 0.0
    %365 = vmatpush.msra.mxu0 %v240
    %366 = vmatpush.msra.mxu0 %v192
    %367 = vmatpush.msra.mxu0 %v185
    %368 = vmatpush.msra.mxu0 %v178
    %369 = vmatpush.msra.mxu0 %v171
    %370 = vmatpush.msra.mxu0 %v164
    %371 = vmatpush.msra.mxu0 %v157
    %372 = vmatpush.msra.mxu0 %v150
    %373 = vmatpush.msra.mxu0 %v143
    %374 = vmatpush.msra.mxu0 %v136
    %375 = vmatpush.msra.mxu0 %v129
    %376 = vmatpush.msra.mxu0 %v122
    %377 = vmatpush.msra.mxu0 %v115
    %378 = vmatmul.f32.gmra.mxu0 %v218
    %v379 = vpop.f32.mrf.mxu0
    %v380 = vadd.f32 %v208, %v379
    %381 = vdwg.mxu0
    %v389 = vrot.slane %v280, 7
    %v390 = vrot.slane %v300, 6
    %v391 = vrot.slane %v320, 5
    %v392 = vrot.slane %v340, 4
    %v393 = vrot.slane %v360, 3
    %v394 = vrot.slane %v380, 2
    %vm395 = vcmask 1040384
    %v396 = vsel %vm395, %v260, %v389
    %vm397 = vcmask 1042434
    %v398 = vsel %vm397, %v390, %v391
    %vm399 = vcmask 1041408
    %v400 = vsel %vm399, %v396, %v398
    %vm401 = vcmask 1044484
    %v402 = vsel %vm401, %v392, %v393
    %vm403 = vcmask 1045508
    %v404 = vsel %vm403, %v402, %v394
    %v405 = vsel %vm220, %v400, %v404
    %v407 = vlaneseq
    %vm408 = vcmp.ge.s32.totalorder %v407, 0
    %vm409 = vcmp.lt.s32.totalorder %v407, 896
    %vm410 = vmand %vm408, %vm409
    %411 = vst.msk [vmem:[#allocation3] sm:$0x7f] %vm410, %v405
    %412 = vst [vmem:[#allocation1] sm:$0xff] %v260
    %413 = vst [vmem:[#allocation1 + $0x9] sm:$0xff] %v280
    %414 = vst [vmem:[#allocation1 + $0x12] sm:$0xff] %v300
    %415 = vst [vmem:[#allocation1 + $0x1b] sm:$0xff] %v320
    %416 = vst [vmem:[#allocation1 + $0x24] sm:$0xff] %v340
    %417 = vst [vmem:[#allocation1 + $0x2d] sm:$0xff] %v360
    %418 = vst [vmem:[#allocation1 + $0x36] sm:$0xff] %v380
    %s419 = scalar_lea.vmem [#allocation1], 1
    %v420 = vld [vmem:[%s419] ss:$9 sm:$0xff]
    %422 = vst.msk [vmem:[#allocation3 + $0x7] sm:$0x7f] %vm410, %v420
    %v423 = vld [vmem:[#allocation3] sm:$0xff]
    %v424 = vld [vmem:[#allocation3 + $0x8] sm:$0x3f]
    %v427 = vperm.slane %v423, 0
    %v428 = vperm.slane %v423, 1
    %v429 = vperm.slane %v423, 2
    %v430 = vperm.slane %v423, 3
    %v431 = vperm.slane %v423, 4
    %v432 = vperm.slane %v423, 5
    %v433 = vperm.slane %v423, 6
    %v434 = vperm.slane %v423, 7
    %v435 = vperm.slane %v424, 0
    %v436 = vperm.slane %v424, 1
    %v437 = vperm.slane %v424, 2
    %v438 = vperm.slane %v424, 3
    %v439 = vperm.slane %v424, 4
    %v440 = vperm.slane %v424, 5
    %v455 = vsel %vm395, %v427, 0.0
    %v456 = vsel %vm395, %v428, 0.0
    %v457 = vadd.f32 %v455, %v456
    %v458 = vsel %vm395, %v429, 0.0
    %v459 = vadd.f32 %v457, %v458
    %v460 = vsel %vm395, %v430, 0.0
    %v461 = vadd.f32 %v459, %v460
    %v462 = vsel %vm395, %v431, 0.0
    %v463 = vadd.f32 %v461, %v462
    %v464 = vsel %vm395, %v432, 0.0
    %v465 = vadd.f32 %v463, %v464
    %v466 = vsel %vm395, %v433, 0.0
    %v467 = vadd.f32 %v465, %v466
    %v468 = vsel %vm395, %v434, 0.0
    %v469 = vadd.f32 %v467, %v468
    %v470 = vsel %vm395, %v435, 0.0
    %v471 = vadd.f32 %v469, %v470
    %v472 = vsel %vm395, %v436, 0.0
    %v473 = vadd.f32 %v471, %v472
    %v474 = vsel %vm395, %v437, 0.0
    %v475 = vadd.f32 %v473, %v474
    %v476 = vsel %vm395, %v438, 0.0
    %v477 = vadd.f32 %v475, %v476
    %v478 = vsel %vm395, %v439, 0.0
    %v479 = vadd.f32 %v477, %v478
    %v480 = vsel %vm395, %v440, 0.0
    %v481 = vadd.f32 %v479, %v480
    %482 = vadd.xlane.f32.xlu0 %v481
    %v483 = vpop.xlane.xlu0 %482
    %v484 = vmul.f32 %v423, %v423
    %v485 = vmul.f32 %v424, %v424
    %v488 = vperm.slane %v484, 0
    %v489 = vperm.slane %v484, 1
    %v490 = vperm.slane %v484, 2
    %v491 = vperm.slane %v484, 3
    %v492 = vperm.slane %v484, 4
    %v493 = vperm.slane %v484, 5
    %v494 = vperm.slane %v484, 6
    %v495 = vperm.slane %v484, 7
    %v496 = vperm.slane %v485, 0
    %v497 = vperm.slane %v485, 1
    %v498 = vperm.slane %v485, 2
    %v499 = vperm.slane %v485, 3
    %v500 = vperm.slane %v485, 4
    %v501 = vperm.slane %v485, 5
    %v516 = vsel %vm395, %v488, 0.0
    %v517 = vsel %vm395, %v489, 0.0
    %v518 = vadd.f32 %v516, %v517
    %v519 = vsel %vm395, %v490, 0.0
    %v520 = vadd.f32 %v518, %v519
    %v521 = vsel %vm395, %v491, 0.0
    %v522 = vadd.f32 %v520, %v521
    %v523 = vsel %vm395, %v492, 0.0
    %v524 = vadd.f32 %v522, %v523
    %v525 = vsel %vm395, %v493, 0.0
    %v526 = vadd.f32 %v524, %v525
    %v527 = vsel %vm395, %v494, 0.0
    %v528 = vadd.f32 %v526, %v527
    %v529 = vsel %vm395, %v495, 0.0
    %v530 = vadd.f32 %v528, %v529
    %v531 = vsel %vm395, %v496, 0.0
    %v532 = vadd.f32 %v530, %v531
    %v533 = vsel %vm395, %v497, 0.0
    %v534 = vadd.f32 %v532, %v533
    %v535 = vsel %vm395, %v498, 0.0
    %v536 = vadd.f32 %v534, %v535
    %v537 = vsel %vm395, %v499, 0.0
    %v538 = vadd.f32 %v536, %v537
    %v539 = vsel %vm395, %v500, 0.0
    %v540 = vadd.f32 %v538, %v539
    %v541 = vsel %vm395, %v501, 0.0
    %v542 = vadd.f32 %v540, %v541
    %543 = vadd.xlane.f32.xlu0 %v542
    %v544 = vpop.xlane.xlu0 %543
    %v545 = vmul.f32 %v483, 0.0006377551
    %v546 = vmul.f32 %v544, 0.0006377551
    %v547 = vmul.f32 %v545, %v545
    %v548 = vsub.f32 %v546, %v547
    %v549 = vld [vmem:[#allocation4] sm:$0x1]
    %v550 = vadd.f32 %v548, 1e-05
    %v551 = vrsqrt.pop %v550
    %v552 = vmul.f32 %v551, %v550
    %v553 = vmul.f32 %v552, %v551
    %v554 = vmul.f32 0.5, %v553
    %v555 = vsub.f32 1.5, %v554
    %v556 = vmul.f32 %v551, %v555
    %vm557 = vweird.f32 %v550
    %vm558 = vweird.f32 %v551
    %vm559 = vmor %vm557, %vm558
    %v560 = vsel %vm559, %v551, %v556
    %v561 = vmul.f32 %v549, %v560
    %v562 = vld [vmem:[#allocation5] sm:$0x1]
    %v563 = vmul.f32 %v545, %v561
    %v564 = vsub.f32 %v562, %v563
    %566 = vset.pattern.permute.xlu0 0
    %567 = vperm.xlu0 %566, %v561
    %v568 = vpop.permute.xlu0 %567
    %v570 = vperm.slane %v568, 0
    %v571 = vmul.f32 %v423, %v570
    %v572 = vmul.f32 %v424, %v570
    %574 = vset.pattern.permute.xlu0 0
    %575 = vperm.xlu0 %574, %v564
    %v576 = vpop.permute.xlu0 %575
    %v578 = vperm.slane %v576, 0
    %v579 = vadd.f32 %v571, %v578
    %v580 = vadd.f32 %v572, %v578
    %v581 = vmax.f32 %v579, 0.0
    %v582 = vmax.f32 %v580, 0.0
    %v585 = vperm.slane %v581, 0
    %v586 = vperm.slane %v581, 1
    %v587 = vperm.slane %v581, 2
    %v588 = vperm.slane %v581, 3
    %v589 = vperm.slane %v581, 4
    %v590 = vperm.slane %v581, 5
    %v591 = vperm.slane %v581, 6
    %v592 = vperm.slane %v581, 7
    %v593 = vperm.slane %v582, 0
    %v594 = vperm.slane %v582, 1
    %v595 = vperm.slane %v582, 2
    %v596 = vperm.slane %v582, 3
    %v597 = vperm.slane %v582, 4
    %v598 = vperm.slane %v582, 5
    %613 = vrot.lane.b32.xlu0 %v585, 29
    %v614 = vpop.permute.xlu0 %613
    %615 = vrot.lane.b32.xlu0 %v586, 29
    %v616 = vpop.permute.xlu0 %615
    %617 = vrot.lane.b32.xlu0 %v587, 29
    %v618 = vpop.permute.xlu0 %617
    %619 = vrot.lane.b32.xlu0 %v588, 29
    %v620 = vpop.permute.xlu0 %619
    %621 = vrot.lane.b32.xlu0 %v589, 29
    %v622 = vpop.permute.xlu0 %621
    %623 = vrot.lane.b32.xlu0 %v590, 29
    %v624 = vpop.permute.xlu0 %623
    %625 = vrot.lane.b32.xlu0 %v591, 29
    %v626 = vpop.permute.xlu0 %625
    %627 = vrot.lane.b32.xlu0 %v592, 29
    %v628 = vpop.permute.xlu0 %627
    %629 = vrot.lane.b32.xlu0 %v593, 29
    %v630 = vpop.permute.xlu0 %629
    %631 = vrot.lane.b32.xlu0 %v594, 29
    %v632 = vpop.permute.xlu0 %631
    %633 = vrot.lane.b32.xlu0 %v595, 29
    %v634 = vpop.permute.xlu0 %633
    %635 = vrot.lane.b32.xlu0 %v596, 29
    %v636 = vpop.permute.xlu0 %635
    %637 = vrot.lane.b32.xlu0 %v597, 29
    %v638 = vpop.permute.xlu0 %637
    %639 = vrot.lane.b32.xlu0 %v598, 29
    %v640 = vpop.permute.xlu0 %639
    %v641 = vlaneseq
    %v642 = vand.u32 %v641, 127
    %vm643 = vcmp.lt.s32.totalorder %v642, 29
    %v644 = vsel %vm643, %v638, %v640
    %v645 = vsel %vm643, %v636, %v638
    %v646 = vsel %vm643, %v634, %v636
    %v647 = vsel %vm643, %v632, %v634
    %v648 = vsel %vm643, %v630, %v632
    %v649 = vsel %vm643, %v628, %v630
    %v650 = vsel %vm643, %v626, %v628
    %v651 = vsel %vm643, %v624, %v626
    %v652 = vsel %vm643, %v622, %v624
    %v653 = vsel %vm643, %v620, %v622
    %v654 = vsel %vm643, %v618, %v620
    %v655 = vsel %vm643, %v616, %v618
    %v656 = vsel %vm643, %v614, %v616
    %v657 = vsel %vm643, %v640, %v614
    %v658 = vld [vmem:[#allocation9] sm:$0xff]
    %v660 = vperm.slane %v658, 0
    %v661 = vperm.slane %v658, 1
    %v662 = vperm.slane %v658, 2
    %v663 = vperm.slane %v658, 3
    %v664 = vperm.slane %v658, 4
    %v665 = vperm.slane %v658, 5
    %v666 = vperm.slane %v658, 6
    %v674 = vmul.f32 %v657, %v660
    %v675 = vmul.f32 %v656, %v661
    %v676 = vmul.f32 %v655, %v662
    %v677 = vmul.f32 %v654, %v663
    %v678 = vmul.f32 %v653, %v664
    %v679 = vmul.f32 %v652, %v665
    %v680 = vmul.f32 %v651, %v666
    %v681 = vmul.f32 %v650, %v660
    %v682 = vmul.f32 %v649, %v661
    %v683 = vmul.f32 %v648, %v662
    %v684 = vmul.f32 %v647, %v663
    %v685 = vmul.f32 %v646, %v664
    %v686 = vmul.f32 %v645, %v665
    %v687 = vmul.f32 %v644, %v666
    %v702 = vrot.slane %v675, 7
    %v703 = vrot.slane %v676, 6
    %v704 = vrot.slane %v677, 5
    %v705 = vrot.slane %v678, 4
    %v706 = vrot.slane %v679, 3
    %v707 = vrot.slane %v680, 2
    %v708 = vrot.slane %v681, 1
    %v709 = vrot.slane %v683, 7
    %v710 = vrot.slane %v684, 6
    %v711 = vrot.slane %v685, 5
    %v712 = vrot.slane %v686, 4
    %v713 = vrot.slane %v687, 3
    %v714 = vsel %vm395, %v674, %v702
    %v715 = vsel %vm397, %v703, %v704
    %v716 = vsel %vm399, %v714, %v715
    %v717 = vsel %vm401, %v705, %v706
    %vm718 = vcmask 1046534
    %v719 = vsel %vm718, %v707, %v708
    %v720 = vsel %vm403, %v717, %v719
    %v721 = vsel %vm220, %v716, %v720
    %v722 = vsel %vm395, %v682, %v709
    %v723 = vsel %vm399, %v722, %v710
    %vm724 = vcmask 1043459
    %v725 = vsel %vm724, %v711, %v712
    %vm726 = vcmask 1044483
    %v727 = vsel %vm726, %v725, %v713
    %vm728 = vcmask 1042432
    %v729 = vsel %vm728, %v723, %v727
    %732 = vst [vmem:[#allocation2] ss:$8 sm:$0xf] %v721
    %733 = vst [vmem:[#allocation2] ss:$8 sm:$0xf0] %v721
    %vm734 = vcmp.lt.s32.totalorder %v407, 768
    %vm735 = vmand %vm408, %vm734
    %s736 = scalar_lea.vmem [#allocation2], 64
    %737 = vst.msk [vmem:[%s736] ss:$8 sm:$0xf] %vm735, %v729
    %738 = vst.msk [vmem:[%s736] ss:$8 sm:$0x30] %vm735, %v729
    %739 = vrot.lane.b32.xlu0 %v585, 28
    %v740 = vpop.permute.xlu0 %739
    %741 = vrot.lane.b32.xlu0 %v586, 28
    %v742 = vpop.permute.xlu0 %741
    %743 = vrot.lane.b32.xlu0 %v587, 28
    %v744 = vpop.permute.xlu0 %743
    %745 = vrot.lane.b32.xlu0 %v588, 28
    %v746 = vpop.permute.xlu0 %745
    %747 = vrot.lane.b32.xlu0 %v589, 28
    %v748 = vpop.permute.xlu0 %747
    %749 = vrot.lane.b32.xlu0 %v590, 28
    %v750 = vpop.permute.xlu0 %749
    %751 = vrot.lane.b32.xlu0 %v591, 28
    %v752 = vpop.permute.xlu0 %751
    %753 = vrot.lane.b32.xlu0 %v592, 28
    %v754 = vpop.permute.xlu0 %753
    %755 = vrot.lane.b32.xlu0 %v593, 28
    %v756 = vpop.permute.xlu0 %755
    %757 = vrot.lane.b32.xlu0 %v594, 28
    %v758 = vpop.permute.xlu0 %757
    %759 = vrot.lane.b32.xlu0 %v595, 28
    %v760 = vpop.permute.xlu0 %759
    %761 = vrot.lane.b32.xlu0 %v596, 28
    %v762 = vpop.permute.xlu0 %761
    %763 = vrot.lane.b32.xlu0 %v597, 28
    %v764 = vpop.permute.xlu0 %763
    %765 = vrot.lane.b32.xlu0 %v598, 28
    %v766 = vpop.permute.xlu0 %765
    %vm767 = vcmp.lt.s32.totalorder %v642, 28
    %v768 = vsel %vm767, %v764, %v766
    %v769 = vsel %vm767, %v762, %v764
    %v770 = vsel %vm767, %v760, %v762
    %v771 = vsel %vm767, %v758, %v760
    %v772 = vsel %vm767, %v756, %v758
    %v773 = vsel %vm767, %v754, %v756
    %v774 = vsel %vm767, %v752, %v754
    %v775 = vsel %vm767, %v750, %v752
    %v776 = vsel %vm767, %v748, %v750
    %v777 = vsel %vm767, %v746, %v748
    %v778 = vsel %vm767, %v744, %v746
    %v779 = vsel %vm767, %v742, %v744
    %v780 = vsel %vm767, %v740, %v742
    %v781 = vsel %vm767, %v766, %v740
    %s782 = scalar_lea.vmem [#allocation9], 7
    %v783 = vld [vmem:[%s782] sm:$0xff]
    %v785 = vperm.slane %v783, 0
    %v786 = vperm.slane %v783, 1
    %v787 = vperm.slane %v783, 2
    %v788 = vperm.slane %v783, 3
    %v789 = vperm.slane %v783, 4
    %v790 = vperm.slane %v783, 5
    %v791 = vperm.slane %v783, 6
    %v799 = vmul.f32 %v781, %v785
    %v800 = vmul.f32 %v780, %v786
    %v801 = vmul.f32 %v779, %v787
    %v802 = vmul.f32 %v778, %v788
    %v803 = vmul.f32 %v777, %v789
    %v804 = vmul.f32 %v776, %v790
    %v805 = vmul.f32 %v775, %v791
    %v806 = vmul.f32 %v774, %v785
    %v807 = vmul.f32 %v773, %v786
    %v808 = vmul.f32 %v772, %v787
    %v809 = vmul.f32 %v771, %v788
    %v810 = vmul.f32 %v770, %v789
    %v811 = vmul.f32 %v769, %v790
    %v812 = vmul.f32 %v768, %v791
    %v827 = vrot.slane %v800, 7
    %v828 = vrot.slane %v801, 6
    %v829 = vrot.slane %v802, 5
    %v830 = vrot.slane %v803, 4
    %v831 = vrot.slane %v804, 3
    %v832 = vrot.slane %v805, 2
    %v833 = vrot.slane %v806, 1
    %v834 = vrot.slane %v808, 7
    %v835 = vrot.slane %v809, 6
    %v836 = vrot.slane %v810, 5
    %v837 = vrot.slane %v811, 4
    %v838 = vrot.slane %v812, 3
    %v839 = vsel %vm395, %v799, %v827
    %v840 = vsel %vm397, %v828, %v829
    %v841 = vsel %vm399, %v839, %v840
    %v842 = vsel %vm401, %v830, %v831
    %v843 = vsel %vm718, %v832, %v833
    %v844 = vsel %vm403, %v842, %v843
    %v845 = vsel %vm220, %v841, %v844
    %v846 = vsel %vm395, %v807, %v834
    %v847 = vsel %vm399, %v846, %v835
    %v848 = vsel %vm724, %v836, %v837
    %v849 = vsel %vm726, %v848, %v838
    %v850 = vsel %vm728, %v847, %v849
    %s853 = scalar_lea.vmem [#allocation2], 1
    %854 = vst [vmem:[%s853] ss:$8 sm:$0xf] %v845
    %855 = vst [vmem:[%s853] ss:$8 sm:$0xf0] %v845
    %s856 = scalar_lea.vmem [#allocation2], 65
    %857 = vst.msk [vmem:[%s856] ss:$8 sm:$0xf] %vm735, %v850
    %858 = vst.msk [vmem:[%s856] ss:$8 sm:$0x30] %vm735, %v850
    %859 = vrot.lane.b32.xlu0 %v585, 27
    %v860 = vpop.permute.xlu0 %859
    %861 = vrot.lane.b32.xlu0 %v586, 27
    %v862 = vpop.permute.xlu0 %861
    %863 = vrot.lane.b32.xlu0 %v587, 27
    %v864 = vpop.permute.xlu0 %863
    %865 = vrot.lane.b32.xlu0 %v588, 27
    %v866 = vpop.permute.xlu0 %865
    %867 = vrot.lane.b32.xlu0 %v589, 27
    %v868 = vpop.permute.xlu0 %867
    %869 = vrot.lane.b32.xlu0 %v590, 27
    %v870 = vpop.permute.xlu0 %869
    %871 = vrot.lane.b32.xlu0 %v591, 27
    %v872 = vpop.permute.xlu0 %871
    %873 = vrot.lane.b32.xlu0 %v592, 27
    %v874 = vpop.permute.xlu0 %873
    %875 = vrot.lane.b32.xlu0 %v593, 27
    %v876 = vpop.permute.xlu0 %875
    %877 = vrot.lane.b32.xlu0 %v594, 27
    %v878 = vpop.permute.xlu0 %877
    %879 = vrot.lane.b32.xlu0 %v595, 27
    %v880 = vpop.permute.xlu0 %879
    %881 = vrot.lane.b32.xlu0 %v596, 27
    %v882 = vpop.permute.xlu0 %881
    %883 = vrot.lane.b32.xlu0 %v597, 27
    %v884 = vpop.permute.xlu0 %883
    %885 = vrot.lane.b32.xlu0 %v598, 27
    %v886 = vpop.permute.xlu0 %885
    %vm887 = vcmp.lt.s32.totalorder %v642, 27
    %v888 = vsel %vm887, %v884, %v886
    %v889 = vsel %vm887, %v882, %v884
    %v890 = vsel %vm887, %v880, %v882
    %v891 = vsel %vm887, %v878, %v880
    %v892 = vsel %vm887, %v876, %v878
    %v893 = vsel %vm887, %v874, %v876
    %v894 = vsel %vm887, %v872, %v874
    %v895 = vsel %vm887, %v870, %v872
    %v896 = vsel %vm887, %v868, %v870
    %v897 = vsel %vm887, %v866, %v868
    %v898 = vsel %vm887, %v864, %v866
    %v899 = vsel %vm887, %v862, %v864
    %v900 = vsel %vm887, %v860, %v862
    %v901 = vsel %vm887, %v886, %v860
    %s902 = scalar_lea.vmem [#allocation9], 14
    %v903 = vld [vmem:[%s902] sm:$0xff]
    %v905 = vperm.slane %v903, 0
    %v906 = vperm.slane %v903, 1
    %v907 = vperm.slane %v903, 2
    %v908 = vperm.slane %v903, 3
    %v909 = vperm.slane %v903, 4
    %v910 = vperm.slane %v903, 5
    %v911 = vperm.slane %v903, 6
    %v919 = vmul.f32 %v901, %v905
    %v920 = vmul.f32 %v900, %v906
    %v921 = vmul.f32 %v899, %v907
    %v922 = vmul.f32 %v898, %v908
    %v923 = vmul.f32 %v897, %v909
    %v924 = vmul.f32 %v896, %v910
    %v925 = vmul.f32 %v895, %v911
    %v926 = vmul.f32 %v894, %v905
    %v927 = vmul.f32 %v893, %v906
    %v928 = vmul.f32 %v892, %v907
    %v929 = vmul.f32 %v891, %v908
    %v930 = vmul.f32 %v890, %v909
    %v931 = vmul.f32 %v889, %v910
    %v932 = vmul.f32 %v888, %v911
    %v947 = vrot.slane %v920, 7
    %v948 = vrot.slane %v921, 6
    %v949 = vrot.slane %v922, 5
    %v950 = vrot.slane %v923, 4
    %v951 = vrot.slane %v924, 3
    %v952 = vrot.slane %v925, 2
    %v953 = vrot.slane %v926, 1
    %v954 = vrot.slane %v928, 7
    %v955 = vrot.slane %v929, 6
    %v956 = vrot.slane %v930, 5
    %v957 = vrot.slane %v931, 4
    %v958 = vrot.slane %v932, 3
    %v959 = vsel %vm395, %v919, %v947
    %v960 = vsel %vm397, %v948, %v949
    %v961 = vsel %vm399, %v959, %v960
    %v962 = vsel %vm401, %v950, %v951
    %v963 = vsel %vm718, %v952, %v953
    %v964 = vsel %vm403, %v962, %v963
    %v965 = vsel %vm220, %v961, %v964
    %v966 = vsel %vm395, %v927, %v954
    %v967 = vsel %vm399, %v966, %v955
    %v968 = vsel %vm724, %v956, %v957
    %v969 = vsel %vm726, %v968, %v958
    %v970 = vsel %vm728, %v967, %v969
    %s973 = scalar_lea.vmem [#allocation2], 2
    %974 = vst [vmem:[%s973] ss:$8 sm:$0xf] %v965
    %975 = vst [vmem:[%s973] ss:$8 sm:$0xf0] %v965
    %s976 = scalar_lea.vmem [#allocation2], 66
    %977 = vst.msk [vmem:[%s976] ss:$8 sm:$0xf] %vm735, %v970
    %978 = vst.msk [vmem:[%s976] ss:$8 sm:$0x30] %vm735, %v970
    %979 = vrot.lane.b32.xlu0 %v585, 1
    %v980 = vpop.permute.xlu0 %979
    %981 = vrot.lane.b32.xlu0 %v586, 1
    %v982 = vpop.permute.xlu0 %981
    %983 = vrot.lane.b32.xlu0 %v587, 1
    %v984 = vpop.permute.xlu0 %983
    %985 = vrot.lane.b32.xlu0 %v588, 1
    %v986 = vpop.permute.xlu0 %985
    %987 = vrot.lane.b32.xlu0 %v589, 1
    %v988 = vpop.permute.xlu0 %987
    %989 = vrot.lane.b32.xlu0 %v590, 1
    %v990 = vpop.permute.xlu0 %989
    %991 = vrot.lane.b32.xlu0 %v591, 1
    %v992 = vpop.permute.xlu0 %991
    %993 = vrot.lane.b32.xlu0 %v592, 1
    %v994 = vpop.permute.xlu0 %993
    %995 = vrot.lane.b32.xlu0 %v593, 1
    %v996 = vpop.permute.xlu0 %995
    %997 = vrot.lane.b32.xlu0 %v594, 1
    %v998 = vpop.permute.xlu0 %997
    %999 = vrot.lane.b32.xlu0 %v595, 1
    %v1000 = vpop.permute.xlu0 %999
    %1001 = vrot.lane.b32.xlu0 %v596, 1
    %v1002 = vpop.permute.xlu0 %1001
    %1003 = vrot.lane.b32.xlu0 %v597, 1
    %v1004 = vpop.permute.xlu0 %1003
    %1005 = vrot.lane.b32.xlu0 %v598, 1
    %v1006 = vpop.permute.xlu0 %1005
    %vm1007 = vcmp.lt.s32.totalorder %v642, 1
    %v1008 = vsel %vm1007, %v1004, %v1006
    %v1009 = vsel %vm1007, %v1002, %v1004
    %v1010 = vsel %vm1007, %v1000, %v1002
    %v1011 = vsel %vm1007, %v998, %v1000
    %v1012 = vsel %vm1007, %v996, %v998
    %v1013 = vsel %vm1007, %v994, %v996
    %v1014 = vsel %vm1007, %v992, %v994
    %v1015 = vsel %vm1007, %v990, %v992
    %v1016 = vsel %vm1007, %v988, %v990
    %v1017 = vsel %vm1007, %v986, %v988
    %v1018 = vsel %vm1007, %v984, %v986
    %v1019 = vsel %vm1007, %v982, %v984
    %v1020 = vsel %vm1007, %v980, %v982
    %v1021 = vsel %vm1007, %v1006, %v980
    %s1022 = scalar_lea.vmem [#allocation9], 21
    %v1023 = vld [vmem:[%s1022] sm:$0xff]
    %v1025 = vperm.slane %v1023, 0
    %v1026 = vperm.slane %v1023, 1
    %v1027 = vperm.slane %v1023, 2
    %v1028 = vperm.slane %v1023, 3
    %v1029 = vperm.slane %v1023, 4
    %v1030 = vperm.slane %v1023, 5
    %v1031 = vperm.slane %v1023, 6
    %v1039 = vmul.f32 %v1021, %v1025
    %v1040 = vmul.f32 %v1020, %v1026
    %v1041 = vmul.f32 %v1019, %v1027
    %v1042 = vmul.f32 %v1018, %v1028
    %v1043 = vmul.f32 %v1017, %v1029
    %v1044 = vmul.f32 %v1016, %v1030
    %v1045 = vmul.f32 %v1015, %v1031
    %v1046 = vmul.f32 %v1014, %v1025
    %v1047 = vmul.f32 %v1013, %v1026
    %v1048 = vmul.f32 %v1012, %v1027
    %v1049 = vmul.f32 %v1011, %v1028
    %v1050 = vmul.f32 %v1010, %v1029
    %v1051 = vmul.f32 %v1009, %v1030
    %v1052 = vmul.f32 %v1008, %v1031
    %v1067 = vrot.slane %v1040, 7
    %v1068 = vrot.slane %v1041, 6
    %v1069 = vrot.slane %v1042, 5
    %v1070 = vrot.slane %v1043, 4
    %v1071 = vrot.slane %v1044, 3
    %v1072 = vrot.slane %v1045, 2
    %v1073 = vrot.slane %v1046, 1
    %v1074 = vrot.slane %v1048, 7
    %v1075 = vrot.slane %v1049, 6
    %v1076 = vrot.slane %v1050, 5
    %v1077 = vrot.slane %v1051, 4
    %v1078 = vrot.slane %v1052, 3
    %v1079 = vsel %vm395, %v1039, %v1067
    %v1080 = vsel %vm397, %v1068, %v1069
    %v1081 = vsel %vm399, %v1079, %v1080
    %v1082 = vsel %vm401, %v1070, %v1071
    %v1083 = vsel %vm718, %v1072, %v1073
    %v1084 = vsel %vm403, %v1082, %v1083
    %v1085 = vsel %vm220, %v1081, %v1084
    %v1086 = vsel %vm395, %v1047, %v1074
    %v1087 = vsel %vm399, %v1086, %v1075
    %v1088 = vsel %vm724, %v1076, %v1077
    %v1089 = vsel %vm726, %v1088, %v1078
    %v1090 = vsel %vm728, %v1087, %v1089
    %s1093 = scalar_lea.vmem [#allocation2], 3
    %1094 = vst [vmem:[%s1093] ss:$8 sm:$0xf] %v1085
    %1095 = vst [vmem:[%s1093] ss:$8 sm:$0xf0] %v1085
    %s1096 = scalar_lea.vmem [#allocation2], 67
    %1097 = vst.msk [vmem:[%s1096] ss:$8 sm:$0xf] %vm735, %v1090
    %1098 = vst.msk [vmem:[%s1096] ss:$8 sm:$0x30] %vm735, %v1090
    %s1099 = scalar_lea.vmem [#allocation2], 4
    %1100 = vst [vmem:[%s1099] ss:$8 sm:$0xf] %v581
    %1101 = vst [vmem:[%s1099] ss:$8 sm:$0xf0] %v581
    %s1102 = scalar_lea.vmem [#allocation2], 68
    %1103 = vst.msk [vmem:[%s1102] ss:$8 sm:$0xf] %vm735, %v582
    %1104 = vst.msk [vmem:[%s1102] ss:$8 sm:$0x30] %vm735, %v582
    %1105 = vrot.lane.b32.xlu0 %v585, 127
    %v1106 = vpop.permute.xlu0 %1105
    %1107 = vrot.lane.b32.xlu0 %v586, 127
    %v1108 = vpop.permute.xlu0 %1107
    %1109 = vrot.lane.b32.xlu0 %v587, 127
    %v1110 = vpop.permute.xlu0 %1109
    %1111 = vrot.lane.b32.xlu0 %v588, 127
    %v1112 = vpop.permute.xlu0 %1111
    %1113 = vrot.lane.b32.xlu0 %v589, 127
    %v1114 = vpop.permute.xlu0 %1113
    %1115 = vrot.lane.b32.xlu0 %v590, 127
    %v1116 = vpop.permute.xlu0 %1115
    %1117 = vrot.lane.b32.xlu0 %v591, 127
    %v1118 = vpop.permute.xlu0 %1117
    %1119 = vrot.lane.b32.xlu0 %v592, 127
    %v1120 = vpop.permute.xlu0 %1119
    %1121 = vrot.lane.b32.xlu0 %v593, 127
    %v1122 = vpop.permute.xlu0 %1121
    %1123 = vrot.lane.b32.xlu0 %v594, 127
    %v1124 = vpop.permute.xlu0 %1123
    %1125 = vrot.lane.b32.xlu0 %v595, 127
    %v1126 = vpop.permute.xlu0 %1125
    %1127 = vrot.lane.b32.xlu0 %v596, 127
    %v1128 = vpop.permute.xlu0 %1127
    %1129 = vrot.lane.b32.xlu0 %v597, 127
    %v1130 = vpop.permute.xlu0 %1129
    %1131 = vrot.lane.b32.xlu0 %v598, 127
    %v1132 = vpop.permute.xlu0 %1131
    %vm1133 = vcmp.lt.s32.totalorder %v642, 127
    %v1134 = vsel %vm1133, %v1130, %v1132
    %v1135 = vsel %vm1133, %v1128, %v1130
    %v1136 = vsel %vm1133, %v1126, %v1128
    %v1137 = vsel %vm1133, %v1124, %v1126
    %v1138 = vsel %vm1133, %v1122, %v1124
    %v1139 = vsel %vm1133, %v1120, %v1122
    %v1140 = vsel %vm1133, %v1118, %v1120
    %v1141 = vsel %vm1133, %v1116, %v1118
    %v1142 = vsel %vm1133, %v1114, %v1116
    %v1143 = vsel %vm1133, %v1112, %v1114
    %v1144 = vsel %vm1133, %v1110, %v1112
    %v1145 = vsel %vm1133, %v1108, %v1110
    %v1146 = vsel %vm1133, %v1106, %v1108
    %v1147 = vsel %vm1133, %v1132, %v1106
    %s1148 = scalar_lea.vmem [#allocation9], 35
    %v1149 = vld [vmem:[%s1148] sm:$0xff]
    %v1151 = vperm.slane %v1149, 0
    %v1152 = vperm.slane %v1149, 1
    %v1153 = vperm.slane %v1149, 2
    %v1154 = vperm.slane %v1149, 3
    %v1155 = vperm.slane %v1149, 4
    %v1156 = vperm.slane %v1149, 5
    %v1157 = vperm.slane %v1149, 6
    %v1165 = vmul.f32 %v1146, %v1151
    %v1166 = vmul.f32 %v1145, %v1152
    %v1167 = vmul.f32 %v1144, %v1153
    %v1168 = vmul.f32 %v1143, %v1154
    %v1169 = vmul.f32 %v1142, %v1155
    %v1170 = vmul.f32 %v1141, %v1156
    %v1171 = vmul.f32 %v1140, %v1157
    %v1172 = vmul.f32 %v1139, %v1151
    %v1173 = vmul.f32 %v1138, %v1152
    %v1174 = vmul.f32 %v1137, %v1153
    %v1175 = vmul.f32 %v1136, %v1154
    %v1176 = vmul.f32 %v1135, %v1155
    %v1177 = vmul.f32 %v1134, %v1156
    %v1178 = vmul.f32 %v1147, %v1157
    %v1193 = vrot.slane %v1166, 7
    %v1194 = vrot.slane %v1167, 6
    %v1195 = vrot.slane %v1168, 5
    %v1196 = vrot.slane %v1169, 4
    %v1197 = vrot.slane %v1170, 3
    %v1198 = vrot.slane %v1171, 2
    %v1199 = vrot.slane %v1172, 1
    %v1200 = vrot.slane %v1174, 7
    %v1201 = vrot.slane %v1175, 6
    %v1202 = vrot.slane %v1176, 5
    %v1203 = vrot.slane %v1177, 4
    %v1204 = vrot.slane %v1178, 3
    %v1205 = vsel %vm395, %v1165, %v1193
    %v1206 = vsel %vm397, %v1194, %v1195
    %v1207 = vsel %vm399, %v1205, %v1206
    %v1208 = vsel %vm401, %v1196, %v1197
    %v1209 = vsel %vm718, %v1198, %v1199
    %v1210 = vsel %vm403, %v1208, %v1209
    %v1211 = vsel %vm220, %v1207, %v1210
    %v1212 = vsel %vm395, %v1173, %v1200
    %v1213 = vsel %vm399, %v1212, %v1201
    %v1214 = vsel %vm724, %v1202, %v1203
    %v1215 = vsel %vm726, %v1214, %v1204
    %v1216 = vsel %vm728, %v1213, %v1215
    %s1219 = scalar_lea.vmem [#allocation2], 5
    %1220 = vst [vmem:[%s1219] ss:$8 sm:$0xf] %v1211
    %1221 = vst [vmem:[%s1219] ss:$8 sm:$0xf0] %v1211
    %s1222 = scalar_lea.vmem [#allocation2], 69
    %1223 = vst.msk [vmem:[%s1222] ss:$8 sm:$0xf] %vm735, %v1216
    %1224 = vst.msk [vmem:[%s1222] ss:$8 sm:$0x30] %vm735, %v1216
    %1225 = vrot.lane.b32.xlu0 %v585, 101
    %v1226 = vpop.permute.xlu0 %1225
    %1227 = vrot.lane.b32.xlu0 %v586, 101
    %v1228 = vpop.permute.xlu0 %1227
    %1229 = vrot.lane.b32.xlu0 %v587, 101
    %v1230 = vpop.permute.xlu0 %1229
    %1231 = vrot.lane.b32.xlu0 %v588, 101
    %v1232 = vpop.permute.xlu0 %1231
    %1233 = vrot.lane.b32.xlu0 %v589, 101
    %v1234 = vpop.permute.xlu0 %1233
    %1235 = vrot.lane.b32.xlu0 %v590, 101
    %v1236 = vpop.permute.xlu0 %1235
    %1237 = vrot.lane.b32.xlu0 %v591, 101
    %v1238 = vpop.permute.xlu0 %1237
    %1239 = vrot.lane.b32.xlu0 %v592, 101
    %v1240 = vpop.permute.xlu0 %1239
    %1241 = vrot.lane.b32.xlu0 %v593, 101
    %v1242 = vpop.permute.xlu0 %1241
    %1243 = vrot.lane.b32.xlu0 %v594, 101
    %v1244 = vpop.permute.xlu0 %1243
    %1245 = vrot.lane.b32.xlu0 %v595, 101
    %v1246 = vpop.permute.xlu0 %1245
    %1247 = vrot.lane.b32.xlu0 %v596, 101
    %v1248 = vpop.permute.xlu0 %1247
    %1249 = vrot.lane.b32.xlu0 %v597, 101
    %v1250 = vpop.permute.xlu0 %1249
    %1251 = vrot.lane.b32.xlu0 %v598, 101
    %v1252 = vpop.permute.xlu0 %1251
    %vm1253 = vcmp.lt.s32.totalorder %v642, 101
    %v1254 = vsel %vm1253, %v1250, %v1252
    %v1255 = vsel %vm1253, %v1248, %v1250
    %v1256 = vsel %vm1253, %v1246, %v1248
    %v1257 = vsel %vm1253, %v1244, %v1246
    %v1258 = vsel %vm1253, %v1242, %v1244
    %v1259 = vsel %vm1253, %v1240, %v1242
    %v1260 = vsel %vm1253, %v1238, %v1240
    %v1261 = vsel %vm1253, %v1236, %v1238
    %v1262 = vsel %vm1253, %v1234, %v1236
    %v1263 = vsel %vm1253, %v1232, %v1234
    %v1264 = vsel %vm1253, %v1230, %v1232
    %v1265 = vsel %vm1253, %v1228, %v1230
    %v1266 = vsel %vm1253, %v1226, %v1228
    %v1267 = vsel %vm1253, %v1252, %v1226
    %s1268 = scalar_lea.vmem [#allocation9], 42
    %v1269 = vld [vmem:[%s1268] sm:$0xff]
    %v1271 = vperm.slane %v1269, 0
    %v1272 = vperm.slane %v1269, 1
    %v1273 = vperm.slane %v1269, 2
    %v1274 = vperm.slane %v1269, 3
    %v1275 = vperm.slane %v1269, 4
    %v1276 = vperm.slane %v1269, 5
    %v1277 = vperm.slane %v1269, 6
    %v1285 = vmul.f32 %v1266, %v1271
    %v1286 = vmul.f32 %v1265, %v1272
    %v1287 = vmul.f32 %v1264, %v1273
    %v1288 = vmul.f32 %v1263, %v1274
    %v1289 = vmul.f32 %v1262, %v1275
    %v1290 = vmul.f32 %v1261, %v1276
    %v1291 = vmul.f32 %v1260, %v1277
    %v1292 = vmul.f32 %v1259, %v1271
    %v1293 = vmul.f32 %v1258, %v1272
    %v1294 = vmul.f32 %v1257, %v1273
    %v1295 = vmul.f32 %v1256, %v1274
    %v1296 = vmul.f32 %v1255, %v1275
    %v1297 = vmul.f32 %v1254, %v1276
    %v1298 = vmul.f32 %v1267, %v1277
    %v1313 = vrot.slane %v1286, 7
    %v1314 = vrot.slane %v1287, 6
    %v1315 = vrot.slane %v1288, 5
    %v1316 = vrot.slane %v1289, 4
    %v1317 = vrot.slane %v1290, 3
    %v1318 = vrot.slane %v1291, 2
    %v1319 = vrot.slane %v1292, 1
    %v1320 = vrot.slane %v1294, 7
    %v1321 = vrot.slane %v1295, 6
    %v1322 = vrot.slane %v1296, 5
    %v1323 = vrot.slane %v1297, 4
    %v1324 = vrot.slane %v1298, 3
    %v1325 = vsel %vm395, %v1285, %v1313
    %v1326 = vsel %vm397, %v1314, %v1315
    %v1327 = vsel %vm399, %v1325, %v1326
    %v1328 = vsel %vm401, %v1316, %v1317
    %v1329 = vsel %vm718, %v1318, %v1319
    %v1330 = vsel %vm403, %v1328, %v1329
    %v1331 = vsel %vm220, %v1327, %v1330
    %v1332 = vsel %vm395, %v1293, %v1320
    %v1333 = vsel %vm399, %v1332, %v1321
    %v1334 = vsel %vm724, %v1322, %v1323
    %v1335 = vsel %vm726, %v1334, %v1324
    %v1336 = vsel %vm728, %v1333, %v1335
    %s1339 = scalar_lea.vmem [#allocation2], 6
    %1340 = vst [vmem:[%s1339] ss:$8 sm:$0xf] %v1331
    %1341 = vst [vmem:[%s1339] ss:$8 sm:$0xf0] %v1331
    %s1342 = scalar_lea.vmem [#allocation2], 70
    %1343 = vst.msk [vmem:[%s1342] ss:$8 sm:$0xf] %vm735, %v1336
    %1344 = vst.msk [vmem:[%s1342] ss:$8 sm:$0x30] %vm735, %v1336
    %1345 = vrot.lane.b32.xlu0 %v585, 100
    %v1346 = vpop.permute.xlu0 %1345
    %1347 = vrot.lane.b32.xlu0 %v586, 100
    %v1348 = vpop.permute.xlu0 %1347
    %1349 = vrot.lane.b32.xlu0 %v587, 100
    %v1350 = vpop.permute.xlu0 %1349
    %1351 = vrot.lane.b32.xlu0 %v588, 100
    %v1352 = vpop.permute.xlu0 %1351
    %1353 = vrot.lane.b32.xlu0 %v589, 100
    %v1354 = vpop.permute.xlu0 %1353
    %1355 = vrot.lane.b32.xlu0 %v590, 100
    %v1356 = vpop.permute.xlu0 %1355
    %1357 = vrot.lane.b32.xlu0 %v591, 100
    %v1358 = vpop.permute.xlu0 %1357
    %1359 = vrot.lane.b32.xlu0 %v592, 100
    %v1360 = vpop.permute.xlu0 %1359
    %1361 = vrot.lane.b32.xlu0 %v593, 100
    %v1362 = vpop.permute.xlu0 %1361
    %1363 = vrot.lane.b32.xlu0 %v594, 100
    %v1364 = vpop.permute.xlu0 %1363
    %1365 = vrot.lane.b32.xlu0 %v595, 100
    %v1366 = vpop.permute.xlu0 %1365
    %1367 = vrot.lane.b32.xlu0 %v596, 100
    %v1368 = vpop.permute.xlu0 %1367
    %1369 = vrot.lane.b32.xlu0 %v597, 100
    %v1370 = vpop.permute.xlu0 %1369
    %1371 = vrot.lane.b32.xlu0 %v598, 100
    %v1372 = vpop.permute.xlu0 %1371
    %vm1373 = vcmp.lt.s32.totalorder %v642, 100
    %v1374 = vsel %vm1373, %v1370, %v1372
    %v1375 = vsel %vm1373, %v1368, %v1370
    %v1376 = vsel %vm1373, %v1366, %v1368
    %v1377 = vsel %vm1373, %v1364, %v1366
    %v1378 = vsel %vm1373, %v1362, %v1364
    %v1379 = vsel %vm1373, %v1360, %v1362
    %v1380 = vsel %vm1373, %v1358, %v1360
    %v1381 = vsel %vm1373, %v1356, %v1358
    %v1382 = vsel %vm1373, %v1354, %v1356
    %v1383 = vsel %vm1373, %v1352, %v1354
    %v1384 = vsel %vm1373, %v1350, %v1352
    %v1385 = vsel %vm1373, %v1348, %v1350
    %v1386 = vsel %vm1373, %v1346, %v1348
    %v1387 = vsel %vm1373, %v1372, %v1346
    %s1388 = scalar_lea.vmem [#allocation9], 49
    %v1389 = vld [vmem:[%s1388] sm:$0xff]
    %v1391 = vperm.slane %v1389, 0
    %v1392 = vperm.slane %v1389, 1
    %v1393 = vperm.slane %v1389, 2
    %v1394 = vperm.slane %v1389, 3
    %v1395 = vperm.slane %v1389, 4
    %v1396 = vperm.slane %v1389, 5
    %v1397 = vperm.slane %v1389, 6
    %v1405 = vmul.f32 %v1386, %v1391
    %v1406 = vmul.f32 %v1385, %v1392
    %v1407 = vmul.f32 %v1384, %v1393
    %v1408 = vmul.f32 %v1383, %v1394
    %v1409 = vmul.f32 %v1382, %v1395
    %v1410 = vmul.f32 %v1381, %v1396
    %v1411 = vmul.f32 %v1380, %v1397
    %v1412 = vmul.f32 %v1379, %v1391
    %v1413 = vmul.f32 %v1378, %v1392
    %v1414 = vmul.f32 %v1377, %v1393
    %v1415 = vmul.f32 %v1376, %v1394
    %v1416 = vmul.f32 %v1375, %v1395
    %v1417 = vmul.f32 %v1374, %v1396
    %v1418 = vmul.f32 %v1387, %v1397
    %v1433 = vrot.slane %v1406, 7
    %v1434 = vrot.slane %v1407, 6
    %v1435 = vrot.slane %v1408, 5
    %v1436 = vrot.slane %v1409, 4
    %v1437 = vrot.slane %v1410, 3
    %v1438 = vrot.slane %v1411, 2
    %v1439 = vrot.slane %v1412, 1
    %v1440 = vrot.slane %v1414, 7
    %v1441 = vrot.slane %v1415, 6
    %v1442 = vrot.slane %v1416, 5
    %v1443 = vrot.slane %v1417, 4
    %v1444 = vrot.slane %v1418, 3
    %v1445 = vsel %vm395, %v1405, %v1433
    %v1446 = vsel %vm397, %v1434, %v1435
    %v1447 = vsel %vm399, %v1445, %v1446
    %v1448 = vsel %vm401, %v1436, %v1437
    %v1449 = vsel %vm718, %v1438, %v1439
    %v1450 = vsel %vm403, %v1448, %v1449
    %v1451 = vsel %vm220, %v1447, %v1450
    %v1452 = vsel %vm395, %v1413, %v1440
    %v1453 = vsel %vm399, %v1452, %v1441
    %v1454 = vsel %vm724, %v1442, %v1443
    %v1455 = vsel %vm726, %v1454, %v1444
    %v1456 = vsel %vm728, %v1453, %v1455
    %s1459 = scalar_lea.vmem [#allocation2], 7
    %1460 = vst [vmem:[%s1459] ss:$8 sm:$0xf] %v1451
    %1461 = vst [vmem:[%s1459] ss:$8 sm:$0xf0] %v1451
    %s1462 = scalar_lea.vmem [#allocation2], 71
    %1463 = vst.msk [vmem:[%s1462] ss:$8 sm:$0xf] %vm735, %v1456
    %1464 = vst.msk [vmem:[%s1462] ss:$8 sm:$0x30] %vm735, %v1456
    %1465 = vrot.lane.b32.xlu0 %v585, 99
    %v1466 = vpop.permute.xlu0 %1465
    %1467 = vrot.lane.b32.xlu0 %v586, 99
    %v1468 = vpop.permute.xlu0 %1467
    %1469 = vrot.lane.b32.xlu0 %v587, 99
    %v1470 = vpop.permute.xlu0 %1469
    %1471 = vrot.lane.b32.xlu0 %v588, 99
    %v1472 = vpop.permute.xlu0 %1471
    %1473 = vrot.lane.b32.xlu0 %v589, 99
    %v1474 = vpop.permute.xlu0 %1473
    %1475 = vrot.lane.b32.xlu0 %v590, 99
    %v1476 = vpop.permute.xlu0 %1475
    %1477 = vrot.lane.b32.xlu0 %v591, 99
    %v1478 = vpop.permute.xlu0 %1477
    %1479 = vrot.lane.b32.xlu0 %v592, 99
    %v1480 = vpop.permute.xlu0 %1479
    %1481 = vrot.lane.b32.xlu0 %v593, 99
    %v1482 = vpop.permute.xlu0 %1481
    %1483 = vrot.lane.b32.xlu0 %v594, 99
    %v1484 = vpop.permute.xlu0 %1483
    %1485 = vrot.lane.b32.xlu0 %v595, 99
    %v1486 = vpop.permute.xlu0 %1485
    %1487 = vrot.lane.b32.xlu0 %v596, 99
    %v1488 = vpop.permute.xlu0 %1487
    %1489 = vrot.lane.b32.xlu0 %v597, 99
    %v1490 = vpop.permute.xlu0 %1489
    %1491 = vrot.lane.b32.xlu0 %v598, 99
    %v1492 = vpop.permute.xlu0 %1491
    %vm1493 = vcmp.lt.s32.totalorder %v642, 99
    %v1494 = vsel %vm1493, %v1490, %v1492
    %v1495 = vsel %vm1493, %v1488, %v1490
    %v1496 = vsel %vm1493, %v1486, %v1488
    %v1497 = vsel %vm1493, %v1484, %v1486
    %v1498 = vsel %vm1493, %v1482, %v1484
    %v1499 = vsel %vm1493, %v1480, %v1482
    %v1500 = vsel %vm1493, %v1478, %v1480
    %v1501 = vsel %vm1493, %v1476, %v1478
    %v1502 = vsel %vm1493, %v1474, %v1476
    %v1503 = vsel %vm1493, %v1472, %v1474
    %v1504 = vsel %vm1493, %v1470, %v1472
    %v1505 = vsel %vm1493, %v1468, %v1470
    %v1506 = vsel %vm1493, %v1466, %v1468
    %v1507 = vsel %vm1493, %v1492, %v1466
    %s1508 = scalar_lea.vmem [#allocation9], 56
    %v1509 = vld [vmem:[%s1508] sm:$0xff]
    %v1511 = vperm.slane %v1509, 0
    %v1512 = vperm.slane %v1509, 1
    %v1513 = vperm.slane %v1509, 2
    %v1514 = vperm.slane %v1509, 3
    %v1515 = vperm.slane %v1509, 4
    %v1516 = vperm.slane %v1509, 5
    %v1517 = vperm.slane %v1509, 6
    %v1525 = vmul.f32 %v1506, %v1511
    %v1526 = vmul.f32 %v1505, %v1512
    %v1527 = vmul.f32 %v1504, %v1513
    %v1528 = vmul.f32 %v1503, %v1514
    %v1529 = vmul.f32 %v1502, %v1515
    %v1530 = vmul.f32 %v1501, %v1516
    %v1531 = vmul.f32 %v1500, %v1517
    %v1532 = vmul.f32 %v1499, %v1511
    %v1533 = vmul.f32 %v1498, %v1512
    %v1534 = vmul.f32 %v1497, %v1513
    %v1535 = vmul.f32 %v1496, %v1514
    %v1536 = vmul.f32 %v1495, %v1515
    %v1537 = vmul.f32 %v1494, %v1516
    %v1538 = vmul.f32 %v1507, %v1517
    %v1553 = vrot.slane %v1526, 7
    %v1554 = vrot.slane %v1527, 6
    %v1555 = vrot.slane %v1528, 5
    %v1556 = vrot.slane %v1529, 4
    %v1557 = vrot.slane %v1530, 3
    %v1558 = vrot.slane %v1531, 2
    %v1559 = vrot.slane %v1532, 1
    %v1560 = vrot.slane %v1534, 7
    %v1561 = vrot.slane %v1535, 6
    %v1562 = vrot.slane %v1536, 5
    %v1563 = vrot.slane %v1537, 4
    %v1564 = vrot.slane %v1538, 3
    %v1565 = vsel %vm395, %v1525, %v1553
    %v1566 = vsel %vm397, %v1554, %v1555
    %v1567 = vsel %vm399, %v1565, %v1566
    %v1568 = vsel %vm401, %v1556, %v1557
    %v1569 = vsel %vm718, %v1558, %v1559
    %v1570 = vsel %vm403, %v1568, %v1569
    %v1571 = vsel %vm220, %v1567, %v1570
    %v1572 = vsel %vm395, %v1533, %v1560
    %v1573 = vsel %vm399, %v1572, %v1561
    %v1574 = vsel %vm724, %v1562, %v1563
    %v1575 = vsel %vm726, %v1574, %v1564
    %v1576 = vsel %vm728, %v1573, %v1575
    %s1579 = scalar_lea.vmem [#allocation2], 112
    %1580 = vst [vmem:[%s1579] ss:$8 sm:$0xf] %v1571
    %1581 = vst [vmem:[%s1579] ss:$8 sm:$0xf0] %v1571
    %s1582 = scalar_lea.vmem [#allocation2], 176
    %1583 = vst.msk [vmem:[%s1582] ss:$8 sm:$0xf] %vm735, %v1576
    %1584 = vst.msk [vmem:[%s1582] ss:$8 sm:$0x30] %vm735, %v1576
    %v1585 = vld [vmem:[%s6] sm:$0xff]
    %v1586 = vld [vmem:[%s6 + $0x8] sm:$0xf]
    %v1587 = vld [vmem:[#allocation2] sm:$0xff]
    %v1588 = vld [vmem:[#allocation2 + $0x8] sm:$0xff]
    %v1589 = vld [vmem:[#allocation2 + $0x10] sm:$0xff]
    %v1590 = vld [vmem:[#allocation2 + $0x18] sm:$0xff]
    %v1591 = vld [vmem:[#allocation2 + $0x20] sm:$0xff]
    %v1592 = vld [vmem:[#allocation2 + $0x28] sm:$0xff]
    %v1593 = vld [vmem:[#allocation2 + $0x30] sm:$0xff]
    %v1594 = vld [vmem:[#allocation2 + $0x38] sm:$0xff]
    %v1595 = vld [vmem:[#allocation2 + $0x40] sm:$0xff]
    %v1596 = vld [vmem:[#allocation2 + $0x48] sm:$0xff]
    %v1597 = vld [vmem:[#allocation2 + $0x50] sm:$0xff]
    %v1598 = vld [vmem:[#allocation2 + $0x58] sm:$0xff]
    %v1599 = vld [vmem:[#allocation2 + $0x60] sm:$0xff]
    %v1600 = vld [vmem:[#allocation2 + $0x68] sm:$0xff]
    %v1601 = vld [vmem:[#allocation2 + $0x70] sm:$0x1]
    %v1602 = vld [vmem:[#allocation2 + $0x78] sm:$0x1]
    %v1603 = vld [vmem:[#allocation2 + $0x80] sm:$0x1]
    %v1604 = vld [vmem:[#allocation2 + $0x88] sm:$0x1]
    %v1605 = vld [vmem:[#allocation2 + $0x90] sm:$0x1]
    %v1606 = vld [vmem:[#allocation2 + $0x98] sm:$0x1]
    %v1607 = vld [vmem:[#allocation2 + $0xa0] sm:$0x1]
    %v1608 = vld [vmem:[#allocation2 + $0xa8] sm:$0x1]
    %v1609 = vld [vmem:[#allocation2 + $0xb0] sm:$0x1]
    %v1610 = vld [vmem:[#allocation2 + $0xb8] sm:$0x1]
    %v1611 = vld [vmem:[#allocation2 + $0xc0] sm:$0x1]
    %v1612 = vld [vmem:[#allocation2 + $0xc8] sm:$0x1]
    %v1613 = vld [vmem:[#allocation2 + $0xd0] sm:$0x1]
    %v1614 = vld [vmem:[#allocation2 + $0xd8] sm:$0x1]
    %v1615 = vld [vmem:[%s7] sm:$0xff]
    %v1616 = vld [vmem:[%s7 + $0x8] sm:$0xf]
    %1618 = vset.pattern.permute.xlu0 0
    %1619 = vperm.xlu0 %1618, %v1615
    %v1620 = vpop.permute.xlu0 %1619
    %1623 = vset.pattern.permute.xlu0 0
    %1624 = vperm.xlu0 %1623, %v1616
    %v1625 = vpop.permute.xlu0 %1624
    %vm1627 = vcmask 72704
    %v1629 = vsel %vm1627, %v1585, 0
    %v1632 = vsel %vm1627, %v1586, 0
    %v1635 = vsel %vm395, %v1601, 0
    %v1638 = vsel %vm395, %v1602, 0
    %v1641 = vsel %vm395, %v1603, 0
    %v1644 = vsel %vm395, %v1604, 0
    %v1647 = vsel %vm395, %v1605, 0
    %v1650 = vsel %vm395, %v1606, 0
    %v1653 = vsel %vm395, %v1607, 0
    %v1656 = vsel %vm395, %v1608, 0
    %v1659 = vsel %vm395, %v1609, 0
    %v1662 = vsel %vm395, %v1610, 0
    %v1665 = vsel %vm395, %v1611, 0
    %v1668 = vsel %vm395, %v1612, 0
    %v1671 = vsel %vm395, %v1613, 0
    %v1674 = vsel %vm395, %v1614, 0
    %1676 = vmatpush.msra.mxu0 0.0
    %1677 = vmatpush.msra.mxu0 0.0
    %1678 = vmatpush.msra.mxu0 0.0
    %1679 = vmatpush.msra.mxu0 0.0
    %1680 = vmatpush.msra.mxu0 0.0
    %1681 = vmatpush.msra.mxu0 0.0
    %1682 = vmatpush.msra.mxu0 0.0
    %1683 = vmatpush.msra.mxu0 0.0
    %1684 = vmatpush.msra.mxu0 0.0
    %1685 = vmatpush.msra.mxu0 0.0
    %1686 = vmatpush.msra.mxu0 0.0
    %1687 = vmatpush.msra.mxu0 0.0
    %1688 = vmatpush.msra.mxu0 0.0
    %1689 = vmatpush.msra.mxu0 0.0
    %1690 = vmatpush.msra.mxu0 %v1635
    %1691 = vmatpush.msra.mxu0 %v1587
    %1692 = vmatmul.f32.gmra.mxu0 %v1629
    %v1693 = vpop.f32.mrf.mxu0
    %v1694 = vadd.f32 %v1620, %v1693
    %1695 = vmatmul.f32.gmra.mxu0 %v1632
    %v1696 = vpop.f32.mrf.mxu0
    %v1697 = vadd.f32 %v1625, %v1696
    %1698 = vdwg.mxu0
    %1699 = vmatpush.msra.mxu0 0.0
    %1700 = vmatpush.msra.mxu0 0.0
    %1701 = vmatpush.msra.mxu0 0.0
    %1702 = vmatpush.msra.mxu0 0.0
    %1703 = vmatpush.msra.mxu0 0.0
    %1704 = vmatpush.msra.mxu0 0.0
    %1705 = vmatpush.msra.mxu0 0.0
    %1706 = vmatpush.msra.mxu0 0.0
    %1707 = vmatpush.msra.mxu0 0.0
    %1708 = vmatpush.msra.mxu0 0.0
    %1709 = vmatpush.msra.mxu0 0.0
    %1710 = vmatpush.msra.mxu0 0.0
    %1711 = vmatpush.msra.mxu0 0.0
    %1712 = vmatpush.msra.mxu0 0.0
    %1713 = vmatpush.msra.mxu0 %v1638
    %1714 = vmatpush.msra.mxu0 %v1588
    %1715 = vmatmul.f32.gmra.mxu0 %v1629
    %v1716 = vpop.f32.mrf.mxu0
    %v1717 = vadd.f32 %v1620, %v1716
    %1718 = vmatmul.f32.gmra.mxu0 %v1632
    %v1719 = vpop.f32.mrf.mxu0
    %v1720 = vadd.f32 %v1625, %v1719
    %1721 = vdwg.mxu0
    %1722 = vmatpush.msra.mxu0 0.0
    %1723 = vmatpush.msra.mxu0 0.0
    %1724 = vmatpush.msra.mxu0 0.0
    %1725 = vmatpush.msra.mxu0 0.0
    %1726 = vmatpush.msra.mxu0 0.0
    %1727 = vmatpush.msra.mxu0 0.0
    %1728 = vmatpush.msra.mxu0 0.0
    %1729 = vmatpush.msra.mxu0 0.0
    %1730 = vmatpush.msra.mxu0 0.0
    %1731 = vmatpush.msra.mxu0 0.0
    %1732 = vmatpush.msra.mxu0 0.0
    %1733 = vmatpush.msra.mxu0 0.0
    %1734 = vmatpush.msra.mxu0 0.0
    %1735 = vmatpush.msra.mxu0 0.0
    %1736 = vmatpush.msra.mxu0 %v1641
    %1737 = vmatpush.msra.mxu0 %v1589
    %1738 = vmatmul.f32.gmra.mxu0 %v1629
    %v1739 = vpop.f32.mrf.mxu0
    %v1740 = vadd.f32 %v1620, %v1739
    %1741 = vmatmul.f32.gmra.mxu0 %v1632
    %v1742 = vpop.f32.mrf.mxu0
    %v1743 = vadd.f32 %v1625, %v1742
    %1744 = vdwg.mxu0
    %1745 = vmatpush.msra.mxu0 0.0
    %1746 = vmatpush.msra.mxu0 0.0
    %1747 = vmatpush.msra.mxu0 0.0
    %1748 = vmatpush.msra.mxu0 0.0
    %1749 = vmatpush.msra.mxu0 0.0
    %1750 = vmatpush.msra.mxu0 0.0
    %1751 = vmatpush.msra.mxu0 0.0
    %1752 = vmatpush.msra.mxu0 0.0
    %1753 = vmatpush.msra.mxu0 0.0
    %1754 = vmatpush.msra.mxu0 0.0
    %1755 = vmatpush.msra.mxu0 0.0
    %1756 = vmatpush.msra.mxu0 0.0
    %1757 = vmatpush.msra.mxu0 0.0
    %1758 = vmatpush.msra.mxu0 0.0
    %1759 = vmatpush.msra.mxu0 %v1644
    %1760 = vmatpush.msra.mxu0 %v1590
    %1761 = vmatmul.f32.gmra.mxu0 %v1629
    %v1762 = vpop.f32.mrf.mxu0
    %v1763 = vadd.f32 %v1620, %v1762
    %1764 = vmatmul.f32.gmra.mxu0 %v1632
    %v1765 = vpop.f32.mrf.mxu0
    %v1766 = vadd.f32 %v1625, %v1765
    %1767 = vdwg.mxu0
    %1768 = vmatpush.msra.mxu0 0.0
    %1769 = vmatpush.msra.mxu0 0.0
    %1770 = vmatpush.msra.mxu0 0.0
    %1771 = vmatpush.msra.mxu0 0.0
    %1772 = vmatpush.msra.mxu0 0.0
    %1773 = vmatpush.msra.mxu0 0.0
    %1774 = vmatpush.msra.mxu0 0.0
    %1775 = vmatpush.msra.mxu0 0.0
    %1776 = vmatpush.msra.mxu0 0.0
    %1777 = vmatpush.msra.mxu0 0.0
    %1778 = vmatpush.msra.mxu0 0.0
    %1779 = vmatpush.msra.mxu0 0.0
    %1780 = vmatpush.msra.mxu0 0.0
    %1781 = vmatpush.msra.mxu0 0.0
    %1782 = vmatpush.msra.mxu0 %v1647
    %1783 = vmatpush.msra.mxu0 %v1591
    %1784 = vmatmul.f32.gmra.mxu0 %v1629
    %v1785 = vpop.f32.mrf.mxu0
    %v1786 = vadd.f32 %v1620, %v1785
    %1787 = vmatmul.f32.gmra.mxu0 %v1632
    %v1788 = vpop.f32.mrf.mxu0
    %v1789 = vadd.f32 %v1625, %v1788
    %1790 = vdwg.mxu0
    %1791 = vmatpush.msra.mxu0 0.0
    %1792 = vmatpush.msra.mxu0 0.0
    %1793 = vmatpush.msra.mxu0 0.0
    %1794 = vmatpush.msra.mxu0 0.0
    %1795 = vmatpush.msra.mxu0 0.0
    %1796 = vmatpush.msra.mxu0 0.0
    %1797 = vmatpush.msra.mxu0 0.0
    %1798 = vmatpush.msra.mxu0 0.0
    %1799 = vmatpush.msra.mxu0 0.0
    %1800 = vmatpush.msra.mxu0 0.0
    %1801 = vmatpush.msra.mxu0 0.0
    %1802 = vmatpush.msra.mxu0 0.0
    %1803 = vmatpush.msra.mxu0 0.0
    %1804 = vmatpush.msra.mxu0 0.0
    %1805 = vmatpush.msra.mxu0 %v1650
    %1806 = vmatpush.msra.mxu0 %v1592
    %1807 = vmatmul.f32.gmra.mxu0 %v1629
    %v1808 = vpop.f32.mrf.mxu0
    %v1809 = vadd.f32 %v1620, %v1808
    %1810 = vmatmul.f32.gmra.mxu0 %v1632
    %v1811 = vpop.f32.mrf.mxu0
    %v1812 = vadd.f32 %v1625, %v1811
    %1813 = vdwg.mxu0
    %1814 = vmatpush.msra.mxu0 0.0
    %1815 = vmatpush.msra.mxu0 0.0
    %1816 = vmatpush.msra.mxu0 0.0
    %1817 = vmatpush.msra.mxu0 0.0
    %1818 = vmatpush.msra.mxu0 0.0
    %1819 = vmatpush.msra.mxu0 0.0
    %1820 = vmatpush.msra.mxu0 0.0
    %1821 = vmatpush.msra.mxu0 0.0
    %1822 = vmatpush.msra.mxu0 0.0
    %1823 = vmatpush.msra.mxu0 0.0
    %1824 = vmatpush.msra.mxu0 0.0
    %1825 = vmatpush.msra.mxu0 0.0
    %1826 = vmatpush.msra.mxu0 0.0
    %1827 = vmatpush.msra.mxu0 0.0
    %1828 = vmatpush.msra.mxu0 %v1653
    %1829 = vmatpush.msra.mxu0 %v1593
    %1830 = vmatmul.f32.gmra.mxu0 %v1629
    %v1831 = vpop.f32.mrf.mxu0
    %v1832 = vadd.f32 %v1620, %v1831
    %1833 = vmatmul.f32.gmra.mxu0 %v1632
    %v1834 = vpop.f32.mrf.mxu0
    %v1835 = vadd.f32 %v1625, %v1834
    %1836 = vdwg.mxu0
    %1837 = vmatpush.msra.mxu0 0.0
    %1838 = vmatpush.msra.mxu0 0.0
    %1839 = vmatpush.msra.mxu0 0.0
    %1840 = vmatpush.msra.mxu0 0.0
    %1841 = vmatpush.msra.mxu0 0.0
    %1842 = vmatpush.msra.mxu0 0.0
    %1843 = vmatpush.msra.mxu0 0.0
    %1844 = vmatpush.msra.mxu0 0.0
    %1845 = vmatpush.msra.mxu0 0.0
    %1846 = vmatpush.msra.mxu0 0.0
    %1847 = vmatpush.msra.mxu0 0.0
    %1848 = vmatpush.msra.mxu0 0.0
    %1849 = vmatpush.msra.mxu0 0.0
    %1850 = vmatpush.msra.mxu0 0.0
    %1851 = vmatpush.msra.mxu0 %v1656
    %1852 = vmatpush.msra.mxu0 %v1594
    %1853 = vmatmul.f32.gmra.mxu0 %v1629
    %v1854 = vpop.f32.mrf.mxu0
    %v1855 = vadd.f32 %v1620, %v1854
    %1856 = vmatmul.f32.gmra.mxu0 %v1632
    %v1857 = vpop.f32.mrf.mxu0
    %v1858 = vadd.f32 %v1625, %v1857
    %1859 = vdwg.mxu0
    %1860 = vmatpush.msra.mxu0 0.0
    %1861 = vmatpush.msra.mxu0 0.0
    %1862 = vmatpush.msra.mxu0 0.0
    %1863 = vmatpush.msra.mxu0 0.0
    %1864 = vmatpush.msra.mxu0 0.0
    %1865 = vmatpush.msra.mxu0 0.0
    %1866 = vmatpush.msra.mxu0 0.0
    %1867 = vmatpush.msra.mxu0 0.0
    %1868 = vmatpush.msra.mxu0 0.0
    %1869 = vmatpush.msra.mxu0 0.0
    %1870 = vmatpush.msra.mxu0 0.0
    %1871 = vmatpush.msra.mxu0 0.0
    %1872 = vmatpush.msra.mxu0 0.0
    %1873 = vmatpush.msra.mxu0 0.0
    %1874 = vmatpush.msra.mxu0 %v1659
    %1875 = vmatpush.msra.mxu0 %v1595
    %1876 = vmatmul.f32.gmra.mxu0 %v1629
    %v1877 = vpop.f32.mrf.mxu0
    %v1878 = vadd.f32 %v1620, %v1877
    %1879 = vmatmul.f32.gmra.mxu0 %v1632
    %v1880 = vpop.f32.mrf.mxu0
    %v1881 = vadd.f32 %v1625, %v1880
    %1882 = vdwg.mxu0
    %1883 = vmatpush.msra.mxu0 0.0
    %1884 = vmatpush.msra.mxu0 0.0
    %1885 = vmatpush.msra.mxu0 0.0
    %1886 = vmatpush.msra.mxu0 0.0
    %1887 = vmatpush.msra.mxu0 0.0
    %1888 = vmatpush.msra.mxu0 0.0
    %1889 = vmatpush.msra.mxu0 0.0
    %1890 = vmatpush.msra.mxu0 0.0
    %1891 = vmatpush.msra.mxu0 0.0
    %1892 = vmatpush.msra.mxu0 0.0
    %1893 = vmatpush.msra.mxu0 0.0
    %1894 = vmatpush.msra.mxu0 0.0
    %1895 = vmatpush.msra.mxu0 0.0
    %1896 = vmatpush.msra.mxu0 0.0
    %1897 = vmatpush.msra.mxu0 %v1662
    %1898 = vmatpush.msra.mxu0 %v1596
    %1899 = vmatmul.f32.gmra.mxu0 %v1629
    %v1900 = vpop.f32.mrf.mxu0
    %v1901 = vadd.f32 %v1620, %v1900
    %1902 = vmatmul.f32.gmra.mxu0 %v1632
    %v1903 = vpop.f32.mrf.mxu0
    %v1904 = vadd.f32 %v1625, %v1903
    %1905 = vdwg.mxu0
    %1906 = vmatpush.msra.mxu0 0.0
    %1907 = vmatpush.msra.mxu0 0.0
    %1908 = vmatpush.msra.mxu0 0.0
    %1909 = vmatpush.msra.mxu0 0.0
    %1910 = vmatpush.msra.mxu0 0.0
    %1911 = vmatpush.msra.mxu0 0.0
    %1912 = vmatpush.msra.mxu0 0.0
    %1913 = vmatpush.msra.mxu0 0.0
    %1914 = vmatpush.msra.mxu0 0.0
    %1915 = vmatpush.msra.mxu0 0.0
    %1916 = vmatpush.msra.mxu0 0.0
    %1917 = vmatpush.msra.mxu0 0.0
    %1918 = vmatpush.msra.mxu0 0.0
    %1919 = vmatpush.msra.mxu0 0.0
    %1920 = vmatpush.msra.mxu0 %v1665
    %1921 = vmatpush.msra.mxu0 %v1597
    %1922 = vmatmul.f32.gmra.mxu0 %v1629
    %v1923 = vpop.f32.mrf.mxu0
    %v1924 = vadd.f32 %v1620, %v1923
    %1925 = vmatmul.f32.gmra.mxu0 %v1632
    %v1926 = vpop.f32.mrf.mxu0
    %v1927 = vadd.f32 %v1625, %v1926
    %1928 = vdwg.mxu0
    %1929 = vmatpush.msra.mxu0 0.0
    %1930 = vmatpush.msra.mxu0 0.0
    %1931 = vmatpush.msra.mxu0 0.0
    %1932 = vmatpush.msra.mxu0 0.0
    %1933 = vmatpush.msra.mxu0 0.0
    %1934 = vmatpush.msra.mxu0 0.0
    %1935 = vmatpush.msra.mxu0 0.0
    %1936 = vmatpush.msra.mxu0 0.0
    %1937 = vmatpush.msra.mxu0 0.0
    %1938 = vmatpush.msra.mxu0 0.0
    %1939 = vmatpush.msra.mxu0 0.0
    %1940 = vmatpush.msra.mxu0 0.0
    %1941 = vmatpush.msra.mxu0 0.0
    %1942 = vmatpush.msra.mxu0 0.0
    %1943 = vmatpush.msra.mxu0 %v1668
    %1944 = vmatpush.msra.mxu0 %v1598
    %1945 = vmatmul.f32.gmra.mxu0 %v1629
    %v1946 = vpop.f32.mrf.mxu0
    %v1947 = vadd.f32 %v1620, %v1946
    %1948 = vmatmul.f32.gmra.mxu0 %v1632
    %v1949 = vpop.f32.mrf.mxu0
    %v1950 = vadd.f32 %v1625, %v1949
    %1951 = vdwg.mxu0
    %1952 = vmatpush.msra.mxu0 0.0
    %1953 = vmatpush.msra.mxu0 0.0
    %1954 = vmatpush.msra.mxu0 0.0
    %1955 = vmatpush.msra.mxu0 0.0
    %1956 = vmatpush.msra.mxu0 0.0
    %1957 = vmatpush.msra.mxu0 0.0
    %1958 = vmatpush.msra.mxu0 0.0
    %1959 = vmatpush.msra.mxu0 0.0
    %1960 = vmatpush.msra.mxu0 0.0
    %1961 = vmatpush.msra.mxu0 0.0
    %1962 = vmatpush.msra.mxu0 0.0
    %1963 = vmatpush.msra.mxu0 0.0
    %1964 = vmatpush.msra.mxu0 0.0
    %1965 = vmatpush.msra.mxu0 0.0
    %1966 = vmatpush.msra.mxu0 %v1671
    %1967 = vmatpush.msra.mxu0 %v1599
    %1968 = vmatmul.f32.gmra.mxu0 %v1629
    %v1969 = vpop.f32.mrf.mxu0
    %v1970 = vadd.f32 %v1620, %v1969
    %1971 = vmatmul.f32.gmra.mxu0 %v1632
    %v1972 = vpop.f32.mrf.mxu0
    %v1973 = vadd.f32 %v1625, %v1972
    %1974 = vdwg.mxu0
    %1975 = vmatpush.msra.mxu0 0.0
    %1976 = vmatpush.msra.mxu0 0.0
    %1977 = vmatpush.msra.mxu0 0.0
    %1978 = vmatpush.msra.mxu0 0.0
    %1979 = vmatpush.msra.mxu0 0.0
    %1980 = vmatpush.msra.mxu0 0.0
    %1981 = vmatpush.msra.mxu0 0.0
    %1982 = vmatpush.msra.mxu0 0.0
    %1983 = vmatpush.msra.mxu0 0.0
    %1984 = vmatpush.msra.mxu0 0.0
    %1985 = vmatpush.msra.mxu0 0.0
    %1986 = vmatpush.msra.mxu0 0.0
    %1987 = vmatpush.msra.mxu0 0.0
    %1988 = vmatpush.msra.mxu0 0.0
    %1989 = vmatpush.msra.mxu0 %v1674
    %1990 = vmatpush.msra.mxu0 %v1600
    %1991 = vmatmul.f32.gmra.mxu0 %v1629
    %v1992 = vpop.f32.mrf.mxu0
    %v1993 = vadd.f32 %v1620, %v1992
    %1994 = vmatmul.f32.gmra.mxu0 %v1632
    %v1995 = vpop.f32.mrf.mxu0
    %v1996 = vadd.f32 %v1625, %v1995
    %1997 = vdwg.mxu0
    %v1998 = vperm.slane %v94, 0
    %v1999 = vperm.slane %v95, 0
    %v2000 = vperm.slane %v96, 0
    %v2001 = vperm.slane %v97, 0
    %v2002 = vperm.slane %v98, 0
    %v2003 = vperm.slane %v99, 0
    %v2004 = vperm.slane %v100, 0
    %v2005 = vmul.f32 %v1694, %v1998
    %v2006 = vmul.f32 %v1717, %v1999
    %v2007 = vmul.f32 %v1740, %v2000
    %v2008 = vmul.f32 %v1763, %v2001
    %v2009 = vmul.f32 %v1786, %v2002
    %v2010 = vmul.f32 %v1809, %v2003
    %v2011 = vmul.f32 %v1832, %v2004
    %v2012 = vmul.f32 %v1855, %v1998
    %v2013 = vmul.f32 %v1878, %v1999
    %v2014 = vmul.f32 %v1901, %v2000
    %v2015 = vmul.f32 %v1924, %v2001
    %v2016 = vmul.f32 %v1947, %v2002
    %v2017 = vmul.f32 %v1970, %v2003
    %v2018 = vmul.f32 %v1993, %v2004
    %v2019 = vmul.f32 %v1697, %v1998
    %v2020 = vmul.f32 %v1720, %v1999
    %v2021 = vmul.f32 %v1743, %v2000
    %v2022 = vmul.f32 %v1766, %v2001
    %v2023 = vmul.f32 %v1789, %v2002
    %v2024 = vmul.f32 %v1812, %v2003
    %v2025 = vmul.f32 %v1835, %v2004
    %v2026 = vmul.f32 %v1858, %v1998
    %v2027 = vmul.f32 %v1881, %v1999
    %v2028 = vmul.f32 %v1904, %v2000
    %v2029 = vmul.f32 %v1927, %v2001
    %v2030 = vmul.f32 %v1950, %v2002
    %v2031 = vmul.f32 %v1973, %v2003
    %v2032 = vmul.f32 %v1996, %v2004
    %v2033 = vadd.f32 %v2005, %v2006
    %v2034 = vadd.f32 %v2033, %v2007
    %v2035 = vadd.f32 %v2034, %v2008
    %v2036 = vadd.f32 %v2035, %v2009
    %v2037 = vadd.f32 %v2036, %v2010
    %v2038 = vadd.f32 %v2037, %v2011
    %v2039 = vadd.f32 %v2038, %v2012
    %v2040 = vadd.f32 %v2039, %v2013
    %v2041 = vadd.f32 %v2040, %v2014
    %v2042 = vadd.f32 %v2041, %v2015
    %v2043 = vadd.f32 %v2042, %v2016
    %v2044 = vadd.f32 %v2043, %v2017
    %v2045 = vadd.f32 %v2044, %v2018
    %2046 = vadd.xlane.f32.xlu0 %v2045
    %v2047 = vpop.xlane.xlu0 %2046
    %v2048 = vsel %vm220, %v2019, 0.0
    %v2049 = vsel %vm220, %v2020, 0.0
    %v2050 = vadd.f32 %v2048, %v2049
    %v2051 = vsel %vm220, %v2021, 0.0
    %v2052 = vadd.f32 %v2050, %v2051
    %v2053 = vsel %vm220, %v2022, 0.0
    %v2054 = vadd.f32 %v2052, %v2053
    %v2055 = vsel %vm220, %v2023, 0.0
    %v2056 = vadd.f32 %v2054, %v2055
    %v2057 = vsel %vm220, %v2024, 0.0
    %v2058 = vadd.f32 %v2056, %v2057
    %v2059 = vsel %vm220, %v2025, 0.0
    %v2060 = vadd.f32 %v2058, %v2059
    %v2061 = vsel %vm220, %v2026, 0.0
    %v2062 = vadd.f32 %v2060, %v2061
    %v2063 = vsel %vm220, %v2027, 0.0
    %v2064 = vadd.f32 %v2062, %v2063
    %v2065 = vsel %vm220, %v2028, 0.0
    %v2066 = vadd.f32 %v2064, %v2065
    %v2067 = vsel %vm220, %v2029, 0.0
    %v2068 = vadd.f32 %v2066, %v2067
    %v2069 = vsel %vm220, %v2030, 0.0
    %v2070 = vadd.f32 %v2068, %v2069
    %v2071 = vsel %vm220, %v2031, 0.0
    %v2072 = vadd.f32 %v2070, %v2071
    %v2073 = vsel %vm220, %v2032, 0.0
    %v2074 = vadd.f32 %v2072, %v2073
    %2075 = vadd.xlane.f32.xlu0 %v2074
    %v2076 = vpop.xlane.xlu0 %2075
    %v2077 = vmul.f32 %v2005, %v2005
    %v2078 = vmul.f32 %v2006, %v2006
    %v2079 = vmul.f32 %v2007, %v2007
    %v2080 = vmul.f32 %v2008, %v2008
    %v2081 = vmul.f32 %v2009, %v2009
    %v2082 = vmul.f32 %v2010, %v2010
    %v2083 = vmul.f32 %v2011, %v2011
    %v2084 = vmul.f32 %v2012, %v2012
    %v2085 = vmul.f32 %v2013, %v2013
    %v2086 = vmul.f32 %v2014, %v2014
    %v2087 = vmul.f32 %v2015, %v2015
    %v2088 = vmul.f32 %v2016, %v2016
    %v2089 = vmul.f32 %v2017, %v2017
    %v2090 = vmul.f32 %v2018, %v2018
    %v2091 = vmul.f32 %v2019, %v2019
    %v2092 = vmul.f32 %v2020, %v2020
    %v2093 = vmul.f32 %v2021, %v2021
    %v2094 = vmul.f32 %v2022, %v2022
    %v2095 = vmul.f32 %v2023, %v2023
    %v2096 = vmul.f32 %v2024, %v2024
    %v2097 = vmul.f32 %v2025, %v2025
    %v2098 = vmul.f32 %v2026, %v2026
    %v2099 = vmul.f32 %v2027, %v2027
    %v2100 = vmul.f32 %v2028, %v2028
    %v2101 = vmul.f32 %v2029, %v2029
    %v2102 = vmul.f32 %v2030, %v2030
    %v2103 = vmul.f32 %v2031, %v2031
    %v2104 = vmul.f32 %v2032, %v2032
    %v2105 = vadd.f32 %v2077, %v2078
    %v2106 = vadd.f32 %v2105, %v2079
    %v2107 = vadd.f32 %v2106, %v2080
    %v2108 = vadd.f32 %v2107, %v2081
    %v2109 = vadd.f32 %v2108, %v2082
    %v2110 = vadd.f32 %v2109, %v2083
    %v2111 = vadd.f32 %v2110, %v2084
    %v2112 = vadd.f32 %v2111, %v2085
    %v2113 = vadd.f32 %v2112, %v2086
    %v2114 = vadd.f32 %v2113, %v2087
    %v2115 = vadd.f32 %v2114, %v2088
    %v2116 = vadd.f32 %v2115, %v2089
    %v2117 = vadd.f32 %v2116, %v2090
    %2118 = vadd.xlane.f32.xlu0 %v2117
    %v2119 = vpop.xlane.xlu0 %2118
    %v2120 = vsel %vm220, %v2091, 0.0
    %v2121 = vsel %vm220, %v2092, 0.0
    %v2122 = vadd.f32 %v2120, %v2121
    %v2123 = vsel %vm220, %v2093, 0.0
    %v2124 = vadd.f32 %v2122, %v2123
    %v2125 = vsel %vm220, %v2094, 0.0
    %v2126 = vadd.f32 %v2124, %v2125
    %v2127 = vsel %vm220, %v2095, 0.0
    %v2128 = vadd.f32 %v2126, %v2127
    %v2129 = vsel %vm220, %v2096, 0.0
    %v2130 = vadd.f32 %v2128, %v2129
    %v2131 = vsel %vm220, %v2097, 0.0
    %v2132 = vadd.f32 %v2130, %v2131
    %v2133 = vsel %vm220, %v2098, 0.0
    %v2134 = vadd.f32 %v2132, %v2133
    %v2135 = vsel %vm220, %v2099, 0.0
    %v2136 = vadd.f32 %v2134, %v2135
    %v2137 = vsel %vm220, %v2100, 0.0
    %v2138 = vadd.f32 %v2136, %v2137
    %v2139 = vsel %vm220, %v2101, 0.0
    %v2140 = vadd.f32 %v2138, %v2139
    %v2141 = vsel %vm220, %v2102, 0.0
    %v2142 = vadd.f32 %v2140, %v2141
    %v2143 = vsel %vm220, %v2103, 0.0
    %v2144 = vadd.f32 %v2142, %v2143
    %v2145 = vsel %vm220, %v2104, 0.0
    %v2146 = vadd.f32 %v2144, %v2145
    %2147 = vadd.xlane.f32.xlu0 %v2146
    %v2148 = vpop.xlane.xlu0 %2147
    %v2149 = vmul.f32 %v2047, 0.0006377551
    %v2150 = vmul.f32 %v2076, 0.0006377551
    %v2151 = vmul.f32 %v2119, 0.0006377551
    %v2152 = vmul.f32 %v2148, 0.0006377551
    %v2153 = vmul.f32 %v2149, %v2149
    %v2154 = vmul.f32 %v2150, %v2150
    %v2155 = vsub.f32 %v2151, %v2153
    %v2156 = vsub.f32 %v2152, %v2154
    %v2157 = vld [vmem:[%s8] sm:$0xff]
    %v2158 = vld [vmem:[%s8 + $0x8] sm:$0xf]
    %v2159 = vadd.f32 %v2155, 1e-05
    %v2160 = vadd.f32 %v2156, 1e-05
    %v2161 = vrsqrt.pop %v2159
    %v2162 = vmul.f32 %v2161, %v2159
    %v2163 = vmul.f32 %v2162, %v2161
    %v2164 = vmul.f32 0.5, %v2163
    %v2165 = vsub.f32 1.5, %v2164
    %v2166 = vmul.f32 %v2161, %v2165
    %vm2167 = vweird.f32 %v2159
    %vm2168 = vweird.f32 %v2161
    %vm2169 = vmor %vm2167, %vm2168
    %v2170 = vsel %vm2169, %v2161, %v2166
    %v2171 = vrsqrt.pop %v2160
    %v2172 = vmul.f32 %v2171, %v2160
    %v2173 = vmul.f32 %v2172, %v2171
    %v2174 = vmul.f32 0.5, %v2173
    %v2175 = vsub.f32 1.5, %v2174
    %v2176 = vmul.f32 %v2171, %v2175
    %vm2177 = vweird.f32 %v2160
    %vm2178 = vweird.f32 %v2171
    %vm2179 = vmor %vm2177, %vm2178
    %v2180 = vsel %vm2179, %v2171, %v2176
    %v2181 = vmul.f32 %v2157, %v2170
    %v2182 = vmul.f32 %v2158, %v2180
    %v2183 = vld [vmem:[%s9] sm:$0xff]
    %v2184 = vld [vmem:[%s9 + $0x8] sm:$0xf]
    %v2185 = vmul.f32 %v2149, %v2181
    %v2186 = vmul.f32 %v2150, %v2182
    %v2187 = vsub.f32 %v2183, %v2185
    %v2188 = vsub.f32 %v2184, %v2186
    %2190 = vset.pattern.permute.xlu0 0
    %2191 = vperm.xlu0 %2190, %v2181
    %v2192 = vpop.permute.xlu0 %2191
    %2195 = vset.pattern.permute.xlu0 0
    %2196 = vperm.xlu0 %2195, %v2182
    %v2197 = vpop.permute.xlu0 %2196
    %v2199 = vmul.f32 %v2005, %v2192
    %v2200 = vmul.f32 %v2006, %v2192
    %v2201 = vmul.f32 %v2007, %v2192
    %v2202 = vmul.f32 %v2008, %v2192
    %v2203 = vmul.f32 %v2009, %v2192
    %v2204 = vmul.f32 %v2010, %v2192
    %v2205 = vmul.f32 %v2011, %v2192
    %v2206 = vmul.f32 %v2012, %v2192
    %v2207 = vmul.f32 %v2013, %v2192
    %v2208 = vmul.f32 %v2014, %v2192
    %v2209 = vmul.f32 %v2015, %v2192
    %v2210 = vmul.f32 %v2016, %v2192
    %v2211 = vmul.f32 %v2017, %v2192
    %v2212 = vmul.f32 %v2018, %v2192
    %v2213 = vmul.f32 %v2019, %v2197
    %v2214 = vmul.f32 %v2020, %v2197
    %v2215 = vmul.f32 %v2021, %v2197
    %v2216 = vmul.f32 %v2022, %v2197
    %v2217 = vmul.f32 %v2023, %v2197
    %v2218 = vmul.f32 %v2024, %v2197
    %v2219 = vmul.f32 %v2025, %v2197
    %v2220 = vmul.f32 %v2026, %v2197
    %v2221 = vmul.f32 %v2027, %v2197
    %v2222 = vmul.f32 %v2028, %v2197
    %v2223 = vmul.f32 %v2029, %v2197
    %v2224 = vmul.f32 %v2030, %v2197
    %v2225 = vmul.f32 %v2031, %v2197
    %v2226 = vmul.f32 %v2032, %v2197
    %2228 = vset.pattern.permute.xlu0 0
    %2229 = vperm.xlu0 %2228, %v2187
    %v2230 = vpop.permute.xlu0 %2229
    %2233 = vset.pattern.permute.xlu0 0
    %2234 = vperm.xlu0 %2233, %v2188
    %v2235 = vpop.permute.xlu0 %2234
    %v2237 = vadd.f32 %v2199, %v2230
    %v2238 = vadd.f32 %v2200, %v2230
    %v2239 = vadd.f32 %v2201, %v2230
    %v2240 = vadd.f32 %v2202, %v2230
    %v2241 = vadd.f32 %v2203, %v2230
    %v2242 = vadd.f32 %v2204, %v2230
    %v2243 = vadd.f32 %v2205, %v2230
    %v2244 = vadd.f32 %v2206, %v2230
    %v2245 = vadd.f32 %v2207, %v2230
    %v2246 = vadd.f32 %v2208, %v2230
    %v2247 = vadd.f32 %v2209, %v2230
    %v2248 = vadd.f32 %v2210, %v2230
    %v2249 = vadd.f32 %v2211, %v2230
    %v2250 = vadd.f32 %v2212, %v2230
    %v2251 = vadd.f32 %v2213, %v2235
    %v2252 = vadd.f32 %v2214, %v2235
    %v2253 = vadd.f32 %v2215, %v2235
    %v2254 = vadd.f32 %v2216, %v2235
    %v2255 = vadd.f32 %v2217, %v2235
    %v2256 = vadd.f32 %v2218, %v2235
    %v2257 = vadd.f32 %v2219, %v2235
    %v2258 = vadd.f32 %v2220, %v2235
    %v2259 = vadd.f32 %v2221, %v2235
    %v2260 = vadd.f32 %v2222, %v2235
    %v2261 = vadd.f32 %v2223, %v2235
    %v2262 = vadd.f32 %v2224, %v2235
    %v2263 = vadd.f32 %v2225, %v2235
    %v2264 = vadd.f32 %v2226, %v2235
    %v2265 = vmax.f32 %v2237, 0.0
    %v2266 = vmax.f32 %v2238, 0.0
    %v2267 = vmax.f32 %v2239, 0.0
    %v2268 = vmax.f32 %v2240, 0.0
    %v2269 = vmax.f32 %v2241, 0.0
    %v2270 = vmax.f32 %v2242, 0.0
    %v2271 = vmax.f32 %v2243, 0.0
    %v2272 = vmax.f32 %v2244, 0.0
    %v2273 = vmax.f32 %v2245, 0.0
    %v2274 = vmax.f32 %v2246, 0.0
    %v2275 = vmax.f32 %v2247, 0.0
    %v2276 = vmax.f32 %v2248, 0.0
    %v2277 = vmax.f32 %v2249, 0.0
    %v2278 = vmax.f32 %v2250, 0.0
    %v2279 = vmax.f32 %v2251, 0.0
    %v2280 = vmax.f32 %v2252, 0.0
    %v2281 = vmax.f32 %v2253, 0.0
    %v2282 = vmax.f32 %v2254, 0.0
    %v2283 = vmax.f32 %v2255, 0.0
    %v2284 = vmax.f32 %v2256, 0.0
    %v2285 = vmax.f32 %v2257, 0.0
    %v2286 = vmax.f32 %v2258, 0.0
    %v2287 = vmax.f32 %v2259, 0.0
    %v2288 = vmax.f32 %v2260, 0.0
    %v2289 = vmax.f32 %v2261, 0.0
    %v2290 = vmax.f32 %v2262, 0.0
    %v2291 = vmax.f32 %v2263, 0.0
    %v2292 = vmax.f32 %v2264, 0.0
    %2293 = vrot.lane.b32.xlu0 %v2265, 29
    %v2294 = vpop.permute.xlu0 %2293
    %2295 = vrot.lane.b32.xlu0 %v2279, 29
    %v2296 = vpop.permute.xlu0 %2295
    %2297 = vrot.lane.b32.xlu0 %v2266, 29
    %v2298 = vpop.permute.xlu0 %2297
    %2299 = vrot.lane.b32.xlu0 %v2280, 29
    %v2300 = vpop.permute.xlu0 %2299
    %2301 = vrot.lane.b32.xlu0 %v2267, 29
    %v2302 = vpop.permute.xlu0 %2301
    %2303 = vrot.lane.b32.xlu0 %v2281, 29
    %v2304 = vpop.permute.xlu0 %2303
    %2305 = vrot.lane.b32.xlu0 %v2268, 29
    %v2306 = vpop.permute.xlu0 %2305
    %2307 = vrot.lane.b32.xlu0 %v2282, 29
    %v2308 = vpop.permute.xlu0 %2307
    %2309 = vrot.lane.b32.xlu0 %v2269, 29
    %v2310 = vpop.permute.xlu0 %2309
    %2311 = vrot.lane.b32.xlu0 %v2283, 29
    %v2312 = vpop.permute.xlu0 %2311
    %2313 = vrot.lane.b32.xlu0 %v2270, 29
    %v2314 = vpop.permute.xlu0 %2313
    %2315 = vrot.lane.b32.xlu0 %v2284, 29
    %v2316 = vpop.permute.xlu0 %2315
    %2317 = vrot.lane.b32.xlu0 %v2271, 29
    %v2318 = vpop.permute.xlu0 %2317
    %2319 = vrot.lane.b32.xlu0 %v2285, 29
    %v2320 = vpop.permute.xlu0 %2319
    %2321 = vrot.lane.b32.xlu0 %v2272, 29
    %v2322 = vpop.permute.xlu0 %2321
    %2323 = vrot.lane.b32.xlu0 %v2286, 29
    %v2324 = vpop.permute.xlu0 %2323
    %2325 = vrot.lane.b32.xlu0 %v2273, 29
    %v2326 = vpop.permute.xlu0 %2325
    %2327 = vrot.lane.b32.xlu0 %v2287, 29
    %v2328 = vpop.permute.xlu0 %2327
    %2329 = vrot.lane.b32.xlu0 %v2274, 29
    %v2330 = vpop.permute.xlu0 %2329
    %2331 = vrot.lane.b32.xlu0 %v2288, 29
    %v2332 = vpop.permute.xlu0 %2331
    %2333 = vrot.lane.b32.xlu0 %v2275, 29
    %v2334 = vpop.permute.xlu0 %2333
    %2335 = vrot.lane.b32.xlu0 %v2289, 29
    %v2336 = vpop.permute.xlu0 %2335
    %2337 = vrot.lane.b32.xlu0 %v2276, 29
    %v2338 = vpop.permute.xlu0 %2337
    %2339 = vrot.lane.b32.xlu0 %v2290, 29
    %v2340 = vpop.permute.xlu0 %2339
    %2341 = vrot.lane.b32.xlu0 %v2277, 29
    %v2342 = vpop.permute.xlu0 %2341
    %2343 = vrot.lane.b32.xlu0 %v2291, 29
    %v2344 = vpop.permute.xlu0 %2343
    %2345 = vrot.lane.b32.xlu0 %v2278, 29
    %v2346 = vpop.permute.xlu0 %2345
    %2347 = vrot.lane.b32.xlu0 %v2292, 29
    %v2348 = vpop.permute.xlu0 %2347
    %v2349 = vsel %vm643, %v2342, %v2346
    %v2350 = vsel %vm643, %v2344, %v2348
    %v2351 = vsel %vm643, %v2338, %v2342
    %v2352 = vsel %vm643, %v2340, %v2344
    %v2353 = vsel %vm643, %v2334, %v2338
    %v2354 = vsel %vm643, %v2336, %v2340
    %v2355 = vsel %vm643, %v2330, %v2334
    %v2356 = vsel %vm643, %v2332, %v2336
    %v2357 = vsel %vm643, %v2326, %v2330
    %v2358 = vsel %vm643, %v2328, %v2332
    %v2359 = vsel %vm643, %v2322, %v2326
    %v2360 = vsel %vm643, %v2324, %v2328
    %v2361 = vsel %vm643, %v2318, %v2322
    %v2362 = vsel %vm643, %v2320, %v2324
    %v2363 = vsel %vm643, %v2314, %v2318
    %v2364 = vsel %vm643, %v2316, %v2320
    %v2365 = vsel %vm643, %v2310, %v2314
    %v2366 = vsel %vm643, %v2312, %v2316
    %v2367 = vsel %vm643, %v2306, %v2310
    %v2368 = vsel %vm643, %v2308, %v2312
    %v2369 = vsel %vm643, %v2302, %v2306
    %v2370 = vsel %vm643, %v2304, %v2308
    %v2371 = vsel %vm643, %v2298, %v2302
    %v2372 = vsel %vm643, %v2300, %v2304
    %v2373 = vsel %vm643, %v2294, %v2298
    %v2374 = vsel %vm643, %v2296, %v2300
    %v2375 = vsel %vm643, %v2346, %v2294
    %v2376 = vsel %vm643, %v2348, %v2296
    %v2377 = vld [vmem:[#allocation9] sm:$0xff]
    %v2379 = vperm.slane %v2377, 0
    %v2380 = vperm.slane %v2377, 1
    %v2381 = vperm.slane %v2377, 2
    %v2382 = vperm.slane %v2377, 3
    %v2383 = vperm.slane %v2377, 4
    %v2384 = vperm.slane %v2377, 5
    %v2385 = vperm.slane %v2377, 6
    %v2393 = vperm.slane %v2379, 0
    %v2394 = vperm.slane %v2380, 0
    %v2395 = vperm.slane %v2381, 0
    %v2396 = vperm.slane %v2382, 0
    %v2397 = vperm.slane %v2383, 0
    %v2398 = vperm.slane %v2384, 0
    %v2399 = vperm.slane %v2385, 0
    %v2400 = vmul.f32 %v2375, %v2393
    %v2401 = vmul.f32 %v2373, %v2394
    %v2402 = vmul.f32 %v2371, %v2395
    %v2403 = vmul.f32 %v2369, %v2396
    %v2404 = vmul.f32 %v2367, %v2397
    %v2405 = vmul.f32 %v2365, %v2398
    %v2406 = vmul.f32 %v2363, %v2399
    %v2407 = vmul.f32 %v2361, %v2393
    %v2408 = vmul.f32 %v2359, %v2394
    %v2409 = vmul.f32 %v2357, %v2395
    %v2410 = vmul.f32 %v2355, %v2396
    %v2411 = vmul.f32 %v2353, %v2397
    %v2412 = vmul.f32 %v2351, %v2398
    %v2413 = vmul.f32 %v2349, %v2399
    %v2414 = vmul.f32 %v2376, %v2393
    %v2415 = vmul.f32 %v2374, %v2394
    %v2416 = vmul.f32 %v2372, %v2395
    %v2417 = vmul.f32 %v2370, %v2396
    %v2418 = vmul.f32 %v2368, %v2397
    %v2419 = vmul.f32 %v2366, %v2398
    %v2420 = vmul.f32 %v2364, %v2399
    %v2421 = vmul.f32 %v2362, %v2393
    %v2422 = vmul.f32 %v2360, %v2394
    %v2423 = vmul.f32 %v2358, %v2395
    %v2424 = vmul.f32 %v2356, %v2396
    %v2425 = vmul.f32 %v2354, %v2397
    %v2426 = vmul.f32 %v2352, %v2398
    %v2427 = vmul.f32 %v2350, %v2399
    %2428 = vst [vmem:[#allocation2] sm:$0xff] %v2400
    %2429 = vst [vmem:[#allocation2 + $0x8] sm:$0xff] %v2401
    %2430 = vst [vmem:[#allocation2 + $0x10] sm:$0xff] %v2402
    %2431 = vst [vmem:[#allocation2 + $0x18] sm:$0xff] %v2403
    %2432 = vst [vmem:[#allocation2 + $0x20] sm:$0xff] %v2404
    %2433 = vst [vmem:[#allocation2 + $0x28] sm:$0xff] %v2405
    %2434 = vst [vmem:[#allocation2 + $0x30] sm:$0xff] %v2406
    %2435 = vst [vmem:[#allocation2 + $0x38] sm:$0xff] %v2407
    %2436 = vst [vmem:[#allocation2 + $0x40] sm:$0xff] %v2408
    %2437 = vst [vmem:[#allocation2 + $0x48] sm:$0xff] %v2409
    %2438 = vst [vmem:[#allocation2 + $0x50] sm:$0xff] %v2410
    %2439 = vst [vmem:[#allocation2 + $0x58] sm:$0xff] %v2411
    %2440 = vst [vmem:[#allocation2 + $0x60] sm:$0xff] %v2412
    %2441 = vst [vmem:[#allocation2 + $0x68] sm:$0xff] %v2413
    %2442 = vst [vmem:[#allocation2 + $0x70] sm:$0xf] %v2414
    %2443 = vst [vmem:[#allocation2 + $0x78] sm:$0xf] %v2415
    %2444 = vst [vmem:[#allocation2 + $0x80] sm:$0xf] %v2416
    %2445 = vst [vmem:[#allocation2 + $0x88] sm:$0xf] %v2417
    %2446 = vst [vmem:[#allocation2 + $0x90] sm:$0xf] %v2418
    %2447 = vst [vmem:[#allocation2 + $0x98] sm:$0xf] %v2419
    %2448 = vst [vmem:[#allocation2 + $0xa0] sm:$0xf] %v2420
    %2449 = vst [vmem:[#allocation2 + $0xa8] sm:$0xf] %v2421
    %2450 = vst [vmem:[#allocation2 + $0xb0] sm:$0xf] %v2422
    %2451 = vst [vmem:[#allocation2 + $0xb8] sm:$0xf] %v2423
    %2452 = vst [vmem:[#allocation2 + $0xc0] sm:$0xf] %v2424
    %2453 = vst [vmem:[#allocation2 + $0xc8] sm:$0xf] %v2425
    %2454 = vst [vmem:[#allocation2 + $0xd0] sm:$0xf] %v2426
    %2455 = vst [vmem:[#allocation2 + $0xd8] sm:$0xf] %v2427
    %2456 = vrot.lane.b32.xlu0 %v2265, 28
    %v2457 = vpop.permute.xlu0 %2456
    %2458 = vrot.lane.b32.xlu0 %v2279, 28
    %v2459 = vpop.permute.xlu0 %2458
    %2460 = vrot.lane.b32.xlu0 %v2266, 28
    %v2461 = vpop.permute.xlu0 %2460
    %2462 = vrot.lane.b32.xlu0 %v2280, 28
    %v2463 = vpop.permute.xlu0 %2462
    %2464 = vrot.lane.b32.xlu0 %v2267, 28
    %v2465 = vpop.permute.xlu0 %2464
    %2466 = vrot.lane.b32.xlu0 %v2281, 28
    %v2467 = vpop.permute.xlu0 %2466
    %2468 = vrot.lane.b32.xlu0 %v2268, 28
    %v2469 = vpop.permute.xlu0 %2468
    %2470 = vrot.lane.b32.xlu0 %v2282, 28
    %v2471 = vpop.permute.xlu0 %2470
    %2472 = vrot.lane.b32.xlu0 %v2269, 28
    %v2473 = vpop.permute.xlu0 %2472
    %2474 = vrot.lane.b32.xlu0 %v2283, 28
    %v2475 = vpop.permute.xlu0 %2474
    %2476 = vrot.lane.b32.xlu0 %v2270, 28
    %v2477 = vpop.permute.xlu0 %2476
    %2478 = vrot.lane.b32.xlu0 %v2284, 28
    %v2479 = vpop.permute.xlu0 %2478
    %2480 = vrot.lane.b32.xlu0 %v2271, 28
    %v2481 = vpop.permute.xlu0 %2480
    %2482 = vrot.lane.b32.xlu0 %v2285, 28
    %v2483 = vpop.permute.xlu0 %2482
    %2484 = vrot.lane.b32.xlu0 %v2272, 28
    %v2485 = vpop.permute.xlu0 %2484
    %2486 = vrot.lane.b32.xlu0 %v2286, 28
    %v2487 = vpop.permute.xlu0 %2486
    %2488 = vrot.lane.b32.xlu0 %v2273, 28
    %v2489 = vpop.permute.xlu0 %2488
    %2490 = vrot.lane.b32.xlu0 %v2287, 28
    %v2491 = vpop.permute.xlu0 %2490
    %2492 = vrot.lane.b32.xlu0 %v2274, 28
    %v2493 = vpop.permute.xlu0 %2492
    %2494 = vrot.lane.b32.xlu0 %v2288, 28
    %v2495 = vpop.permute.xlu0 %2494
    %2496 = vrot.lane.b32.xlu0 %v2275, 28
    %v2497 = vpop.permute.xlu0 %2496
    %2498 = vrot.lane.b32.xlu0 %v2289, 28
    %v2499 = vpop.permute.xlu0 %2498
    %2500 = vrot.lane.b32.xlu0 %v2276, 28
    %v2501 = vpop.permute.xlu0 %2500
    %2502 = vrot.lane.b32.xlu0 %v2290, 28
    %v2503 = vpop.permute.xlu0 %2502
    %2504 = vrot.lane.b32.xlu0 %v2277, 28
    %v2505 = vpop.permute.xlu0 %2504
    %2506 = vrot.lane.b32.xlu0 %v2291, 28
    %v2507 = vpop.permute.xlu0 %2506
    %2508 = vrot.lane.b32.xlu0 %v2278, 28
    %v2509 = vpop.permute.xlu0 %2508
    %2510 = vrot.lane.b32.xlu0 %v2292, 28
    %v2511 = vpop.permute.xlu0 %2510
    %v2512 = vsel %vm767, %v2505, %v2509
    %v2513 = vsel %vm767, %v2507, %v2511
    %v2514 = vsel %vm767, %v2501, %v2505
    %v2515 = vsel %vm767, %v2503, %v2507
    %v2516 = vsel %vm767, %v2497, %v2501
    %v2517 = vsel %vm767, %v2499, %v2503
    %v2518 = vsel %vm767, %v2493, %v2497
    %v2519 = vsel %vm767, %v2495, %v2499
    %v2520 = vsel %vm767, %v2489, %v2493
    %v2521 = vsel %vm767, %v2491, %v2495
    %v2522 = vsel %vm767, %v2485, %v2489
    %v2523 = vsel %vm767, %v2487, %v2491
    %v2524 = vsel %vm767, %v2481, %v2485
    %v2525 = vsel %vm767, %v2483, %v2487
    %v2526 = vsel %vm767, %v2477, %v2481
    %v2527 = vsel %vm767, %v2479, %v2483
    %v2528 = vsel %vm767, %v2473, %v2477
    %v2529 = vsel %vm767, %v2475, %v2479
    %v2530 = vsel %vm767, %v2469, %v2473
    %v2531 = vsel %vm767, %v2471, %v2475
    %v2532 = vsel %vm767, %v2465, %v2469
    %v2533 = vsel %vm767, %v2467, %v2471
    %v2534 = vsel %vm767, %v2461, %v2465
    %v2535 = vsel %vm767, %v2463, %v2467
    %v2536 = vsel %vm767, %v2457, %v2461
    %v2537 = vsel %vm767, %v2459, %v2463
    %v2538 = vsel %vm767, %v2509, %v2457
    %v2539 = vsel %vm767, %v2511, %v2459
    %v2540 = vld [vmem:[%s782] sm:$0xff]
    %v2542 = vperm.slane %v2540, 0
    %v2543 = vperm.slane %v2540, 1
    %v2544 = vperm.slane %v2540, 2
    %v2545 = vperm.slane %v2540, 3
    %v2546 = vperm.slane %v2540, 4
    %v2547 = vperm.slane %v2540, 5
    %v2548 = vperm.slane %v2540, 6
    %v2556 = vperm.slane %v2542, 0
    %v2557 = vperm.slane %v2543, 0
    %v2558 = vperm.slane %v2544, 0
    %v2559 = vperm.slane %v2545, 0
    %v2560 = vperm.slane %v2546, 0
    %v2561 = vperm.slane %v2547, 0
    %v2562 = vperm.slane %v2548, 0
    %v2563 = vmul.f32 %v2538, %v2556
    %v2564 = vmul.f32 %v2536, %v2557
    %v2565 = vmul.f32 %v2534, %v2558
    %v2566 = vmul.f32 %v2532, %v2559
    %v2567 = vmul.f32 %v2530, %v2560
    %v2568 = vmul.f32 %v2528, %v2561
    %v2569 = vmul.f32 %v2526, %v2562
    %v2570 = vmul.f32 %v2524, %v2556
    %v2571 = vmul.f32 %v2522, %v2557
    %v2572 = vmul.f32 %v2520, %v2558
    %v2573 = vmul.f32 %v2518, %v2559
    %v2574 = vmul.f32 %v2516, %v2560
    %v2575 = vmul.f32 %v2514, %v2561
    %v2576 = vmul.f32 %v2512, %v2562
    %v2577 = vmul.f32 %v2539, %v2556
    %v2578 = vmul.f32 %v2537, %v2557
    %v2579 = vmul.f32 %v2535, %v2558
    %v2580 = vmul.f32 %v2533, %v2559
    %v2581 = vmul.f32 %v2531, %v2560
    %v2582 = vmul.f32 %v2529, %v2561
    %v2583 = vmul.f32 %v2527, %v2562
    %v2584 = vmul.f32 %v2525, %v2556
    %v2585 = vmul.f32 %v2523, %v2557
    %v2586 = vmul.f32 %v2521, %v2558
    %v2587 = vmul.f32 %v2519, %v2559
    %v2588 = vmul.f32 %v2517, %v2560
    %v2589 = vmul.f32 %v2515, %v2561
    %v2590 = vmul.f32 %v2513, %v2562
    %v2619 = vrot.slane %v2563, 4
    %v2620 = vrot.slane %v2564, 4
    %v2621 = vrot.slane %v2565, 4
    %v2622 = vrot.slane %v2566, 4
    %v2623 = vrot.slane %v2567, 4
    %v2624 = vrot.slane %v2568, 4
    %v2625 = vrot.slane %v2569, 4
    %v2626 = vrot.slane %v2570, 4
    %v2627 = vrot.slane %v2571, 4
    %v2628 = vrot.slane %v2572, 4
    %v2629 = vrot.slane %v2573, 4
    %v2630 = vrot.slane %v2574, 4
    %v2631 = vrot.slane %v2575, 4
    %v2632 = vrot.slane %v2576, 4
    %v2633 = vrot.slane %v2577, 4
    %v2634 = vsel %vm220, %v2619, %v2633
    %v2635 = vrot.slane %v2578, 4
    %v2636 = vsel %vm220, %v2620, %v2635
    %v2637 = vrot.slane %v2579, 4
    %v2638 = vsel %vm220, %v2621, %v2637
    %v2639 = vrot.slane %v2580, 4
    %v2640 = vsel %vm220, %v2622, %v2639
    %v2641 = vrot.slane %v2581, 4
    %v2642 = vsel %vm220, %v2623, %v2641
    %v2643 = vrot.slane %v2582, 4
    %v2644 = vsel %vm220, %v2624, %v2643
    %v2645 = vrot.slane %v2583, 4
    %v2646 = vsel %vm220, %v2625, %v2645
    %v2647 = vrot.slane %v2584, 4
    %v2648 = vsel %vm220, %v2626, %v2647
    %v2649 = vrot.slane %v2585, 4
    %v2650 = vsel %vm220, %v2627, %v2649
    %v2651 = vrot.slane %v2586, 4
    %v2652 = vsel %vm220, %v2628, %v2651
    %v2653 = vrot.slane %v2587, 4
    %v2654 = vsel %vm220, %v2629, %v2653
    %v2655 = vrot.slane %v2588, 4
    %v2656 = vsel %vm220, %v2630, %v2655
    %v2657 = vrot.slane %v2589, 4
    %v2658 = vsel %vm220, %v2631, %v2657
    %v2659 = vrot.slane %v2590, 4
    %v2660 = vsel %vm220, %v2632, %v2659
    %2689 = vst [vmem:[#allocation2 + $0x70] sm:$0xf0] %v2619
    %2690 = vst [vmem:[#allocation2 + $0x78] sm:$0xf0] %v2620
    %2691 = vst [vmem:[#allocation2 + $0x80] sm:$0xf0] %v2621
    %2692 = vst [vmem:[#allocation2 + $0x88] sm:$0xf0] %v2622
    %2693 = vst [vmem:[#allocation2 + $0x90] sm:$0xf0] %v2623
    %2694 = vst [vmem:[#allocation2 + $0x98] sm:$0xf0] %v2624
    %2695 = vst [vmem:[#allocation2 + $0xa0] sm:$0xf0] %v2625
    %2696 = vst [vmem:[#allocation2 + $0xa8] sm:$0xf0] %v2626
    %2697 = vst [vmem:[#allocation2 + $0xb0] sm:$0xf0] %v2627
    %2698 = vst [vmem:[#allocation2 + $0xb8] sm:$0xf0] %v2628
    %2699 = vst [vmem:[#allocation2 + $0xc0] sm:$0xf0] %v2629
    %2700 = vst [vmem:[#allocation2 + $0xc8] sm:$0xf0] %v2630
    %2701 = vst [vmem:[#allocation2 + $0xd0] sm:$0xf0] %v2631
    %2702 = vst [vmem:[#allocation2 + $0xd8] sm:$0xf0] %v2632
    %2703 = vst [vmem:[#allocation2 + $0xe0] sm:$0xff] %v2634
    %2704 = vst [vmem:[#allocation2 + $0xe8] sm:$0xff] %v2636
    %2705 = vst [vmem:[#allocation2 + $0xf0] sm:$0xff] %v2638
    %2706 = vst [vmem:[#allocation2 + $0xf8] sm:$0xff] %v2640
    %2707 = vst [vmem:[#allocation2 + $0x100] sm:$0xff] %v2642
    %2708 = vst [vmem:[#allocation2 + $0x108] sm:$0xff] %v2644
    %2709 = vst [vmem:[#allocation2 + $0x110] sm:$0xff] %v2646
    %2710 = vst [vmem:[#allocation2 + $0x118] sm:$0xff] %v2648
    %2711 = vst [vmem:[#allocation2 + $0x120] sm:$0xff] %v2650
    %2712 = vst [vmem:[#allocation2 + $0x128] sm:$0xff] %v2652
    %2713 = vst [vmem:[#allocation2 + $0x130] sm:$0xff] %v2654
    %2714 = vst [vmem:[#allocation2 + $0x138] sm:$0xff] %v2656
    %2715 = vst [vmem:[#allocation2 + $0x140] sm:$0xff] %v2658
    %2716 = vst [vmem:[#allocation2 + $0x148] sm:$0xff] %v2660
    %2717 = vrot.lane.b32.xlu0 %v2265, 27
    %v2718 = vpop.permute.xlu0 %2717
    %2719 = vrot.lane.b32.xlu0 %v2279, 27
    %v2720 = vpop.permute.xlu0 %2719
    %2721 = vrot.lane.b32.xlu0 %v2266, 27
    %v2722 = vpop.permute.xlu0 %2721
    %2723 = vrot.lane.b32.xlu0 %v2280, 27
    %v2724 = vpop.permute.xlu0 %2723
    %2725 = vrot.lane.b32.xlu0 %v2267, 27
    %v2726 = vpop.permute.xlu0 %2725
    %2727 = vrot.lane.b32.xlu0 %v2281, 27
    %v2728 = vpop.permute.xlu0 %2727
    %2729 = vrot.lane.b32.xlu0 %v2268, 27
    %v2730 = vpop.permute.xlu0 %2729
    %2731 = vrot.lane.b32.xlu0 %v2282, 27
    %v2732 = vpop.permute.xlu0 %2731
    %2733 = vrot.lane.b32.xlu0 %v2269, 27
    %v2734 = vpop.permute.xlu0 %2733
    %2735 = vrot.lane.b32.xlu0 %v2283, 27
    %v2736 = vpop.permute.xlu0 %2735
    %2737 = vrot.lane.b32.xlu0 %v2270, 27
    %v2738 = vpop.permute.xlu0 %2737
    %2739 = vrot.lane.b32.xlu0 %v2284, 27
    %v2740 = vpop.permute.xlu0 %2739
    %2741 = vrot.lane.b32.xlu0 %v2271, 27
    %v2742 = vpop.permute.xlu0 %2741
    %2743 = vrot.lane.b32.xlu0 %v2285, 27
    %v2744 = vpop.permute.xlu0 %2743
    %2745 = vrot.lane.b32.xlu0 %v2272, 27
    %v2746 = vpop.permute.xlu0 %2745
    %2747 = vrot.lane.b32.xlu0 %v2286, 27
    %v2748 = vpop.permute.xlu0 %2747
    %2749 = vrot.lane.b32.xlu0 %v2273, 27
    %v2750 = vpop.permute.xlu0 %2749
    %2751 = vrot.lane.b32.xlu0 %v2287, 27
    %v2752 = vpop.permute.xlu0 %2751
    %2753 = vrot.lane.b32.xlu0 %v2274, 27
    %v2754 = vpop.permute.xlu0 %2753
    %2755 = vrot.lane.b32.xlu0 %v2288, 27
    %v2756 = vpop.permute.xlu0 %2755
    %2757 = vrot.lane.b32.xlu0 %v2275, 27
    %v2758 = vpop.permute.xlu0 %2757
    %2759 = vrot.lane.b32.xlu0 %v2289, 27
    %v2760 = vpop.permute.xlu0 %2759
    %2761 = vrot.lane.b32.xlu0 %v2276, 27
    %v2762 = vpop.permute.xlu0 %2761
    %2763 = vrot.lane.b32.xlu0 %v2290, 27
    %v2764 = vpop.permute.xlu0 %2763
    %2765 = vrot.lane.b32.xlu0 %v2277, 27
    %v2766 = vpop.permute.xlu0 %2765
    %2767 = vrot.lane.b32.xlu0 %v2291, 27
    %v2768 = vpop.permute.xlu0 %2767
    %2769 = vrot.lane.b32.xlu0 %v2278, 27
    %v2770 = vpop.permute.xlu0 %2769
    %2771 = vrot.lane.b32.xlu0 %v2292, 27
    %v2772 = vpop.permute.xlu0 %2771
    %v2773 = vsel %vm887, %v2766, %v2770
    %v2774 = vsel %vm887, %v2768, %v2772
    %v2775 = vsel %vm887, %v2762, %v2766
    %v2776 = vsel %vm887, %v2764, %v2768
    %v2777 = vsel %vm887, %v2758, %v2762
    %v2778 = vsel %vm887, %v2760, %v2764
    %v2779 = vsel %vm887, %v2754, %v2758
    %v2780 = vsel %vm887, %v2756, %v2760
    %v2781 = vsel %vm887, %v2750, %v2754
    %v2782 = vsel %vm887, %v2752, %v2756
    %v2783 = vsel %vm887, %v2746, %v2750
    %v2784 = vsel %vm887, %v2748, %v2752
    %v2785 = vsel %vm887, %v2742, %v2746
    %v2786 = vsel %vm887, %v2744, %v2748
    %v2787 = vsel %vm887, %v2738, %v2742
    %v2788 = vsel %vm887, %v2740, %v2744
    %v2789 = vsel %vm887, %v2734, %v2738
    %v2790 = vsel %vm887, %v2736, %v2740
    %v2791 = vsel %vm887, %v2730, %v2734
    %v2792 = vsel %vm887, %v2732, %v2736
    %v2793 = vsel %vm887, %v2726, %v2730
    %v2794 = vsel %vm887, %v2728, %v2732
    %v2795 = vsel %vm887, %v2722, %v2726
    %v2796 = vsel %vm887, %v2724, %v2728
    %v2797 = vsel %vm887, %v2718, %v2722
    %v2798 = vsel %vm887, %v2720, %v2724
    %v2799 = vsel %vm887, %v2770, %v2718
    %v2800 = vsel %vm887, %v2772, %v2720
    %v2801 = vld [vmem:[%s902] sm:$0xff]
    %v2803 = vperm.slane %v2801, 0
    %v2804 = vperm.slane %v2801, 1
    %v2805 = vperm.slane %v2801, 2
    %v2806 = vperm.slane %v2801, 3
    %v2807 = vperm.slane %v2801, 4
    %v2808 = vperm.slane %v2801, 5
    %v2809 = vperm.slane %v2801, 6
    %v2817 = vperm.slane %v2803, 0
    %v2818 = vperm.slane %v2804, 0
    %v2819 = vperm.slane %v2805, 0
    %v2820 = vperm.slane %v2806, 0
    %v2821 = vperm.slane %v2807, 0
    %v2822 = vperm.slane %v2808, 0
    %v2823 = vperm.slane %v2809, 0
    %v2824 = vmul.f32 %v2799, %v2817
    %v2825 = vmul.f32 %v2797, %v2818
    %v2826 = vmul.f32 %v2795, %v2819
    %v2827 = vmul.f32 %v2793, %v2820
    %v2828 = vmul.f32 %v2791, %v2821
    %v2829 = vmul.f32 %v2789, %v2822
    %v2830 = vmul.f32 %v2787, %v2823
    %v2831 = vmul.f32 %v2785, %v2817
    %v2832 = vmul.f32 %v2783, %v2818
    %v2833 = vmul.f32 %v2781, %v2819
    %v2834 = vmul.f32 %v2779, %v2820
    %v2835 = vmul.f32 %v2777, %v2821
    %v2836 = vmul.f32 %v2775, %v2822
    %v2837 = vmul.f32 %v2773, %v2823
    %v2838 = vmul.f32 %v2800, %v2817
    %v2839 = vmul.f32 %v2798, %v2818
    %v2840 = vmul.f32 %v2796, %v2819
    %v2841 = vmul.f32 %v2794, %v2820
    %v2842 = vmul.f32 %v2792, %v2821
    %v2843 = vmul.f32 %v2790, %v2822
    %v2844 = vmul.f32 %v2788, %v2823
    %v2845 = vmul.f32 %v2786, %v2817
    %v2846 = vmul.f32 %v2784, %v2818
    %v2847 = vmul.f32 %v2782, %v2819
    %v2848 = vmul.f32 %v2780, %v2820
    %v2849 = vmul.f32 %v2778, %v2821
    %v2850 = vmul.f32 %v2776, %v2822
    %v2851 = vmul.f32 %v2774, %v2823
    %2852 = vst [vmem:[#allocation2 + $0x150] sm:$0xff] %v2824
    %2853 = vst [vmem:[#allocation2 + $0x158] sm:$0xff] %v2825
    %2854 = vst [vmem:[#allocation2 + $0x160] sm:$0xff] %v2826
    %2855 = vst [vmem:[#allocation2 + $0x168] sm:$0xff] %v2827
    %2856 = vst [vmem:[#allocation2 + $0x170] sm:$0xff] %v2828
    %2857 = vst [vmem:[#allocation2 + $0x178] sm:$0xff] %v2829
    %2858 = vst [vmem:[#allocation2 + $0x180] sm:$0xff] %v2830
    %2859 = vst [vmem:[#allocation2 + $0x188] sm:$0xff] %v2831
    %2860 = vst [vmem:[#allocation2 + $0x190] sm:$0xff] %v2832
    %2861 = vst [vmem:[#allocation2 + $0x198] sm:$0xff] %v2833
    %2862 = vst [vmem:[#allocation2 + $0x1a0] sm:$0xff] %v2834
    %2863 = vst [vmem:[#allocation2 + $0x1a8] sm:$0xff] %v2835
    %2864 = vst [vmem:[#allocation2 + $0x1b0] sm:$0xff] %v2836
    %2865 = vst [vmem:[#allocation2 + $0x1b8] sm:$0xff] %v2837
    %2866 = vst [vmem:[#allocation2 + $0x1c0] sm:$0xf] %v2838
    %2867 = vst [vmem:[#allocation2 + $0x1c8] sm:$0xf] %v2839
    %2868 = vst [vmem:[#allocation2 + $0x1d0] sm:$0xf] %v2840
    %2869 = vst [vmem:[#allocation2 + $0x1d8] sm:$0xf] %v2841
    %2870 = vst [vmem:[#allocation2 + $0x1e0] sm:$0xf] %v2842
    %2871 = vst [vmem:[#allocation2 + $0x1e8] sm:$0xf] %v2843
    %2872 = vst [vmem:[#allocation2 + $0x1f0] sm:$0xf] %v2844
    %2873 = vst [vmem:[#allocation2 + $0x1f8] sm:$0xf] %v2845
    %2874 = vst [vmem:[#allocation2 + $0x200] sm:$0xf] %v2846
    %2875 = vst [vmem:[#allocation2 + $0x208] sm:$0xf] %v2847
    %2876 = vst [vmem:[#allocation2 + $0x210] sm:$0xf] %v2848
    %2877 = vst [vmem:[#allocation2 + $0x218] sm:$0xf] %v2849
    %2878 = vst [vmem:[#allocation2 + $0x220] sm:$0xf] %v2850
    %2879 = vst [vmem:[#allocation2 + $0x228] sm:$0xf] %v2851
    %2880 = vrot.lane.b32.xlu0 %v2265, 1
    %v2881 = vpop.permute.xlu0 %2880
    %2882 = vrot.lane.b32.xlu0 %v2279, 1
    %v2883 = vpop.permute.xlu0 %2882
    %2884 = vrot.lane.b32.xlu0 %v2266, 1
    %v2885 = vpop.permute.xlu0 %2884
    %2886 = vrot.lane.b32.xlu0 %v2280, 1
    %v2887 = vpop.permute.xlu0 %2886
    %2888 = vrot.lane.b32.xlu0 %v2267, 1
    %v2889 = vpop.permute.xlu0 %2888
    %2890 = vrot.lane.b32.xlu0 %v2281, 1
    %v2891 = vpop.permute.xlu0 %2890
    %2892 = vrot.lane.b32.xlu0 %v2268, 1
    %v2893 = vpop.permute.xlu0 %2892
    %2894 = vrot.lane.b32.xlu0 %v2282, 1
    %v2895 = vpop.permute.xlu0 %2894
    %2896 = vrot.lane.b32.xlu0 %v2269, 1
    %v2897 = vpop.permute.xlu0 %2896
    %2898 = vrot.lane.b32.xlu0 %v2283, 1
    %v2899 = vpop.permute.xlu0 %2898
    %2900 = vrot.lane.b32.xlu0 %v2270, 1
    %v2901 = vpop.permute.xlu0 %2900
    %2902 = vrot.lane.b32.xlu0 %v2284, 1
    %v2903 = vpop.permute.xlu0 %2902
    %2904 = vrot.lane.b32.xlu0 %v2271, 1
    %v2905 = vpop.permute.xlu0 %2904
    %2906 = vrot.lane.b32.xlu0 %v2285, 1
    %v2907 = vpop.permute.xlu0 %2906
    %2908 = vrot.lane.b32.xlu0 %v2272, 1
    %v2909 = vpop.permute.xlu0 %2908
    %2910 = vrot.lane.b32.xlu0 %v2286, 1
    %v2911 = vpop.permute.xlu0 %2910
    %2912 = vrot.lane.b32.xlu0 %v2273, 1
    %v2913 = vpop.permute.xlu0 %2912
    %2914 = vrot.lane.b32.xlu0 %v2287, 1
    %v2915 = vpop.permute.xlu0 %2914
    %2916 = vrot.lane.b32.xlu0 %v2274, 1
    %v2917 = vpop.permute.xlu0 %2916
    %2918 = vrot.lane.b32.xlu0 %v2288, 1
    %v2919 = vpop.permute.xlu0 %2918
    %2920 = vrot.lane.b32.xlu0 %v2275, 1
    %v2921 = vpop.permute.xlu0 %2920
    %2922 = vrot.lane.b32.xlu0 %v2289, 1
    %v2923 = vpop.permute.xlu0 %2922
    %2924 = vrot.lane.b32.xlu0 %v2276, 1
    %v2925 = vpop.permute.xlu0 %2924
    %2926 = vrot.lane.b32.xlu0 %v2290, 1
    %v2927 = vpop.permute.xlu0 %2926
    %2928 = vrot.lane.b32.xlu0 %v2277, 1
    %v2929 = vpop.permute.xlu0 %2928
    %2930 = vrot.lane.b32.xlu0 %v2291, 1
    %v2931 = vpop.permute.xlu0 %2930
    %2932 = vrot.lane.b32.xlu0 %v2278, 1
    %v2933 = vpop.permute.xlu0 %2932
    %2934 = vrot.lane.b32.xlu0 %v2292, 1
    %v2935 = vpop.permute.xlu0 %2934
    %v2936 = vsel %vm1007, %v2929, %v2933
    %v2937 = vsel %vm1007, %v2931, %v2935
    %v2938 = vsel %vm1007, %v2925, %v2929
    %v2939 = vsel %vm1007, %v2927, %v2931
    %v2940 = vsel %vm1007, %v2921, %v2925
    %v2941 = vsel %vm1007, %v2923, %v2927
    %v2942 = vsel %vm1007, %v2917, %v2921
    %v2943 = vsel %vm1007, %v2919, %v2923
    %v2944 = vsel %vm1007, %v2913, %v2917
    %v2945 = vsel %vm1007, %v2915, %v2919
    %v2946 = vsel %vm1007, %v2909, %v2913
    %v2947 = vsel %vm1007, %v2911, %v2915
    %v2948 = vsel %vm1007, %v2905, %v2909
    %v2949 = vsel %vm1007, %v2907, %v2911
    %v2950 = vsel %vm1007, %v2901, %v2905
    %v2951 = vsel %vm1007, %v2903, %v2907
    %v2952 = vsel %vm1007, %v2897, %v2901
    %v2953 = vsel %vm1007, %v2899, %v2903
    %v2954 = vsel %vm1007, %v2893, %v2897
    %v2955 = vsel %vm1007, %v2895, %v2899
    %v2956 = vsel %vm1007, %v2889, %v2893
    %v2957 = vsel %vm1007, %v2891, %v2895
    %v2958 = vsel %vm1007, %v2885, %v2889
    %v2959 = vsel %vm1007, %v2887, %v2891
    %v2960 = vsel %vm1007, %v2881, %v2885
    %v2961 = vsel %vm1007, %v2883, %v2887
    %v2962 = vsel %vm1007, %v2933, %v2881
    %v2963 = vsel %vm1007, %v2935, %v2883
    %v2964 = vld [vmem:[%s1022] sm:$0xff]
    %v2966 = vperm.slane %v2964, 0
    %v2967 = vperm.slane %v2964, 1
    %v2968 = vperm.slane %v2964, 2
    %v2969 = vperm.slane %v2964, 3
    %v2970 = vperm.slane %v2964, 4
    %v2971 = vperm.slane %v2964, 5
    %v2972 = vperm.slane %v2964, 6
    %v2980 = vperm.slane %v2966, 0
    %v2981 = vperm.slane %v2967, 0
    %v2982 = vperm.slane %v2968, 0
    %v2983 = vperm.slane %v2969, 0
    %v2984 = vperm.slane %v2970, 0
    %v2985 = vperm.slane %v2971, 0
    %v2986 = vperm.slane %v2972, 0
    %v2987 = vmul.f32 %v2962, %v2980
    %v2988 = vmul.f32 %v2960, %v2981
    %v2989 = vmul.f32 %v2958, %v2982
    %v2990 = vmul.f32 %v2956, %v2983
    %v2991 = vmul.f32 %v2954, %v2984
    %v2992 = vmul.f32 %v2952, %v2985
    %v2993 = vmul.f32 %v2950, %v2986
    %v2994 = vmul.f32 %v2948, %v2980
    %v2995 = vmul.f32 %v2946, %v2981
    %v2996 = vmul.f32 %v2944, %v2982
    %v2997 = vmul.f32 %v2942, %v2983
    %v2998 = vmul.f32 %v2940, %v2984
    %v2999 = vmul.f32 %v2938, %v2985
    %v3000 = vmul.f32 %v2936, %v2986
    %v3001 = vmul.f32 %v2963, %v2980
    %v3002 = vmul.f32 %v2961, %v2981
    %v3003 = vmul.f32 %v2959, %v2982
    %v3004 = vmul.f32 %v2957, %v2983
    %v3005 = vmul.f32 %v2955, %v2984
    %v3006 = vmul.f32 %v2953, %v2985
    %v3007 = vmul.f32 %v2951, %v2986
    %v3008 = vmul.f32 %v2949, %v2980
    %v3009 = vmul.f32 %v2947, %v2981
    %v3010 = vmul.f32 %v2945, %v2982
    %v3011 = vmul.f32 %v2943, %v2983
    %v3012 = vmul.f32 %v2941, %v2984
    %v3013 = vmul.f32 %v2939, %v2985
    %v3014 = vmul.f32 %v2937, %v2986
    %v3043 = vrot.slane %v2987, 4
    %v3044 = vrot.slane %v2988, 4
    %v3045 = vrot.slane %v2989, 4
    %v3046 = vrot.slane %v2990, 4
    %v3047 = vrot.slane %v2991, 4
    %v3048 = vrot.slane %v2992, 4
    %v3049 = vrot.slane %v2993, 4
    %v3050 = vrot.slane %v2994, 4
    %v3051 = vrot.slane %v2995, 4
    %v3052 = vrot.slane %v2996, 4
    %v3053 = vrot.slane %v2997, 4
    %v3054 = vrot.slane %v2998, 4
    %v3055 = vrot.slane %v2999, 4
    %v3056 = vrot.slane %v3000, 4
    %v3057 = vrot.slane %v3001, 4
    %v3058 = vsel %vm220, %v3043, %v3057
    %v3059 = vrot.slane %v3002, 4
    %v3060 = vsel %vm220, %v3044, %v3059
    %v3061 = vrot.slane %v3003, 4
    %v3062 = vsel %vm220, %v3045, %v3061
    %v3063 = vrot.slane %v3004, 4
    %v3064 = vsel %vm220, %v3046, %v3063
    %v3065 = vrot.slane %v3005, 4
    %v3066 = vsel %vm220, %v3047, %v3065
    %v3067 = vrot.slane %v3006, 4
    %v3068 = vsel %vm220, %v3048, %v3067
    %v3069 = vrot.slane %v3007, 4
    %v3070 = vsel %vm220, %v3049, %v3069
    %v3071 = vrot.slane %v3008, 4
    %v3072 = vsel %vm220, %v3050, %v3071
    %v3073 = vrot.slane %v3009, 4
    %v3074 = vsel %vm220, %v3051, %v3073
    %v3075 = vrot.slane %v3010, 4
    %v3076 = vsel %vm220, %v3052, %v3075
    %v3077 = vrot.slane %v3011, 4
    %v3078 = vsel %vm220, %v3053, %v3077
    %v3079 = vrot.slane %v3012, 4
    %v3080 = vsel %vm220, %v3054, %v3079
    %v3081 = vrot.slane %v3013, 4
    %v3082 = vsel %vm220, %v3055, %v3081
    %v3083 = vrot.slane %v3014, 4
    %v3084 = vsel %vm220, %v3056, %v3083
    %3113 = vst [vmem:[#allocation2 + $0x1c0] sm:$0xf0] %v3043
    %3114 = vst [vmem:[#allocation2 + $0x1c8] sm:$0xf0] %v3044
    %3115 = vst [vmem:[#allocation2 + $0x1d0] sm:$0xf0] %v3045
    %3116 = vst [vmem:[#allocation2 + $0x1d8] sm:$0xf0] %v3046
    %3117 = vst [vmem:[#allocation2 + $0x1e0] sm:$0xf0] %v3047
    %3118 = vst [vmem:[#allocation2 + $0x1e8] sm:$0xf0] %v3048
    %3119 = vst [vmem:[#allocation2 + $0x1f0] sm:$0xf0] %v3049
    %3120 = vst [vmem:[#allocation2 + $0x1f8] sm:$0xf0] %v3050
    %3121 = vst [vmem:[#allocation2 + $0x200] sm:$0xf0] %v3051
    %3122 = vst [vmem:[#allocation2 + $0x208] sm:$0xf0] %v3052
    %3123 = vst [vmem:[#allocation2 + $0x210] sm:$0xf0] %v3053
    %3124 = vst [vmem:[#allocation2 + $0x218] sm:$0xf0] %v3054
    %3125 = vst [vmem:[#allocation2 + $0x220] sm:$0xf0] %v3055
    %3126 = vst [vmem:[#allocation2 + $0x228] sm:$0xf0] %v3056
    %3127 = vst [vmem:[#allocation2 + $0x230] sm:$0xff] %v3058
    %3128 = vst [vmem:[#allocation2 + $0x238] sm:$0xff] %v3060
    %3129 = vst [vmem:[#allocation2 + $0x240] sm:$0xff] %v3062
    %3130 = vst [vmem:[#allocation2 + $0x248] sm:$0xff] %v3064
    %3131 = vst [vmem:[#allocation2 + $0x250] sm:$0xff] %v3066
    %3132 = vst [vmem:[#allocation2 + $0x258] sm:$0xff] %v3068
    %3133 = vst [vmem:[#allocation2 + $0x260] sm:$0xff] %v3070
    %3134 = vst [vmem:[#allocation2 + $0x268] sm:$0xff] %v3072
    %3135 = vst [vmem:[#allocation2 + $0x270] sm:$0xff] %v3074
    %3136 = vst [vmem:[#allocation2 + $0x278] sm:$0xff] %v3076
    %3137 = vst [vmem:[#allocation2 + $0x280] sm:$0xff] %v3078
    %3138 = vst [vmem:[#allocation2 + $0x288] sm:$0xff] %v3080
    %3139 = vst [vmem:[#allocation2 + $0x290] sm:$0xff] %v3082
    %3140 = vst [vmem:[#allocation2 + $0x298] sm:$0xff] %v3084
    %3141 = vst [vmem:[#allocation2 + $0x2a0] sm:$0xff] %v2265
    %3142 = vst [vmem:[#allocation2 + $0x2a8] sm:$0xff] %v2266
    %3143 = vst [vmem:[#allocation2 + $0x2b0] sm:$0xff] %v2267
    %3144 = vst [vmem:[#allocation2 + $0x2b8] sm:$0xff] %v2268
    %3145 = vst [vmem:[#allocation2 + $0x2c0] sm:$0xff] %v2269
    %3146 = vst [vmem:[#allocation2 + $0x2c8] sm:$0xff] %v2270
    %3147 = vst [vmem:[#allocation2 + $0x2d0] sm:$0xff] %v2271
    %3148 = vst [vmem:[#allocation2 + $0x2d8] sm:$0xff] %v2272
    %3149 = vst [vmem:[#allocation2 + $0x2e0] sm:$0xff] %v2273
    %3150 = vst [vmem:[#allocation2 + $0x2e8] sm:$0xff] %v2274
    %3151 = vst [vmem:[#allocation2 + $0x2f0] sm:$0xff] %v2275
    %3152 = vst [vmem:[#allocation2 + $0x2f8] sm:$0xff] %v2276
    %3153 = vst [vmem:[#allocation2 + $0x300] sm:$0xff] %v2277
    %3154 = vst [vmem:[#allocation2 + $0x308] sm:$0xff] %v2278
    %3155 = vst [vmem:[#allocation2 + $0x310] sm:$0xf] %v2279
    %3156 = vst [vmem:[#allocation2 + $0x318] sm:$0xf] %v2280
    %3157 = vst [vmem:[#allocation2 + $0x320] sm:$0xf] %v2281
    %3158 = vst [vmem:[#allocation2 + $0x328] sm:$0xf] %v2282
    %3159 = vst [vmem:[#allocation2 + $0x330] sm:$0xf] %v2283
    %3160 = vst [vmem:[#allocation2 + $0x338] sm:$0xf] %v2284
    %3161 = vst [vmem:[#allocation2 + $0x340] sm:$0xf] %v2285
    %3162 = vst [vmem:[#allocation2 + $0x348] sm:$0xf] %v2286
    %3163 = vst [vmem:[#allocation2 + $0x350] sm:$0xf] %v2287
    %3164 = vst [vmem:[#allocation2 + $0x358] sm:$0xf] %v2288
    %3165 = vst [vmem:[#allocation2 + $0x360] sm:$0xf] %v2289
    %3166 = vst [vmem:[#allocation2 + $0x368] sm:$0xf] %v2290
    %3167 = vst [vmem:[#allocation2 + $0x370] sm:$0xf] %v2291
    %3168 = vst [vmem:[#allocation2 + $0x378] sm:$0xf] %v2292
    %3169 = vrot.lane.b32.xlu0 %v2265, 127
    %v3170 = vpop.permute.xlu0 %3169
    %3171 = vrot.lane.b32.xlu0 %v2279, 127
    %v3172 = vpop.permute.xlu0 %3171
    %3173 = vrot.lane.b32.xlu0 %v2266, 127
    %v3174 = vpop.permute.xlu0 %3173
    %3175 = vrot.lane.b32.xlu0 %v2280, 127
    %v3176 = vpop.permute.xlu0 %3175
    %3177 = vrot.lane.b32.xlu0 %v2267, 127
    %v3178 = vpop.permute.xlu0 %3177
    %3179 = vrot.lane.b32.xlu0 %v2281, 127
    %v3180 = vpop.permute.xlu0 %3179
    %3181 = vrot.lane.b32.xlu0 %v2268, 127
    %v3182 = vpop.permute.xlu0 %3181
    %3183 = vrot.lane.b32.xlu0 %v2282, 127
    %v3184 = vpop.permute.xlu0 %3183
    %3185 = vrot.lane.b32.xlu0 %v2269, 127
    %v3186 = vpop.permute.xlu0 %3185
    %3187 = vrot.lane.b32.xlu0 %v2283, 127
    %v3188 = vpop.permute.xlu0 %3187
    %3189 = vrot.lane.b32.xlu0 %v2270, 127
    %v3190 = vpop.permute.xlu0 %3189
    %3191 = vrot.lane.b32.xlu0 %v2284, 127
    %v3192 = vpop.permute.xlu0 %3191
    %3193 = vrot.lane.b32.xlu0 %v2271, 127
    %v3194 = vpop.permute.xlu0 %3193
    %3195 = vrot.lane.b32.xlu0 %v2285, 127
    %v3196 = vpop.permute.xlu0 %3195
    %3197 = vrot.lane.b32.xlu0 %v2272, 127
    %v3198 = vpop.permute.xlu0 %3197
    %3199 = vrot.lane.b32.xlu0 %v2286, 127
    %v3200 = vpop.permute.xlu0 %3199
    %3201 = vrot.lane.b32.xlu0 %v2273, 127
    %v3202 = vpop.permute.xlu0 %3201
    %3203 = vrot.lane.b32.xlu0 %v2287, 127
    %v3204 = vpop.permute.xlu0 %3203
    %3205 = vrot.lane.b32.xlu0 %v2274, 127
    %v3206 = vpop.permute.xlu0 %3205
    %3207 = vrot.lane.b32.xlu0 %v2288, 127
    %v3208 = vpop.permute.xlu0 %3207
    %3209 = vrot.lane.b32.xlu0 %v2275, 127
    %v3210 = vpop.permute.xlu0 %3209
    %3211 = vrot.lane.b32.xlu0 %v2289, 127
    %v3212 = vpop.permute.xlu0 %3211
    %3213 = vrot.lane.b32.xlu0 %v2276, 127
    %v3214 = vpop.permute.xlu0 %3213
    %3215 = vrot.lane.b32.xlu0 %v2290, 127
    %v3216 = vpop.permute.xlu0 %3215
    %3217 = vrot.lane.b32.xlu0 %v2277, 127
    %v3218 = vpop.permute.xlu0 %3217
    %3219 = vrot.lane.b32.xlu0 %v2291, 127
    %v3220 = vpop.permute.xlu0 %3219
    %3221 = vrot.lane.b32.xlu0 %v2278, 127
    %v3222 = vpop.permute.xlu0 %3221
    %3223 = vrot.lane.b32.xlu0 %v2292, 127
    %v3224 = vpop.permute.xlu0 %3223
    %v3225 = vsel %vm1133, %v3218, %v3222
    %v3226 = vsel %vm1133, %v3220, %v3224
    %v3227 = vsel %vm1133, %v3214, %v3218
    %v3228 = vsel %vm1133, %v3216, %v3220
    %v3229 = vsel %vm1133, %v3210, %v3214
    %v3230 = vsel %vm1133, %v3212, %v3216
    %v3231 = vsel %vm1133, %v3206, %v3210
    %v3232 = vsel %vm1133, %v3208, %v3212
    %v3233 = vsel %vm1133, %v3202, %v3206
    %v3234 = vsel %vm1133, %v3204, %v3208
    %v3235 = vsel %vm1133, %v3198, %v3202
    %v3236 = vsel %vm1133, %v3200, %v3204
    %v3237 = vsel %vm1133, %v3194, %v3198
    %v3238 = vsel %vm1133, %v3196, %v3200
    %v3239 = vsel %vm1133, %v3190, %v3194
    %v3240 = vsel %vm1133, %v3192, %v3196
    %v3241 = vsel %vm1133, %v3186, %v3190
    %v3242 = vsel %vm1133, %v3188, %v3192
    %v3243 = vsel %vm1133, %v3182, %v3186
    %v3244 = vsel %vm1133, %v3184, %v3188
    %v3245 = vsel %vm1133, %v3178, %v3182
    %v3246 = vsel %vm1133, %v3180, %v3184
    %v3247 = vsel %vm1133, %v3174, %v3178
    %v3248 = vsel %vm1133, %v3176, %v3180
    %v3249 = vsel %vm1133, %v3170, %v3174
    %v3250 = vsel %vm1133, %v3172, %v3176
    %v3251 = vsel %vm1133, %v3222, %v3170
    %v3252 = vsel %vm1133, %v3224, %v3172
    %v3253 = vld [vmem:[%s1148] sm:$0xff]
    %v3255 = vperm.slane %v3253, 0
    %v3256 = vperm.slane %v3253, 1
    %v3257 = vperm.slane %v3253, 2
    %v3258 = vperm.slane %v3253, 3
    %v3259 = vperm.slane %v3253, 4
    %v3260 = vperm.slane %v3253, 5
    %v3261 = vperm.slane %v3253, 6
    %v3269 = vperm.slane %v3255, 0
    %v3270 = vperm.slane %v3256, 0
    %v3271 = vperm.slane %v3257, 0
    %v3272 = vperm.slane %v3258, 0
    %v3273 = vperm.slane %v3259, 0
    %v3274 = vperm.slane %v3260, 0
    %v3275 = vperm.slane %v3261, 0
    %v3276 = vmul.f32 %v3249, %v3269
    %v3277 = vmul.f32 %v3247, %v3270
    %v3278 = vmul.f32 %v3245, %v3271
    %v3279 = vmul.f32 %v3243, %v3272
    %v3280 = vmul.f32 %v3241, %v3273
    %v3281 = vmul.f32 %v3239, %v3274
    %v3282 = vmul.f32 %v3237, %v3275
    %v3283 = vmul.f32 %v3235, %v3269
    %v3284 = vmul.f32 %v3233, %v3270
    %v3285 = vmul.f32 %v3231, %v3271
    %v3286 = vmul.f32 %v3229, %v3272
    %v3287 = vmul.f32 %v3227, %v3273
    %v3288 = vmul.f32 %v3225, %v3274
    %v3289 = vmul.f32 %v3251, %v3275
    %v3290 = vmul.f32 %v3250, %v3269
    %v3291 = vmul.f32 %v3248, %v3270
    %v3292 = vmul.f32 %v3246, %v3271
    %v3293 = vmul.f32 %v3244, %v3272
    %v3294 = vmul.f32 %v3242, %v3273
    %v3295 = vmul.f32 %v3240, %v3274
    %v3296 = vmul.f32 %v3238, %v3275
    %v3297 = vmul.f32 %v3236, %v3269
    %v3298 = vmul.f32 %v3234, %v3270
    %v3299 = vmul.f32 %v3232, %v3271
    %v3300 = vmul.f32 %v3230, %v3272
    %v3301 = vmul.f32 %v3228, %v3273
    %v3302 = vmul.f32 %v3226, %v3274
    %v3303 = vmul.f32 %v3252, %v3275
    %v3332 = vrot.slane %v3276, 4
    %v3333 = vrot.slane %v3277, 4
    %v3334 = vrot.slane %v3278, 4
    %v3335 = vrot.slane %v3279, 4
    %v3336 = vrot.slane %v3280, 4
    %v3337 = vrot.slane %v3281, 4
    %v3338 = vrot.slane %v3282, 4
    %v3339 = vrot.slane %v3283, 4
    %v3340 = vrot.slane %v3284, 4
    %v3341 = vrot.slane %v3285, 4
    %v3342 = vrot.slane %v3286, 4
    %v3343 = vrot.slane %v3287, 4
    %v3344 = vrot.slane %v3288, 4
    %v3345 = vrot.slane %v3289, 4
    %v3346 = vrot.slane %v3290, 4
    %v3347 = vsel %vm220, %v3332, %v3346
    %v3348 = vrot.slane %v3291, 4
    %v3349 = vsel %vm220, %v3333, %v3348
    %v3350 = vrot.slane %v3292, 4
    %v3351 = vsel %vm220, %v3334, %v3350
    %v3352 = vrot.slane %v3293, 4
    %v3353 = vsel %vm220, %v3335, %v3352
    %v3354 = vrot.slane %v3294, 4
    %v3355 = vsel %vm220, %v3336, %v3354
    %v3356 = vrot.slane %v3295, 4
    %v3357 = vsel %vm220, %v3337, %v3356
    %v3358 = vrot.slane %v3296, 4
    %v3359 = vsel %vm220, %v3338, %v3358
    %v3360 = vrot.slane %v3297, 4
    %v3361 = vsel %vm220, %v3339, %v3360
    %v3362 = vrot.slane %v3298, 4
    %v3363 = vsel %vm220, %v3340, %v3362
    %v3364 = vrot.slane %v3299, 4
    %v3365 = vsel %vm220, %v3341, %v3364
    %v3366 = vrot.slane %v3300, 4
    %v3367 = vsel %vm220, %v3342, %v3366
    %v3368 = vrot.slane %v3301, 4
    %v3369 = vsel %vm220, %v3343, %v3368
    %v3370 = vrot.slane %v3302, 4
    %v3371 = vsel %vm220, %v3344, %v3370
    %v3372 = vrot.slane %v3303, 4
    %v3373 = vsel %vm220, %v3345, %v3372
    %3402 = vst [vmem:[#allocation2 + $0x310] sm:$0xf0] %v3332
    %3403 = vst [vmem:[#allocation2 + $0x318] sm:$0xf0] %v3333
    %3404 = vst [vmem:[#allocation2 + $0x320] sm:$0xf0] %v3334
    %3405 = vst [vmem:[#allocation2 + $0x328] sm:$0xf0] %v3335
    %3406 = vst [vmem:[#allocation2 + $0x330] sm:$0xf0] %v3336
    %3407 = vst [vmem:[#allocation2 + $0x338] sm:$0xf0] %v3337
    %3408 = vst [vmem:[#allocation2 + $0x340] sm:$0xf0] %v3338
    %3409 = vst [vmem:[#allocation2 + $0x348] sm:$0xf0] %v3339
    %3410 = vst [vmem:[#allocation2 + $0x350] sm:$0xf0] %v3340
    %3411 = vst [vmem:[#allocation2 + $0x358] sm:$0xf0] %v3341
    %3412 = vst [vmem:[#allocation2 + $0x360] sm:$0xf0] %v3342
    %3413 = vst [vmem:[#allocation2 + $0x368] sm:$0xf0] %v3343
    %3414 = vst [vmem:[#allocation2 + $0x370] sm:$0xf0] %v3344
    %3415 = vst [vmem:[#allocation2 + $0x378] sm:$0xf0] %v3345
    %3416 = vst [vmem:[#allocation2 + $0x380] sm:$0xff] %v3347
    %3417 = vst [vmem:[#allocation2 + $0x388] sm:$0xff] %v3349
    %3418 = vst [vmem:[#allocation2 + $0x390] sm:$0xff] %v3351
    %3419 = vst [vmem:[#allocation2 + $0x398] sm:$0xff] %v3353
    %3420 = vst [vmem:[#allocation2 + $0x3a0] sm:$0xff] %v3355
    %3421 = vst [vmem:[#allocation2 + $0x3a8] sm:$0xff] %v3357
    %3422 = vst [vmem:[#allocation2 + $0x3b0] sm:$0xff] %v3359
    %3423 = vst [vmem:[#allocation2 + $0x3b8] sm:$0xff] %v3361
    %3424 = vst [vmem:[#allocation2 + $0x3c0] sm:$0xff] %v3363
    %3425 = vst [vmem:[#allocation2 + $0x3c8] sm:$0xff] %v3365
    %3426 = vst [vmem:[#allocation2 + $0x3d0] sm:$0xff] %v3367
    %3427 = vst [vmem:[#allocation2 + $0x3d8] sm:$0xff] %v3369
    %3428 = vst [vmem:[#allocation2 + $0x3e0] sm:$0xff] %v3371
    %3429 = vst [vmem:[#allocation2 + $0x3e8] sm:$0xff] %v3373
    %3430 = vrot.lane.b32.xlu0 %v2265, 101
    %v3431 = vpop.permute.xlu0 %3430
    %3432 = vrot.lane.b32.xlu0 %v2279, 101
    %v3433 = vpop.permute.xlu0 %3432
    %3434 = vrot.lane.b32.xlu0 %v2266, 101
    %v3435 = vpop.permute.xlu0 %3434
    %3436 = vrot.lane.b32.xlu0 %v2280, 101
    %v3437 = vpop.permute.xlu0 %3436
    %3438 = vrot.lane.b32.xlu0 %v2267, 101
    %v3439 = vpop.permute.xlu0 %3438
    %3440 = vrot.lane.b32.xlu0 %v2281, 101
    %v3441 = vpop.permute.xlu0 %3440
    %3442 = vrot.lane.b32.xlu0 %v2268, 101
    %v3443 = vpop.permute.xlu0 %3442
    %3444 = vrot.lane.b32.xlu0 %v2282, 101
    %v3445 = vpop.permute.xlu0 %3444
    %3446 = vrot.lane.b32.xlu0 %v2269, 101
    %v3447 = vpop.permute.xlu0 %3446
    %3448 = vrot.lane.b32.xlu0 %v2283, 101
    %v3449 = vpop.permute.xlu0 %3448
    %3450 = vrot.lane.b32.xlu0 %v2270, 101
    %v3451 = vpop.permute.xlu0 %3450
    %3452 = vrot.lane.b32.xlu0 %v2284, 101
    %v3453 = vpop.permute.xlu0 %3452
    %3454 = vrot.lane.b32.xlu0 %v2271, 101
    %v3455 = vpop.permute.xlu0 %3454
    %3456 = vrot.lane.b32.xlu0 %v2285, 101
    %v3457 = vpop.permute.xlu0 %3456
    %3458 = vrot.lane.b32.xlu0 %v2272, 101
    %v3459 = vpop.permute.xlu0 %3458
    %3460 = vrot.lane.b32.xlu0 %v2286, 101
    %v3461 = vpop.permute.xlu0 %3460
    %3462 = vrot.lane.b32.xlu0 %v2273, 101
    %v3463 = vpop.permute.xlu0 %3462
    %3464 = vrot.lane.b32.xlu0 %v2287, 101
    %v3465 = vpop.permute.xlu0 %3464
    %3466 = vrot.lane.b32.xlu0 %v2274, 101
    %v3467 = vpop.permute.xlu0 %3466
    %3468 = vrot.lane.b32.xlu0 %v2288, 101
    %v3469 = vpop.permute.xlu0 %3468
    %3470 = vrot.lane.b32.xlu0 %v2275, 101
    %v3471 = vpop.permute.xlu0 %3470
    %3472 = vrot.lane.b32.xlu0 %v2289, 101
    %v3473 = vpop.permute.xlu0 %3472
    %3474 = vrot.lane.b32.xlu0 %v2276, 101
    %v3475 = vpop.permute.xlu0 %3474
    %3476 = vrot.lane.b32.xlu0 %v2290, 101
    %v3477 = vpop.permute.xlu0 %3476
    %3478 = vrot.lane.b32.xlu0 %v2277, 101
    %v3479 = vpop.permute.xlu0 %3478
    %3480 = vrot.lane.b32.xlu0 %v2291, 101
    %v3481 = vpop.permute.xlu0 %3480
    %3482 = vrot.lane.b32.xlu0 %v2278, 101
    %v3483 = vpop.permute.xlu0 %3482
    %3484 = vrot.lane.b32.xlu0 %v2292, 101
    %v3485 = vpop.permute.xlu0 %3484
    %v3486 = vsel %vm1253, %v3479, %v3483
    %v3487 = vsel %vm1253, %v3481, %v3485
    %v3488 = vsel %vm1253, %v3475, %v3479
    %v3489 = vsel %vm1253, %v3477, %v3481
    %v3490 = vsel %vm1253, %v3471, %v3475
    %v3491 = vsel %vm1253, %v3473, %v3477
    %v3492 = vsel %vm1253, %v3467, %v3471
    %v3493 = vsel %vm1253, %v3469, %v3473
    %v3494 = vsel %vm1253, %v3463, %v3467
    %v3495 = vsel %vm1253, %v3465, %v3469
    %v3496 = vsel %vm1253, %v3459, %v3463
    %v3497 = vsel %vm1253, %v3461, %v3465
    %v3498 = vsel %vm1253, %v3455, %v3459
    %v3499 = vsel %vm1253, %v3457, %v3461
    %v3500 = vsel %vm1253, %v3451, %v3455
    %v3501 = vsel %vm1253, %v3453, %v3457
    %v3502 = vsel %vm1253, %v3447, %v3451
    %v3503 = vsel %vm1253, %v3449, %v3453
    %v3504 = vsel %vm1253, %v3443, %v3447
    %v3505 = vsel %vm1253, %v3445, %v3449
    %v3506 = vsel %vm1253, %v3439, %v3443
    %v3507 = vsel %vm1253, %v3441, %v3445
    %v3508 = vsel %vm1253, %v3435, %v3439
    %v3509 = vsel %vm1253, %v3437, %v3441
    %v3510 = vsel %vm1253, %v3431, %v3435
    %v3511 = vsel %vm1253, %v3433, %v3437
    %v3512 = vsel %vm1253, %v3483, %v3431
    %v3513 = vsel %vm1253, %v3485, %v3433
    %v3514 = vld [vmem:[%s1268] sm:$0xff]
    %v3516 = vperm.slane %v3514, 0
    %v3517 = vperm.slane %v3514, 1
    %v3518 = vperm.slane %v3514, 2
    %v3519 = vperm.slane %v3514, 3
    %v3520 = vperm.slane %v3514, 4
    %v3521 = vperm.slane %v3514, 5
    %v3522 = vperm.slane %v3514, 6
    %v3530 = vperm.slane %v3516, 0
    %v3531 = vperm.slane %v3517, 0
    %v3532 = vperm.slane %v3518, 0
    %v3533 = vperm.slane %v3519, 0
    %v3534 = vperm.slane %v3520, 0
    %v3535 = vperm.slane %v3521, 0
    %v3536 = vperm.slane %v3522, 0
    %v3537 = vmul.f32 %v3510, %v3530
    %v3538 = vmul.f32 %v3508, %v3531
    %v3539 = vmul.f32 %v3506, %v3532
    %v3540 = vmul.f32 %v3504, %v3533
    %v3541 = vmul.f32 %v3502, %v3534
    %v3542 = vmul.f32 %v3500, %v3535
    %v3543 = vmul.f32 %v3498, %v3536
    %v3544 = vmul.f32 %v3496, %v3530
    %v3545 = vmul.f32 %v3494, %v3531
    %v3546 = vmul.f32 %v3492, %v3532
    %v3547 = vmul.f32 %v3490, %v3533
    %v3548 = vmul.f32 %v3488, %v3534
    %v3549 = vmul.f32 %v3486, %v3535
    %v3550 = vmul.f32 %v3512, %v3536
    %v3551 = vmul.f32 %v3511, %v3530
    %v3552 = vmul.f32 %v3509, %v3531
    %v3553 = vmul.f32 %v3507, %v3532
    %v3554 = vmul.f32 %v3505, %v3533
    %v3555 = vmul.f32 %v3503, %v3534
    %v3556 = vmul.f32 %v3501, %v3535
    %v3557 = vmul.f32 %v3499, %v3536
    %v3558 = vmul.f32 %v3497, %v3530
    %v3559 = vmul.f32 %v3495, %v3531
    %v3560 = vmul.f32 %v3493, %v3532
    %v3561 = vmul.f32 %v3491, %v3533
    %v3562 = vmul.f32 %v3489, %v3534
    %v3563 = vmul.f32 %v3487, %v3535
    %v3564 = vmul.f32 %v3513, %v3536
    %3565 = vst [vmem:[#allocation2 + $0x3f0] sm:$0xff] %v3537
    %3566 = vst [vmem:[#allocation2 + $0x3f8] sm:$0xff] %v3538
    %3567 = vst [vmem:[#allocation2 + $0x400] sm:$0xff] %v3539
    %3568 = vst [vmem:[#allocation2 + $0x408] sm:$0xff] %v3540
    %3569 = vst [vmem:[#allocation2 + $0x410] sm:$0xff] %v3541
    %3570 = vst [vmem:[#allocation2 + $0x418] sm:$0xff] %v3542
    %3571 = vst [vmem:[#allocation2 + $0x420] sm:$0xff] %v3543
    %3572 = vst [vmem:[#allocation2 + $0x428] sm:$0xff] %v3544
    %3573 = vst [vmem:[#allocation2 + $0x430] sm:$0xff] %v3545
    %3574 = vst [vmem:[#allocation2 + $0x438] sm:$0xff] %v3546
    %3575 = vst [vmem:[#allocation2 + $0x440] sm:$0xff] %v3547
    %3576 = vst [vmem:[#allocation2 + $0x448] sm:$0xff] %v3548
    %3577 = vst [vmem:[#allocation2 + $0x450] sm:$0xff] %v3549
    %3578 = vst [vmem:[#allocation2 + $0x458] sm:$0xff] %v3550
    %3579 = vst [vmem:[#allocation2 + $0x460] sm:$0xf] %v3551
    %3580 = vst [vmem:[#allocation2 + $0x468] sm:$0xf] %v3552
    %3581 = vst [vmem:[#allocation2 + $0x470] sm:$0xf] %v3553
    %3582 = vst [vmem:[#allocation2 + $0x478] sm:$0xf] %v3554
    %3583 = vst [vmem:[#allocation2 + $0x480] sm:$0xf] %v3555
    %3584 = vst [vmem:[#allocation2 + $0x488] sm:$0xf] %v3556
    %3585 = vst [vmem:[#allocation2 + $0x490] sm:$0xf] %v3557
    %3586 = vst [vmem:[#allocation2 + $0x498] sm:$0xf] %v3558
    %3587 = vst [vmem:[#allocation2 + $0x4a0] sm:$0xf] %v3559
    %3588 = vst [vmem:[#allocation2 + $0x4a8] sm:$0xf] %v3560
    %3589 = vst [vmem:[#allocation2 + $0x4b0] sm:$0xf] %v3561
    %3590 = vst [vmem:[#allocation2 + $0x4b8] sm:$0xf] %v3562
    %3591 = vst [vmem:[#allocation2 + $0x4c0] sm:$0xf] %v3563
    %3592 = vst [vmem:[#allocation2 + $0x4c8] sm:$0xf] %v3564
    %3593 = vrot.lane.b32.xlu0 %v2265, 100
    %v3594 = vpop.permute.xlu0 %3593
    %3595 = vrot.lane.b32.xlu0 %v2279, 100
    %v3596 = vpop.permute.xlu0 %3595
    %3597 = vrot.lane.b32.xlu0 %v2266, 100
    %v3598 = vpop.permute.xlu0 %3597
    %3599 = vrot.lane.b32.xlu0 %v2280, 100
    %v3600 = vpop.permute.xlu0 %3599
    %3601 = vrot.lane.b32.xlu0 %v2267, 100
    %v3602 = vpop.permute.xlu0 %3601
    %3603 = vrot.lane.b32.xlu0 %v2281, 100
    %v3604 = vpop.permute.xlu0 %3603
    %3605 = vrot.lane.b32.xlu0 %v2268, 100
    %v3606 = vpop.permute.xlu0 %3605
    %3607 = vrot.lane.b32.xlu0 %v2282, 100
    %v3608 = vpop.permute.xlu0 %3607
    %3609 = vrot.lane.b32.xlu0 %v2269, 100
    %v3610 = vpop.permute.xlu0 %3609
    %3611 = vrot.lane.b32.xlu0 %v2283, 100
    %v3612 = vpop.permute.xlu0 %3611
    %3613 = vrot.lane.b32.xlu0 %v2270, 100
    %v3614 = vpop.permute.xlu0 %3613
    %3615 = vrot.lane.b32.xlu0 %v2284, 100
    %v3616 = vpop.permute.xlu0 %3615
    %3617 = vrot.lane.b32.xlu0 %v2271, 100
    %v3618 = vpop.permute.xlu0 %3617
    %3619 = vrot.lane.b32.xlu0 %v2285, 100
    %v3620 = vpop.permute.xlu0 %3619
    %3621 = vrot.lane.b32.xlu0 %v2272, 100
    %v3622 = vpop.permute.xlu0 %3621
    %3623 = vrot.lane.b32.xlu0 %v2286, 100
    %v3624 = vpop.permute.xlu0 %3623
    %3625 = vrot.lane.b32.xlu0 %v2273, 100
    %v3626 = vpop.permute.xlu0 %3625
    %3627 = vrot.lane.b32.xlu0 %v2287, 100
    %v3628 = vpop.permute.xlu0 %3627
    %3629 = vrot.lane.b32.xlu0 %v2274, 100
    %v3630 = vpop.permute.xlu0 %3629
    %3631 = vrot.lane.b32.xlu0 %v2288, 100
    %v3632 = vpop.permute.xlu0 %3631
    %3633 = vrot.lane.b32.xlu0 %v2275, 100
    %v3634 = vpop.permute.xlu0 %3633
    %3635 = vrot.lane.b32.xlu0 %v2289, 100
    %v3636 = vpop.permute.xlu0 %3635
    %3637 = vrot.lane.b32.xlu0 %v2276, 100
    %v3638 = vpop.permute.xlu0 %3637
    %3639 = vrot.lane.b32.xlu0 %v2290, 100
    %v3640 = vpop.permute.xlu0 %3639
    %3641 = vrot.lane.b32.xlu0 %v2277, 100
    %v3642 = vpop.permute.xlu0 %3641
    %3643 = vrot.lane.b32.xlu0 %v2291, 100
    %v3644 = vpop.permute.xlu0 %3643
    %3645 = vrot.lane.b32.xlu0 %v2278, 100
    %v3646 = vpop.permute.xlu0 %3645
    %3647 = vrot.lane.b32.xlu0 %v2292, 100
    %v3648 = vpop.permute.xlu0 %3647
    %v3649 = vsel %vm1373, %v3642, %v3646
    %v3650 = vsel %vm1373, %v3644, %v3648
    %v3651 = vsel %vm1373, %v3638, %v3642
    %v3652 = vsel %vm1373, %v3640, %v3644
    %v3653 = vsel %vm1373, %v3634, %v3638
    %v3654 = vsel %vm1373, %v3636, %v3640
    %v3655 = vsel %vm1373, %v3630, %v3634
    %v3656 = vsel %vm1373, %v3632, %v3636
    %v3657 = vsel %vm1373, %v3626, %v3630
    %v3658 = vsel %vm1373, %v3628, %v3632
    %v3659 = vsel %vm1373, %v3622, %v3626
    %v3660 = vsel %vm1373, %v3624, %v3628
    %v3661 = vsel %vm1373, %v3618, %v3622
    %v3662 = vsel %vm1373, %v3620, %v3624
    %v3663 = vsel %vm1373, %v3614, %v3618
    %v3664 = vsel %vm1373, %v3616, %v3620
    %v3665 = vsel %vm1373, %v3610, %v3614
    %v3666 = vsel %vm1373, %v3612, %v3616
    %v3667 = vsel %vm1373, %v3606, %v3610
    %v3668 = vsel %vm1373, %v3608, %v3612
    %v3669 = vsel %vm1373, %v3602, %v3606
    %v3670 = vsel %vm1373, %v3604, %v3608
    %v3671 = vsel %vm1373, %v3598, %v3602
    %v3672 = vsel %vm1373, %v3600, %v3604
    %v3673 = vsel %vm1373, %v3594, %v3598
    %v3674 = vsel %vm1373, %v3596, %v3600
    %v3675 = vsel %vm1373, %v3646, %v3594
    %v3676 = vsel %vm1373, %v3648, %v3596
    %v3677 = vld [vmem:[%s1388] sm:$0xff]
    %v3679 = vperm.slane %v3677, 0
    %v3680 = vperm.slane %v3677, 1
    %v3681 = vperm.slane %v3677, 2
    %v3682 = vperm.slane %v3677, 3
    %v3683 = vperm.slane %v3677, 4
    %v3684 = vperm.slane %v3677, 5
    %v3685 = vperm.slane %v3677, 6
    %v3693 = vperm.slane %v3679, 0
    %v3694 = vperm.slane %v3680, 0
    %v3695 = vperm.slane %v3681, 0
    %v3696 = vperm.slane %v3682, 0
    %v3697 = vperm.slane %v3683, 0
    %v3698 = vperm.slane %v3684, 0
    %v3699 = vperm.slane %v3685, 0
    %v3700 = vmul.f32 %v3673, %v3693
    %v3701 = vmul.f32 %v3671, %v3694
    %v3702 = vmul.f32 %v3669, %v3695
    %v3703 = vmul.f32 %v3667, %v3696
    %v3704 = vmul.f32 %v3665, %v3697
    %v3705 = vmul.f32 %v3663, %v3698
    %v3706 = vmul.f32 %v3661, %v3699
    %v3707 = vmul.f32 %v3659, %v3693
    %v3708 = vmul.f32 %v3657, %v3694
    %v3709 = vmul.f32 %v3655, %v3695
    %v3710 = vmul.f32 %v3653, %v3696
    %v3711 = vmul.f32 %v3651, %v3697
    %v3712 = vmul.f32 %v3649, %v3698
    %v3713 = vmul.f32 %v3675, %v3699
    %v3714 = vmul.f32 %v3674, %v3693
    %v3715 = vmul.f32 %v3672, %v3694
    %v3716 = vmul.f32 %v3670, %v3695
    %v3717 = vmul.f32 %v3668, %v3696
    %v3718 = vmul.f32 %v3666, %v3697
    %v3719 = vmul.f32 %v3664, %v3698
    %v3720 = vmul.f32 %v3662, %v3699
    %v3721 = vmul.f32 %v3660, %v3693
    %v3722 = vmul.f32 %v3658, %v3694
    %v3723 = vmul.f32 %v3656, %v3695
    %v3724 = vmul.f32 %v3654, %v3696
    %v3725 = vmul.f32 %v3652, %v3697
    %v3726 = vmul.f32 %v3650, %v3698
    %v3727 = vmul.f32 %v3676, %v3699
    %v3756 = vrot.slane %v3700, 4
    %v3757 = vrot.slane %v3701, 4
    %v3758 = vrot.slane %v3702, 4
    %v3759 = vrot.slane %v3703, 4
    %v3760 = vrot.slane %v3704, 4
    %v3761 = vrot.slane %v3705, 4
    %v3762 = vrot.slane %v3706, 4
    %v3763 = vrot.slane %v3707, 4
    %v3764 = vrot.slane %v3708, 4
    %v3765 = vrot.slane %v3709, 4
    %v3766 = vrot.slane %v3710, 4
    %v3767 = vrot.slane %v3711, 4
    %v3768 = vrot.slane %v3712, 4
    %v3769 = vrot.slane %v3713, 4
    %v3770 = vrot.slane %v3714, 4
    %v3771 = vsel %vm220, %v3756, %v3770
    %v3772 = vrot.slane %v3715, 4
    %v3773 = vsel %vm220, %v3757, %v3772
    %v3774 = vrot.slane %v3716, 4
    %v3775 = vsel %vm220, %v3758, %v3774
    %v3776 = vrot.slane %v3717, 4
    %v3777 = vsel %vm220, %v3759, %v3776
    %v3778 = vrot.slane %v3718, 4
    %v3779 = vsel %vm220, %v3760, %v3778
    %v3780 = vrot.slane %v3719, 4
    %v3781 = vsel %vm220, %v3761, %v3780
    %v3782 = vrot.slane %v3720, 4
    %v3783 = vsel %vm220, %v3762, %v3782
    %v3784 = vrot.slane %v3721, 4
    %v3785 = vsel %vm220, %v3763, %v3784
    %v3786 = vrot.slane %v3722, 4
    %v3787 = vsel %vm220, %v3764, %v3786
    %v3788 = vrot.slane %v3723, 4
    %v3789 = vsel %vm220, %v3765, %v3788
    %v3790 = vrot.slane %v3724, 4
    %v3791 = vsel %vm220, %v3766, %v3790
    %v3792 = vrot.slane %v3725, 4
    %v3793 = vsel %vm220, %v3767, %v3792
    %v3794 = vrot.slane %v3726, 4
    %v3795 = vsel %vm220, %v3768, %v3794
    %v3796 = vrot.slane %v3727, 4
    %v3797 = vsel %vm220, %v3769, %v3796
    %3826 = vst [vmem:[#allocation2 + $0x460] sm:$0xf0] %v3756
    %3827 = vst [vmem:[#allocation2 + $0x468] sm:$0xf0] %v3757
    %3828 = vst [vmem:[#allocation2 + $0x470] sm:$0xf0] %v3758
    %3829 = vst [vmem:[#allocation2 + $0x478] sm:$0xf0] %v3759
    %3830 = vst [vmem:[#allocation2 + $0x480] sm:$0xf0] %v3760
    %3831 = vst [vmem:[#allocation2 + $0x488] sm:$0xf0] %v3761
    %3832 = vst [vmem:[#allocation2 + $0x490] sm:$0xf0] %v3762
    %3833 = vst [vmem:[#allocation2 + $0x498] sm:$0xf0] %v3763
    %3834 = vst [vmem:[#allocation2 + $0x4a0] sm:$0xf0] %v3764
    %3835 = vst [vmem:[#allocation2 + $0x4a8] sm:$0xf0] %v3765
    %3836 = vst [vmem:[#allocation2 + $0x4b0] sm:$0xf0] %v3766
    %3837 = vst [vmem:[#allocation2 + $0x4b8] sm:$0xf0] %v3767
    %3838 = vst [vmem:[#allocation2 + $0x4c0] sm:$0xf0] %v3768
    %3839 = vst [vmem:[#allocation2 + $0x4c8] sm:$0xf0] %v3769
    %3840 = vst [vmem:[#allocation2 + $0x4d0] sm:$0xff] %v3771
    %3841 = vst [vmem:[#allocation2 + $0x4d8] sm:$0xff] %v3773
    %3842 = vst [vmem:[#allocation2 + $0x4e0] sm:$0xff] %v3775
    %3843 = vst [vmem:[#allocation2 + $0x4e8] sm:$0xff] %v3777
    %3844 = vst [vmem:[#allocation2 + $0x4f0] sm:$0xff] %v3779
    %3845 = vst [vmem:[#allocation2 + $0x4f8] sm:$0xff] %v3781
    %3846 = vst [vmem:[#allocation2 + $0x500] sm:$0xff] %v3783
    %3847 = vst [vmem:[#allocation2 + $0x508] sm:$0xff] %v3785
    %3848 = vst [vmem:[#allocation2 + $0x510] sm:$0xff] %v3787
    %3849 = vst [vmem:[#allocation2 + $0x518] sm:$0xff] %v3789
    %3850 = vst [vmem:[#allocation2 + $0x520] sm:$0xff] %v3791
    %3851 = vst [vmem:[#allocation2 + $0x528] sm:$0xff] %v3793
    %3852 = vst [vmem:[#allocation2 + $0x530] sm:$0xff] %v3795
    %3853 = vst [vmem:[#allocation2 + $0x538] sm:$0xff] %v3797
    %3854 = vrot.lane.b32.xlu0 %v2265, 99
    %v3855 = vpop.permute.xlu0 %3854
    %3856 = vrot.lane.b32.xlu0 %v2279, 99
    %v3857 = vpop.permute.xlu0 %3856
    %3858 = vrot.lane.b32.xlu0 %v2266, 99
    %v3859 = vpop.permute.xlu0 %3858
    %3860 = vrot.lane.b32.xlu0 %v2280, 99
    %v3861 = vpop.permute.xlu0 %3860
    %3862 = vrot.lane.b32.xlu0 %v2267, 99
    %v3863 = vpop.permute.xlu0 %3862
    %3864 = vrot.lane.b32.xlu0 %v2281, 99
    %v3865 = vpop.permute.xlu0 %3864
    %3866 = vrot.lane.b32.xlu0 %v2268, 99
    %v3867 = vpop.permute.xlu0 %3866
    %3868 = vrot.lane.b32.xlu0 %v2282, 99
    %v3869 = vpop.permute.xlu0 %3868
    %3870 = vrot.lane.b32.xlu0 %v2269, 99
    %v3871 = vpop.permute.xlu0 %3870
    %3872 = vrot.lane.b32.xlu0 %v2283, 99
    %v3873 = vpop.permute.xlu0 %3872
    %3874 = vrot.lane.b32.xlu0 %v2270, 99
    %v3875 = vpop.permute.xlu0 %3874
    %3876 = vrot.lane.b32.xlu0 %v2284, 99
    %v3877 = vpop.permute.xlu0 %3876
    %3878 = vrot.lane.b32.xlu0 %v2271, 99
    %v3879 = vpop.permute.xlu0 %3878
    %3880 = vrot.lane.b32.xlu0 %v2285, 99
    %v3881 = vpop.permute.xlu0 %3880
    %3882 = vrot.lane.b32.xlu0 %v2272, 99
    %v3883 = vpop.permute.xlu0 %3882
    %3884 = vrot.lane.b32.xlu0 %v2286, 99
    %v3885 = vpop.permute.xlu0 %3884
    %3886 = vrot.lane.b32.xlu0 %v2273, 99
    %v3887 = vpop.permute.xlu0 %3886
    %3888 = vrot.lane.b32.xlu0 %v2287, 99
    %v3889 = vpop.permute.xlu0 %3888
    %3890 = vrot.lane.b32.xlu0 %v2274, 99
    %v3891 = vpop.permute.xlu0 %3890
    %3892 = vrot.lane.b32.xlu0 %v2288, 99
    %v3893 = vpop.permute.xlu0 %3892
    %3894 = vrot.lane.b32.xlu0 %v2275, 99
    %v3895 = vpop.permute.xlu0 %3894
    %3896 = vrot.lane.b32.xlu0 %v2289, 99
    %v3897 = vpop.permute.xlu0 %3896
    %3898 = vrot.lane.b32.xlu0 %v2276, 99
    %v3899 = vpop.permute.xlu0 %3898
    %3900 = vrot.lane.b32.xlu0 %v2290, 99
    %v3901 = vpop.permute.xlu0 %3900
    %3902 = vrot.lane.b32.xlu0 %v2277, 99
    %v3903 = vpop.permute.xlu0 %3902
    %3904 = vrot.lane.b32.xlu0 %v2291, 99
    %v3905 = vpop.permute.xlu0 %3904
    %3906 = vrot.lane.b32.xlu0 %v2278, 99
    %v3907 = vpop.permute.xlu0 %3906
    %3908 = vrot.lane.b32.xlu0 %v2292, 99
    %v3909 = vpop.permute.xlu0 %3908
    %v3910 = vsel %vm1493, %v3903, %v3907
    %v3911 = vsel %vm1493, %v3905, %v3909
    %v3912 = vsel %vm1493, %v3899, %v3903
    %v3913 = vsel %vm1493, %v3901, %v3905
    %v3914 = vsel %vm1493, %v3895, %v3899
    %v3915 = vsel %vm1493, %v3897, %v3901
    %v3916 = vsel %vm1493, %v3891, %v3895
    %v3917 = vsel %vm1493, %v3893, %v3897
    %v3918 = vsel %vm1493, %v3887, %v3891
    %v3919 = vsel %vm1493, %v3889, %v3893
    %v3920 = vsel %vm1493, %v3883, %v3887
    %v3921 = vsel %vm1493, %v3885, %v3889
    %v3922 = vsel %vm1493, %v3879, %v3883
    %v3923 = vsel %vm1493, %v3881, %v3885
    %v3924 = vsel %vm1493, %v3875, %v3879
    %v3925 = vsel %vm1493, %v3877, %v3881
    %v3926 = vsel %vm1493, %v3871, %v3875
    %v3927 = vsel %vm1493, %v3873, %v3877
    %v3928 = vsel %vm1493, %v3867, %v3871
    %v3929 = vsel %vm1493, %v3869, %v3873
    %v3930 = vsel %vm1493, %v3863, %v3867
    %v3931 = vsel %vm1493, %v3865, %v3869
    %v3932 = vsel %vm1493, %v3859, %v3863
    %v3933 = vsel %vm1493, %v3861, %v3865
    %v3934 = vsel %vm1493, %v3855, %v3859
    %v3935 = vsel %vm1493, %v3857, %v3861
    %v3936 = vsel %vm1493, %v3907, %v3855
    %v3937 = vsel %vm1493, %v3909, %v3857
    %v3938 = vld [vmem:[%s1508] sm:$0xff]
    %v3940 = vperm.slane %v3938, 0
    %v3941 = vperm.slane %v3938, 1
    %v3942 = vperm.slane %v3938, 2
    %v3943 = vperm.slane %v3938, 3
    %v3944 = vperm.slane %v3938, 4
    %v3945 = vperm.slane %v3938, 5
    %v3946 = vperm.slane %v3938, 6
    %v3954 = vperm.slane %v3940, 0
    %v3955 = vperm.slane %v3941, 0
    %v3956 = vperm.slane %v3942, 0
    %v3957 = vperm.slane %v3943, 0
    %v3958 = vperm.slane %v3944, 0
    %v3959 = vperm.slane %v3945, 0
    %v3960 = vperm.slane %v3946, 0
    %v3961 = vmul.f32 %v3934, %v3954
    %v3962 = vmul.f32 %v3932, %v3955
    %v3963 = vmul.f32 %v3930, %v3956
    %v3964 = vmul.f32 %v3928, %v3957
    %v3965 = vmul.f32 %v3926, %v3958
    %v3966 = vmul.f32 %v3924, %v3959
    %v3967 = vmul.f32 %v3922, %v3960
    %v3968 = vmul.f32 %v3920, %v3954
    %v3969 = vmul.f32 %v3918, %v3955
    %v3970 = vmul.f32 %v3916, %v3956
    %v3971 = vmul.f32 %v3914, %v3957
    %v3972 = vmul.f32 %v3912, %v3958
    %v3973 = vmul.f32 %v3910, %v3959
    %v3974 = vmul.f32 %v3936, %v3960
    %v3975 = vmul.f32 %v3935, %v3954
    %v3976 = vmul.f32 %v3933, %v3955
    %v3977 = vmul.f32 %v3931, %v3956
    %v3978 = vmul.f32 %v3929, %v3957
    %v3979 = vmul.f32 %v3927, %v3958
    %v3980 = vmul.f32 %v3925, %v3959
    %v3981 = vmul.f32 %v3923, %v3960
    %v3982 = vmul.f32 %v3921, %v3954
    %v3983 = vmul.f32 %v3919, %v3955
    %v3984 = vmul.f32 %v3917, %v3956
    %v3985 = vmul.f32 %v3915, %v3957
    %v3986 = vmul.f32 %v3913, %v3958
    %v3987 = vmul.f32 %v3911, %v3959
    %v3988 = vmul.f32 %v3937, %v3960
    %3989 = vst [vmem:[#allocation2 + $0x540] sm:$0xff] %v3961
    %3990 = vst [vmem:[#allocation2 + $0x548] sm:$0xff] %v3962
    %3991 = vst [vmem:[#allocation2 + $0x550] sm:$0xff] %v3963
    %3992 = vst [vmem:[#allocation2 + $0x558] sm:$0xff] %v3964
    %3993 = vst [vmem:[#allocation2 + $0x560] sm:$0xff] %v3965
    %3994 = vst [vmem:[#allocation2 + $0x568] sm:$0xff] %v3966
    %3995 = vst [vmem:[#allocation2 + $0x570] sm:$0xff] %v3967
    %3996 = vst [vmem:[#allocation2 + $0x578] sm:$0xff] %v3968
    %3997 = vst [vmem:[#allocation2 + $0x580] sm:$0xff] %v3969
    %3998 = vst [vmem:[#allocation2 + $0x588] sm:$0xff] %v3970
    %3999 = vst [vmem:[#allocation2 + $0x590] sm:$0xff] %v3971
    %4000 = vst [vmem:[#allocation2 + $0x598] sm:$0xff] %v3972
    %4001 = vst [vmem:[#allocation2 + $0x5a0] sm:$0xff] %v3973
    %4002 = vst [vmem:[#allocation2 + $0x5a8] sm:$0xff] %v3974
    %4003 = vst [vmem:[#allocation2 + $0x5b0] sm:$0xf] %v3975
    %4004 = vst [vmem:[#allocation2 + $0x5b8] sm:$0xf] %v3976
    %4005 = vst [vmem:[#allocation2 + $0x5c0] sm:$0xf] %v3977
    %4006 = vst [vmem:[#allocation2 + $0x5c8] sm:$0xf] %v3978
    %4007 = vst [vmem:[#allocation2 + $0x5d0] sm:$0xf] %v3979
    %4008 = vst [vmem:[#allocation2 + $0x5d8] sm:$0xf] %v3980
    %4009 = vst [vmem:[#allocation2 + $0x5e0] sm:$0xf] %v3981
    %4010 = vst [vmem:[#allocation2 + $0x5e8] sm:$0xf] %v3982
    %4011 = vst [vmem:[#allocation2 + $0x5f0] sm:$0xf] %v3983
    %4012 = vst [vmem:[#allocation2 + $0x5f8] sm:$0xf] %v3984
    %4013 = vst [vmem:[#allocation2 + $0x600] sm:$0xf] %v3985
    %4014 = vst [vmem:[#allocation2 + $0x608] sm:$0xf] %v3986
    %4015 = vst [vmem:[#allocation2 + $0x610] sm:$0xf] %v3987
    %4016 = vst [vmem:[#allocation2 + $0x618] sm:$0xf] %v3988
    %v4017 = vld [vmem:[%s10] sm:$0x3f]
    %v4018 = vld [vmem:[#allocation2] sm:$0xff]
    %v4019 = vld [vmem:[#allocation2 + $0x8] sm:$0xff]
    %v4020 = vld [vmem:[#allocation2 + $0x10] sm:$0xff]
    %v4021 = vld [vmem:[#allocation2 + $0x18] sm:$0xff]
    %v4022 = vld [vmem:[#allocation2 + $0x20] sm:$0xff]
    %v4023 = vld [vmem:[#allocation2 + $0x28] sm:$0xff]
    %v4024 = vld [vmem:[#allocation2 + $0x30] sm:$0xff]
    %v4025 = vld [vmem:[#allocation2 + $0x38] sm:$0xff]
    %v4026 = vld [vmem:[#allocation2 + $0x40] sm:$0xff]
    %v4027 = vld [vmem:[#allocation2 + $0x48] sm:$0xff]
    %v4028 = vld [vmem:[#allocation2 + $0x50] sm:$0xff]
    %v4029 = vld [vmem:[#allocation2 + $0x58] sm:$0xff]
    %v4030 = vld [vmem:[#allocation2 + $0x60] sm:$0xff]
    %v4031 = vld [vmem:[#allocation2 + $0x68] sm:$0xff]
    %v4032 = vld [vmem:[#allocation2 + $0x70] sm:$0xff]
    %v4033 = vld [vmem:[#allocation2 + $0x78] sm:$0xff]
    %v4034 = vld [vmem:[#allocation2 + $0x80] sm:$0xff]
    %v4035 = vld [vmem:[#allocation2 + $0x88] sm:$0xff]
    %v4036 = vld [vmem:[#allocation2 + $0x90] sm:$0xff]
    %v4037 = vld [vmem:[#allocation2 + $0x98] sm:$0xff]
    %v4038 = vld [vmem:[#allocation2 + $0xa0] sm:$0xff]
    %v4039 = vld [vmem:[#allocation2 + $0xa8] sm:$0xff]
    %v4040 = vld [vmem:[#allocation2 + $0xb0] sm:$0xff]
    %v4041 = vld [vmem:[#allocation2 + $0xb8] sm:$0xff]
    %v4042 = vld [vmem:[#allocation2 + $0xc0] sm:$0xff]
    %v4043 = vld [vmem:[#allocation2 + $0xc8] sm:$0xff]
    %v4044 = vld [vmem:[#allocation2 + $0xd0] sm:$0xff]
    %v4045 = vld [vmem:[#allocation2 + $0xd8] sm:$0xff]
    %v4046 = vld [vmem:[#allocation2 + $0xe0] sm:$0xff]
    %v4047 = vld [vmem:[#allocation2 + $0xe8] sm:$0xff]
    %v4048 = vld [vmem:[#allocation2 + $0xf0] sm:$0xff]
    %v4049 = vld [vmem:[#allocation2 + $0xf8] sm:$0xff]
    %v4050 = vld [vmem:[#allocation2 + $0x100] sm:$0xff]
    %v4051 = vld [vmem:[#allocation2 + $0x108] sm:$0xff]
    %v4052 = vld [vmem:[#allocation2 + $0x110] sm:$0xff]
    %v4053 = vld [vmem:[#allocation2 + $0x118] sm:$0xff]
    %v4054 = vld [vmem:[#allocation2 + $0x120] sm:$0xff]
    %v4055 = vld [vmem:[#allocation2 + $0x128] sm:$0xff]
    %v4056 = vld [vmem:[#allocation2 + $0x130] sm:$0xff]
    %v4057 = vld [vmem:[#allocation2 + $0x138] sm:$0xff]
    %v4058 = vld [vmem:[#allocation2 + $0x140] sm:$0xff]
    %v4059 = vld [vmem:[#allocation2 + $0x148] sm:$0xff]
    %v4060 = vld [vmem:[#allocation2 + $0x150] sm:$0xff]
    %v4061 = vld [vmem:[#allocation2 + $0x158] sm:$0xff]
    %v4062 = vld [vmem:[#allocation2 + $0x160] sm:$0xff]
    %v4063 = vld [vmem:[#allocation2 + $0x168] sm:$0xff]
    %v4064 = vld [vmem:[#allocation2 + $0x170] sm:$0xff]
    %v4065 = vld [vmem:[#allocation2 + $0x178] sm:$0xff]
    %v4066 = vld [vmem:[#allocation2 + $0x180] sm:$0xff]
    %v4067 = vld [vmem:[#allocation2 + $0x188] sm:$0xff]
    %v4068 = vld [vmem:[#allocation2 + $0x190] sm:$0xff]
    %v4069 = vld [vmem:[#allocation2 + $0x198] sm:$0xff]
    %v4070 = vld [vmem:[#allocation2 + $0x1a0] sm:$0xff]
    %v4071 = vld [vmem:[#allocation2 + $0x1a8] sm:$0xff]
    %v4072 = vld [vmem:[#allocation2 + $0x1b0] sm:$0xff]
    %v4073 = vld [vmem:[#allocation2 + $0x1b8] sm:$0xff]
    %v4074 = vld [vmem:[#allocation2 + $0x1c0] sm:$0xff]
    %v4075 = vld [vmem:[#allocation2 + $0x1c8] sm:$0xff]
    %v4076 = vld [vmem:[#allocation2 + $0x1d0] sm:$0xff]
    %v4077 = vld [vmem:[#allocation2 + $0x1d8] sm:$0xff]
    %v4078 = vld [vmem:[#allocation2 + $0x1e0] sm:$0xff]
    %v4079 = vld [vmem:[#allocation2 + $0x1e8] sm:$0xff]
    %v4080 = vld [vmem:[#allocation2 + $0x1f0] sm:$0xff]
    %v4081 = vld [vmem:[#allocation2 + $0x1f8] sm:$0xff]
    %v4082 = vld [vmem:[#allocation2 + $0x200] sm:$0xff]
    %v4083 = vld [vmem:[#allocation2 + $0x208] sm:$0xff]
    %v4084 = vld [vmem:[#allocation2 + $0x210] sm:$0xff]
    %v4085 = vld [vmem:[#allocation2 + $0x218] sm:$0xff]
    %v4086 = vld [vmem:[#allocation2 + $0x220] sm:$0xff]
    %v4087 = vld [vmem:[#allocation2 + $0x228] sm:$0xff]
    %v4088 = vld [vmem:[#allocation2 + $0x230] sm:$0xff]
    %v4089 = vld [vmem:[#allocation2 + $0x238] sm:$0xff]
    %v4090 = vld [vmem:[#allocation2 + $0x240] sm:$0xff]
    %v4091 = vld [vmem:[#allocation2 + $0x248] sm:$0xff]
    %v4092 = vld [vmem:[#allocation2 + $0x250] sm:$0xff]
    %v4093 = vld [vmem:[#allocation2 + $0x258] sm:$0xff]
    %v4094 = vld [vmem:[#allocation2 + $0x260] sm:$0xff]
    %v4095 = vld [vmem:[#allocation2 + $0x268] sm:$0xff]
    %v4096 = vld [vmem:[#allocation2 + $0x270] sm:$0xff]
    %v4097 = vld [vmem:[#allocation2 + $0x278] sm:$0xff]
    %v4098 = vld [vmem:[#allocation2 + $0x280] sm:$0xff]
    %v4099 = vld [vmem:[#allocation2 + $0x288] sm:$0xff]
    %v4100 = vld [vmem:[#allocation2 + $0x290] sm:$0xff]
    %v4101 = vld [vmem:[#allocation2 + $0x298] sm:$0xff]
    %v4102 = vld [vmem:[#allocation2 + $0x2a0] sm:$0xff]
    %v4103 = vld [vmem:[#allocation2 + $0x2a8] sm:$0xff]
    %v4104 = vld [vmem:[#allocation2 + $0x2b0] sm:$0xff]
    %v4105 = vld [vmem:[#allocation2 + $0x2b8] sm:$0xff]
    %v4106 = vld [vmem:[#allocation2 + $0x2c0] sm:$0xff]
    %v4107 = vld [vmem:[#allocation2 + $0x2c8] sm:$0xff]
    %v4108 = vld [vmem:[#allocation2 + $0x2d0] sm:$0xff]
    %v4109 = vld [vmem:[#allocation2 + $0x2d8] sm:$0xff]
    %v4110 = vld [vmem:[#allocation2 + $0x2e0] sm:$0xff]
    %v4111 = vld [vmem:[#allocation2 + $0x2e8] sm:$0xff]
    %v4112 = vld [vmem:[#allocation2 + $0x2f0] sm:$0xff]
    %v4113 = vld [vmem:[#allocation2 + $0x2f8] sm:$0xff]
    %v4114 = vld [vmem:[#allocation2 + $0x300] sm:$0xff]
    %v4115 = vld [vmem:[#allocation2 + $0x308] sm:$0xff]
    %v4116 = vld [vmem:[#allocation2 + $0x310] sm:$0xff]
    %v4117 = vld [vmem:[#allocation2 + $0x318] sm:$0xff]
    %v4118 = vld [vmem:[#allocation2 + $0x320] sm:$0xff]
    %v4119 = vld [vmem:[#allocation2 + $0x328] sm:$0xff]
    %v4120 = vld [vmem:[#allocation2 + $0x330] sm:$0xff]
    %v4121 = vld [vmem:[#allocation2 + $0x338] sm:$0xff]
    %v4122 = vld [vmem:[#allocation2 + $0x340] sm:$0xff]
    %v4123 = vld [vmem:[#allocation2 + $0x348] sm:$0xff]
    %v4124 = vld [vmem:[#allocation2 + $0x350] sm:$0xff]
    %v4125 = vld [vmem:[#allocation2 + $0x358] sm:$0xff]
    %v4126 = vld [vmem:[#allocation2 + $0x360] sm:$0xff]
    %v4127 = vld [vmem:[#allocation2 + $0x368] sm:$0xff]
    %v4128 = vld [vmem:[#allocation2 + $0x370] sm:$0xff]
    %v4129 = vld [vmem:[#allocation2 + $0x378] sm:$0xff]
    %v4130 = vld [vmem:[#allocation2 + $0x380] sm:$0xff]
    %v4131 = vld [vmem:[#allocation2 + $0x388] sm:$0xff]
    %v4132 = vld [vmem:[#allocation2 + $0x390] sm:$0xff]
    %v4133 = vld [vmem:[#allocation2 + $0x398] sm:$0xff]
    %v4134 = vld [vmem:[#allocation2 + $0x3a0] sm:$0xff]
    %v4135 = vld [vmem:[#allocation2 + $0x3a8] sm:$0xff]
    %v4136 = vld [vmem:[#allocation2 + $0x3b0] sm:$0xff]
    %v4137 = vld [vmem:[#allocation2 + $0x3b8] sm:$0xff]
    %v4138 = vld [vmem:[#allocation2 + $0x3c0] sm:$0xff]
    %v4139 = vld [vmem:[#allocation2 + $0x3c8] sm:$0xff]
    %v4140 = vld [vmem:[#allocation2 + $0x3d0] sm:$0xff]
    %v4141 = vld [vmem:[#allocation2 + $0x3d8] sm:$0xff]
    %v4142 = vld [vmem:[#allocation2 + $0x3e0] sm:$0xff]
    %v4143 = vld [vmem:[#allocation2 + $0x3e8] sm:$0xff]
    %v4144 = vld [vmem:[#allocation2 + $0x3f0] sm:$0xff]
    %v4145 = vld [vmem:[#allocation2 + $0x3f8] sm:$0xff]
    %v4146 = vld [vmem:[#allocation2 + $0x400] sm:$0xff]
    %v4147 = vld [vmem:[#allocation2 + $0x408] sm:$0xff]
    %v4148 = vld [vmem:[#allocation2 + $0x410] sm:$0xff]
    %v4149 = vld [vmem:[#allocation2 + $0x418] sm:$0xff]
    %v4150 = vld [vmem:[#allocation2 + $0x420] sm:$0xff]
    %v4151 = vld [vmem:[#allocation2 + $0x428] sm:$0xff]
    %v4152 = vld [vmem:[#allocation2 + $0x430] sm:$0xff]
    %v4153 = vld [vmem:[#allocation2 + $0x438] sm:$0xff]
    %v4154 = vld [vmem:[#allocation2 + $0x440] sm:$0xff]
    %v4155 = vld [vmem:[#allocation2 + $0x448] sm:$0xff]
    %v4156 = vld [vmem:[#allocation2 + $0x450] sm:$0xff]
    %v4157 = vld [vmem:[#allocation2 + $0x458] sm:$0xff]
    %v4158 = vld [vmem:[#allocation2 + $0x460] sm:$0xff]
    %v4159 = vld [vmem:[#allocation2 + $0x468] sm:$0xff]
    %v4160 = vld [vmem:[#allocation2 + $0x470] sm:$0xff]
    %v4161 = vld [vmem:[#allocation2 + $0x478] sm:$0xff]
    %v4162 = vld [vmem:[#allocation2 + $0x480] sm:$0xff]
    %v4163 = vld [vmem:[#allocation2 + $0x488] sm:$0xff]
    %v4164 = vld [vmem:[#allocation2 + $0x490] sm:$0xff]
    %v4165 = vld [vmem:[#allocation2 + $0x498] sm:$0xff]
    %v4166 = vld [vmem:[#allocation2 + $0x4a0] sm:$0xff]
    %v4167 = vld [vmem:[#allocation2 + $0x4a8] sm:$0xff]
    %v4168 = vld [vmem:[#allocation2 + $0x4b0] sm:$0xff]
    %v4169 = vld [vmem:[#allocation2 + $0x4b8] sm:$0xff]
    %v4170 = vld [vmem:[#allocation2 + $0x4c0] sm:$0xff]
    %v4171 = vld [vmem:[#allocation2 + $0x4c8] sm:$0xff]
    %v4172 = vld [vmem:[#allocation2 + $0x4d0] sm:$0xff]
    %v4173 = vld [vmem:[#allocation2 + $0x4d8] sm:$0xff]
    %v4174 = vld [vmem:[#allocation2 + $0x4e0] sm:$0xff]
    %v4175 = vld [vmem:[#allocation2 + $0x4e8] sm:$0xff]
    %v4176 = vld [vmem:[#allocation2 + $0x4f0] sm:$0xff]
    %v4177 = vld [vmem:[#allocation2 + $0x4f8] sm:$0xff]
    %v4178 = vld [vmem:[#allocation2 + $0x500] sm:$0xff]
    %v4179 = vld [vmem:[#allocation2 + $0x508] sm:$0xff]
    %v4180 = vld [vmem:[#allocation2 + $0x510] sm:$0xff]
    %v4181 = vld [vmem:[#allocation2 + $0x518] sm:$0xff]
    %v4182 = vld [vmem:[#allocation2 + $0x520] sm:$0xff]
    %v4183 = vld [vmem:[#allocation2 + $0x528] sm:$0xff]
    %v4184 = vld [vmem:[#allocation2 + $0x530] sm:$0xff]
    %v4185 = vld [vmem:[#allocation2 + $0x538] sm:$0xff]
    %v4186 = vld [vmem:[#allocation2 + $0x540] sm:$0xff]
    %v4187 = vld [vmem:[#allocation2 + $0x548] sm:$0xff]
    %v4188 = vld [vmem:[#allocation2 + $0x550] sm:$0xff]
    %v4189 = vld [vmem:[#allocation2 + $0x558] sm:$0xff]
    %v4190 = vld [vmem:[#allocation2 + $0x560] sm:$0xff]
    %v4191 = vld [vmem:[#allocation2 + $0x568] sm:$0xff]
    %v4192 = vld [vmem:[#allocation2 + $0x570] sm:$0xff]
    %v4193 = vld [vmem:[#allocation2 + $0x578] sm:$0xff]
    %v4194 = vld [vmem:[#allocation2 + $0x580] sm:$0xff]
    %v4195 = vld [vmem:[#allocation2 + $0x588] sm:$0xff]
    %v4196 = vld [vmem:[#allocation2 + $0x590] sm:$0xff]
    %v4197 = vld [vmem:[#allocation2 + $0x598] sm:$0xff]
    %v4198 = vld [vmem:[#allocation2 + $0x5a0] sm:$0xff]
    %v4199 = vld [vmem:[#allocation2 + $0x5a8] sm:$0xff]
    %v4200 = vld [vmem:[#allocation2 + $0x5b0] sm:$0xf]
    %v4201 = vld [vmem:[#allocation2 + $0x5b8] sm:$0xf]
    %v4202 = vld [vmem:[#allocation2 + $0x5c0] sm:$0xf]
    %v4203 = vld [vmem:[#allocation2 + $0x5c8] sm:$0xf]
    %v4204 = vld [vmem:[#allocation2 + $0x5d0] sm:$0xf]
    %v4205 = vld [vmem:[#allocation2 + $0x5d8] sm:$0xf]
    %v4206 = vld [vmem:[#allocation2 + $0x5e0] sm:$0xf]
    %v4207 = vld [vmem:[#allocation2 + $0x5e8] sm:$0xf]
    %v4208 = vld [vmem:[#allocation2 + $0x5f0] sm:$0xf]
    %v4209 = vld [vmem:[#allocation2 + $0x5f8] sm:$0xf]
    %v4210 = vld [vmem:[#allocation2 + $0x600] sm:$0xf]
    %v4211 = vld [vmem:[#allocation2 + $0x608] sm:$0xf]
    %v4212 = vld [vmem:[#allocation2 + $0x610] sm:$0xf]
    %v4213 = vld [vmem:[#allocation2 + $0x618] sm:$0xf]
    %v4214 = vld [vmem:[%s11] sm:$0x3f]
    %4216 = vset.pattern.permute.xlu0 0
    %4217 = vperm.xlu0 %4216, %v4214
    %v4218 = vpop.permute.xlu0 %4217
    %vm4220 = vcmask 883712
    %v4222 = vsel %vm4220, %v4017, 0
    %v4225 = vsel %vm220, %v4200, 0
    %v4228 = vsel %vm220, %v4201, 0
    %v4231 = vsel %vm220, %v4202, 0
    %v4234 = vsel %vm220, %v4203, 0
    %v4237 = vsel %vm220, %v4204, 0
    %v4240 = vsel %vm220, %v4205, 0
    %v4243 = vsel %vm220, %v4206, 0
    %v4246 = vsel %vm220, %v4207, 0
    %v4249 = vsel %vm220, %v4208, 0
    %v4252 = vsel %vm220, %v4209, 0
    %v4255 = vsel %vm220, %v4210, 0
    %v4258 = vsel %vm220, %v4211, 0
    %v4261 = vsel %vm220, %v4212, 0
    %v4264 = vsel %vm220, %v4213, 0
    %4266 = vmatpush.msra.mxu0 0.0
    %4267 = vmatpush.msra.mxu0 0.0
    %4268 = vmatpush.msra.mxu0 %v4225
    %4269 = vmatpush.msra.mxu0 %v4186
    %4270 = vmatpush.msra.mxu0 %v4172
    %4271 = vmatpush.msra.mxu0 %v4158
    %4272 = vmatpush.msra.mxu0 %v4144
    %4273 = vmatpush.msra.mxu0 %v4130
    %4274 = vmatpush.msra.mxu0 %v4116
    %4275 = vmatpush.msra.mxu0 %v4102
    %4276 = vmatpush.msra.mxu0 %v4088
    %4277 = vmatpush.msra.mxu0 %v4074
    %4278 = vmatpush.msra.mxu0 %v4060
    %4279 = vmatpush.msra.mxu0 %v4046
    %4280 = vmatpush.msra.mxu0 %v4032
    %4281 = vmatpush.msra.mxu0 %v4018
    %4282 = vmatmul.f32.gmra.mxu0 %v4222
    %v4283 = vpop.f32.mrf.mxu0
    %v4284 = vadd.f32 %v4218, %v4283
    %4285 = vdwg.mxu0
    %4286 = vmatpush.msra.mxu0 0.0
    %4287 = vmatpush.msra.mxu0 0.0
    %4288 = vmatpush.msra.mxu0 %v4228
    %4289 = vmatpush.msra.mxu0 %v4187
    %4290 = vmatpush.msra.mxu0 %v4173
    %4291 = vmatpush.msra.mxu0 %v4159
    %4292 = vmatpush.msra.mxu0 %v4145
    %4293 = vmatpush.msra.mxu0 %v4131
    %4294 = vmatpush.msra.mxu0 %v4117
    %4295 = vmatpush.msra.mxu0 %v4103
    %4296 = vmatpush.msra.mxu0 %v4089
    %4297 = vmatpush.msra.mxu0 %v4075
    %4298 = vmatpush.msra.mxu0 %v4061
    %4299 = vmatpush.msra.mxu0 %v4047
    %4300 = vmatpush.msra.mxu0 %v4033
    %4301 = vmatpush.msra.mxu0 %v4019
    %4302 = vmatmul.f32.gmra.mxu0 %v4222
    %v4303 = vpop.f32.mrf.mxu0
    %v4304 = vadd.f32 %v4218, %v4303
    %4305 = vdwg.mxu0
    %4306 = vmatpush.msra.mxu0 0.0
    %4307 = vmatpush.msra.mxu0 0.0
    %4308 = vmatpush.msra.mxu0 %v4231
    %4309 = vmatpush.msra.mxu0 %v4188
    %4310 = vmatpush.msra.mxu0 %v4174
    %4311 = vmatpush.msra.mxu0 %v4160
    %4312 = vmatpush.msra.mxu0 %v4146
    %4313 = vmatpush.msra.mxu0 %v4132
    %4314 = vmatpush.msra.mxu0 %v4118
    %4315 = vmatpush.msra.mxu0 %v4104
    %4316 = vmatpush.msra.mxu0 %v4090
    %4317 = vmatpush.msra.mxu0 %v4076
    %4318 = vmatpush.msra.mxu0 %v4062
    %4319 = vmatpush.msra.mxu0 %v4048
    %4320 = vmatpush.msra.mxu0 %v4034
    %4321 = vmatpush.msra.mxu0 %v4020
    %4322 = vmatmul.f32.gmra.mxu0 %v4222
    %v4323 = vpop.f32.mrf.mxu0
    %v4324 = vadd.f32 %v4218, %v4323
    %4325 = vdwg.mxu0
    %4326 = vmatpush.msra.mxu0 0.0
    %4327 = vmatpush.msra.mxu0 0.0
    %4328 = vmatpush.msra.mxu0 %v4234
    %4329 = vmatpush.msra.mxu0 %v4189
    %4330 = vmatpush.msra.mxu0 %v4175
    %4331 = vmatpush.msra.mxu0 %v4161
    %4332 = vmatpush.msra.mxu0 %v4147
    %4333 = vmatpush.msra.mxu0 %v4133
    %4334 = vmatpush.msra.mxu0 %v4119
    %4335 = vmatpush.msra.mxu0 %v4105
    %4336 = vmatpush.msra.mxu0 %v4091
    %4337 = vmatpush.msra.mxu0 %v4077
    %4338 = vmatpush.msra.mxu0 %v4063
    %4339 = vmatpush.msra.mxu0 %v4049
    %4340 = vmatpush.msra.mxu0 %v4035
    %4341 = vmatpush.msra.mxu0 %v4021
    %4342 = vmatmul.f32.gmra.mxu0 %v4222
    %v4343 = vpop.f32.mrf.mxu0
    %v4344 = vadd.f32 %v4218, %v4343
    %4345 = vdwg.mxu0
    %4346 = vmatpush.msra.mxu0 0.0
    %4347 = vmatpush.msra.mxu0 0.0
    %4348 = vmatpush.msra.mxu0 %v4237
    %4349 = vmatpush.msra.mxu0 %v4190
    %4350 = vmatpush.msra.mxu0 %v4176
    %4351 = vmatpush.msra.mxu0 %v4162
    %4352 = vmatpush.msra.mxu0 %v4148
    %4353 = vmatpush.msra.mxu0 %v4134
    %4354 = vmatpush.msra.mxu0 %v4120
    %4355 = vmatpush.msra.mxu0 %v4106
    %4356 = vmatpush.msra.mxu0 %v4092
    %4357 = vmatpush.msra.mxu0 %v4078
    %4358 = vmatpush.msra.mxu0 %v4064
    %4359 = vmatpush.msra.mxu0 %v4050
    %4360 = vmatpush.msra.mxu0 %v4036
    %4361 = vmatpush.msra.mxu0 %v4022
    %4362 = vmatmul.f32.gmra.mxu0 %v4222
    %v4363 = vpop.f32.mrf.mxu0
    %v4364 = vadd.f32 %v4218, %v4363
    %4365 = vdwg.mxu0
    %4366 = vmatpush.msra.mxu0 0.0
    %4367 = vmatpush.msra.mxu0 0.0
    %4368 = vmatpush.msra.mxu0 %v4240
    %4369 = vmatpush.msra.mxu0 %v4191
    %4370 = vmatpush.msra.mxu0 %v4177
    %4371 = vmatpush.msra.mxu0 %v4163
    %4372 = vmatpush.msra.mxu0 %v4149
    %4373 = vmatpush.msra.mxu0 %v4135
    %4374 = vmatpush.msra.mxu0 %v4121
    %4375 = vmatpush.msra.mxu0 %v4107
    %4376 = vmatpush.msra.mxu0 %v4093
    %4377 = vmatpush.msra.mxu0 %v4079
    %4378 = vmatpush.msra.mxu0 %v4065
    %4379 = vmatpush.msra.mxu0 %v4051
    %4380 = vmatpush.msra.mxu0 %v4037
    %4381 = vmatpush.msra.mxu0 %v4023
    %4382 = vmatmul.f32.gmra.mxu0 %v4222
    %v4383 = vpop.f32.mrf.mxu0
    %v4384 = vadd.f32 %v4218, %v4383
    %4385 = vdwg.mxu0
    %4386 = vmatpush.msra.mxu0 0.0
    %4387 = vmatpush.msra.mxu0 0.0
    %4388 = vmatpush.msra.mxu0 %v4243
    %4389 = vmatpush.msra.mxu0 %v4192
    %4390 = vmatpush.msra.mxu0 %v4178
    %4391 = vmatpush.msra.mxu0 %v4164
    %4392 = vmatpush.msra.mxu0 %v4150
    %4393 = vmatpush.msra.mxu0 %v4136
    %4394 = vmatpush.msra.mxu0 %v4122
    %4395 = vmatpush.msra.mxu0 %v4108
    %4396 = vmatpush.msra.mxu0 %v4094
    %4397 = vmatpush.msra.mxu0 %v4080
    %4398 = vmatpush.msra.mxu0 %v4066
    %4399 = vmatpush.msra.mxu0 %v4052
    %4400 = vmatpush.msra.mxu0 %v4038
    %4401 = vmatpush.msra.mxu0 %v4024
    %4402 = vmatmul.f32.gmra.mxu0 %v4222
    %v4403 = vpop.f32.mrf.mxu0
    %v4404 = vadd.f32 %v4218, %v4403
    %4405 = vdwg.mxu0
    %4406 = vmatpush.msra.mxu0 0.0
    %4407 = vmatpush.msra.mxu0 0.0
    %4408 = vmatpush.msra.mxu0 %v4246
    %4409 = vmatpush.msra.mxu0 %v4193
    %4410 = vmatpush.msra.mxu0 %v4179
    %4411 = vmatpush.msra.mxu0 %v4165
    %4412 = vmatpush.msra.mxu0 %v4151
    %4413 = vmatpush.msra.mxu0 %v4137
    %4414 = vmatpush.msra.mxu0 %v4123
    %4415 = vmatpush.msra.mxu0 %v4109
    %4416 = vmatpush.msra.mxu0 %v4095
    %4417 = vmatpush.msra.mxu0 %v4081
    %4418 = vmatpush.msra.mxu0 %v4067
    %4419 = vmatpush.msra.mxu0 %v4053
    %4420 = vmatpush.msra.mxu0 %v4039
    %4421 = vmatpush.msra.mxu0 %v4025
    %4422 = vmatmul.f32.gmra.mxu0 %v4222
    %v4423 = vpop.f32.mrf.mxu0
    %v4424 = vadd.f32 %v4218, %v4423
    %4425 = vdwg.mxu0
    %4426 = vmatpush.msra.mxu0 0.0
    %4427 = vmatpush.msra.mxu0 0.0
    %4428 = vmatpush.msra.mxu0 %v4249
    %4429 = vmatpush.msra.mxu0 %v4194
    %4430 = vmatpush.msra.mxu0 %v4180
    %4431 = vmatpush.msra.mxu0 %v4166
    %4432 = vmatpush.msra.mxu0 %v4152
    %4433 = vmatpush.msra.mxu0 %v4138
    %4434 = vmatpush.msra.mxu0 %v4124
    %4435 = vmatpush.msra.mxu0 %v4110
    %4436 = vmatpush.msra.mxu0 %v4096
    %4437 = vmatpush.msra.mxu0 %v4082
    %4438 = vmatpush.msra.mxu0 %v4068
    %4439 = vmatpush.msra.mxu0 %v4054
    %4440 = vmatpush.msra.mxu0 %v4040
    %4441 = vmatpush.msra.mxu0 %v4026
    %4442 = vmatmul.f32.gmra.mxu0 %v4222
    %v4443 = vpop.f32.mrf.mxu0
    %v4444 = vadd.f32 %v4218, %v4443
    %4445 = vdwg.mxu0
    %4446 = vmatpush.msra.mxu0 0.0
    %4447 = vmatpush.msra.mxu0 0.0
    %4448 = vmatpush.msra.mxu0 %v4252
    %4449 = vmatpush.msra.mxu0 %v4195
    %4450 = vmatpush.msra.mxu0 %v4181
    %4451 = vmatpush.msra.mxu0 %v4167
    %4452 = vmatpush.msra.mxu0 %v4153
    %4453 = vmatpush.msra.mxu0 %v4139
    %4454 = vmatpush.msra.mxu0 %v4125
    %4455 = vmatpush.msra.mxu0 %v4111
    %4456 = vmatpush.msra.mxu0 %v4097
    %4457 = vmatpush.msra.mxu0 %v4083
    %4458 = vmatpush.msra.mxu0 %v4069
    %4459 = vmatpush.msra.mxu0 %v4055
    %4460 = vmatpush.msra.mxu0 %v4041
    %4461 = vmatpush.msra.mxu0 %v4027
    %4462 = vmatmul.f32.gmra.mxu0 %v4222
    %v4463 = vpop.f32.mrf.mxu0
    %v4464 = vadd.f32 %v4218, %v4463
    %4465 = vdwg.mxu0
    %4466 = vmatpush.msra.mxu0 0.0
    %4467 = vmatpush.msra.mxu0 0.0
    %4468 = vmatpush.msra.mxu0 %v4255
    %4469 = vmatpush.msra.mxu0 %v4196
    %4470 = vmatpush.msra.mxu0 %v4182
    %4471 = vmatpush.msra.mxu0 %v4168
    %4472 = vmatpush.msra.mxu0 %v4154
    %4473 = vmatpush.msra.mxu0 %v4140
    %4474 = vmatpush.msra.mxu0 %v4126
    %4475 = vmatpush.msra.mxu0 %v4112
    %4476 = vmatpush.msra.mxu0 %v4098
    %4477 = vmatpush.msra.mxu0 %v4084
    %4478 = vmatpush.msra.mxu0 %v4070
    %4479 = vmatpush.msra.mxu0 %v4056
    %4480 = vmatpush.msra.mxu0 %v4042
    %4481 = vmatpush.msra.mxu0 %v4028
    %4482 = vmatmul.f32.gmra.mxu0 %v4222
    %v4483 = vpop.f32.mrf.mxu0
    %v4484 = vadd.f32 %v4218, %v4483
    %4485 = vdwg.mxu0
    %4486 = vmatpush.msra.mxu0 0.0
    %4487 = vmatpush.msra.mxu0 0.0
    %4488 = vmatpush.msra.mxu0 %v4258
    %4489 = vmatpush.msra.mxu0 %v4197
    %4490 = vmatpush.msra.mxu0 %v4183
    %4491 = vmatpush.msra.mxu0 %v4169
    %4492 = vmatpush.msra.mxu0 %v4155
    %4493 = vmatpush.msra.mxu0 %v4141
    %4494 = vmatpush.msra.mxu0 %v4127
    %4495 = vmatpush.msra.mxu0 %v4113
    %4496 = vmatpush.msra.mxu0 %v4099
    %4497 = vmatpush.msra.mxu0 %v4085
    %4498 = vmatpush.msra.mxu0 %v4071
    %4499 = vmatpush.msra.mxu0 %v4057
    %4500 = vmatpush.msra.mxu0 %v4043
    %4501 = vmatpush.msra.mxu0 %v4029
    %4502 = vmatmul.f32.gmra.mxu0 %v4222
    %v4503 = vpop.f32.mrf.mxu0
    %v4504 = vadd.f32 %v4218, %v4503
    %4505 = vdwg.mxu0
    %4506 = vmatpush.msra.mxu0 0.0
    %4507 = vmatpush.msra.mxu0 0.0
    %4508 = vmatpush.msra.mxu0 %v4261
    %4509 = vmatpush.msra.mxu0 %v4198
    %4510 = vmatpush.msra.mxu0 %v4184
    %4511 = vmatpush.msra.mxu0 %v4170
    %4512 = vmatpush.msra.mxu0 %v4156
    %4513 = vmatpush.msra.mxu0 %v4142
    %4514 = vmatpush.msra.mxu0 %v4128
    %4515 = vmatpush.msra.mxu0 %v4114
    %4516 = vmatpush.msra.mxu0 %v4100
    %4517 = vmatpush.msra.mxu0 %v4086
    %4518 = vmatpush.msra.mxu0 %v4072
    %4519 = vmatpush.msra.mxu0 %v4058
    %4520 = vmatpush.msra.mxu0 %v4044
    %4521 = vmatpush.msra.mxu0 %v4030
    %4522 = vmatmul.f32.gmra.mxu0 %v4222
    %v4523 = vpop.f32.mrf.mxu0
    %v4524 = vadd.f32 %v4218, %v4523
    %4525 = vdwg.mxu0
    %4526 = vmatpush.msra.mxu0 0.0
    %4527 = vmatpush.msra.mxu0 0.0
    %4528 = vmatpush.msra.mxu0 %v4264
    %4529 = vmatpush.msra.mxu0 %v4199
    %4530 = vmatpush.msra.mxu0 %v4185
    %4531 = vmatpush.msra.mxu0 %v4171
    %4532 = vmatpush.msra.mxu0 %v4157
    %4533 = vmatpush.msra.mxu0 %v4143
    %4534 = vmatpush.msra.mxu0 %v4129
    %4535 = vmatpush.msra.mxu0 %v4115
    %4536 = vmatpush.msra.mxu0 %v4101
    %4537 = vmatpush.msra.mxu0 %v4087
    %4538 = vmatpush.msra.mxu0 %v4073
    %4539 = vmatpush.msra.mxu0 %v4059
    %4540 = vmatpush.msra.mxu0 %v4045
    %4541 = vmatpush.msra.mxu0 %v4031
    %4542 = vmatmul.f32.gmra.mxu0 %v4222
    %v4543 = vpop.f32.mrf.mxu0
    %v4544 = vadd.f32 %v4218, %v4543
    %4545 = vdwg.mxu0
    %v4546 = vmul.f32 %v4284, %v1998
    %v4547 = vmul.f32 %v4304, %v1999
    %v4548 = vmul.f32 %v4324, %v2000
    %v4549 = vmul.f32 %v4344, %v2001
    %v4550 = vmul.f32 %v4364, %v2002
    %v4551 = vmul.f32 %v4384, %v2003
    %v4552 = vmul.f32 %v4404, %v2004
    %v4553 = vmul.f32 %v4424, %v1998
    %v4554 = vmul.f32 %v4444, %v1999
    %v4555 = vmul.f32 %v4464, %v2000
    %v4556 = vmul.f32 %v4484, %v2001
    %v4557 = vmul.f32 %v4504, %v2002
    %v4558 = vmul.f32 %v4524, %v2003
    %v4559 = vmul.f32 %v4544, %v2004
    %vm4560 = vcmask 1045504
    %v4561 = vsel %vm4560, %v4546, 0.0
    %v4562 = vsel %vm4560, %v4547, 0.0
    %v4563 = vadd.f32 %v4561, %v4562
    %v4564 = vsel %vm4560, %v4548, 0.0
    %v4565 = vadd.f32 %v4563, %v4564
    %v4566 = vsel %vm4560, %v4549, 0.0
    %v4567 = vadd.f32 %v4565, %v4566
    %v4568 = vsel %vm4560, %v4550, 0.0
    %v4569 = vadd.f32 %v4567, %v4568
    %v4570 = vsel %vm4560, %v4551, 0.0
    %v4571 = vadd.f32 %v4569, %v4570
    %v4572 = vsel %vm4560, %v4552, 0.0
    %v4573 = vadd.f32 %v4571, %v4572
    %v4574 = vsel %vm4560, %v4553, 0.0
    %v4575 = vadd.f32 %v4573, %v4574
    %v4576 = vsel %vm4560, %v4554, 0.0
    %v4577 = vadd.f32 %v4575, %v4576
    %v4578 = vsel %vm4560, %v4555, 0.0
    %v4579 = vadd.f32 %v4577, %v4578
    %v4580 = vsel %vm4560, %v4556, 0.0
    %v4581 = vadd.f32 %v4579, %v4580
    %v4582 = vsel %vm4560, %v4557, 0.0
    %v4583 = vadd.f32 %v4581, %v4582
    %v4584 = vsel %vm4560, %v4558, 0.0
    %v4585 = vadd.f32 %v4583, %v4584
    %v4586 = vsel %vm4560, %v4559, 0.0
    %v4587 = vadd.f32 %v4585, %v4586
    %4588 = vadd.xlane.f32.xlu0 %v4587
    %v4589 = vpop.xlane.xlu0 %4588
    %v4590 = vmul.f32 %v4546, %v4546
    %v4591 = vmul.f32 %v4547, %v4547
    %v4592 = vmul.f32 %v4548, %v4548
    %v4593 = vmul.f32 %v4549, %v4549
    %v4594 = vmul.f32 %v4550, %v4550
    %v4595 = vmul.f32 %v4551, %v4551
    %v4596 = vmul.f32 %v4552, %v4552
    %v4597 = vmul.f32 %v4553, %v4553
    %v4598 = vmul.f32 %v4554, %v4554
    %v4599 = vmul.f32 %v4555, %v4555
    %v4600 = vmul.f32 %v4556, %v4556
    %v4601 = vmul.f32 %v4557, %v4557
    %v4602 = vmul.f32 %v4558, %v4558
    %v4603 = vmul.f32 %v4559, %v4559
    %v4604 = vsel %vm4560, %v4590, 0.0
    %v4605 = vsel %vm4560, %v4591, 0.0
    %v4606 = vadd.f32 %v4604, %v4605
    %v4607 = vsel %vm4560, %v4592, 0.0
    %v4608 = vadd.f32 %v4606, %v4607
    %v4609 = vsel %vm4560, %v4593, 0.0
    %v4610 = vadd.f32 %v4608, %v4609
    %v4611 = vsel %vm4560, %v4594, 0.0
    %v4612 = vadd.f32 %v4610, %v4611
    %v4613 = vsel %vm4560, %v4595, 0.0
    %v4614 = vadd.f32 %v4612, %v4613
    %v4615 = vsel %vm4560, %v4596, 0.0
    %v4616 = vadd.f32 %v4614, %v4615
    %v4617 = vsel %vm4560, %v4597, 0.0
    %v4618 = vadd.f32 %v4616, %v4617
    %v4619 = vsel %vm4560, %v4598, 0.0
    %v4620 = vadd.f32 %v4618, %v4619
    %v4621 = vsel %vm4560, %v4599, 0.0
    %v4622 = vadd.f32 %v4620, %v4621
    %v4623 = vsel %vm4560, %v4600, 0.0
    %v4624 = vadd.f32 %v4622, %v4623
    %v4625 = vsel %vm4560, %v4601, 0.0
    %v4626 = vadd.f32 %v4624, %v4625
    %v4627 = vsel %vm4560, %v4602, 0.0
    %v4628 = vadd.f32 %v4626, %v4627
    %v4629 = vsel %vm4560, %v4603, 0.0
    %v4630 = vadd.f32 %v4628, %v4629
    %4631 = vadd.xlane.f32.xlu0 %v4630
    %v4632 = vpop.xlane.xlu0 %4631
    %v4633 = vmul.f32 %v4589, 0.0006377551
    %v4634 = vmul.f32 %v4632, 0.0006377551
    %v4635 = vmul.f32 %v4633, %v4633
    %v4636 = vsub.f32 %v4634, %v4635
    %v4637 = vld [vmem:[%s12] sm:$0x3f]
    %v4638 = vadd.f32 %v4636, 1e-05
    %v4639 = vrsqrt.pop %v4638
    %v4640 = vmul.f32 %v4639, %v4638
    %v4641 = vmul.f32 %v4640, %v4639
    %v4642 = vmul.f32 0.5, %v4641
    %v4643 = vsub.f32 1.5, %v4642
    %v4644 = vmul.f32 %v4639, %v4643
    %vm4645 = vweird.f32 %v4638
    %vm4646 = vweird.f32 %v4639
    %vm4647 = vmor %vm4645, %vm4646
    %v4648 = vsel %vm4647, %v4639, %v4644
    %v4649 = vmul.f32 %v4637, %v4648
    %v4650 = vld [vmem:[%s13] sm:$0x3f]
    %v4651 = vmul.f32 %v4633, %v4649
    %v4652 = vsub.f32 %v4650, %v4651
    %4654 = vset.pattern.permute.xlu0 0
    %4655 = vperm.xlu0 %4654, %v4649
    %v4656 = vpop.permute.xlu0 %4655
    %v4658 = vmul.f32 %v4546, %v4656
    %v4659 = vmul.f32 %v4547, %v4656
    %v4660 = vmul.f32 %v4548, %v4656
    %v4661 = vmul.f32 %v4549, %v4656
    %v4662 = vmul.f32 %v4550, %v4656
    %v4663 = vmul.f32 %v4551, %v4656
    %v4664 = vmul.f32 %v4552, %v4656
    %v4665 = vmul.f32 %v4553, %v4656
    %v4666 = vmul.f32 %v4554, %v4656
    %v4667 = vmul.f32 %v4555, %v4656
    %v4668 = vmul.f32 %v4556, %v4656
    %v4669 = vmul.f32 %v4557, %v4656
    %v4670 = vmul.f32 %v4558, %v4656
    %v4671 = vmul.f32 %v4559, %v4656
    %4673 = vset.pattern.permute.xlu0 0
    %4674 = vperm.xlu0 %4673, %v4652
    %v4675 = vpop.permute.xlu0 %4674
    %v4677 = vadd.f32 %v4658, %v4675
    %v4678 = vadd.f32 %v4659, %v4675
    %v4679 = vadd.f32 %v4660, %v4675
    %v4680 = vadd.f32 %v4661, %v4675
    %v4681 = vadd.f32 %v4662, %v4675
    %v4682 = vadd.f32 %v4663, %v4675
    %v4683 = vadd.f32 %v4664, %v4675
    %v4684 = vadd.f32 %v4665, %v4675
    %v4685 = vadd.f32 %v4666, %v4675
    %v4686 = vadd.f32 %v4667, %v4675
    %v4687 = vadd.f32 %v4668, %v4675
    %v4688 = vadd.f32 %v4669, %v4675
    %v4689 = vadd.f32 %v4670, %v4675
    %v4690 = vadd.f32 %v4671, %v4675
    %v4691 = vmax.f32 %v4677, 0.0
    %v4692 = vmax.f32 %v4678, 0.0
    %v4693 = vmax.f32 %v4679, 0.0
    %v4694 = vmax.f32 %v4680, 0.0
    %v4695 = vmax.f32 %v4681, 0.0
    %v4696 = vmax.f32 %v4682, 0.0
    %v4697 = vmax.f32 %v4683, 0.0
    %v4698 = vmax.f32 %v4684, 0.0
    %v4699 = vmax.f32 %v4685, 0.0
    %v4700 = vmax.f32 %v4686, 0.0
    %v4701 = vmax.f32 %v4687, 0.0
    %v4702 = vmax.f32 %v4688, 0.0
    %v4703 = vmax.f32 %v4689, 0.0
    %v4704 = vmax.f32 %v4690, 0.0
    %4705 = vrot.lane.b32.xlu0 %v4691, 29
    %v4706 = vpop.permute.xlu0 %4705
    %4707 = vrot.lane.b32.xlu0 %v4692, 29
    %v4708 = vpop.permute.xlu0 %4707
    %4709 = vrot.lane.b32.xlu0 %v4693, 29
    %v4710 = vpop.permute.xlu0 %4709
    %4711 = vrot.lane.b32.xlu0 %v4694, 29
    %v4712 = vpop.permute.xlu0 %4711
    %4713 = vrot.lane.b32.xlu0 %v4695, 29
    %v4714 = vpop.permute.xlu0 %4713
    %4715 = vrot.lane.b32.xlu0 %v4696, 29
    %v4716 = vpop.permute.xlu0 %4715
    %4717 = vrot.lane.b32.xlu0 %v4697, 29
    %v4718 = vpop.permute.xlu0 %4717
    %4719 = vrot.lane.b32.xlu0 %v4698, 29
    %v4720 = vpop.permute.xlu0 %4719
    %4721 = vrot.lane.b32.xlu0 %v4699, 29
    %v4722 = vpop.permute.xlu0 %4721
    %4723 = vrot.lane.b32.xlu0 %v4700, 29
    %v4724 = vpop.permute.xlu0 %4723
    %4725 = vrot.lane.b32.xlu0 %v4701, 29
    %v4726 = vpop.permute.xlu0 %4725
    %4727 = vrot.lane.b32.xlu0 %v4702, 29
    %v4728 = vpop.permute.xlu0 %4727
    %4729 = vrot.lane.b32.xlu0 %v4703, 29
    %v4730 = vpop.permute.xlu0 %4729
    %4731 = vrot.lane.b32.xlu0 %v4704, 29
    %v4732 = vpop.permute.xlu0 %4731
    %v4733 = vsel %vm643, %v4730, %v4732
    %v4734 = vsel %vm643, %v4728, %v4730
    %v4735 = vsel %vm643, %v4726, %v4728
    %v4736 = vsel %vm643, %v4724, %v4726
    %v4737 = vsel %vm643, %v4722, %v4724
    %v4738 = vsel %vm643, %v4720, %v4722
    %v4739 = vsel %vm643, %v4718, %v4720
    %v4740 = vsel %vm643, %v4716, %v4718
    %v4741 = vsel %vm643, %v4714, %v4716
    %v4742 = vsel %vm643, %v4712, %v4714
    %v4743 = vsel %vm643, %v4710, %v4712
    %v4744 = vsel %vm643, %v4708, %v4710
    %v4745 = vsel %vm643, %v4706, %v4708
    %v4746 = vsel %vm643, %v4732, %v4706
    %v4747 = vld [vmem:[#allocation9] sm:$0xff]
    %v4749 = vperm.slane %v4747, 0
    %v4750 = vperm.slane %v4747, 1
    %v4751 = vperm.slane %v4747, 2
    %v4752 = vperm.slane %v4747, 3
    %v4753 = vperm.slane %v4747, 4
    %v4754 = vperm.slane %v4747, 5
    %v4755 = vperm.slane %v4747, 6
    %v4763 = vperm.slane %v4749, 0
    %v4764 = vperm.slane %v4750, 0
    %v4765 = vperm.slane %v4751, 0
    %v4766 = vperm.slane %v4752, 0
    %v4767 = vperm.slane %v4753, 0
    %v4768 = vperm.slane %v4754, 0
    %v4769 = vperm.slane %v4755, 0
    %v4770 = vmul.f32 %v4746, %v4763
    %v4771 = vmul.f32 %v4745, %v4764
    %v4772 = vmul.f32 %v4744, %v4765
    %v4773 = vmul.f32 %v4743, %v4766
    %v4774 = vmul.f32 %v4742, %v4767
    %v4775 = vmul.f32 %v4741, %v4768
    %v4776 = vmul.f32 %v4740, %v4769
    %v4777 = vmul.f32 %v4739, %v4763
    %v4778 = vmul.f32 %v4738, %v4764
    %v4779 = vmul.f32 %v4737, %v4765
    %v4780 = vmul.f32 %v4736, %v4766
    %v4781 = vmul.f32 %v4735, %v4767
    %v4782 = vmul.f32 %v4734, %v4768
    %v4783 = vmul.f32 %v4733, %v4769
    %4784 = vst [vmem:[#allocation2] sm:$0x3f] %v4770
    %4785 = vst [vmem:[#allocation2 + $0x8] sm:$0x3f] %v4771
    %4786 = vst [vmem:[#allocation2 + $0x10] sm:$0x3f] %v4772
    %4787 = vst [vmem:[#allocation2 + $0x18] sm:$0x3f] %v4773
    %4788 = vst [vmem:[#allocation2 + $0x20] sm:$0x3f] %v4774
    %4789 = vst [vmem:[#allocation2 + $0x28] sm:$0x3f] %v4775
    %4790 = vst [vmem:[#allocation2 + $0x30] sm:$0x3f] %v4776
    %4791 = vst [vmem:[#allocation2 + $0x38] sm:$0x3f] %v4777
    %4792 = vst [vmem:[#allocation2 + $0x40] sm:$0x3f] %v4778
    %4793 = vst [vmem:[#allocation2 + $0x48] sm:$0x3f] %v4779
    %4794 = vst [vmem:[#allocation2 + $0x50] sm:$0x3f] %v4780
    %4795 = vst [vmem:[#allocation2 + $0x58] sm:$0x3f] %v4781
    %4796 = vst [vmem:[#allocation2 + $0x60] sm:$0x3f] %v4782
    %4797 = vst [vmem:[#allocation2 + $0x68] sm:$0x3f] %v4783
    %4798 = vrot.lane.b32.xlu0 %v4691, 28
    %v4799 = vpop.permute.xlu0 %4798
    %4800 = vrot.lane.b32.xlu0 %v4692, 28
    %v4801 = vpop.permute.xlu0 %4800
    %4802 = vrot.lane.b32.xlu0 %v4693, 28
    %v4803 = vpop.permute.xlu0 %4802
    %4804 = vrot.lane.b32.xlu0 %v4694, 28
    %v4805 = vpop.permute.xlu0 %4804
    %4806 = vrot.lane.b32.xlu0 %v4695, 28
    %v4807 = vpop.permute.xlu0 %4806
    %4808 = vrot.lane.b32.xlu0 %v4696, 28
    %v4809 = vpop.permute.xlu0 %4808
    %4810 = vrot.lane.b32.xlu0 %v4697, 28
    %v4811 = vpop.permute.xlu0 %4810
    %4812 = vrot.lane.b32.xlu0 %v4698, 28
    %v4813 = vpop.permute.xlu0 %4812
    %4814 = vrot.lane.b32.xlu0 %v4699, 28
    %v4815 = vpop.permute.xlu0 %4814
    %4816 = vrot.lane.b32.xlu0 %v4700, 28
    %v4817 = vpop.permute.xlu0 %4816
    %4818 = vrot.lane.b32.xlu0 %v4701, 28
    %v4819 = vpop.permute.xlu0 %4818
    %4820 = vrot.lane.b32.xlu0 %v4702, 28
    %v4821 = vpop.permute.xlu0 %4820
    %4822 = vrot.lane.b32.xlu0 %v4703, 28
    %v4823 = vpop.permute.xlu0 %4822
    %4824 = vrot.lane.b32.xlu0 %v4704, 28
    %v4825 = vpop.permute.xlu0 %4824
    %v4826 = vsel %vm767, %v4823, %v4825
    %v4827 = vsel %vm767, %v4821, %v4823
    %v4828 = vsel %vm767, %v4819, %v4821
    %v4829 = vsel %vm767, %v4817, %v4819
    %v4830 = vsel %vm767, %v4815, %v4817
    %v4831 = vsel %vm767, %v4813, %v4815
    %v4832 = vsel %vm767, %v4811, %v4813
    %v4833 = vsel %vm767, %v4809, %v4811
    %v4834 = vsel %vm767, %v4807, %v4809
    %v4835 = vsel %vm767, %v4805, %v4807
    %v4836 = vsel %vm767, %v4803, %v4805
    %v4837 = vsel %vm767, %v4801, %v4803
    %v4838 = vsel %vm767, %v4799, %v4801
    %v4839 = vsel %vm767, %v4825, %v4799
    %v4840 = vld [vmem:[%s782] sm:$0xff]
    %v4842 = vperm.slane %v4840, 0
    %v4843 = vperm.slane %v4840, 1
    %v4844 = vperm.slane %v4840, 2
    %v4845 = vperm.slane %v4840, 3
    %v4846 = vperm.slane %v4840, 4
    %v4847 = vperm.slane %v4840, 5
    %v4848 = vperm.slane %v4840, 6
    %v4856 = vperm.slane %v4842, 0
    %v4857 = vperm.slane %v4843, 0
    %v4858 = vperm.slane %v4844, 0
    %v4859 = vperm.slane %v4845, 0
    %v4860 = vperm.slane %v4846, 0
    %v4861 = vperm.slane %v4847, 0
    %v4862 = vperm.slane %v4848, 0
    %v4863 = vmul.f32 %v4839, %v4856
    %v4864 = vmul.f32 %v4838, %v4857
    %v4865 = vmul.f32 %v4837, %v4858
    %v4866 = vmul.f32 %v4836, %v4859
    %v4867 = vmul.f32 %v4835, %v4860
    %v4868 = vmul.f32 %v4834, %v4861
    %v4869 = vmul.f32 %v4833, %v4862
    %v4870 = vmul.f32 %v4832, %v4856
    %v4871 = vmul.f32 %v4831, %v4857
    %v4872 = vmul.f32 %v4830, %v4858
    %v4873 = vmul.f32 %v4829, %v4859
    %v4874 = vmul.f32 %v4828, %v4860
    %v4875 = vmul.f32 %v4827, %v4861
    %v4876 = vmul.f32 %v4826, %v4862
    %v4891 = vrot.slane %v4863, 2
    %v4892 = vrot.slane %v4864, 2
    %v4893 = vrot.slane %v4865, 2
    %v4894 = vrot.slane %v4866, 2
    %v4895 = vrot.slane %v4867, 2
    %v4896 = vrot.slane %v4868, 2
    %v4897 = vrot.slane %v4869, 2
    %v4898 = vrot.slane %v4870, 2
    %v4899 = vrot.slane %v4871, 2
    %v4900 = vrot.slane %v4872, 2
    %v4901 = vrot.slane %v4873, 2
    %v4902 = vrot.slane %v4874, 2
    %v4903 = vrot.slane %v4875, 2
    %v4904 = vrot.slane %v4876, 2
    %4919 = vst [vmem:[#allocation2] sm:$0xc0] %v4891
    %4920 = vst [vmem:[#allocation2 + $0x8] sm:$0xc0] %v4892
    %4921 = vst [vmem:[#allocation2 + $0x10] sm:$0xc0] %v4893
    %4922 = vst [vmem:[#allocation2 + $0x18] sm:$0xc0] %v4894
    %4923 = vst [vmem:[#allocation2 + $0x20] sm:$0xc0] %v4895
    %4924 = vst [vmem:[#allocation2 + $0x28] sm:$0xc0] %v4896
    %4925 = vst [vmem:[#allocation2 + $0x30] sm:$0xc0] %v4897
    %4926 = vst [vmem:[#allocation2 + $0x38] sm:$0xc0] %v4898
    %4927 = vst [vmem:[#allocation2 + $0x40] sm:$0xc0] %v4899
    %4928 = vst [vmem:[#allocation2 + $0x48] sm:$0xc0] %v4900
    %4929 = vst [vmem:[#allocation2 + $0x50] sm:$0xc0] %v4901
    %4930 = vst [vmem:[#allocation2 + $0x58] sm:$0xc0] %v4902
    %4931 = vst [vmem:[#allocation2 + $0x60] sm:$0xc0] %v4903
    %4932 = vst [vmem:[#allocation2 + $0x68] sm:$0xc0] %v4904
    %4933 = vst [vmem:[#allocation2 + $0x70] sm:$0xf] %v4891
    %4934 = vst [vmem:[#allocation2 + $0x78] sm:$0xf] %v4892
    %4935 = vst [vmem:[#allocation2 + $0x80] sm:$0xf] %v4893
    %4936 = vst [vmem:[#allocation2 + $0x88] sm:$0xf] %v4894
    %4937 = vst [vmem:[#allocation2 + $0x90] sm:$0xf] %v4895
    %4938 = vst [vmem:[#allocation2 + $0x98] sm:$0xf] %v4896
    %4939 = vst [vmem:[#allocation2 + $0xa0] sm:$0xf] %v4897
    %4940 = vst [vmem:[#allocation2 + $0xa8] sm:$0xf] %v4898
    %4941 = vst [vmem:[#allocation2 + $0xb0] sm:$0xf] %v4899
    %4942 = vst [vmem:[#allocation2 + $0xb8] sm:$0xf] %v4900
    %4943 = vst [vmem:[#allocation2 + $0xc0] sm:$0xf] %v4901
    %4944 = vst [vmem:[#allocation2 + $0xc8] sm:$0xf] %v4902
    %4945 = vst [vmem:[#allocation2 + $0xd0] sm:$0xf] %v4903
    %4946 = vst [vmem:[#allocation2 + $0xd8] sm:$0xf] %v4904
    %4947 = vrot.lane.b32.xlu0 %v4691, 27
    %v4948 = vpop.permute.xlu0 %4947
    %4949 = vrot.lane.b32.xlu0 %v4692, 27
    %v4950 = vpop.permute.xlu0 %4949
    %4951 = vrot.lane.b32.xlu0 %v4693, 27
    %v4952 = vpop.permute.xlu0 %4951
    %4953 = vrot.lane.b32.xlu0 %v4694, 27
    %v4954 = vpop.permute.xlu0 %4953
    %4955 = vrot.lane.b32.xlu0 %v4695, 27
    %v4956 = vpop.permute.xlu0 %4955
    %4957 = vrot.lane.b32.xlu0 %v4696, 27
    %v4958 = vpop.permute.xlu0 %4957
    %4959 = vrot.lane.b32.xlu0 %v4697, 27
    %v4960 = vpop.permute.xlu0 %4959
    %4961 = vrot.lane.b32.xlu0 %v4698, 27
    %v4962 = vpop.permute.xlu0 %4961
    %4963 = vrot.lane.b32.xlu0 %v4699, 27
    %v4964 = vpop.permute.xlu0 %4963
    %4965 = vrot.lane.b32.xlu0 %v4700, 27
    %v4966 = vpop.permute.xlu0 %4965
    %4967 = vrot.lane.b32.xlu0 %v4701, 27
    %v4968 = vpop.permute.xlu0 %4967
    %4969 = vrot.lane.b32.xlu0 %v4702, 27
    %v4970 = vpop.permute.xlu0 %4969
    %4971 = vrot.lane.b32.xlu0 %v4703, 27
    %v4972 = vpop.permute.xlu0 %4971
    %4973 = vrot.lane.b32.xlu0 %v4704, 27
    %v4974 = vpop.permute.xlu0 %4973
    %v4975 = vsel %vm887, %v4972, %v4974
    %v4976 = vsel %vm887, %v4970, %v4972
    %v4977 = vsel %vm887, %v4968, %v4970
    %v4978 = vsel %vm887, %v4966, %v4968
    %v4979 = vsel %vm887, %v4964, %v4966
    %v4980 = vsel %vm887, %v4962, %v4964
    %v4981 = vsel %vm887, %v4960, %v4962
    %v4982 = vsel %vm887, %v4958, %v4960
    %v4983 = vsel %vm887, %v4956, %v4958
    %v4984 = vsel %vm887, %v4954, %v4956
    %v4985 = vsel %vm887, %v4952, %v4954
    %v4986 = vsel %vm887, %v4950, %v4952
    %v4987 = vsel %vm887, %v4948, %v4950
    %v4988 = vsel %vm887, %v4974, %v4948
    %v4989 = vld [vmem:[%s902] sm:$0xff]
    %v4991 = vperm.slane %v4989, 0
    %v4992 = vperm.slane %v4989, 1
    %v4993 = vperm.slane %v4989, 2
    %v4994 = vperm.slane %v4989, 3
    %v4995 = vperm.slane %v4989, 4
    %v4996 = vperm.slane %v4989, 5
    %v4997 = vperm.slane %v4989, 6
    %v5005 = vperm.slane %v4991, 0
    %v5006 = vperm.slane %v4992, 0
    %v5007 = vperm.slane %v4993, 0
    %v5008 = vperm.slane %v4994, 0
    %v5009 = vperm.slane %v4995, 0
    %v5010 = vperm.slane %v4996, 0
    %v5011 = vperm.slane %v4997, 0
    %v5012 = vmul.f32 %v4988, %v5005
    %v5013 = vmul.f32 %v4987, %v5006
    %v5014 = vmul.f32 %v4986, %v5007
    %v5015 = vmul.f32 %v4985, %v5008
    %v5016 = vmul.f32 %v4984, %v5009
    %v5017 = vmul.f32 %v4983, %v5010
    %v5018 = vmul.f32 %v4982, %v5011
    %v5019 = vmul.f32 %v4981, %v5005
    %v5020 = vmul.f32 %v4980, %v5006
    %v5021 = vmul.f32 %v4979, %v5007
    %v5022 = vmul.f32 %v4978, %v5008
    %v5023 = vmul.f32 %v4977, %v5009
    %v5024 = vmul.f32 %v4976, %v5010
    %v5025 = vmul.f32 %v4975, %v5011
    %v5040 = vrot.slane %v5012, 4
    %v5041 = vrot.slane %v5013, 4
    %v5042 = vrot.slane %v5014, 4
    %v5043 = vrot.slane %v5015, 4
    %v5044 = vrot.slane %v5016, 4
    %v5045 = vrot.slane %v5017, 4
    %v5046 = vrot.slane %v5018, 4
    %v5047 = vrot.slane %v5019, 4
    %v5048 = vrot.slane %v5020, 4
    %v5049 = vrot.slane %v5021, 4
    %v5050 = vrot.slane %v5022, 4
    %v5051 = vrot.slane %v5023, 4
    %v5052 = vrot.slane %v5024, 4
    %v5053 = vrot.slane %v5025, 4
    %5068 = vst [vmem:[#allocation2 + $0x70] sm:$0xf0] %v5040
    %5069 = vst [vmem:[#allocation2 + $0x78] sm:$0xf0] %v5041
    %5070 = vst [vmem:[#allocation2 + $0x80] sm:$0xf0] %v5042
    %5071 = vst [vmem:[#allocation2 + $0x88] sm:$0xf0] %v5043
    %5072 = vst [vmem:[#allocation2 + $0x90] sm:$0xf0] %v5044
    %5073 = vst [vmem:[#allocation2 + $0x98] sm:$0xf0] %v5045
    %5074 = vst [vmem:[#allocation2 + $0xa0] sm:$0xf0] %v5046
    %5075 = vst [vmem:[#allocation2 + $0xa8] sm:$0xf0] %v5047
    %5076 = vst [vmem:[#allocation2 + $0xb0] sm:$0xf0] %v5048
    %5077 = vst [vmem:[#allocation2 + $0xb8] sm:$0xf0] %v5049
    %5078 = vst [vmem:[#allocation2 + $0xc0] sm:$0xf0] %v5050
    %5079 = vst [vmem:[#allocation2 + $0xc8] sm:$0xf0] %v5051
    %5080 = vst [vmem:[#allocation2 + $0xd0] sm:$0xf0] %v5052
    %5081 = vst [vmem:[#allocation2 + $0xd8] sm:$0xf0] %v5053
    %5082 = vst [vmem:[#allocation2 + $0xe0] sm:$0x3] %v5040
    %5083 = vst [vmem:[#allocation2 + $0xe8] sm:$0x3] %v5041
    %5084 = vst [vmem:[#allocation2 + $0xf0] sm:$0x3] %v5042
    %5085 = vst [vmem:[#allocation2 + $0xf8] sm:$0x3] %v5043
    %5086 = vst [vmem:[#allocation2 + $0x100] sm:$0x3] %v5044
    %5087 = vst [vmem:[#allocation2 + $0x108] sm:$0x3] %v5045
    %5088 = vst [vmem:[#allocation2 + $0x110] sm:$0x3] %v5046
    %5089 = vst [vmem:[#allocation2 + $0x118] sm:$0x3] %v5047
    %5090 = vst [vmem:[#allocation2 + $0x120] sm:$0x3] %v5048
    %5091 = vst [vmem:[#allocation2 + $0x128] sm:$0x3] %v5049
    %5092 = vst [vmem:[#allocation2 + $0x130] sm:$0x3] %v5050
    %5093 = vst [vmem:[#allocation2 + $0x138] sm:$0x3] %v5051
    %5094 = vst [vmem:[#allocation2 + $0x140] sm:$0x3] %v5052
    %5095 = vst [vmem:[#allocation2 + $0x148] sm:$0x3] %v5053
    %5096 = vrot.lane.b32.xlu0 %v4691, 1
    %v5097 = vpop.permute.xlu0 %5096
    %5098 = vrot.lane.b32.xlu0 %v4692, 1
    %v5099 = vpop.permute.xlu0 %5098
    %5100 = vrot.lane.b32.xlu0 %v4693, 1
    %v5101 = vpop.permute.xlu0 %5100
    %5102 = vrot.lane.b32.xlu0 %v4694, 1
    %v5103 = vpop.permute.xlu0 %5102
    %5104 = vrot.lane.b32.xlu0 %v4695, 1
    %v5105 = vpop.permute.xlu0 %5104
    %5106 = vrot.lane.b32.xlu0 %v4696, 1
    %v5107 = vpop.permute.xlu0 %5106
    %5108 = vrot.lane.b32.xlu0 %v4697, 1
    %v5109 = vpop.permute.xlu0 %5108
    %5110 = vrot.lane.b32.xlu0 %v4698, 1
    %v5111 = vpop.permute.xlu0 %5110
    %5112 = vrot.lane.b32.xlu0 %v4699, 1
    %v5113 = vpop.permute.xlu0 %5112
    %5114 = vrot.lane.b32.xlu0 %v4700, 1
    %v5115 = vpop.permute.xlu0 %5114
    %5116 = vrot.lane.b32.xlu0 %v4701, 1
    %v5117 = vpop.permute.xlu0 %5116
    %5118 = vrot.lane.b32.xlu0 %v4702, 1
    %v5119 = vpop.permute.xlu0 %5118
    %5120 = vrot.lane.b32.xlu0 %v4703, 1
    %v5121 = vpop.permute.xlu0 %5120
    %5122 = vrot.lane.b32.xlu0 %v4704, 1
    %v5123 = vpop.permute.xlu0 %5122
    %v5124 = vsel %vm1007, %v5121, %v5123
    %v5125 = vsel %vm1007, %v5119, %v5121
    %v5126 = vsel %vm1007, %v5117, %v5119
    %v5127 = vsel %vm1007, %v5115, %v5117
    %v5128 = vsel %vm1007, %v5113, %v5115
    %v5129 = vsel %vm1007, %v5111, %v5113
    %v5130 = vsel %vm1007, %v5109, %v5111
    %v5131 = vsel %vm1007, %v5107, %v5109
    %v5132 = vsel %vm1007, %v5105, %v5107
    %v5133 = vsel %vm1007, %v5103, %v5105
    %v5134 = vsel %vm1007, %v5101, %v5103
    %v5135 = vsel %vm1007, %v5099, %v5101
    %v5136 = vsel %vm1007, %v5097, %v5099
    %v5137 = vsel %vm1007, %v5123, %v5097
    %v5138 = vld [vmem:[%s1022] sm:$0xff]
    %v5140 = vperm.slane %v5138, 0
    %v5141 = vperm.slane %v5138, 1
    %v5142 = vperm.slane %v5138, 2
    %v5143 = vperm.slane %v5138, 3
    %v5144 = vperm.slane %v5138, 4
    %v5145 = vperm.slane %v5138, 5
    %v5146 = vperm.slane %v5138, 6
    %v5154 = vperm.slane %v5140, 0
    %v5155 = vperm.slane %v5141, 0
    %v5156 = vperm.slane %v5142, 0
    %v5157 = vperm.slane %v5143, 0
    %v5158 = vperm.slane %v5144, 0
    %v5159 = vperm.slane %v5145, 0
    %v5160 = vperm.slane %v5146, 0
    %v5161 = vmul.f32 %v5137, %v5154
    %v5162 = vmul.f32 %v5136, %v5155
    %v5163 = vmul.f32 %v5135, %v5156
    %v5164 = vmul.f32 %v5134, %v5157
    %v5165 = vmul.f32 %v5133, %v5158
    %v5166 = vmul.f32 %v5132, %v5159
    %v5167 = vmul.f32 %v5131, %v5160
    %v5168 = vmul.f32 %v5130, %v5154
    %v5169 = vmul.f32 %v5129, %v5155
    %v5170 = vmul.f32 %v5128, %v5156
    %v5171 = vmul.f32 %v5127, %v5157
    %v5172 = vmul.f32 %v5126, %v5158
    %v5173 = vmul.f32 %v5125, %v5159
    %v5174 = vmul.f32 %v5124, %v5160
    %v5189 = vrot.slane %v5161, 6
    %v5190 = vrot.slane %v5162, 6
    %v5191 = vrot.slane %v5163, 6
    %v5192 = vrot.slane %v5164, 6
    %v5193 = vrot.slane %v5165, 6
    %v5194 = vrot.slane %v5166, 6
    %v5195 = vrot.slane %v5167, 6
    %v5196 = vrot.slane %v5168, 6
    %v5197 = vrot.slane %v5169, 6
    %v5198 = vrot.slane %v5170, 6
    %v5199 = vrot.slane %v5171, 6
    %v5200 = vrot.slane %v5172, 6
    %v5201 = vrot.slane %v5173, 6
    %v5202 = vrot.slane %v5174, 6
    %5217 = vst [vmem:[#allocation2 + $0xe0] sm:$0xfc] %v5189
    %5218 = vst [vmem:[#allocation2 + $0xe8] sm:$0xfc] %v5190
    %5219 = vst [vmem:[#allocation2 + $0xf0] sm:$0xfc] %v5191
    %5220 = vst [vmem:[#allocation2 + $0xf8] sm:$0xfc] %v5192
    %5221 = vst [vmem:[#allocation2 + $0x100] sm:$0xfc] %v5193
    %5222 = vst [vmem:[#allocation2 + $0x108] sm:$0xfc] %v5194
    %5223 = vst [vmem:[#allocation2 + $0x110] sm:$0xfc] %v5195
    %5224 = vst [vmem:[#allocation2 + $0x118] sm:$0xfc] %v5196
    %5225 = vst [vmem:[#allocation2 + $0x120] sm:$0xfc] %v5197
    %5226 = vst [vmem:[#allocation2 + $0x128] sm:$0xfc] %v5198
    %5227 = vst [vmem:[#allocation2 + $0x130] sm:$0xfc] %v5199
    %5228 = vst [vmem:[#allocation2 + $0x138] sm:$0xfc] %v5200
    %5229 = vst [vmem:[#allocation2 + $0x140] sm:$0xfc] %v5201
    %5230 = vst [vmem:[#allocation2 + $0x148] sm:$0xfc] %v5202
    %5231 = vst [vmem:[#allocation2 + $0x150] sm:$0x3f] %v4691
    %5232 = vst [vmem:[#allocation2 + $0x158] sm:$0x3f] %v4692
    %5233 = vst [vmem:[#allocation2 + $0x160] sm:$0x3f] %v4693
    %5234 = vst [vmem:[#allocation2 + $0x168] sm:$0x3f] %v4694
    %5235 = vst [vmem:[#allocation2 + $0x170] sm:$0x3f] %v4695
    %5236 = vst [vmem:[#allocation2 + $0x178] sm:$0x3f] %v4696
    %5237 = vst [vmem:[#allocation2 + $0x180] sm:$0x3f] %v4697
    %5238 = vst [vmem:[#allocation2 + $0x188] sm:$0x3f] %v4698
    %5239 = vst [vmem:[#allocation2 + $0x190] sm:$0x3f] %v4699
    %5240 = vst [vmem:[#allocation2 + $0x198] sm:$0x3f] %v4700
    %5241 = vst [vmem:[#allocation2 + $0x1a0] sm:$0x3f] %v4701
    %5242 = vst [vmem:[#allocation2 + $0x1a8] sm:$0x3f] %v4702
    %5243 = vst [vmem:[#allocation2 + $0x1b0] sm:$0x3f] %v4703
    %5244 = vst [vmem:[#allocation2 + $0x1b8] sm:$0x3f] %v4704
    %5245 = vrot.lane.b32.xlu0 %v4691, 127
    %v5246 = vpop.permute.xlu0 %5245
    %5247 = vrot.lane.b32.xlu0 %v4692, 127
    %v5248 = vpop.permute.xlu0 %5247
    %5249 = vrot.lane.b32.xlu0 %v4693, 127
    %v5250 = vpop.permute.xlu0 %5249
    %5251 = vrot.lane.b32.xlu0 %v4694, 127
    %v5252 = vpop.permute.xlu0 %5251
    %5253 = vrot.lane.b32.xlu0 %v4695, 127
    %v5254 = vpop.permute.xlu0 %5253
    %5255 = vrot.lane.b32.xlu0 %v4696, 127
    %v5256 = vpop.permute.xlu0 %5255
    %5257 = vrot.lane.b32.xlu0 %v4697, 127
    %v5258 = vpop.permute.xlu0 %5257
    %5259 = vrot.lane.b32.xlu0 %v4698, 127
    %v5260 = vpop.permute.xlu0 %5259
    %5261 = vrot.lane.b32.xlu0 %v4699, 127
    %v5262 = vpop.permute.xlu0 %5261
    %5263 = vrot.lane.b32.xlu0 %v4700, 127
    %v5264 = vpop.permute.xlu0 %5263
    %5265 = vrot.lane.b32.xlu0 %v4701, 127
    %v5266 = vpop.permute.xlu0 %5265
    %5267 = vrot.lane.b32.xlu0 %v4702, 127
    %v5268 = vpop.permute.xlu0 %5267
    %5269 = vrot.lane.b32.xlu0 %v4703, 127
    %v5270 = vpop.permute.xlu0 %5269
    %5271 = vrot.lane.b32.xlu0 %v4704, 127
    %v5272 = vpop.permute.xlu0 %5271
    %v5273 = vsel %vm1133, %v5270, %v5272
    %v5274 = vsel %vm1133, %v5268, %v5270
    %v5275 = vsel %vm1133, %v5266, %v5268
    %v5276 = vsel %vm1133, %v5264, %v5266
    %v5277 = vsel %vm1133, %v5262, %v5264
    %v5278 = vsel %vm1133, %v5260, %v5262
    %v5279 = vsel %vm1133, %v5258, %v5260
    %v5280 = vsel %vm1133, %v5256, %v5258
    %v5281 = vsel %vm1133, %v5254, %v5256
    %v5282 = vsel %vm1133, %v5252, %v5254
    %v5283 = vsel %vm1133, %v5250, %v5252
    %v5284 = vsel %vm1133, %v5248, %v5250
    %v5285 = vsel %vm1133, %v5246, %v5248
    %v5286 = vsel %vm1133, %v5272, %v5246
    %v5287 = vld [vmem:[%s1148] sm:$0xff]
    %v5289 = vperm.slane %v5287, 0
    %v5290 = vperm.slane %v5287, 1
    %v5291 = vperm.slane %v5287, 2
    %v5292 = vperm.slane %v5287, 3
    %v5293 = vperm.slane %v5287, 4
    %v5294 = vperm.slane %v5287, 5
    %v5295 = vperm.slane %v5287, 6
    %v5303 = vperm.slane %v5289, 0
    %v5304 = vperm.slane %v5290, 0
    %v5305 = vperm.slane %v5291, 0
    %v5306 = vperm.slane %v5292, 0
    %v5307 = vperm.slane %v5293, 0
    %v5308 = vperm.slane %v5294, 0
    %v5309 = vperm.slane %v5295, 0
    %v5310 = vmul.f32 %v5285, %v5303
    %v5311 = vmul.f32 %v5284, %v5304
    %v5312 = vmul.f32 %v5283, %v5305
    %v5313 = vmul.f32 %v5282, %v5306
    %v5314 = vmul.f32 %v5281, %v5307
    %v5315 = vmul.f32 %v5280, %v5308
    %v5316 = vmul.f32 %v5279, %v5309
    %v5317 = vmul.f32 %v5278, %v5303
    %v5318 = vmul.f32 %v5277, %v5304
    %v5319 = vmul.f32 %v5276, %v5305
    %v5320 = vmul.f32 %v5275, %v5306
    %v5321 = vmul.f32 %v5274, %v5307
    %v5322 = vmul.f32 %v5273, %v5308
    %v5323 = vmul.f32 %v5286, %v5309
    %v5338 = vrot.slane %v5310, 2
    %v5339 = vrot.slane %v5311, 2
    %v5340 = vrot.slane %v5312, 2
    %v5341 = vrot.slane %v5313, 2
    %v5342 = vrot.slane %v5314, 2
    %v5343 = vrot.slane %v5315, 2
    %v5344 = vrot.slane %v5316, 2
    %v5345 = vrot.slane %v5317, 2
    %v5346 = vrot.slane %v5318, 2
    %v5347 = vrot.slane %v5319, 2
    %v5348 = vrot.slane %v5320, 2
    %v5349 = vrot.slane %v5321, 2
    %v5350 = vrot.slane %v5322, 2
    %v5351 = vrot.slane %v5323, 2
    %5366 = vst [vmem:[#allocation2 + $0x150] sm:$0xc0] %v5338
    %5367 = vst [vmem:[#allocation2 + $0x158] sm:$0xc0] %v5339
    %5368 = vst [vmem:[#allocation2 + $0x160] sm:$0xc0] %v5340
    %5369 = vst [vmem:[#allocation2 + $0x168] sm:$0xc0] %v5341
    %5370 = vst [vmem:[#allocation2 + $0x170] sm:$0xc0] %v5342
    %5371 = vst [vmem:[#allocation2 + $0x178] sm:$0xc0] %v5343
    %5372 = vst [vmem:[#allocation2 + $0x180] sm:$0xc0] %v5344
    %5373 = vst [vmem:[#allocation2 + $0x188] sm:$0xc0] %v5345
    %5374 = vst [vmem:[#allocation2 + $0x190] sm:$0xc0] %v5346
    %5375 = vst [vmem:[#allocation2 + $0x198] sm:$0xc0] %v5347
    %5376 = vst [vmem:[#allocation2 + $0x1a0] sm:$0xc0] %v5348
    %5377 = vst [vmem:[#allocation2 + $0x1a8] sm:$0xc0] %v5349
    %5378 = vst [vmem:[#allocation2 + $0x1b0] sm:$0xc0] %v5350
    %5379 = vst [vmem:[#allocation2 + $0x1b8] sm:$0xc0] %v5351
    %5380 = vst [vmem:[#allocation2 + $0x1c0] sm:$0xf] %v5338
    %5381 = vst [vmem:[#allocation2 + $0x1c8] sm:$0xf] %v5339
    %5382 = vst [vmem:[#allocation2 + $0x1d0] sm:$0xf] %v5340
    %5383 = vst [vmem:[#allocation2 + $0x1d8] sm:$0xf] %v5341
    %5384 = vst [vmem:[#allocation2 + $0x1e0] sm:$0xf] %v5342
    %5385 = vst [vmem:[#allocation2 + $0x1e8] sm:$0xf] %v5343
    %5386 = vst [vmem:[#allocation2 + $0x1f0] sm:$0xf] %v5344
    %5387 = vst [vmem:[#allocation2 + $0x1f8] sm:$0xf] %v5345
    %5388 = vst [vmem:[#allocation2 + $0x200] sm:$0xf] %v5346
    %5389 = vst [vmem:[#allocation2 + $0x208] sm:$0xf] %v5347
    %5390 = vst [vmem:[#allocation2 + $0x210] sm:$0xf] %v5348
    %5391 = vst [vmem:[#allocation2 + $0x218] sm:$0xf] %v5349
    %5392 = vst [vmem:[#allocation2 + $0x220] sm:$0xf] %v5350
    %5393 = vst [vmem:[#allocation2 + $0x228] sm:$0xf] %v5351
    %5394 = vrot.lane.b32.xlu0 %v4691, 101
    %v5395 = vpop.permute.xlu0 %5394
    %5396 = vrot.lane.b32.xlu0 %v4692, 101
    %v5397 = vpop.permute.xlu0 %5396
    %5398 = vrot.lane.b32.xlu0 %v4693, 101
    %v5399 = vpop.permute.xlu0 %5398
    %5400 = vrot.lane.b32.xlu0 %v4694, 101
    %v5401 = vpop.permute.xlu0 %5400
    %5402 = vrot.lane.b32.xlu0 %v4695, 101
    %v5403 = vpop.permute.xlu0 %5402
    %5404 = vrot.lane.b32.xlu0 %v4696, 101
    %v5405 = vpop.permute.xlu0 %5404
    %5406 = vrot.lane.b32.xlu0 %v4697, 101
    %v5407 = vpop.permute.xlu0 %5406
    %5408 = vrot.lane.b32.xlu0 %v4698, 101
    %v5409 = vpop.permute.xlu0 %5408
    %5410 = vrot.lane.b32.xlu0 %v4699, 101
    %v5411 = vpop.permute.xlu0 %5410
    %5412 = vrot.lane.b32.xlu0 %v4700, 101
    %v5413 = vpop.permute.xlu0 %5412
    %5414 = vrot.lane.b32.xlu0 %v4701, 101
    %v5415 = vpop.permute.xlu0 %5414
    %5416 = vrot.lane.b32.xlu0 %v4702, 101
    %v5417 = vpop.permute.xlu0 %5416
    %5418 = vrot.lane.b32.xlu0 %v4703, 101
    %v5419 = vpop.permute.xlu0 %5418
    %5420 = vrot.lane.b32.xlu0 %v4704, 101
    %v5421 = vpop.permute.xlu0 %5420
    %v5422 = vsel %vm1253, %v5419, %v5421
    %v5423 = vsel %vm1253, %v5417, %v5419
    %v5424 = vsel %vm1253, %v5415, %v5417
    %v5425 = vsel %vm1253, %v5413, %v5415
    %v5426 = vsel %vm1253, %v5411, %v5413
    %v5427 = vsel %vm1253, %v5409, %v5411
    %v5428 = vsel %vm1253, %v5407, %v5409
    %v5429 = vsel %vm1253, %v5405, %v5407
    %v5430 = vsel %vm1253, %v5403, %v5405
    %v5431 = vsel %vm1253, %v5401, %v5403
    %v5432 = vsel %vm1253, %v5399, %v5401
    %v5433 = vsel %vm1253, %v5397, %v5399
    %v5434 = vsel %vm1253, %v5395, %v5397
    %v5435 = vsel %vm1253, %v5421, %v5395
    %v5436 = vld [vmem:[%s1268] sm:$0xff]
    %v5438 = vperm.slane %v5436, 0
    %v5439 = vperm.slane %v5436, 1
    %v5440 = vperm.slane %v5436, 2
    %v5441 = vperm.slane %v5436, 3
    %v5442 = vperm.slane %v5436, 4
    %v5443 = vperm.slane %v5436, 5
    %v5444 = vperm.slane %v5436, 6
    %v5452 = vperm.slane %v5438, 0
    %v5453 = vperm.slane %v5439, 0
    %v5454 = vperm.slane %v5440, 0
    %v5455 = vperm.slane %v5441, 0
    %v5456 = vperm.slane %v5442, 0
    %v5457 = vperm.slane %v5443, 0
    %v5458 = vperm.slane %v5444, 0
    %v5459 = vmul.f32 %v5434, %v5452
    %v5460 = vmul.f32 %v5433, %v5453
    %v5461 = vmul.f32 %v5432, %v5454
    %v5462 = vmul.f32 %v5431, %v5455
    %v5463 = vmul.f32 %v5430, %v5456
    %v5464 = vmul.f32 %v5429, %v5457
    %v5465 = vmul.f32 %v5428, %v5458
    %v5466 = vmul.f32 %v5427, %v5452
    %v5467 = vmul.f32 %v5426, %v5453
    %v5468 = vmul.f32 %v5425, %v5454
    %v5469 = vmul.f32 %v5424, %v5455
    %v5470 = vmul.f32 %v5423, %v5456
    %v5471 = vmul.f32 %v5422, %v5457
    %v5472 = vmul.f32 %v5435, %v5458
    %v5487 = vrot.slane %v5459, 4
    %v5488 = vrot.slane %v5460, 4
    %v5489 = vrot.slane %v5461, 4
    %v5490 = vrot.slane %v5462, 4
    %v5491 = vrot.slane %v5463, 4
    %v5492 = vrot.slane %v5464, 4
    %v5493 = vrot.slane %v5465, 4
    %v5494 = vrot.slane %v5466, 4
    %v5495 = vrot.slane %v5467, 4
    %v5496 = vrot.slane %v5468, 4
    %v5497 = vrot.slane %v5469, 4
    %v5498 = vrot.slane %v5470, 4
    %v5499 = vrot.slane %v5471, 4
    %v5500 = vrot.slane %v5472, 4
    %5515 = vst [vmem:[#allocation2 + $0x1c0] sm:$0xf0] %v5487
    %5516 = vst [vmem:[#allocation2 + $0x1c8] sm:$0xf0] %v5488
    %5517 = vst [vmem:[#allocation2 + $0x1d0] sm:$0xf0] %v5489
    %5518 = vst [vmem:[#allocation2 + $0x1d8] sm:$0xf0] %v5490
    %5519 = vst [vmem:[#allocation2 + $0x1e0] sm:$0xf0] %v5491
    %5520 = vst [vmem:[#allocation2 + $0x1e8] sm:$0xf0] %v5492
    %5521 = vst [vmem:[#allocation2 + $0x1f0] sm:$0xf0] %v5493
    %5522 = vst [vmem:[#allocation2 + $0x1f8] sm:$0xf0] %v5494
    %5523 = vst [vmem:[#allocation2 + $0x200] sm:$0xf0] %v5495
    %5524 = vst [vmem:[#allocation2 + $0x208] sm:$0xf0] %v5496
    %5525 = vst [vmem:[#allocation2 + $0x210] sm:$0xf0] %v5497
    %5526 = vst [vmem:[#allocation2 + $0x218] sm:$0xf0] %v5498
    %5527 = vst [vmem:[#allocation2 + $0x220] sm:$0xf0] %v5499
    %5528 = vst [vmem:[#allocation2 + $0x228] sm:$0xf0] %v5500
    %5529 = vst [vmem:[#allocation2 + $0x230] sm:$0x3] %v5487
    %5530 = vst [vmem:[#allocation2 + $0x238] sm:$0x3] %v5488
    %5531 = vst [vmem:[#allocation2 + $0x240] sm:$0x3] %v5489
    %5532 = vst [vmem:[#allocation2 + $0x248] sm:$0x3] %v5490
    %5533 = vst [vmem:[#allocation2 + $0x250] sm:$0x3] %v5491
    %5534 = vst [vmem:[#allocation2 + $0x258] sm:$0x3] %v5492
    %5535 = vst [vmem:[#allocation2 + $0x260] sm:$0x3] %v5493
    %5536 = vst [vmem:[#allocation2 + $0x268] sm:$0x3] %v5494
    %5537 = vst [vmem:[#allocation2 + $0x270] sm:$0x3] %v5495
    %5538 = vst [vmem:[#allocation2 + $0x278] sm:$0x3] %v5496
    %5539 = vst [vmem:[#allocation2 + $0x280] sm:$0x3] %v5497
    %5540 = vst [vmem:[#allocation2 + $0x288] sm:$0x3] %v5498
    %5541 = vst [vmem:[#allocation2 + $0x290] sm:$0x3] %v5499
    %5542 = vst [vmem:[#allocation2 + $0x298] sm:$0x3] %v5500
    %5543 = vrot.lane.b32.xlu0 %v4691, 100
    %v5544 = vpop.permute.xlu0 %5543
    %5545 = vrot.lane.b32.xlu0 %v4692, 100
    %v5546 = vpop.permute.xlu0 %5545
    %5547 = vrot.lane.b32.xlu0 %v4693, 100
    %v5548 = vpop.permute.xlu0 %5547
    %5549 = vrot.lane.b32.xlu0 %v4694, 100
    %v5550 = vpop.permute.xlu0 %5549
    %5551 = vrot.lane.b32.xlu0 %v4695, 100
    %v5552 = vpop.permute.xlu0 %5551
    %5553 = vrot.lane.b32.xlu0 %v4696, 100
    %v5554 = vpop.permute.xlu0 %5553
    %5555 = vrot.lane.b32.xlu0 %v4697, 100
    %v5556 = vpop.permute.xlu0 %5555
    %5557 = vrot.lane.b32.xlu0 %v4698, 100
    %v5558 = vpop.permute.xlu0 %5557
    %5559 = vrot.lane.b32.xlu0 %v4699, 100
    %v5560 = vpop.permute.xlu0 %5559
    %5561 = vrot.lane.b32.xlu0 %v4700, 100
    %v5562 = vpop.permute.xlu0 %5561
    %5563 = vrot.lane.b32.xlu0 %v4701, 100
    %v5564 = vpop.permute.xlu0 %5563
    %5565 = vrot.lane.b32.xlu0 %v4702, 100
    %v5566 = vpop.permute.xlu0 %5565
    %5567 = vrot.lane.b32.xlu0 %v4703, 100
    %v5568 = vpop.permute.xlu0 %5567
    %5569 = vrot.lane.b32.xlu0 %v4704, 100
    %v5570 = vpop.permute.xlu0 %5569
    %v5571 = vsel %vm1373, %v5568, %v5570
    %v5572 = vsel %vm1373, %v5566, %v5568
    %v5573 = vsel %vm1373, %v5564, %v5566
    %v5574 = vsel %vm1373, %v5562, %v5564
    %v5575 = vsel %vm1373, %v5560, %v5562
    %v5576 = vsel %vm1373, %v5558, %v5560
    %v5577 = vsel %vm1373, %v5556, %v5558
    %v5578 = vsel %vm1373, %v5554, %v5556
    %v5579 = vsel %vm1373, %v5552, %v5554
    %v5580 = vsel %vm1373, %v5550, %v5552
    %v5581 = vsel %vm1373, %v5548, %v5550
    %v5582 = vsel %vm1373, %v5546, %v5548
    %v5583 = vsel %vm1373, %v5544, %v5546
    %v5584 = vsel %vm1373, %v5570, %v5544
    %v5585 = vld [vmem:[%s1388] sm:$0xff]
    %v5587 = vperm.slane %v5585, 0
    %v5588 = vperm.slane %v5585, 1
    %v5589 = vperm.slane %v5585, 2
    %v5590 = vperm.slane %v5585, 3
    %v5591 = vperm.slane %v5585, 4
    %v5592 = vperm.slane %v5585, 5
    %v5593 = vperm.slane %v5585, 6
    %v5601 = vperm.slane %v5587, 0
    %v5602 = vperm.slane %v5588, 0
    %v5603 = vperm.slane %v5589, 0
    %v5604 = vperm.slane %v5590, 0
    %v5605 = vperm.slane %v5591, 0
    %v5606 = vperm.slane %v5592, 0
    %v5607 = vperm.slane %v5593, 0
    %v5608 = vmul.f32 %v5583, %v5601
    %v5609 = vmul.f32 %v5582, %v5602
    %v5610 = vmul.f32 %v5581, %v5603
    %v5611 = vmul.f32 %v5580, %v5604
    %v5612 = vmul.f32 %v5579, %v5605
    %v5613 = vmul.f32 %v5578, %v5606
    %v5614 = vmul.f32 %v5577, %v5607
    %v5615 = vmul.f32 %v5576, %v5601
    %v5616 = vmul.f32 %v5575, %v5602
    %v5617 = vmul.f32 %v5574, %v5603
    %v5618 = vmul.f32 %v5573, %v5604
    %v5619 = vmul.f32 %v5572, %v5605
    %v5620 = vmul.f32 %v5571, %v5606
    %v5621 = vmul.f32 %v5584, %v5607
    %v5636 = vrot.slane %v5608, 6
    %v5637 = vrot.slane %v5609, 6
    %v5638 = vrot.slane %v5610, 6
    %v5639 = vrot.slane %v5611, 6
    %v5640 = vrot.slane %v5612, 6
    %v5641 = vrot.slane %v5613, 6
    %v5642 = vrot.slane %v5614, 6
    %v5643 = vrot.slane %v5615, 6
    %v5644 = vrot.slane %v5616, 6
    %v5645 = vrot.slane %v5617, 6
    %v5646 = vrot.slane %v5618, 6
    %v5647 = vrot.slane %v5619, 6
    %v5648 = vrot.slane %v5620, 6
    %v5649 = vrot.slane %v5621, 6
    %5664 = vst [vmem:[#allocation2 + $0x230] sm:$0xfc] %v5636
    %5665 = vst [vmem:[#allocation2 + $0x238] sm:$0xfc] %v5637
    %5666 = vst [vmem:[#allocation2 + $0x240] sm:$0xfc] %v5638
    %5667 = vst [vmem:[#allocation2 + $0x248] sm:$0xfc] %v5639
    %5668 = vst [vmem:[#allocation2 + $0x250] sm:$0xfc] %v5640
    %5669 = vst [vmem:[#allocation2 + $0x258] sm:$0xfc] %v5641
    %5670 = vst [vmem:[#allocation2 + $0x260] sm:$0xfc] %v5642
    %5671 = vst [vmem:[#allocation2 + $0x268] sm:$0xfc] %v5643
    %5672 = vst [vmem:[#allocation2 + $0x270] sm:$0xfc] %v5644
    %5673 = vst [vmem:[#allocation2 + $0x278] sm:$0xfc] %v5645
    %5674 = vst [vmem:[#allocation2 + $0x280] sm:$0xfc] %v5646
    %5675 = vst [vmem:[#allocation2 + $0x288] sm:$0xfc] %v5647
    %5676 = vst [vmem:[#allocation2 + $0x290] sm:$0xfc] %v5648
    %5677 = vst [vmem:[#allocation2 + $0x298] sm:$0xfc] %v5649
    %5678 = vrot.lane.b32.xlu0 %v4691, 99
    %v5679 = vpop.permute.xlu0 %5678
    %5680 = vrot.lane.b32.xlu0 %v4692, 99
    %v5681 = vpop.permute.xlu0 %5680
    %5682 = vrot.lane.b32.xlu0 %v4693, 99
    %v5683 = vpop.permute.xlu0 %5682
    %5684 = vrot.lane.b32.xlu0 %v4694, 99
    %v5685 = vpop.permute.xlu0 %5684
    %5686 = vrot.lane.b32.xlu0 %v4695, 99
    %v5687 = vpop.permute.xlu0 %5686
    %5688 = vrot.lane.b32.xlu0 %v4696, 99
    %v5689 = vpop.permute.xlu0 %5688
    %5690 = vrot.lane.b32.xlu0 %v4697, 99
    %v5691 = vpop.permute.xlu0 %5690
    %5692 = vrot.lane.b32.xlu0 %v4698, 99
    %v5693 = vpop.permute.xlu0 %5692
    %5694 = vrot.lane.b32.xlu0 %v4699, 99
    %v5695 = vpop.permute.xlu0 %5694
    %5696 = vrot.lane.b32.xlu0 %v4700, 99
    %v5697 = vpop.permute.xlu0 %5696
    %5698 = vrot.lane.b32.xlu0 %v4701, 99
    %v5699 = vpop.permute.xlu0 %5698
    %5700 = vrot.lane.b32.xlu0 %v4702, 99
    %v5701 = vpop.permute.xlu0 %5700
    %5702 = vrot.lane.b32.xlu0 %v4703, 99
    %v5703 = vpop.permute.xlu0 %5702
    %5704 = vrot.lane.b32.xlu0 %v4704, 99
    %v5705 = vpop.permute.xlu0 %5704
    %v5706 = vsel %vm1493, %v5703, %v5705
    %v5707 = vsel %vm1493, %v5701, %v5703
    %v5708 = vsel %vm1493, %v5699, %v5701
    %v5709 = vsel %vm1493, %v5697, %v5699
    %v5710 = vsel %vm1493, %v5695, %v5697
    %v5711 = vsel %vm1493, %v5693, %v5695
    %v5712 = vsel %vm1493, %v5691, %v5693
    %v5713 = vsel %vm1493, %v5689, %v5691
    %v5714 = vsel %vm1493, %v5687, %v5689
    %v5715 = vsel %vm1493, %v5685, %v5687
    %v5716 = vsel %vm1493, %v5683, %v5685
    %v5717 = vsel %vm1493, %v5681, %v5683
    %v5718 = vsel %vm1493, %v5679, %v5681
    %v5719 = vsel %vm1493, %v5705, %v5679
    %v5720 = vld [vmem:[%s1508] sm:$0xff]
    %v5722 = vperm.slane %v5720, 0
    %v5723 = vperm.slane %v5720, 1
    %v5724 = vperm.slane %v5720, 2
    %v5725 = vperm.slane %v5720, 3
    %v5726 = vperm.slane %v5720, 4
    %v5727 = vperm.slane %v5720, 5
    %v5728 = vperm.slane %v5720, 6
    %v5736 = vperm.slane %v5722, 0
    %v5737 = vperm.slane %v5723, 0
    %v5738 = vperm.slane %v5724, 0
    %v5739 = vperm.slane %v5725, 0
    %v5740 = vperm.slane %v5726, 0
    %v5741 = vperm.slane %v5727, 0
    %v5742 = vperm.slane %v5728, 0
    %v5743 = vmul.f32 %v5718, %v5736
    %v5744 = vmul.f32 %v5717, %v5737
    %v5745 = vmul.f32 %v5716, %v5738
    %v5746 = vmul.f32 %v5715, %v5739
    %v5747 = vmul.f32 %v5714, %v5740
    %v5748 = vmul.f32 %v5713, %v5741
    %v5749 = vmul.f32 %v5712, %v5742
    %v5750 = vmul.f32 %v5711, %v5736
    %v5751 = vmul.f32 %v5710, %v5737
    %v5752 = vmul.f32 %v5709, %v5738
    %v5753 = vmul.f32 %v5708, %v5739
    %v5754 = vmul.f32 %v5707, %v5740
    %v5755 = vmul.f32 %v5706, %v5741
    %v5756 = vmul.f32 %v5719, %v5742
    %5757 = vst [vmem:[#allocation2 + $0x2a0] sm:$0x3f] %v5743
    %5758 = vst [vmem:[#allocation2 + $0x2a8] sm:$0x3f] %v5744
    %5759 = vst [vmem:[#allocation2 + $0x2b0] sm:$0x3f] %v5745
    %5760 = vst [vmem:[#allocation2 + $0x2b8] sm:$0x3f] %v5746
    %5761 = vst [vmem:[#allocation2 + $0x2c0] sm:$0x3f] %v5747
    %5762 = vst [vmem:[#allocation2 + $0x2c8] sm:$0x3f] %v5748
    %5763 = vst [vmem:[#allocation2 + $0x2d0] sm:$0x3f] %v5749
    %5764 = vst [vmem:[#allocation2 + $0x2d8] sm:$0x3f] %v5750
    %5765 = vst [vmem:[#allocation2 + $0x2e0] sm:$0x3f] %v5751
    %5766 = vst [vmem:[#allocation2 + $0x2e8] sm:$0x3f] %v5752
    %5767 = vst [vmem:[#allocation2 + $0x2f0] sm:$0x3f] %v5753
    %5768 = vst [vmem:[#allocation2 + $0x2f8] sm:$0x3f] %v5754
    %5769 = vst [vmem:[#allocation2 + $0x300] sm:$0x3f] %v5755
    %5770 = vst [vmem:[#allocation2 + $0x308] sm:$0x3f] %v5756
    %v5771 = vld [vmem:[%s14] sm:$0x1]
    %v5772 = vld [vmem:[#allocation2] sm:$0xff]
    %v5773 = vld [vmem:[#allocation2 + $0x8] sm:$0xff]
    %v5774 = vld [vmem:[#allocation2 + $0x10] sm:$0xff]
    %v5775 = vld [vmem:[#allocation2 + $0x18] sm:$0xff]
    %v5776 = vld [vmem:[#allocation2 + $0x20] sm:$0xff]
    %v5777 = vld [vmem:[#allocation2 + $0x28] sm:$0xff]
    %v5778 = vld [vmem:[#allocation2 + $0x30] sm:$0xff]
    %v5779 = vld [vmem:[#allocation2 + $0x38] sm:$0xff]
    %v5780 = vld [vmem:[#allocation2 + $0x40] sm:$0xff]
    %v5781 = vld [vmem:[#allocation2 + $0x48] sm:$0xff]
    %v5782 = vld [vmem:[#allocation2 + $0x50] sm:$0xff]
    %v5783 = vld [vmem:[#allocation2 + $0x58] sm:$0xff]
    %v5784 = vld [vmem:[#allocation2 + $0x60] sm:$0xff]
    %v5785 = vld [vmem:[#allocation2 + $0x68] sm:$0xff]
    %v5786 = vld [vmem:[#allocation2 + $0x70] sm:$0xff]
    %v5787 = vld [vmem:[#allocation2 + $0x78] sm:$0xff]
    %v5788 = vld [vmem:[#allocation2 + $0x80] sm:$0xff]
    %v5789 = vld [vmem:[#allocation2 + $0x88] sm:$0xff]
    %v5790 = vld [vmem:[#allocation2 + $0x90] sm:$0xff]
    %v5791 = vld [vmem:[#allocation2 + $0x98] sm:$0xff]
    %v5792 = vld [vmem:[#allocation2 + $0xa0] sm:$0xff]
    %v5793 = vld [vmem:[#allocation2 + $0xa8] sm:$0xff]
    %v5794 = vld [vmem:[#allocation2 + $0xb0] sm:$0xff]
    %v5795 = vld [vmem:[#allocation2 + $0xb8] sm:$0xff]
    %v5796 = vld [vmem:[#allocation2 + $0xc0] sm:$0xff]
    %v5797 = vld [vmem:[#allocation2 + $0xc8] sm:$0xff]
    %v5798 = vld [vmem:[#allocation2 + $0xd0] sm:$0xff]
    %v5799 = vld [vmem:[#allocation2 + $0xd8] sm:$0xff]
    %v5800 = vld [vmem:[#allocation2 + $0xe0] sm:$0xff]
    %v5801 = vld [vmem:[#allocation2 + $0xe8] sm:$0xff]
    %v5802 = vld [vmem:[#allocation2 + $0xf0] sm:$0xff]
    %v5803 = vld [vmem:[#allocation2 + $0xf8] sm:$0xff]
    %v5804 = vld [vmem:[#allocation2 + $0x100] sm:$0xff]
    %v5805 = vld [vmem:[#allocation2 + $0x108] sm:$0xff]
    %v5806 = vld [vmem:[#allocation2 + $0x110] sm:$0xff]
    %v5807 = vld [vmem:[#allocation2 + $0x118] sm:$0xff]
    %v5808 = vld [vmem:[#allocation2 + $0x120] sm:$0xff]
    %v5809 = vld [vmem:[#allocation2 + $0x128] sm:$0xff]
    %v5810 = vld [vmem:[#allocation2 + $0x130] sm:$0xff]
    %v5811 = vld [vmem:[#allocation2 + $0x138] sm:$0xff]
    %v5812 = vld [vmem:[#allocation2 + $0x140] sm:$0xff]
    %v5813 = vld [vmem:[#allocation2 + $0x148] sm:$0xff]
    %v5814 = vld [vmem:[#allocation2 + $0x150] sm:$0xff]
    %v5815 = vld [vmem:[#allocation2 + $0x158] sm:$0xff]
    %v5816 = vld [vmem:[#allocation2 + $0x160] sm:$0xff]
    %v5817 = vld [vmem:[#allocation2 + $0x168] sm:$0xff]
    %v5818 = vld [vmem:[#allocation2 + $0x170] sm:$0xff]
    %v5819 = vld [vmem:[#allocation2 + $0x178] sm:$0xff]
    %v5820 = vld [vmem:[#allocation2 + $0x180] sm:$0xff]
    %v5821 = vld [vmem:[#allocation2 + $0x188] sm:$0xff]
    %v5822 = vld [vmem:[#allocation2 + $0x190] sm:$0xff]
    %v5823 = vld [vmem:[#allocation2 + $0x198] sm:$0xff]
    %v5824 = vld [vmem:[#allocation2 + $0x1a0] sm:$0xff]
    %v5825 = vld [vmem:[#allocation2 + $0x1a8] sm:$0xff]
    %v5826 = vld [vmem:[#allocation2 + $0x1b0] sm:$0xff]
    %v5827 = vld [vmem:[#allocation2 + $0x1b8] sm:$0xff]
    %v5828 = vld [vmem:[#allocation2 + $0x1c0] sm:$0xff]
    %v5829 = vld [vmem:[#allocation2 + $0x1c8] sm:$0xff]
    %v5830 = vld [vmem:[#allocation2 + $0x1d0] sm:$0xff]
    %v5831 = vld [vmem:[#allocation2 + $0x1d8] sm:$0xff]
    %v5832 = vld [vmem:[#allocation2 + $0x1e0] sm:$0xff]
    %v5833 = vld [vmem:[#allocation2 + $0x1e8] sm:$0xff]
    %v5834 = vld [vmem:[#allocation2 + $0x1f0] sm:$0xff]
    %v5835 = vld [vmem:[#allocation2 + $0x1f8] sm:$0xff]
    %v5836 = vld [vmem:[#allocation2 + $0x200] sm:$0xff]
    %v5837 = vld [vmem:[#allocation2 + $0x208] sm:$0xff]
    %v5838 = vld [vmem:[#allocation2 + $0x210] sm:$0xff]
    %v5839 = vld [vmem:[#allocation2 + $0x218] sm:$0xff]
    %v5840 = vld [vmem:[#allocation2 + $0x220] sm:$0xff]
    %v5841 = vld [vmem:[#allocation2 + $0x228] sm:$0xff]
    %v5842 = vld [vmem:[#allocation2 + $0x230] sm:$0xff]
    %v5843 = vld [vmem:[#allocation2 + $0x238] sm:$0xff]
    %v5844 = vld [vmem:[#allocation2 + $0x240] sm:$0xff]
    %v5845 = vld [vmem:[#allocation2 + $0x248] sm:$0xff]
    %v5846 = vld [vmem:[#allocation2 + $0x250] sm:$0xff]
    %v5847 = vld [vmem:[#allocation2 + $0x258] sm:$0xff]
    %v5848 = vld [vmem:[#allocation2 + $0x260] sm:$0xff]
    %v5849 = vld [vmem:[#allocation2 + $0x268] sm:$0xff]
    %v5850 = vld [vmem:[#allocation2 + $0x270] sm:$0xff]
    %v5851 = vld [vmem:[#allocation2 + $0x278] sm:$0xff]
    %v5852 = vld [vmem:[#allocation2 + $0x280] sm:$0xff]
    %v5853 = vld [vmem:[#allocation2 + $0x288] sm:$0xff]
    %v5854 = vld [vmem:[#allocation2 + $0x290] sm:$0xff]
    %v5855 = vld [vmem:[#allocation2 + $0x298] sm:$0xff]
    %v5856 = vld [vmem:[#allocation2 + $0x2a0] sm:$0x3f]
    %v5857 = vld [vmem:[#allocation2 + $0x2a8] sm:$0x3f]
    %v5858 = vld [vmem:[#allocation2 + $0x2b0] sm:$0x3f]
    %v5859 = vld [vmem:[#allocation2 + $0x2b8] sm:$0x3f]
    %v5860 = vld [vmem:[#allocation2 + $0x2c0] sm:$0x3f]
    %v5861 = vld [vmem:[#allocation2 + $0x2c8] sm:$0x3f]
    %v5862 = vld [vmem:[#allocation2 + $0x2d0] sm:$0x3f]
    %v5863 = vld [vmem:[#allocation2 + $0x2d8] sm:$0x3f]
    %v5864 = vld [vmem:[#allocation2 + $0x2e0] sm:$0x3f]
    %v5865 = vld [vmem:[#allocation2 + $0x2e8] sm:$0x3f]
    %v5866 = vld [vmem:[#allocation2 + $0x2f0] sm:$0x3f]
    %v5867 = vld [vmem:[#allocation2 + $0x2f8] sm:$0x3f]
    %v5868 = vld [vmem:[#allocation2 + $0x300] sm:$0x3f]
    %v5869 = vld [vmem:[#allocation2 + $0x308] sm:$0x3f]
    %v5870 = vld [vmem:[#allocation6] sm:$0x1]
    %5872 = vset.pattern.permute.xlu0 0
    %5873 = vperm.xlu0 %5872, %v5870
    %v5874 = vpop.permute.xlu0 %5873
    %v5876 = vperm.slane %v5874, 0
    %vm5877 = vcmask 441344
    %v5879 = vsel %vm5877, %v5771, 0
    %v5882 = vsel %vm4560, %v5856, 0
    %v5885 = vsel %vm4560, %v5857, 0
    %v5888 = vsel %vm4560, %v5858, 0
    %v5891 = vsel %vm4560, %v5859, 0
    %v5894 = vsel %vm4560, %v5860, 0
    %v5897 = vsel %vm4560, %v5861, 0
    %v5900 = vsel %vm4560, %v5862, 0
    %v5903 = vsel %vm4560, %v5863, 0
    %v5906 = vsel %vm4560, %v5864, 0
    %v5909 = vsel %vm4560, %v5865, 0
    %v5912 = vsel %vm4560, %v5866, 0
    %v5915 = vsel %vm4560, %v5867, 0
    %v5918 = vsel %vm4560, %v5868, 0
    %v5921 = vsel %vm4560, %v5869, 0
    %5923 = vmatpush.msra.mxu0 0.0
    %5924 = vmatpush.msra.mxu0 0.0
    %5925 = vmatpush.msra.mxu0 0.0
    %5926 = vmatpush.msra.mxu0 0.0
    %5927 = vmatpush.msra.mxu0 0.0
    %5928 = vmatpush.msra.mxu0 0.0
    %5929 = vmatpush.msra.mxu0 0.0
    %5930 = vmatpush.msra.mxu0 0.0
    %5931 = vmatpush.msra.mxu0 0.0
    %5932 = vmatpush.msra.mxu0 %v5882
    %5933 = vmatpush.msra.mxu0 %v5842
    %5934 = vmatpush.msra.mxu0 %v5828
    %5935 = vmatpush.msra.mxu0 %v5814
    %5936 = vmatpush.msra.mxu0 %v5800
    %5937 = vmatpush.msra.mxu0 %v5786
    %5938 = vmatpush.msra.mxu0 %v5772
    %5939 = vmatmul.f32.gmra.mxu0 %v5879
    %v5940 = vpop.f32.mrf.mxu0
    %v5941 = vadd.f32 %v5876, %v5940
    %5942 = vdwg.mxu0
    %5943 = vmatpush.msra.mxu0 0.0
    %5944 = vmatpush.msra.mxu0 0.0
    %5945 = vmatpush.msra.mxu0 0.0
    %5946 = vmatpush.msra.mxu0 0.0
    %5947 = vmatpush.msra.mxu0 0.0
    %5948 = vmatpush.msra.mxu0 0.0
    %5949 = vmatpush.msra.mxu0 0.0
    %5950 = vmatpush.msra.mxu0 0.0
    %5951 = vmatpush.msra.mxu0 0.0
    %5952 = vmatpush.msra.mxu0 %v5885
    %5953 = vmatpush.msra.mxu0 %v5843
    %5954 = vmatpush.msra.mxu0 %v5829
    %5955 = vmatpush.msra.mxu0 %v5815
    %5956 = vmatpush.msra.mxu0 %v5801
    %5957 = vmatpush.msra.mxu0 %v5787
    %5958 = vmatpush.msra.mxu0 %v5773
    %5959 = vmatmul.f32.gmra.mxu0 %v5879
    %v5960 = vpop.f32.mrf.mxu0
    %v5961 = vadd.f32 %v5876, %v5960
    %5962 = vdwg.mxu0
    %5963 = vmatpush.msra.mxu0 0.0
    %5964 = vmatpush.msra.mxu0 0.0
    %5965 = vmatpush.msra.mxu0 0.0
    %5966 = vmatpush.msra.mxu0 0.0
    %5967 = vmatpush.msra.mxu0 0.0
    %5968 = vmatpush.msra.mxu0 0.0
    %5969 = vmatpush.msra.mxu0 0.0
    %5970 = vmatpush.msra.mxu0 0.0
    %5971 = vmatpush.msra.mxu0 0.0
    %5972 = vmatpush.msra.mxu0 %v5888
    %5973 = vmatpush.msra.mxu0 %v5844
    %5974 = vmatpush.msra.mxu0 %v5830
    %5975 = vmatpush.msra.mxu0 %v5816
    %5976 = vmatpush.msra.mxu0 %v5802
    %5977 = vmatpush.msra.mxu0 %v5788
    %5978 = vmatpush.msra.mxu0 %v5774
    %5979 = vmatmul.f32.gmra.mxu0 %v5879
    %v5980 = vpop.f32.mrf.mxu0
    %v5981 = vadd.f32 %v5876, %v5980
    %5982 = vdwg.mxu0
    %5983 = vmatpush.msra.mxu0 0.0
    %5984 = vmatpush.msra.mxu0 0.0
    %5985 = vmatpush.msra.mxu0 0.0
    %5986 = vmatpush.msra.mxu0 0.0
    %5987 = vmatpush.msra.mxu0 0.0
    %5988 = vmatpush.msra.mxu0 0.0
    %5989 = vmatpush.msra.mxu0 0.0
    %5990 = vmatpush.msra.mxu0 0.0
    %5991 = vmatpush.msra.mxu0 0.0
    %5992 = vmatpush.msra.mxu0 %v5891
    %5993 = vmatpush.msra.mxu0 %v5845
    %5994 = vmatpush.msra.mxu0 %v5831
    %5995 = vmatpush.msra.mxu0 %v5817
    %5996 = vmatpush.msra.mxu0 %v5803
    %5997 = vmatpush.msra.mxu0 %v5789
    %5998 = vmatpush.msra.mxu0 %v5775
    %5999 = vmatmul.f32.gmra.mxu0 %v5879
    %v6000 = vpop.f32.mrf.mxu0
    %v6001 = vadd.f32 %v5876, %v6000
    %6002 = vdwg.mxu0
    %6003 = vmatpush.msra.mxu0 0.0
    %6004 = vmatpush.msra.mxu0 0.0
    %6005 = vmatpush.msra.mxu0 0.0
    %6006 = vmatpush.msra.mxu0 0.0
    %6007 = vmatpush.msra.mxu0 0.0
    %6008 = vmatpush.msra.mxu0 0.0
    %6009 = vmatpush.msra.mxu0 0.0
    %6010 = vmatpush.msra.mxu0 0.0
    %6011 = vmatpush.msra.mxu0 0.0
    %6012 = vmatpush.msra.mxu0 %v5894
    %6013 = vmatpush.msra.mxu0 %v5846
    %6014 = vmatpush.msra.mxu0 %v5832
    %6015 = vmatpush.msra.mxu0 %v5818
    %6016 = vmatpush.msra.mxu0 %v5804
    %6017 = vmatpush.msra.mxu0 %v5790
    %6018 = vmatpush.msra.mxu0 %v5776
    %6019 = vmatmul.f32.gmra.mxu0 %v5879
    %v6020 = vpop.f32.mrf.mxu0
    %v6021 = vadd.f32 %v5876, %v6020
    %6022 = vdwg.mxu0
    %6023 = vmatpush.msra.mxu0 0.0
    %6024 = vmatpush.msra.mxu0 0.0
    %6025 = vmatpush.msra.mxu0 0.0
    %6026 = vmatpush.msra.mxu0 0.0
    %6027 = vmatpush.msra.mxu0 0.0
    %6028 = vmatpush.msra.mxu0 0.0
    %6029 = vmatpush.msra.mxu0 0.0
    %6030 = vmatpush.msra.mxu0 0.0
    %6031 = vmatpush.msra.mxu0 0.0
    %6032 = vmatpush.msra.mxu0 %v5897
    %6033 = vmatpush.msra.mxu0 %v5847
    %6034 = vmatpush.msra.mxu0 %v5833
    %6035 = vmatpush.msra.mxu0 %v5819
    %6036 = vmatpush.msra.mxu0 %v5805
    %6037 = vmatpush.msra.mxu0 %v5791
    %6038 = vmatpush.msra.mxu0 %v5777
    %6039 = vmatmul.f32.gmra.mxu0 %v5879
    %v6040 = vpop.f32.mrf.mxu0
    %v6041 = vadd.f32 %v5876, %v6040
    %6042 = vdwg.mxu0
    %6043 = vmatpush.msra.mxu0 0.0
    %6044 = vmatpush.msra.mxu0 0.0
    %6045 = vmatpush.msra.mxu0 0.0
    %6046 = vmatpush.msra.mxu0 0.0
    %6047 = vmatpush.msra.mxu0 0.0
    %6048 = vmatpush.msra.mxu0 0.0
    %6049 = vmatpush.msra.mxu0 0.0
    %6050 = vmatpush.msra.mxu0 0.0
    %6051 = vmatpush.msra.mxu0 0.0
    %6052 = vmatpush.msra.mxu0 %v5900
    %6053 = vmatpush.msra.mxu0 %v5848
    %6054 = vmatpush.msra.mxu0 %v5834
    %6055 = vmatpush.msra.mxu0 %v5820
    %6056 = vmatpush.msra.mxu0 %v5806
    %6057 = vmatpush.msra.mxu0 %v5792
    %6058 = vmatpush.msra.mxu0 %v5778
    %6059 = vmatmul.f32.gmra.mxu0 %v5879
    %v6060 = vpop.f32.mrf.mxu0
    %v6061 = vadd.f32 %v5876, %v6060
    %6062 = vdwg.mxu0
    %6063 = vmatpush.msra.mxu0 0.0
    %6064 = vmatpush.msra.mxu0 0.0
    %6065 = vmatpush.msra.mxu0 0.0
    %6066 = vmatpush.msra.mxu0 0.0
    %6067 = vmatpush.msra.mxu0 0.0
    %6068 = vmatpush.msra.mxu0 0.0
    %6069 = vmatpush.msra.mxu0 0.0
    %6070 = vmatpush.msra.mxu0 0.0
    %6071 = vmatpush.msra.mxu0 0.0
    %6072 = vmatpush.msra.mxu0 %v5903
    %6073 = vmatpush.msra.mxu0 %v5849
    %6074 = vmatpush.msra.mxu0 %v5835
    %6075 = vmatpush.msra.mxu0 %v5821
    %6076 = vmatpush.msra.mxu0 %v5807
    %6077 = vmatpush.msra.mxu0 %v5793
    %6078 = vmatpush.msra.mxu0 %v5779
    %6079 = vmatmul.f32.gmra.mxu0 %v5879
    %v6080 = vpop.f32.mrf.mxu0
    %v6081 = vadd.f32 %v5876, %v6080
    %6082 = vdwg.mxu0
    %6083 = vmatpush.msra.mxu0 0.0
    %6084 = vmatpush.msra.mxu0 0.0
    %6085 = vmatpush.msra.mxu0 0.0
    %6086 = vmatpush.msra.mxu0 0.0
    %6087 = vmatpush.msra.mxu0 0.0
    %6088 = vmatpush.msra.mxu0 0.0
    %6089 = vmatpush.msra.mxu0 0.0
    %6090 = vmatpush.msra.mxu0 0.0
    %6091 = vmatpush.msra.mxu0 0.0
    %6092 = vmatpush.msra.mxu0 %v5906
    %6093 = vmatpush.msra.mxu0 %v5850
    %6094 = vmatpush.msra.mxu0 %v5836
    %6095 = vmatpush.msra.mxu0 %v5822
    %6096 = vmatpush.msra.mxu0 %v5808
    %6097 = vmatpush.msra.mxu0 %v5794
    %6098 = vmatpush.msra.mxu0 %v5780
    %6099 = vmatmul.f32.gmra.mxu0 %v5879
    %v6100 = vpop.f32.mrf.mxu0
    %v6101 = vadd.f32 %v5876, %v6100
    %6102 = vdwg.mxu0
    %6103 = vmatpush.msra.mxu0 0.0
    %6104 = vmatpush.msra.mxu0 0.0
    %6105 = vmatpush.msra.mxu0 0.0
    %6106 = vmatpush.msra.mxu0 0.0
    %6107 = vmatpush.msra.mxu0 0.0
    %6108 = vmatpush.msra.mxu0 0.0
    %6109 = vmatpush.msra.mxu0 0.0
    %6110 = vmatpush.msra.mxu0 0.0
    %6111 = vmatpush.msra.mxu0 0.0
    %6112 = vmatpush.msra.mxu0 %v5909
    %6113 = vmatpush.msra.mxu0 %v5851
    %6114 = vmatpush.msra.mxu0 %v5837
    %6115 = vmatpush.msra.mxu0 %v5823
    %6116 = vmatpush.msra.mxu0 %v5809
    %6117 = vmatpush.msra.mxu0 %v5795
    %6118 = vmatpush.msra.mxu0 %v5781
    %6119 = vmatmul.f32.gmra.mxu0 %v5879
    %v6120 = vpop.f32.mrf.mxu0
    %v6121 = vadd.f32 %v5876, %v6120
    %6122 = vdwg.mxu0
    %6123 = vmatpush.msra.mxu0 0.0
    %6124 = vmatpush.msra.mxu0 0.0
    %6125 = vmatpush.msra.mxu0 0.0
    %6126 = vmatpush.msra.mxu0 0.0
    %6127 = vmatpush.msra.mxu0 0.0
    %6128 = vmatpush.msra.mxu0 0.0
    %6129 = vmatpush.msra.mxu0 0.0
    %6130 = vmatpush.msra.mxu0 0.0
    %6131 = vmatpush.msra.mxu0 0.0
    %6132 = vmatpush.msra.mxu0 %v5912
    %6133 = vmatpush.msra.mxu0 %v5852
    %6134 = vmatpush.msra.mxu0 %v5838
    %6135 = vmatpush.msra.mxu0 %v5824
    %6136 = vmatpush.msra.mxu0 %v5810
    %6137 = vmatpush.msra.mxu0 %v5796
    %6138 = vmatpush.msra.mxu0 %v5782
    %6139 = vmatmul.f32.gmra.mxu0 %v5879
    %v6140 = vpop.f32.mrf.mxu0
    %v6141 = vadd.f32 %v5876, %v6140
    %6142 = vdwg.mxu0
    %6143 = vmatpush.msra.mxu0 0.0
    %6144 = vmatpush.msra.mxu0 0.0
    %6145 = vmatpush.msra.mxu0 0.0
    %6146 = vmatpush.msra.mxu0 0.0
    %6147 = vmatpush.msra.mxu0 0.0
    %6148 = vmatpush.msra.mxu0 0.0
    %6149 = vmatpush.msra.mxu0 0.0
    %6150 = vmatpush.msra.mxu0 0.0
    %6151 = vmatpush.msra.mxu0 0.0
    %6152 = vmatpush.msra.mxu0 %v5915
    %6153 = vmatpush.msra.mxu0 %v5853
    %6154 = vmatpush.msra.mxu0 %v5839
    %6155 = vmatpush.msra.mxu0 %v5825
    %6156 = vmatpush.msra.mxu0 %v5811
    %6157 = vmatpush.msra.mxu0 %v5797
    %6158 = vmatpush.msra.mxu0 %v5783
    %6159 = vmatmul.f32.gmra.mxu0 %v5879
    %v6160 = vpop.f32.mrf.mxu0
    %v6161 = vadd.f32 %v5876, %v6160
    %6162 = vdwg.mxu0
    %6163 = vmatpush.msra.mxu0 0.0
    %6164 = vmatpush.msra.mxu0 0.0
    %6165 = vmatpush.msra.mxu0 0.0
    %6166 = vmatpush.msra.mxu0 0.0
    %6167 = vmatpush.msra.mxu0 0.0
    %6168 = vmatpush.msra.mxu0 0.0
    %6169 = vmatpush.msra.mxu0 0.0
    %6170 = vmatpush.msra.mxu0 0.0
    %6171 = vmatpush.msra.mxu0 0.0
    %6172 = vmatpush.msra.mxu0 %v5918
    %6173 = vmatpush.msra.mxu0 %v5854
    %6174 = vmatpush.msra.mxu0 %v5840
    %6175 = vmatpush.msra.mxu0 %v5826
    %6176 = vmatpush.msra.mxu0 %v5812
    %6177 = vmatpush.msra.mxu0 %v5798
    %6178 = vmatpush.msra.mxu0 %v5784
    %6179 = vmatmul.f32.gmra.mxu0 %v5879
    %v6180 = vpop.f32.mrf.mxu0
    %v6181 = vadd.f32 %v5876, %v6180
    %6182 = vdwg.mxu0
    %6183 = vmatpush.msra.mxu0 0.0
    %6184 = vmatpush.msra.mxu0 0.0
    %6185 = vmatpush.msra.mxu0 0.0
    %6186 = vmatpush.msra.mxu0 0.0
    %6187 = vmatpush.msra.mxu0 0.0
    %6188 = vmatpush.msra.mxu0 0.0
    %6189 = vmatpush.msra.mxu0 0.0
    %6190 = vmatpush.msra.mxu0 0.0
    %6191 = vmatpush.msra.mxu0 0.0
    %6192 = vmatpush.msra.mxu0 %v5921
    %6193 = vmatpush.msra.mxu0 %v5855
    %6194 = vmatpush.msra.mxu0 %v5841
    %6195 = vmatpush.msra.mxu0 %v5827
    %6196 = vmatpush.msra.mxu0 %v5813
    %6197 = vmatpush.msra.mxu0 %v5799
    %6198 = vmatpush.msra.mxu0 %v5785
    %6199 = vmatmul.f32.gmra.mxu0 %v5879
    %v6200 = vpop.f32.mrf.mxu0
    %v6201 = vadd.f32 %v5876, %v6200
    %6202 = vdwg.mxu0
    %v6203 = vtanh.pop %v5941
    %v6204 = vtanh.pop %v5961
    %v6205 = vtanh.pop %v5981
    %v6206 = vtanh.pop %v6001
    %v6207 = vtanh.pop %v6021
    %v6208 = vtanh.pop %v6041
    %v6209 = vtanh.pop %v6061
    %v6210 = vtanh.pop %v6081
    %v6211 = vtanh.pop %v6101
    %v6212 = vtanh.pop %v6121
    %v6213 = vtanh.pop %v6141
    %v6214 = vtanh.pop %v6161
    %v6215 = vtanh.pop %v6181
    %v6216 = vtanh.pop %v6201
    %v6231 = vrot.slane %v6204, 7
    %v6232 = vrot.slane %v6205, 6
    %v6233 = vrot.slane %v6206, 5
    %v6234 = vrot.slane %v6207, 4
    %v6235 = vrot.slane %v6208, 3
    %v6236 = vrot.slane %v6209, 2
    %v6237 = vrot.slane %v6210, 1
    %v6238 = vrot.slane %v6212, 7
    %v6239 = vrot.slane %v6213, 6
    %v6240 = vrot.slane %v6214, 5
    %v6241 = vrot.slane %v6215, 4
    %v6242 = vrot.slane %v6216, 3
    %v6243 = vsel %vm395, %v6203, %v6231
    %v6244 = vsel %vm397, %v6232, %v6233
    %v6245 = vsel %vm399, %v6243, %v6244
    %v6246 = vsel %vm401, %v6234, %v6235
    %v6247 = vsel %vm718, %v6236, %v6237
    %v6248 = vsel %vm403, %v6246, %v6247
    %v6249 = vsel %vm220, %v6245, %v6248
    %v6250 = vsel %vm395, %v6211, %v6238
    %v6251 = vsel %vm399, %v6250, %v6239
    %v6252 = vsel %vm724, %v6240, %v6241
    %v6253 = vsel %vm726, %v6252, %v6242
    %v6254 = vsel %vm728, %v6251, %v6253
    %6257 = vst [vmem:[%s16] sm:$0xff] %v6249
    %6258 = vst.msk [vmem:[%s16 + $0x8] sm:$0x3f] %vm735, %v6254
    // Predicated region
    $region74: #{generator_forward.1} parent=1 // pred_check
      _
    $region75: #{generator_forward.1} parent=1 // pred_check_branch
      %6260 = sbr.rel (0) target = $region77
    $region76: #{generator_forward.1} parent=1 // pred_region
      _
    $region77: #{generator_forward.1} parent=1 // pred_fallthru
      _
    // Predicated region
    $region78: #{generator_forward.1} parent=1 // pred_check
      _
    $region79: #{generator_forward.1} parent=1 // pred_check_branch
      %6262 = sbr.rel (0) target = $region81
    $region80: #{generator_forward.1} parent=1 // pred_region
      _
    $region81: #{generator_forward.1} parent=1 // pred_fallthru
      _
    %6263 = vsyncpa [#allocation8], 1
    %6264 = vsyncpa [#allocation10], 1

</llo_original>
